<compile_context>
chip_gen: v5e
topology: v5e:2x2
jax: 0.10.0
libtpu: 0.0.40
codegen_flags: <defaults>
</compile_context>

<pallas_src>
import functools
from math import sqrt

import jax
import jax.numpy as jnp
from jax.experimental import pallas as pl
from jax.experimental.pallas import tpu as pltpu


def _mhsa_kernel(x_ref, w_ref, o_ref, *, block_b, num_heads, dim_k, dim_v,
                 mxu_dtype, approx_recip):
    # x_ref : (block_b, N, dim_in)        block of batch elements (already in mxu_dtype)
    # w_ref : (dim_in, 2*dim_k + dim_v)   fused [Wq^T*scale | Wk^T | Wv^T], VMEM resident
    # o_ref : (block_b, N, dim_v)         torch output layout (head-major along lanes)
    H = num_heads
    dk = dim_k // H
    dv = dim_v // H
    N = x_ref.shape[1]
    dim_in = x_ref.shape[2]
    M = block_b * N
    G = block_b * H

    x = x_ref[...].reshape(M, dim_in)     # merge batch/seq -> real M dimension for the MXU
    w = w_ref[...]

    # Fused Q/K/V projection: one lane-dense MXU matmul, f32 accumulation.
    qkv = jnp.dot(x, w, preferred_element_type=jnp.float32)   # (M, 2*dim_k + dim_v), f32
    qkv = qkv.astype(mxu_dtype)                                # single wide cast

    # Head-batched layout: (block_b, N, H, d) -> (G, N, d).  Lane->sublane relayout is
    # paid once here instead of 8 narrow slices + a concatenate per step.
    q = qkv[:, :dim_k].reshape(block_b, N, H, dk)
    k = qkv[:, dim_k:2 * dim_k].reshape(block_b, N, H, dk)
    v = qkv[:, 2 * dim_k:].reshape(block_b, N, H, dv)
    q = q.transpose(0, 2, 1, 3).reshape(G, N, dk)
    k = k.transpose(0, 2, 1, 3).reshape(G, N, dk)
    v = v.transpose(0, 2, 1, 3).reshape(G, N, dv)

    # scores (scale already folded into Wq): one batched contraction over all heads.
    s = jnp.einsum('gqd,gkd->gqk', q, k,
                   preferred_element_type=jnp.float32)          # (G, N, N), f32

    # Numerically-stable batched softmax, entirely in f32.
    s = s - jnp.max(s, axis=-1, keepdims=True)
    e = jnp.exp(s)
    denom = jnp.sum(e, axis=-1, keepdims=True)
    if approx_recip:
        p = e * pl.reciprocal(denom, approx=True)   # EUP slot, frees VPU (bf16 path)
    else:
        p = e / denom                               # exact path for the f32 check

    att = jnp.einsum('gqk,gkd->gqd', p.astype(mxu_dtype), v,
                     preferred_element_type=jnp.float32)        # (G, N, dv), f32

    # Back to the torch layout: head h lands in columns [h*dv, (h+1)*dv).
    att = att.reshape(block_b, H, N, dv).transpose(0, 2, 1, 3).reshape(block_b, N, dim_v)
    o_ref[...] = att.astype(o_ref.dtype)


def _pick_block_b(B, N, dim_in, dim_k, dim_v, num_heads, mxu_itemsize,
                  vmem_budget_bytes=24 << 20):
    """Batch-tile size: big enough to feed the MXU an M dimension, small enough for VMEM."""
    dim_f = 2 * dim_k + dim_v
    # Rough per-batch-element f32-dominated footprint of one grid step.
    per_elem = (
        2 * N * dim_in * mxu_itemsize            # double-buffered x block
        + N * dim_f * (4 + 2 * mxu_itemsize)     # qkv f32 + cast + head-batched relayout copies
        + 3 * num_heads * N * N * 4              # scores / exp / probs (f32, all heads batched)
        + N * dim_v * (4 + 2 * 4)                # att f32 + double-buffered output block
    )
    cap = max(1, vmem_budget_bytes // max(per_elem, 1))
    target = max(1, -(-256 // N))                # aim for >=256 projection rows per step
    bb = min(B, target, cap)
    # Prefer >=2 grid steps (keeps both v7x TensorCores busy) as long as each step
    # still has a substantial M dimension; at tiny demo shapes one step is fine.
    if bb >= B and B >= 2 and (B // 2) * N >= 256:
        bb = B // 2
    while B % bb:                                # blocks must tile the batch exactly
        bb -= 1
    return bb


def multi_head_self_attention(x, wq, wk, wv, num_heads, *, mxu_dtype=jnp.bfloat16,
                              block_b=None):
    """x: (B, N, dim_in); wq/wk: (dim_k, dim_in); wv: (dim_v, dim_in) (torch Linear layout)."""
    B, N, dim_in = x.shape
    dim_k = wq.shape[0]
    dim_v = wv.shape[0]
    assert dim_k % num_heads == 0 and dim_v % num_heads == 0
    dk = dim_k // num_heads
    norm_fact = 1.0 / sqrt(dk)
    dim_f = 2 * dim_k + dim_v

    # Wrapper-side (free) layout plumbing: transpose torch (out, in) weights to (in, out),
    # fold the softmax scale into the Q columns, fuse all three projections into one
    # lane-dense matrix, and cast MXU operands once.
    w_all = jnp.concatenate([wq.T * norm_fact, wk.T, wv.T], axis=1).astype(mxu_dtype)
    x_in = x.astype(mxu_dtype)

    if block_b is None:
        block_b = _pick_block_b(B, N, dim_in, dim_k, dim_v, num_heads,
                                jnp.dtype(mxu_dtype).itemsize)
    grid_b = B // block_b

    kernel = functools.partial(
        _mhsa_kernel,
        block_b=block_b, num_heads=num_heads, dim_k=dim_k, dim_v=dim_v,
        mxu_dtype=mxu_dtype, approx_recip=(mxu_dtype != jnp.float32))

    def build(weight_pipeline_mode):
        w_kwargs = {}
        if weight_pipeline_mode is not None:
            w_kwargs["pipeline_mode"] = weight_pipeline_mode
        return pl.pallas_call(
            kernel,
            out_shape=jax.ShapeDtypeStruct((B, N, dim_v), x.dtype),
            grid_spec=pltpu.PrefetchScalarGridSpec(
                num_scalar_prefetch=0,
                grid=(grid_b,),
                in_specs=[
                    # block_b batch elements per grid step.
                    pl.BlockSpec((block_b, N, dim_in), lambda b: (b, 0, 0)),
                    # Fused weights: constant block index -> DMA'd once, VMEM resident;
                    # single-buffered (no point double-buffering an invariant block).
                    pl.BlockSpec((dim_in, dim_f), lambda b: (0, 0), **w_kwargs),
                ],
                # Lane-dense output in the final torch layout (no wrapper transpose).
                out_specs=pl.BlockSpec((block_b, N, dim_v), lambda b: (b, 0, 0)),
            ),
            compiler_params=pltpu.CompilerParams(
                dimension_semantics=("parallel",),   # batch tiles shard across TCs on v7x
            ),
        )

    try:
        out = build(pl.Buffered(1))(x_in, w_all)
    except Exception:
        # Fallback if this jax version rejects single-buffering on an invariant block.
        out = build(None)(x_in, w_all)
    return out


def _reference(x, wq, wk, wv, num_heads):
    """Pure-JAX re-implementation of the torch forward, for verification."""
    B, N, dim_in = x.shape
    dim_k, dim_v = wq.shape[0], wv.shape[0]
    dk, dv = dim_k // num_heads, dim_v // num_heads
    q = (x @ wq.T).reshape(B, N, num_heads, dk).transpose(0, 2, 1, 3)
    k = (x @ wk.T).reshape(B, N, num_heads, dk).transpose(0, 2, 1, 3)
    v = (x @ wv.T).reshape(B, N, num_heads, dv).transpose(0, 2, 1, 3)
    dist = jnp.einsum("bhqd,bhkd->bhqk", q, k) * (1.0 / sqrt(dk))
    dist = jax.nn.softmax(dist, axis=-1)
    att = jnp.einsum("bhqk,bhkd->bhqd", dist, v)
    return att.transpose(0, 2, 1, 3).reshape(B, N, dim_v)


if __name__ == "__main__":
    # Small shapes consistent with the module's forward: x is (batch, seq, dim_in).
    batch, seq, dim_in = 2, 16, 32
    dim_k, dim_v, num_heads = 64, 64, 8

    key = jax.random.PRNGKey(0)
    kx, kq, kk, kv = jax.random.split(key, 4)
    x = jax.random.normal(kx, (batch, seq, dim_in), dtype=jnp.float32)
    # Deterministic "Kaiming-uniform-ish" init for nn.Linear weights (out, in).
    bound = 1.0 / sqrt(dim_in)
    wq = jax.random.uniform(kq, (dim_k, dim_in), jnp.float32, -bound, bound)
    wk = jax.random.uniform(kk, (dim_k, dim_in), jnp.float32, -bound, bound)
    wv = jax.random.uniform(kv, (dim_v, dim_in), jnp.float32, -bound, bound)

    ref = _reference(x, wq, wk, wv, num_heads)

    # f32 MXU path: exact-division softmax, tight tolerance against the reference.
    out_f32 = multi_head_self_attention(x, wq, wk, wv, num_heads, mxu_dtype=jnp.float32)
    out_f32 = jax.block_until_ready(out_f32)
    assert out_f32.shape == (batch, seq, dim_v)
    assert jnp.allclose(out_f32, ref, atol=1e-5, rtol=1e-5)

    # bf16 MXU operands (default fast path): f32 accumulation + f32 softmax stats,
    # checked at a bf16-appropriate tolerance.
    out_bf16 = multi_head_self_attention(x, wq, wk, wv, num_heads, mxu_dtype=jnp.bfloat16)
    out_bf16 = jax.block_until_ready(out_bf16)
    assert out_bf16.shape == (batch, seq, dim_v)
    assert jnp.allclose(out_bf16, ref, atol=5e-2, rtol=5e-2)

    print("KERNEL_OK")
</pallas_src>

<mosaic_0001>
module attributes {stable_mosaic.version = 11 : i64} {
  func.func @_mhsa_kernel(%arg0: i32, %arg1: memref<2x16x32xf32, #tpu.memory_space<vmem>>, %arg2: memref<32x192xf32, #tpu.memory_space<vmem>>, %arg3: memref<2x16x64xf32, #tpu.memory_space<vmem>>) attributes {dimension_semantics = [#tpu.dimension_semantics<parallel>], iteration_bounds = array<i64: 1>, scalar_prefetch = 0 : i64, scratch_operands = 0 : i64, tpu.core_type = #tpu.core_type<tc>, window_params = [{transform_indices = @transform_0, window_bounds = array<i64: 2, 16, 32>}, {pipeline_mode = #tpu.pipeline_mode<synchronous>, transform_indices = @transform_1, window_bounds = array<i64: 32, 192>}, {transform_indices = @transform_2, window_bounds = array<i64: 2, 16, 64>}]} {
    %c0 = arith.constant 0 : index
    %c0_0 = arith.constant 0 : index
    %c0_1 = arith.constant 0 : index
    %0 = vector.load %arg1[%c0, %c0_0, %c0_1] : memref<2x16x32xf32, #tpu.memory_space<vmem>>, vector<2x16x32xf32>
    %1 = vector.shape_cast %0 : vector<2x16x32xf32> to vector<32x32xf32>
    %c0_2 = arith.constant 0 : index
    %c0_3 = arith.constant 0 : index
    %2 = vector.load %arg2[%c0_2, %c0_3] : memref<32x192xf32, #tpu.memory_space<vmem>>, vector<32x192xf32>
    %cst = arith.constant dense<0.000000e+00> : vector<32x192xf32>
    %3 = tpu.matmul %1, %2, %cst {dimension_numbers = #tpu.dot_dimension_numbers<[1], [0], [0], [1], [0, 0, 1, 1], [], []>} : vector<32x32xf32>, vector<32x192xf32>, vector<32x192xf32> -> vector<32x192xf32>
    %4 = vector.extract_strided_slice %3 {offsets = [0, 0], sizes = [32, 64], strides = [1, 1]} : vector<32x192xf32> to vector<32x64xf32>
    %5 = vector.shape_cast %4 : vector<32x64xf32> to vector<2x16x8x8xf32>
    %6 = vector.extract_strided_slice %3 {offsets = [0, 64], sizes = [32, 64], strides = [1, 1]} : vector<32x192xf32> to vector<32x64xf32>
    %7 = vector.shape_cast %6 : vector<32x64xf32> to vector<2x16x8x8xf32>
    %8 = vector.extract_strided_slice %3 {offsets = [0, 128], sizes = [32, 64], strides = [1, 1]} : vector<32x192xf32> to vector<32x64xf32>
    %9 = vector.shape_cast %8 : vector<32x64xf32> to vector<2x16x8x8xf32>
    %10 = tpu.transpose %5, [0, 2, 1, 3] : vector<2x16x8x8xf32> -> vector<2x8x16x8xf32>
    %11 = vector.shape_cast %10 : vector<2x8x16x8xf32> to vector<16x16x8xf32>
    %12 = tpu.transpose %7, [0, 2, 1, 3] : vector<2x16x8x8xf32> -> vector<2x8x16x8xf32>
    %13 = vector.shape_cast %12 : vector<2x8x16x8xf32> to vector<16x16x8xf32>
    %14 = tpu.transpose %9, [0, 2, 1, 3] : vector<2x16x8x8xf32> -> vector<2x8x16x8xf32>
    %15 = vector.shape_cast %14 : vector<2x8x16x8xf32> to vector<16x16x8xf32>
    "tpu.trace_start"() <{level = 10 : i32, message = "gqd,gkd->gqk"}> : () -> ()
    %cst_4 = arith.constant dense<0.000000e+00> : vector<16x16x16xf32>
    %16 = tpu.matmul %11, %13, %cst_4 {dimension_numbers = #tpu.dot_dimension_numbers<[2], [2], [1], [1], [0, 0, 0, 1, 1, 1], [0], [0]>} : vector<16x16x8xf32>, vector<16x16x8xf32>, vector<16x16x16xf32> -> vector<16x16x16xf32>
    "tpu.trace_stop"() : () -> ()
    %cst_5 = arith.constant dense<0xFF800000> : vector<16x16xf32>
    %17 = vector.multi_reduction <maximumf>, %16, %cst_5 [2] : vector<16x16x16xf32> to vector<16x16xf32>
    %18 = vector.shape_cast %17 : vector<16x16xf32> to vector<16x16x1xf32>
    %19 = vector.broadcast %18 : vector<16x16x1xf32> to vector<16x16x16xf32>
    %20 = arith.subf %16, %19 : vector<16x16x16xf32>
    %21 = math.exp %20 : vector<16x16x16xf32>
    %cst_6 = arith.constant dense<0.000000e+00> : vector<16x16xf32>
    %22 = vector.multi_reduction <add>, %21, %cst_6 [2] : vector<16x16x16xf32> to vector<16x16xf32>
    %23 = vector.shape_cast %22 : vector<16x16xf32> to vector<16x16x1xf32>
    %24 = vector.broadcast %23 : vector<16x16x1xf32> to vector<16x16x16xf32>
    %25 = arith.divf %21, %24 : vector<16x16x16xf32>
    "tpu.trace_start"() <{level = 10 : i32, message = "gqk,gkd->gqd"}> : () -> ()
    %cst_7 = arith.constant dense<0.000000e+00> : vector<16x16x8xf32>
    %26 = tpu.matmul %25, %15, %cst_7 {dimension_numbers = #tpu.dot_dimension_numbers<[2], [1], [1], [2], [0, 0, 0, 1, 1, 2], [0], [0]>} : vector<16x16x16xf32>, vector<16x16x8xf32>, vector<16x16x8xf32> -> vector<16x16x8xf32>
    "tpu.trace_stop"() : () -> ()
    %27 = vector.shape_cast %26 : vector<16x16x8xf32> to vector<2x8x16x8xf32>
    %28 = tpu.transpose %27, [0, 2, 1, 3] : vector<2x8x16x8xf32> -> vector<2x16x8x8xf32>
    %29 = vector.shape_cast %28 : vector<2x16x8x8xf32> to vector<2x16x64xf32>
    %c0_8 = arith.constant 0 : index
    %c0_9 = arith.constant 0 : index
    %c0_10 = arith.constant 0 : index
    %30 = vector.load %arg3[%c0_8, %c0_9, %c0_10] : memref<2x16x64xf32, #tpu.memory_space<vmem>>, vector<2x16x64xf32>
    tpu.vector_store %arg3[%c0_8, %c0_9, %c0_10], %29 {strides = array<i32>} : memref<2x16x64xf32, #tpu.memory_space<vmem>>, vector<2x16x64xf32>,
    return
  }
  func.func @transform_0(%arg0: i32) -> (i32, i32, i32) {
    %c0_i32 = arith.constant 0 : i32
    %c0_i32_0 = arith.constant 0 : i32
    %c0_i32_1 = arith.constant 0 : i32
    return %arg0, %c0_i32, %c0_i32_0 : i32, i32, i32
  }
  func.func @transform_1(%arg0: i32) -> (i32, i32) {
    %c0_i32 = arith.constant 0 : i32
    %c0_i32_0 = arith.constant 0 : i32
    %c0_i32_1 = arith.constant 0 : i32
    return %c0_i32, %c0_i32_0 : i32, i32
  }
  func.func @transform_2(%arg0: i32) -> (i32, i32, i32) {
    %c0_i32 = arith.constant 0 : i32
    %c0_i32_0 = arith.constant 0 : i32
    %c0_i32_1 = arith.constant 0 : i32
    return %arg0, %c0_i32, %c0_i32_0 : i32, i32, i32
  }
}

module attributes {stable_mosaic.version = 11 : i64} {
  func.func @_mhsa_kernel(%arg0: i32, %arg1: memref<2x16x32xf32, #tpu.memory_space<vmem>>, %arg2: memref<32x192xf32, #tpu.memory_space<vmem>>, %arg3: memref<2x16x64xf32, #tpu.memory_space<vmem>>) attributes {dimension_semantics = [#tpu.dimension_semantics<parallel>], iteration_bounds = array<i64: 1>, scalar_prefetch = 0 : i64, scratch_operands = 0 : i64, tpu.core_type = #tpu.core_type<tc>, window_params = [{transform_indices = @transform_0, window_bounds = array<i64: 2, 16, 32>}, {pipeline_mode = #tpu.pipeline_mode<synchronous>, transform_indices = @transform_1, window_bounds = array<i64: 32, 192>}, {transform_indices = @transform_2, window_bounds = array<i64: 2, 16, 64>}]} {
    %c0 = arith.constant 0 : index
    %c0_0 = arith.constant 0 : index
    %c0_1 = arith.constant 0 : index
    %0 = vector.load %arg1[%c0, %c0_0, %c0_1] : memref<2x16x32xf32, #tpu.memory_space<vmem>>, vector<2x16x32xf32>
    %1 = vector.shape_cast %0 : vector<2x16x32xf32> to vector<32x32xf32>
    %c0_2 = arith.constant 0 : index
    %c0_3 = arith.constant 0 : index
    %2 = vector.load %arg2[%c0_2, %c0_3] : memref<32x192xf32, #tpu.memory_space<vmem>>, vector<32x192xf32>
    %cst = arith.constant dense<0.000000e+00> : vector<32x192xf32>
    %3 = tpu.matmul %1, %2, %cst {dimension_numbers = #tpu.dot_dimension_numbers<[1], [0], [0], [1], [0, 0, 1, 1], [], []>} : vector<32x32xf32>, vector<32x192xf32>, vector<32x192xf32> -> vector<32x192xf32>
    %4 = vector.extract_strided_slice %3 {offsets = [0, 0], sizes = [32, 64], strides = [1, 1]} : vector<32x192xf32> to vector<32x64xf32>
    %5 = vector.shape_cast %4 : vector<32x64xf32> to vector<2x16x8x8xf32>
    %6 = vector.extract_strided_slice %3 {offsets = [0, 64], sizes = [32, 64], strides = [1, 1]} : vector<32x192xf32> to vector<32x64xf32>
    %7 = vector.shape_cast %6 : vector<32x64xf32> to vector<2x16x8x8xf32>
    %8 = vector.extract_strided_slice %3 {offsets = [0, 128], sizes = [32, 64], strides = [1, 1]} : vector<32x192xf32> to vector<32x64xf32>
    %9 = vector.shape_cast %8 : vector<32x64xf32> to vector<2x16x8x8xf32>
    %10 = tpu.transpose %5, [0, 2, 1, 3] : vector<2x16x8x8xf32> -> vector<2x8x16x8xf32>
    %11 = vector.shape_cast %10 : vector<2x8x16x8xf32> to vector<16x16x8xf32>
    %12 = tpu.transpose %7, [0, 2, 1, 3] : vector<2x16x8x8xf32> -> vector<2x8x16x8xf32>
    %13 = vector.shape_cast %12 : vector<2x8x16x8xf32> to vector<16x16x8xf32>
    %14 = tpu.transpose %9, [0, 2, 1, 3] : vector<2x16x8x8xf32> -> vector<2x8x16x8xf32>
    %15 = vector.shape_cast %14 : vector<2x8x16x8xf32> to vector<16x16x8xf32>
    "tpu.trace_start"() <{level = 10 : i32, message = "gqd,gkd->gqk"}> : () -> ()
    %cst_4 = arith.constant dense<0.000000e+00> : vector<16x16x16xf32>
    %16 = tpu.matmul %11, %13, %cst_4 {dimension_numbers = #tpu.dot_dimension_numbers<[2], [2], [1], [1], [0, 0, 0, 1, 1, 1], [0], [0]>} : vector<16x16x8xf32>, vector<16x16x8xf32>, vector<16x16x16xf32> -> vector<16x16x16xf32>
    "tpu.trace_stop"() : () -> ()
    %cst_5 = arith.constant dense<0xFF800000> : vector<16x16xf32>
    %17 = vector.multi_reduction <maximumf>, %16, %cst_5 [2] : vector<16x16x16xf32> to vector<16x16xf32>
    %18 = vector.shape_cast %17 : vector<16x16xf32> to vector<16x16x1xf32>
    %19 = vector.broadcast %18 : vector<16x16x1xf32> to vector<16x16x16xf32>
    %20 = arith.subf %16, %19 : vector<16x16x16xf32>
    %21 = math.exp %20 : vector<16x16x16xf32>
    %cst_6 = arith.constant dense<0.000000e+00> : vector<16x16xf32>
    %22 = vector.multi_reduction <add>, %21, %cst_6 [2] : vector<16x16x16xf32> to vector<16x16xf32>
    %23 = vector.shape_cast %22 : vector<16x16xf32> to vector<16x16x1xf32>
    %24 = vector.broadcast %23 : vector<16x16x1xf32> to vector<16x16x16xf32>
    %25 = arith.divf %21, %24 : vector<16x16x16xf32>
    "tpu.trace_start"() <{level = 10 : i32, message = "gqk,gkd->gqd"}> : () -> ()
    %cst_7 = arith.constant dense<0.000000e+00> : vector<16x16x8xf32>
    %26 = tpu.matmul %25, %15, %cst_7 {dimension_numbers = #tpu.dot_dimension_numbers<[2], [1], [1], [2], [0, 0, 0, 1, 1, 2], [0], [0]>} : vector<16x16x16xf32>, vector<16x16x8xf32>, vector<16x16x8xf32> -> vector<16x16x8xf32>
    "tpu.trace_stop"() : () -> ()
    %27 = vector.shape_cast %26 : vector<16x16x8xf32> to vector<2x8x16x8xf32>
    %28 = tpu.transpose %27, [0, 2, 1, 3] : vector<2x8x16x8xf32> -> vector<2x16x8x8xf32>
    %29 = vector.shape_cast %28 : vector<2x16x8x8xf32> to vector<2x16x64xf32>
    %c0_8 = arith.constant 0 : index
    %c0_9 = arith.constant 0 : index
    %c0_10 = arith.constant 0 : index
    %30 = vector.load %arg3[%c0_8, %c0_9, %c0_10] : memref<2x16x64xf32, #tpu.memory_space<vmem>>, vector<2x16x64xf32>
    tpu.vector_store %arg3[%c0_8, %c0_9, %c0_10], %29 {strides = array<i32>} : memref<2x16x64xf32, #tpu.memory_space<vmem>>, vector<2x16x64xf32>,
    return
  }
  func.func @transform_0(%arg0: i32) -> (i32, i32, i32) {
    %c0_i32 = arith.constant 0 : i32
    %c0_i32_0 = arith.constant 0 : i32
    %c0_i32_1 = arith.constant 0 : i32
    return %arg0, %c0_i32, %c0_i32_0 : i32, i32, i32
  }
  func.func @transform_1(%arg0: i32) -> (i32, i32) {
    %c0_i32 = arith.constant 0 : i32
    %c0_i32_0 = arith.constant 0 : i32
    %c0_i32_1 = arith.constant 0 : i32
    return %c0_i32, %c0_i32_0 : i32, i32
  }
  func.func @transform_2(%arg0: i32) -> (i32, i32, i32) {
    %c0_i32 = arith.constant 0 : i32
    %c0_i32_0 = arith.constant 0 : i32
    %c0_i32_1 = arith.constant 0 : i32
    return %arg0, %c0_i32, %c0_i32_0 : i32, i32, i32
  }
}

</mosaic_0001>

<llo_original>
// kernel: tpu_custom_call.1
$region0: #{tpu_custom_call.1}
  #allocation0 [shape = 'u32[]', space=smem, size = 0x4, offset = 0x4, fixed_abs, tag = 'smem constant byte address 0x4 - core index']
  #allocation1 [shape = 'u32[72,128]{1,0:T(1,128)}', space=vmem, size = 0x9000, scoped, tag = 'internal scratch']
  %s0 = inlined_call_operand.hbm [shape: f32[2,16,32], index: 0, kind: input, shape index: {}]
  %s1 = inlined_call_operand.hbm [shape: f32[32,192], index: 1, kind: input, shape index: {}]
  %s2 = inlined_call_operand.hbm [shape: f32[2,16,64], index: 2, kind: output, shape index: {}]
  %s3 = sld [smem:[#allocation0]]
  $region26: #{tpu_custom_call.1} parent=0
    _
  %s5 = ssub.s32 1, %s3
  %s6 = scalar_select 0, %s5, %s3
  $region1: #{tpu_custom_call.1} parent=0
    #allocation2 [shape = 'u8[16384]{0}', space=vmem, size = 0x4000, scoped, tag = 'input window, operand 0, single buffered']
    #allocation3 [shape = 's32[1]{0}', space=sflag, size = 0x4, scoped, tag = 'scoped memory for tpu_custom_call.1']
    #allocation4 [shape = 's32[1]{0}', space=sflag, size = 0x4, scoped, tag = 'scoped memory for tpu_custom_call.1']
    #allocation5 [shape = 'u8[32768]{0}', space=vmem, size = 0x8000, scoped, tag = 'input window, operand 1, single buffered']
    #allocation6 [shape = 's32[1]{0}', space=sflag, size = 0x4, scoped, tag = 'scoped memory for tpu_custom_call.1']
    #allocation7 [shape = 'u8[16384]{0}', space=vmem, size = 0x4000, scoped, tag = 'output window, operand 0, single buffered']
    %7 = vsyncpa [#allocation3], 0
    %8 = vsyncpa [#allocation6], 0
    %9 = vsyncpa [#allocation4], 0
    // Predicated region
    $region2: #{tpu_custom_call.1} parent=1 // pred_check
      _
    $region3: #{tpu_custom_call.1} parent=1 // pred_check_branch
      %11 = sbr.rel (0) target = $region5
    $region4: #{tpu_custom_call.1} parent=1 // pred_region
      %13 = vsyncadd [#allocation3], 0
      %s14 = sshll.u32 %s0, 4
      %s15 = int_to_ptr.hbm [resolvable:$true] %s14
      %s16 = sshll.u32 [#allocation2], 4
      %s17 = int_to_ptr.vmem [resolvable:$true] %s16
      %22 = dma.hbm_to_vmem [thread:$0]  %s15, 512, %s17, [#allocation3], 128, 128, 8
    $region5: #{tpu_custom_call.1} parent=1 // pred_fallthru
      _
    // Predicated region
    $region6: #{tpu_custom_call.1} parent=1 // pred_check
      _
    $region7: #{tpu_custom_call.1} parent=1 // pred_check_branch
      %24 = sbr.rel (0) target = $region9
    $region8: #{tpu_custom_call.1} parent=1 // pred_region
      %26 = vsyncadd [#allocation6], 0
      %s27 = sshll.u32 %s1, 4
      %s28 = int_to_ptr.hbm [resolvable:$true] %s27
      %s29 = sshll.u32 [#allocation5], 4
      %s30 = int_to_ptr.vmem [resolvable:$true] %s29
      %35 = dma.hbm_to_vmem [thread:$0]  %s28, 1024, %s30, [#allocation6], 256, 256, 16
    $region9: #{tpu_custom_call.1} parent=1 // pred_fallthru
      _
    // Predicated region
    $region10: #{tpu_custom_call.1} parent=1 // pred_check
      _
    $region11: #{tpu_custom_call.1} parent=1 // pred_check_branch
      %37 = sbr.rel (0) target = $region13
    $region12: #{tpu_custom_call.1} parent=1 // pred_region
      %39 = dma.done [#allocation3], 512
    $region13: #{tpu_custom_call.1} parent=1 // pred_fallthru
      _
    // Predicated region
    $region14: #{tpu_custom_call.1} parent=1 // pred_check
      _
    $region15: #{tpu_custom_call.1} parent=1 // pred_check_branch
      %41 = sbr.rel (0) target = $region17
    $region16: #{tpu_custom_call.1} parent=1 // pred_region
      %43 = dma.done [#allocation6], 1024
    $region17: #{tpu_custom_call.1} parent=1 // pred_fallthru
      _
    %v44 = vld [vmem:[#allocation2] sm:$0xff]
    %v45 = vld [vmem:[#allocation2 + $0x8] sm:$0xff]
    %v46 = vld [vmem:[#allocation2 + $0x10] sm:$0xff]
    %v47 = vld [vmem:[#allocation2 + $0x18] sm:$0xff]
    %v48 = vld [vmem:[#allocation5] sm:$0xff]
    %v49 = vld [vmem:[#allocation5 + $0x8] sm:$0xff]
    %v50 = vld [vmem:[#allocation5 + $0x10] sm:$0xff]
    %v51 = vld [vmem:[#allocation5 + $0x18] sm:$0xff]
    %v52 = vld [vmem:[#allocation5 + $0x20] sm:$0xff]
    %v53 = vld [vmem:[#allocation5 + $0x28] sm:$0xff]
    %v54 = vld [vmem:[#allocation5 + $0x30] sm:$0xff]
    %v55 = vld [vmem:[#allocation5 + $0x38] sm:$0xff]
    %vm56 = vcmask 261120
    %v58 = vsel %vm56, %v44, 0
    %v61 = vsel %vm56, %v45, 0
    %v64 = vsel %vm56, %v46, 0
    %v67 = vsel %vm56, %v47, 0
    %69 = vmatpush.msra.mxu0 0.0
    %70 = vmatpush.msra.mxu0 0.0
    %71 = vmatpush.msra.mxu0 0.0
    %72 = vmatpush.msra.mxu0 0.0
    %73 = vmatpush.msra.mxu0 0.0
    %74 = vmatpush.msra.mxu0 0.0
    %75 = vmatpush.msra.mxu0 0.0
    %76 = vmatpush.msra.mxu0 0.0
    %77 = vmatpush.msra.mxu0 0.0
    %78 = vmatpush.msra.mxu0 0.0
    %79 = vmatpush.msra.mxu0 0.0
    %80 = vmatpush.msra.mxu0 0.0
    %81 = vmatpush.msra.mxu0 %v54
    %82 = vmatpush.msra.mxu0 %v52
    %83 = vmatpush.msra.mxu0 %v50
    %84 = vmatpush.msra.mxu0 %v48
    %85 = vmatmul.f32.gmra.mxu0 %v58
    %v86 = vpop.f32.mrf.mxu0
    %v87 = vadd.f32 0.0, %v86
    %88 = vmatmul.f32.gmra.mxu0 %v61
    %v89 = vpop.f32.mrf.mxu0
    %v90 = vadd.f32 0.0, %v89
    %91 = vmatmul.f32.gmra.mxu0 %v64
    %v92 = vpop.f32.mrf.mxu0
    %v93 = vadd.f32 0.0, %v92
    %94 = vmatmul.f32.gmra.mxu0 %v67
    %v95 = vpop.f32.mrf.mxu0
    %v96 = vadd.f32 0.0, %v95
    %97 = vdwg.mxu0
    %98 = vmatpush.msra.mxu0 0.0
    %99 = vmatpush.msra.mxu0 0.0
    %100 = vmatpush.msra.mxu0 0.0
    %101 = vmatpush.msra.mxu0 0.0
    %102 = vmatpush.msra.mxu0 0.0
    %103 = vmatpush.msra.mxu0 0.0
    %104 = vmatpush.msra.mxu0 0.0
    %105 = vmatpush.msra.mxu0 0.0
    %106 = vmatpush.msra.mxu0 0.0
    %107 = vmatpush.msra.mxu0 0.0
    %108 = vmatpush.msra.mxu0 0.0
    %109 = vmatpush.msra.mxu0 0.0
    %110 = vmatpush.msra.mxu0 %v55
    %111 = vmatpush.msra.mxu0 %v53
    %112 = vmatpush.msra.mxu0 %v51
    %113 = vmatpush.msra.mxu0 %v49
    %114 = vmatmul.f32.gmra.mxu0 %v58
    %v115 = vpop.f32.mrf.mxu0
    %v116 = vadd.f32 0.0, %v115
    %117 = vmatmul.f32.gmra.mxu0 %v61
    %v118 = vpop.f32.mrf.mxu0
    %v119 = vadd.f32 0.0, %v118
    %120 = vmatmul.f32.gmra.mxu0 %v64
    %v121 = vpop.f32.mrf.mxu0
    %v122 = vadd.f32 0.0, %v121
    %123 = vmatmul.f32.gmra.mxu0 %v67
    %v124 = vpop.f32.mrf.mxu0
    %v125 = vadd.f32 0.0, %v124
    %126 = vdwg.mxu0
    %131 = vrot.lane.b32.xlu0 %v87, 120
    %v132 = vpop.permute.xlu0 %131
    %133 = vrot.lane.b32.xlu0 %v90, 120
    %v134 = vpop.permute.xlu0 %133
    %135 = vrot.lane.b32.xlu0 %v93, 120
    %v136 = vpop.permute.xlu0 %135
    %137 = vrot.lane.b32.xlu0 %v96, 120
    %v138 = vpop.permute.xlu0 %137
    %143 = vrot.lane.b32.xlu0 %v87, 112
    %v144 = vpop.permute.xlu0 %143
    %145 = vrot.lane.b32.xlu0 %v90, 112
    %v146 = vpop.permute.xlu0 %145
    %147 = vrot.lane.b32.xlu0 %v93, 112
    %v148 = vpop.permute.xlu0 %147
    %149 = vrot.lane.b32.xlu0 %v96, 112
    %v150 = vpop.permute.xlu0 %149
    %155 = vrot.lane.b32.xlu0 %v87, 104
    %v156 = vpop.permute.xlu0 %155
    %157 = vrot.lane.b32.xlu0 %v90, 104
    %v158 = vpop.permute.xlu0 %157
    %159 = vrot.lane.b32.xlu0 %v93, 104
    %v160 = vpop.permute.xlu0 %159
    %161 = vrot.lane.b32.xlu0 %v96, 104
    %v162 = vpop.permute.xlu0 %161
    %167 = vrot.lane.b32.xlu0 %v87, 96
    %v168 = vpop.permute.xlu0 %167
    %169 = vrot.lane.b32.xlu0 %v90, 96
    %v170 = vpop.permute.xlu0 %169
    %171 = vrot.lane.b32.xlu0 %v93, 96
    %v172 = vpop.permute.xlu0 %171
    %173 = vrot.lane.b32.xlu0 %v96, 96
    %v174 = vpop.permute.xlu0 %173
    %179 = vrot.lane.b32.xlu0 %v87, 88
    %v180 = vpop.permute.xlu0 %179
    %181 = vrot.lane.b32.xlu0 %v90, 88
    %v182 = vpop.permute.xlu0 %181
    %183 = vrot.lane.b32.xlu0 %v93, 88
    %v184 = vpop.permute.xlu0 %183
    %185 = vrot.lane.b32.xlu0 %v96, 88
    %v186 = vpop.permute.xlu0 %185
    %191 = vrot.lane.b32.xlu0 %v87, 80
    %v192 = vpop.permute.xlu0 %191
    %193 = vrot.lane.b32.xlu0 %v90, 80
    %v194 = vpop.permute.xlu0 %193
    %195 = vrot.lane.b32.xlu0 %v93, 80
    %v196 = vpop.permute.xlu0 %195
    %197 = vrot.lane.b32.xlu0 %v96, 80
    %v198 = vpop.permute.xlu0 %197
    %203 = vrot.lane.b32.xlu0 %v87, 72
    %v204 = vpop.permute.xlu0 %203
    %205 = vrot.lane.b32.xlu0 %v90, 72
    %v206 = vpop.permute.xlu0 %205
    %207 = vrot.lane.b32.xlu0 %v93, 72
    %v208 = vpop.permute.xlu0 %207
    %209 = vrot.lane.b32.xlu0 %v96, 72
    %v210 = vpop.permute.xlu0 %209
    %v215 = vrot.slane %v144, 4
    %vm216 = vcmask 1047556
    %v217 = vsel %vm216, %v215, %v87
    %v218 = vrot.slane %v87, 4
    %v219 = vsel %vm216, %v144, %v218
    %v221 = vunpack.c.l.s4 1983009808
    %v222 = vunpack.c.0.s8 %v221
    %v223 = vperm.slane %v217, %v222
    %v225 = vunpack.c.l.s4 1983009808
    %v226 = vunpack.c.0.s8 %v225
    %v227 = vperm.slane %v219, %v226
    %v228 = vrot.slane %v156, 4
    %v229 = vsel %vm216, %v228, %v132
    %v230 = vrot.slane %v132, 4
    %v231 = vsel %vm216, %v156, %v230
    %v233 = vunpack.c.l.s4 1983009808
    %v234 = vunpack.c.0.s8 %v233
    %v235 = vperm.slane %v229, %v234
    %v237 = vunpack.c.l.s4 1983009808
    %v238 = vunpack.c.0.s8 %v237
    %v239 = vperm.slane %v231, %v238
    %v240 = vrot.slane %v192, 4
    %v241 = vsel %vm216, %v240, %v168
    %v242 = vrot.slane %v168, 4
    %v243 = vsel %vm216, %v192, %v242
    %v245 = vunpack.c.l.s4 1983009808
    %v246 = vunpack.c.0.s8 %v245
    %v247 = vperm.slane %v241, %v246
    %v249 = vunpack.c.l.s4 1983009808
    %v250 = vunpack.c.0.s8 %v249
    %v251 = vperm.slane %v243, %v250
    %v252 = vrot.slane %v204, 4
    %v253 = vsel %vm216, %v252, %v180
    %v254 = vrot.slane %v180, 4
    %v255 = vsel %vm216, %v204, %v254
    %v257 = vunpack.c.l.s4 1983009808
    %v258 = vunpack.c.0.s8 %v257
    %v259 = vperm.slane %v253, %v258
    %v261 = vunpack.c.l.s4 1983009808
    %v262 = vunpack.c.0.s8 %v261
    %v263 = vperm.slane %v255, %v262
    %v264 = vrot.slane %v235, 4
    %v265 = vsel %vm216, %v264, %v223
    %v266 = vrot.slane %v223, 4
    %v267 = vsel %vm216, %v235, %v266
    %v269 = vunpack.c.l.s4 1934713408
    %v270 = vunpack.c.0.s8 %v269
    %v271 = vperm.slane %v265, %v270
    %v273 = vunpack.c.l.s4 1934713408
    %v274 = vunpack.c.0.s8 %v273
    %v275 = vperm.slane %v267, %v274
    %v276 = vrot.slane %v239, 4
    %v277 = vsel %vm216, %v276, %v227
    %v278 = vrot.slane %v227, 4
    %v279 = vsel %vm216, %v239, %v278
    %v281 = vunpack.c.l.s4 1934713408
    %v282 = vunpack.c.0.s8 %v281
    %v283 = vperm.slane %v277, %v282
    %v285 = vunpack.c.l.s4 1934713408
    %v286 = vunpack.c.0.s8 %v285
    %v287 = vperm.slane %v279, %v286
    %v288 = vrot.slane %v259, 4
    %v289 = vsel %vm216, %v288, %v247
    %v290 = vrot.slane %v247, 4
    %v291 = vsel %vm216, %v259, %v290
    %v293 = vunpack.c.l.s4 1934713408
    %v294 = vunpack.c.0.s8 %v293
    %v295 = vperm.slane %v289, %v294
    %v297 = vunpack.c.l.s4 1934713408
    %v298 = vunpack.c.0.s8 %v297
    %v299 = vperm.slane %v291, %v298
    %v300 = vrot.slane %v263, 4
    %v301 = vsel %vm216, %v300, %v251
    %v302 = vrot.slane %v251, 4
    %v303 = vsel %vm216, %v263, %v302
    %v305 = vunpack.c.l.s4 1934713408
    %v306 = vunpack.c.0.s8 %v305
    %v307 = vperm.slane %v301, %v306
    %v309 = vunpack.c.l.s4 1934713408
    %v310 = vunpack.c.0.s8 %v309
    %v311 = vperm.slane %v303, %v310
    %v312 = vrot.slane %v295, 4
    %v313 = vsel %vm216, %v312, %v271
    %v314 = vrot.slane %v271, 4
    %v315 = vsel %vm216, %v295, %v314
    %v316 = vrot.slane %v299, 4
    %v317 = vsel %vm216, %v316, %v275
    %v318 = vrot.slane %v275, 4
    %v319 = vsel %vm216, %v299, %v318
    %v320 = vrot.slane %v307, 4
    %v321 = vsel %vm216, %v320, %v283
    %v322 = vrot.slane %v283, 4
    %v323 = vsel %vm216, %v307, %v322
    %v324 = vrot.slane %v311, 4
    %v325 = vsel %vm216, %v324, %v287
    %v326 = vrot.slane %v287, 4
    %v327 = vsel %vm216, %v311, %v326
    %v328 = vrot.slane %v146, 4
    %v329 = vsel %vm216, %v328, %v90
    %v330 = vrot.slane %v90, 4
    %v331 = vsel %vm216, %v146, %v330
    %v333 = vunpack.c.l.s4 1983009808
    %v334 = vunpack.c.0.s8 %v333
    %v335 = vperm.slane %v329, %v334
    %v337 = vunpack.c.l.s4 1983009808
    %v338 = vunpack.c.0.s8 %v337
    %v339 = vperm.slane %v331, %v338
    %v340 = vrot.slane %v158, 4
    %v341 = vsel %vm216, %v340, %v134
    %v342 = vrot.slane %v134, 4
    %v343 = vsel %vm216, %v158, %v342
    %v345 = vunpack.c.l.s4 1983009808
    %v346 = vunpack.c.0.s8 %v345
    %v347 = vperm.slane %v341, %v346
    %v349 = vunpack.c.l.s4 1983009808
    %v350 = vunpack.c.0.s8 %v349
    %v351 = vperm.slane %v343, %v350
    %v352 = vrot.slane %v194, 4
    %v353 = vsel %vm216, %v352, %v170
    %v354 = vrot.slane %v170, 4
    %v355 = vsel %vm216, %v194, %v354
    %v357 = vunpack.c.l.s4 1983009808
    %v358 = vunpack.c.0.s8 %v357
    %v359 = vperm.slane %v353, %v358
    %v361 = vunpack.c.l.s4 1983009808
    %v362 = vunpack.c.0.s8 %v361
    %v363 = vperm.slane %v355, %v362
    %v364 = vrot.slane %v206, 4
    %v365 = vsel %vm216, %v364, %v182
    %v366 = vrot.slane %v182, 4
    %v367 = vsel %vm216, %v206, %v366
    %v369 = vunpack.c.l.s4 1983009808
    %v370 = vunpack.c.0.s8 %v369
    %v371 = vperm.slane %v365, %v370
    %v373 = vunpack.c.l.s4 1983009808
    %v374 = vunpack.c.0.s8 %v373
    %v375 = vperm.slane %v367, %v374
    %v376 = vrot.slane %v347, 4
    %v377 = vsel %vm216, %v376, %v335
    %v378 = vrot.slane %v335, 4
    %v379 = vsel %vm216, %v347, %v378
    %v381 = vunpack.c.l.s4 1934713408
    %v382 = vunpack.c.0.s8 %v381
    %v383 = vperm.slane %v377, %v382
    %v385 = vunpack.c.l.s4 1934713408
    %v386 = vunpack.c.0.s8 %v385
    %v387 = vperm.slane %v379, %v386
    %v388 = vrot.slane %v351, 4
    %v389 = vsel %vm216, %v388, %v339
    %v390 = vrot.slane %v339, 4
    %v391 = vsel %vm216, %v351, %v390
    %v393 = vunpack.c.l.s4 1934713408
    %v394 = vunpack.c.0.s8 %v393
    %v395 = vperm.slane %v389, %v394
    %v397 = vunpack.c.l.s4 1934713408
    %v398 = vunpack.c.0.s8 %v397
    %v399 = vperm.slane %v391, %v398
    %v400 = vrot.slane %v371, 4
    %v401 = vsel %vm216, %v400, %v359
    %v402 = vrot.slane %v359, 4
    %v403 = vsel %vm216, %v371, %v402
    %v405 = vunpack.c.l.s4 1934713408
    %v406 = vunpack.c.0.s8 %v405
    %v407 = vperm.slane %v401, %v406
    %v409 = vunpack.c.l.s4 1934713408
    %v410 = vunpack.c.0.s8 %v409
    %v411 = vperm.slane %v403, %v410
    %v412 = vrot.slane %v375, 4
    %v413 = vsel %vm216, %v412, %v363
    %v414 = vrot.slane %v363, 4
    %v415 = vsel %vm216, %v375, %v414
    %v417 = vunpack.c.l.s4 1934713408
    %v418 = vunpack.c.0.s8 %v417
    %v419 = vperm.slane %v413, %v418
    %v421 = vunpack.c.l.s4 1934713408
    %v422 = vunpack.c.0.s8 %v421
    %v423 = vperm.slane %v415, %v422
    %v424 = vrot.slane %v407, 4
    %v425 = vsel %vm216, %v424, %v383
    %v426 = vrot.slane %v383, 4
    %v427 = vsel %vm216, %v407, %v426
    %v428 = vrot.slane %v411, 4
    %v429 = vsel %vm216, %v428, %v387
    %v430 = vrot.slane %v387, 4
    %v431 = vsel %vm216, %v411, %v430
    %v432 = vrot.slane %v419, 4
    %v433 = vsel %vm216, %v432, %v395
    %v434 = vrot.slane %v395, 4
    %v435 = vsel %vm216, %v419, %v434
    %v436 = vrot.slane %v423, 4
    %v437 = vsel %vm216, %v436, %v399
    %v438 = vrot.slane %v399, 4
    %v439 = vsel %vm216, %v423, %v438
    %v440 = vrot.slane %v148, 4
    %v441 = vsel %vm216, %v440, %v93
    %v442 = vrot.slane %v93, 4
    %v443 = vsel %vm216, %v148, %v442
    %v445 = vunpack.c.l.s4 1983009808
    %v446 = vunpack.c.0.s8 %v445
    %v447 = vperm.slane %v441, %v446
    %v449 = vunpack.c.l.s4 1983009808
    %v450 = vunpack.c.0.s8 %v449
    %v451 = vperm.slane %v443, %v450
    %v452 = vrot.slane %v160, 4
    %v453 = vsel %vm216, %v452, %v136
    %v454 = vrot.slane %v136, 4
    %v455 = vsel %vm216, %v160, %v454
    %v457 = vunpack.c.l.s4 1983009808
    %v458 = vunpack.c.0.s8 %v457
    %v459 = vperm.slane %v453, %v458
    %v461 = vunpack.c.l.s4 1983009808
    %v462 = vunpack.c.0.s8 %v461
    %v463 = vperm.slane %v455, %v462
    %v464 = vrot.slane %v196, 4
    %v465 = vsel %vm216, %v464, %v172
    %v466 = vrot.slane %v172, 4
    %v467 = vsel %vm216, %v196, %v466
    %v469 = vunpack.c.l.s4 1983009808
    %v470 = vunpack.c.0.s8 %v469
    %v471 = vperm.slane %v465, %v470
    %v473 = vunpack.c.l.s4 1983009808
    %v474 = vunpack.c.0.s8 %v473
    %v475 = vperm.slane %v467, %v474
    %v476 = vrot.slane %v208, 4
    %v477 = vsel %vm216, %v476, %v184
    %v478 = vrot.slane %v184, 4
    %v479 = vsel %vm216, %v208, %v478
    %v481 = vunpack.c.l.s4 1983009808
    %v482 = vunpack.c.0.s8 %v481
    %v483 = vperm.slane %v477, %v482
    %v485 = vunpack.c.l.s4 1983009808
    %v486 = vunpack.c.0.s8 %v485
    %v487 = vperm.slane %v479, %v486
    %v488 = vrot.slane %v459, 4
    %v489 = vsel %vm216, %v488, %v447
    %v490 = vrot.slane %v447, 4
    %v491 = vsel %vm216, %v459, %v490
    %v493 = vunpack.c.l.s4 1934713408
    %v494 = vunpack.c.0.s8 %v493
    %v495 = vperm.slane %v489, %v494
    %v497 = vunpack.c.l.s4 1934713408
    %v498 = vunpack.c.0.s8 %v497
    %v499 = vperm.slane %v491, %v498
    %v500 = vrot.slane %v463, 4
    %v501 = vsel %vm216, %v500, %v451
    %v502 = vrot.slane %v451, 4
    %v503 = vsel %vm216, %v463, %v502
    %v505 = vunpack.c.l.s4 1934713408
    %v506 = vunpack.c.0.s8 %v505
    %v507 = vperm.slane %v501, %v506
    %v509 = vunpack.c.l.s4 1934713408
    %v510 = vunpack.c.0.s8 %v509
    %v511 = vperm.slane %v503, %v510
    %v512 = vrot.slane %v483, 4
    %v513 = vsel %vm216, %v512, %v471
    %v514 = vrot.slane %v471, 4
    %v515 = vsel %vm216, %v483, %v514
    %v517 = vunpack.c.l.s4 1934713408
    %v518 = vunpack.c.0.s8 %v517
    %v519 = vperm.slane %v513, %v518
    %v521 = vunpack.c.l.s4 1934713408
    %v522 = vunpack.c.0.s8 %v521
    %v523 = vperm.slane %v515, %v522
    %v524 = vrot.slane %v487, 4
    %v525 = vsel %vm216, %v524, %v475
    %v526 = vrot.slane %v475, 4
    %v527 = vsel %vm216, %v487, %v526
    %v529 = vunpack.c.l.s4 1934713408
    %v530 = vunpack.c.0.s8 %v529
    %v531 = vperm.slane %v525, %v530
    %v533 = vunpack.c.l.s4 1934713408
    %v534 = vunpack.c.0.s8 %v533
    %v535 = vperm.slane %v527, %v534
    %v536 = vrot.slane %v519, 4
    %v537 = vsel %vm216, %v536, %v495
    %v538 = vrot.slane %v495, 4
    %v539 = vsel %vm216, %v519, %v538
    %v540 = vrot.slane %v523, 4
    %v541 = vsel %vm216, %v540, %v499
    %v542 = vrot.slane %v499, 4
    %v543 = vsel %vm216, %v523, %v542
    %v544 = vrot.slane %v531, 4
    %v545 = vsel %vm216, %v544, %v507
    %v546 = vrot.slane %v507, 4
    %v547 = vsel %vm216, %v531, %v546
    %v548 = vrot.slane %v535, 4
    %v549 = vsel %vm216, %v548, %v511
    %v550 = vrot.slane %v511, 4
    %v551 = vsel %vm216, %v535, %v550
    %v552 = vrot.slane %v150, 4
    %v553 = vsel %vm216, %v552, %v96
    %v554 = vrot.slane %v96, 4
    %v555 = vsel %vm216, %v150, %v554
    %v557 = vunpack.c.l.s4 1983009808
    %v558 = vunpack.c.0.s8 %v557
    %v559 = vperm.slane %v553, %v558
    %v561 = vunpack.c.l.s4 1983009808
    %v562 = vunpack.c.0.s8 %v561
    %v563 = vperm.slane %v555, %v562
    %v564 = vrot.slane %v162, 4
    %v565 = vsel %vm216, %v564, %v138
    %v566 = vrot.slane %v138, 4
    %v567 = vsel %vm216, %v162, %v566
    %v569 = vunpack.c.l.s4 1983009808
    %v570 = vunpack.c.0.s8 %v569
    %v571 = vperm.slane %v565, %v570
    %v573 = vunpack.c.l.s4 1983009808
    %v574 = vunpack.c.0.s8 %v573
    %v575 = vperm.slane %v567, %v574
    %v576 = vrot.slane %v198, 4
    %v577 = vsel %vm216, %v576, %v174
    %v578 = vrot.slane %v174, 4
    %v579 = vsel %vm216, %v198, %v578
    %v581 = vunpack.c.l.s4 1983009808
    %v582 = vunpack.c.0.s8 %v581
    %v583 = vperm.slane %v577, %v582
    %v585 = vunpack.c.l.s4 1983009808
    %v586 = vunpack.c.0.s8 %v585
    %v587 = vperm.slane %v579, %v586
    %v588 = vrot.slane %v210, 4
    %v589 = vsel %vm216, %v588, %v186
    %v590 = vrot.slane %v186, 4
    %v591 = vsel %vm216, %v210, %v590
    %v593 = vunpack.c.l.s4 1983009808
    %v594 = vunpack.c.0.s8 %v593
    %v595 = vperm.slane %v589, %v594
    %v597 = vunpack.c.l.s4 1983009808
    %v598 = vunpack.c.0.s8 %v597
    %v599 = vperm.slane %v591, %v598
    %v600 = vrot.slane %v571, 4
    %v601 = vsel %vm216, %v600, %v559
    %v602 = vrot.slane %v559, 4
    %v603 = vsel %vm216, %v571, %v602
    %v605 = vunpack.c.l.s4 1934713408
    %v606 = vunpack.c.0.s8 %v605
    %v607 = vperm.slane %v601, %v606
    %v609 = vunpack.c.l.s4 1934713408
    %v610 = vunpack.c.0.s8 %v609
    %v611 = vperm.slane %v603, %v610
    %v612 = vrot.slane %v575, 4
    %v613 = vsel %vm216, %v612, %v563
    %v614 = vrot.slane %v563, 4
    %v615 = vsel %vm216, %v575, %v614
    %v617 = vunpack.c.l.s4 1934713408
    %v618 = vunpack.c.0.s8 %v617
    %v619 = vperm.slane %v613, %v618
    %v621 = vunpack.c.l.s4 1934713408
    %v622 = vunpack.c.0.s8 %v621
    %v623 = vperm.slane %v615, %v622
    %v624 = vrot.slane %v595, 4
    %v625 = vsel %vm216, %v624, %v583
    %v626 = vrot.slane %v583, 4
    %v627 = vsel %vm216, %v595, %v626
    %v629 = vunpack.c.l.s4 1934713408
    %v630 = vunpack.c.0.s8 %v629
    %v631 = vperm.slane %v625, %v630
    %v633 = vunpack.c.l.s4 1934713408
    %v634 = vunpack.c.0.s8 %v633
    %v635 = vperm.slane %v627, %v634
    %v636 = vrot.slane %v599, 4
    %v637 = vsel %vm216, %v636, %v587
    %v638 = vrot.slane %v587, 4
    %v639 = vsel %vm216, %v599, %v638
    %v641 = vunpack.c.l.s4 1934713408
    %v642 = vunpack.c.0.s8 %v641
    %v643 = vperm.slane %v637, %v642
    %v645 = vunpack.c.l.s4 1934713408
    %v646 = vunpack.c.0.s8 %v645
    %v647 = vperm.slane %v639, %v646
    %v648 = vrot.slane %v631, 4
    %v649 = vsel %vm216, %v648, %v607
    %v650 = vrot.slane %v607, 4
    %v651 = vsel %vm216, %v631, %v650
    %v652 = vrot.slane %v635, 4
    %v653 = vsel %vm216, %v652, %v611
    %v654 = vrot.slane %v611, 4
    %v655 = vsel %vm216, %v635, %v654
    %v656 = vrot.slane %v643, 4
    %v657 = vsel %vm216, %v656, %v619
    %v658 = vrot.slane %v619, 4
    %v659 = vsel %vm216, %v643, %v658
    %v660 = vrot.slane %v647, 4
    %v661 = vsel %vm216, %v660, %v623
    %v662 = vrot.slane %v623, 4
    %v663 = vsel %vm216, %v647, %v662
    %664 = vrot.lane.b32.xlu0 %v87, 64
    %v665 = vpop.permute.xlu0 %664
    %666 = vrot.lane.b32.xlu0 %v90, 64
    %v667 = vpop.permute.xlu0 %666
    %668 = vrot.lane.b32.xlu0 %v93, 64
    %v669 = vpop.permute.xlu0 %668
    %670 = vrot.lane.b32.xlu0 %v96, 64
    %v671 = vpop.permute.xlu0 %670
    %672 = vrot.lane.b32.xlu0 %v132, 64
    %v673 = vpop.permute.xlu0 %672
    %674 = vrot.lane.b32.xlu0 %v134, 64
    %v675 = vpop.permute.xlu0 %674
    %676 = vrot.lane.b32.xlu0 %v136, 64
    %v677 = vpop.permute.xlu0 %676
    %678 = vrot.lane.b32.xlu0 %v138, 64
    %v679 = vpop.permute.xlu0 %678
    %680 = vrot.lane.b32.xlu0 %v144, 64
    %v681 = vpop.permute.xlu0 %680
    %682 = vrot.lane.b32.xlu0 %v146, 64
    %v683 = vpop.permute.xlu0 %682
    %684 = vrot.lane.b32.xlu0 %v148, 64
    %v685 = vpop.permute.xlu0 %684
    %686 = vrot.lane.b32.xlu0 %v150, 64
    %v687 = vpop.permute.xlu0 %686
    %688 = vrot.lane.b32.xlu0 %v156, 64
    %v689 = vpop.permute.xlu0 %688
    %690 = vrot.lane.b32.xlu0 %v158, 64
    %v691 = vpop.permute.xlu0 %690
    %692 = vrot.lane.b32.xlu0 %v160, 64
    %v693 = vpop.permute.xlu0 %692
    %694 = vrot.lane.b32.xlu0 %v162, 64
    %v695 = vpop.permute.xlu0 %694
    %696 = vrot.lane.b32.xlu0 %v168, 64
    %v697 = vpop.permute.xlu0 %696
    %698 = vrot.lane.b32.xlu0 %v170, 64
    %v699 = vpop.permute.xlu0 %698
    %700 = vrot.lane.b32.xlu0 %v172, 64
    %v701 = vpop.permute.xlu0 %700
    %702 = vrot.lane.b32.xlu0 %v174, 64
    %v703 = vpop.permute.xlu0 %702
    %704 = vrot.lane.b32.xlu0 %v180, 64
    %v705 = vpop.permute.xlu0 %704
    %706 = vrot.lane.b32.xlu0 %v182, 64
    %v707 = vpop.permute.xlu0 %706
    %708 = vrot.lane.b32.xlu0 %v184, 64
    %v709 = vpop.permute.xlu0 %708
    %710 = vrot.lane.b32.xlu0 %v186, 64
    %v711 = vpop.permute.xlu0 %710
    %712 = vrot.lane.b32.xlu0 %v192, 64
    %v713 = vpop.permute.xlu0 %712
    %714 = vrot.lane.b32.xlu0 %v194, 64
    %v715 = vpop.permute.xlu0 %714
    %716 = vrot.lane.b32.xlu0 %v196, 64
    %v717 = vpop.permute.xlu0 %716
    %718 = vrot.lane.b32.xlu0 %v198, 64
    %v719 = vpop.permute.xlu0 %718
    %720 = vrot.lane.b32.xlu0 %v204, 64
    %v721 = vpop.permute.xlu0 %720
    %722 = vrot.lane.b32.xlu0 %v206, 64
    %v723 = vpop.permute.xlu0 %722
    %724 = vrot.lane.b32.xlu0 %v208, 64
    %v725 = vpop.permute.xlu0 %724
    %726 = vrot.lane.b32.xlu0 %v210, 64
    %v727 = vpop.permute.xlu0 %726
    %v760 = vrot.slane %v681, 4
    %v761 = vsel %vm216, %v760, %v665
    %v762 = vrot.slane %v665, 4
    %v763 = vsel %vm216, %v681, %v762
    %v765 = vunpack.c.l.s4 1983009808
    %v766 = vunpack.c.0.s8 %v765
    %v767 = vperm.slane %v761, %v766
    %v769 = vunpack.c.l.s4 1983009808
    %v770 = vunpack.c.0.s8 %v769
    %v771 = vperm.slane %v763, %v770
    %v772 = vrot.slane %v689, 4
    %v773 = vsel %vm216, %v772, %v673
    %v774 = vrot.slane %v673, 4
    %v775 = vsel %vm216, %v689, %v774
    %v777 = vunpack.c.l.s4 1983009808
    %v778 = vunpack.c.0.s8 %v777
    %v779 = vperm.slane %v773, %v778
    %v781 = vunpack.c.l.s4 1983009808
    %v782 = vunpack.c.0.s8 %v781
    %v783 = vperm.slane %v775, %v782
    %v784 = vrot.slane %v713, 4
    %v785 = vsel %vm216, %v784, %v697
    %v786 = vrot.slane %v697, 4
    %v787 = vsel %vm216, %v713, %v786
    %v789 = vunpack.c.l.s4 1983009808
    %v790 = vunpack.c.0.s8 %v789
    %v791 = vperm.slane %v785, %v790
    %v793 = vunpack.c.l.s4 1983009808
    %v794 = vunpack.c.0.s8 %v793
    %v795 = vperm.slane %v787, %v794
    %v796 = vrot.slane %v721, 4
    %v797 = vsel %vm216, %v796, %v705
    %v798 = vrot.slane %v705, 4
    %v799 = vsel %vm216, %v721, %v798
    %v801 = vunpack.c.l.s4 1983009808
    %v802 = vunpack.c.0.s8 %v801
    %v803 = vperm.slane %v797, %v802
    %v805 = vunpack.c.l.s4 1983009808
    %v806 = vunpack.c.0.s8 %v805
    %v807 = vperm.slane %v799, %v806
    %v808 = vrot.slane %v779, 4
    %v809 = vsel %vm216, %v808, %v767
    %v810 = vrot.slane %v767, 4
    %v811 = vsel %vm216, %v779, %v810
    %v813 = vunpack.c.l.s4 1934713408
    %v814 = vunpack.c.0.s8 %v813
    %v815 = vperm.slane %v809, %v814
    %v817 = vunpack.c.l.s4 1934713408
    %v818 = vunpack.c.0.s8 %v817
    %v819 = vperm.slane %v811, %v818
    %v820 = vrot.slane %v783, 4
    %v821 = vsel %vm216, %v820, %v771
    %v822 = vrot.slane %v771, 4
    %v823 = vsel %vm216, %v783, %v822
    %v825 = vunpack.c.l.s4 1934713408
    %v826 = vunpack.c.0.s8 %v825
    %v827 = vperm.slane %v821, %v826
    %v829 = vunpack.c.l.s4 1934713408
    %v830 = vunpack.c.0.s8 %v829
    %v831 = vperm.slane %v823, %v830
    %v832 = vrot.slane %v803, 4
    %v833 = vsel %vm216, %v832, %v791
    %v834 = vrot.slane %v791, 4
    %v835 = vsel %vm216, %v803, %v834
    %v837 = vunpack.c.l.s4 1934713408
    %v838 = vunpack.c.0.s8 %v837
    %v839 = vperm.slane %v833, %v838
    %v841 = vunpack.c.l.s4 1934713408
    %v842 = vunpack.c.0.s8 %v841
    %v843 = vperm.slane %v835, %v842
    %v844 = vrot.slane %v807, 4
    %v845 = vsel %vm216, %v844, %v795
    %v846 = vrot.slane %v795, 4
    %v847 = vsel %vm216, %v807, %v846
    %v849 = vunpack.c.l.s4 1934713408
    %v850 = vunpack.c.0.s8 %v849
    %v851 = vperm.slane %v845, %v850
    %v853 = vunpack.c.l.s4 1934713408
    %v854 = vunpack.c.0.s8 %v853
    %v855 = vperm.slane %v847, %v854
    %v856 = vrot.slane %v839, 4
    %v857 = vsel %vm216, %v856, %v815
    %v858 = vrot.slane %v815, 4
    %v859 = vsel %vm216, %v839, %v858
    %v860 = vrot.slane %v843, 4
    %v861 = vsel %vm216, %v860, %v819
    %v862 = vrot.slane %v819, 4
    %v863 = vsel %vm216, %v843, %v862
    %v864 = vrot.slane %v851, 4
    %v865 = vsel %vm216, %v864, %v827
    %v866 = vrot.slane %v827, 4
    %v867 = vsel %vm216, %v851, %v866
    %v868 = vrot.slane %v855, 4
    %v869 = vsel %vm216, %v868, %v831
    %v870 = vrot.slane %v831, 4
    %v871 = vsel %vm216, %v855, %v870
    %v872 = vrot.slane %v683, 4
    %v873 = vsel %vm216, %v872, %v667
    %v874 = vrot.slane %v667, 4
    %v875 = vsel %vm216, %v683, %v874
    %v877 = vunpack.c.l.s4 1983009808
    %v878 = vunpack.c.0.s8 %v877
    %v879 = vperm.slane %v873, %v878
    %v881 = vunpack.c.l.s4 1983009808
    %v882 = vunpack.c.0.s8 %v881
    %v883 = vperm.slane %v875, %v882
    %v884 = vrot.slane %v691, 4
    %v885 = vsel %vm216, %v884, %v675
    %v886 = vrot.slane %v675, 4
    %v887 = vsel %vm216, %v691, %v886
    %v889 = vunpack.c.l.s4 1983009808
    %v890 = vunpack.c.0.s8 %v889
    %v891 = vperm.slane %v885, %v890
    %v893 = vunpack.c.l.s4 1983009808
    %v894 = vunpack.c.0.s8 %v893
    %v895 = vperm.slane %v887, %v894
    %v896 = vrot.slane %v715, 4
    %v897 = vsel %vm216, %v896, %v699
    %v898 = vrot.slane %v699, 4
    %v899 = vsel %vm216, %v715, %v898
    %v901 = vunpack.c.l.s4 1983009808
    %v902 = vunpack.c.0.s8 %v901
    %v903 = vperm.slane %v897, %v902
    %v905 = vunpack.c.l.s4 1983009808
    %v906 = vunpack.c.0.s8 %v905
    %v907 = vperm.slane %v899, %v906
    %v908 = vrot.slane %v723, 4
    %v909 = vsel %vm216, %v908, %v707
    %v910 = vrot.slane %v707, 4
    %v911 = vsel %vm216, %v723, %v910
    %v913 = vunpack.c.l.s4 1983009808
    %v914 = vunpack.c.0.s8 %v913
    %v915 = vperm.slane %v909, %v914
    %v917 = vunpack.c.l.s4 1983009808
    %v918 = vunpack.c.0.s8 %v917
    %v919 = vperm.slane %v911, %v918
    %v920 = vrot.slane %v891, 4
    %v921 = vsel %vm216, %v920, %v879
    %v922 = vrot.slane %v879, 4
    %v923 = vsel %vm216, %v891, %v922
    %v925 = vunpack.c.l.s4 1934713408
    %v926 = vunpack.c.0.s8 %v925
    %v927 = vperm.slane %v921, %v926
    %v929 = vunpack.c.l.s4 1934713408
    %v930 = vunpack.c.0.s8 %v929
    %v931 = vperm.slane %v923, %v930
    %v932 = vrot.slane %v895, 4
    %v933 = vsel %vm216, %v932, %v883
    %v934 = vrot.slane %v883, 4
    %v935 = vsel %vm216, %v895, %v934
    %v937 = vunpack.c.l.s4 1934713408
    %v938 = vunpack.c.0.s8 %v937
    %v939 = vperm.slane %v933, %v938
    %v941 = vunpack.c.l.s4 1934713408
    %v942 = vunpack.c.0.s8 %v941
    %v943 = vperm.slane %v935, %v942
    %v944 = vrot.slane %v915, 4
    %v945 = vsel %vm216, %v944, %v903
    %v946 = vrot.slane %v903, 4
    %v947 = vsel %vm216, %v915, %v946
    %v949 = vunpack.c.l.s4 1934713408
    %v950 = vunpack.c.0.s8 %v949
    %v951 = vperm.slane %v945, %v950
    %v953 = vunpack.c.l.s4 1934713408
    %v954 = vunpack.c.0.s8 %v953
    %v955 = vperm.slane %v947, %v954
    %v956 = vrot.slane %v919, 4
    %v957 = vsel %vm216, %v956, %v907
    %v958 = vrot.slane %v907, 4
    %v959 = vsel %vm216, %v919, %v958
    %v961 = vunpack.c.l.s4 1934713408
    %v962 = vunpack.c.0.s8 %v961
    %v963 = vperm.slane %v957, %v962
    %v965 = vunpack.c.l.s4 1934713408
    %v966 = vunpack.c.0.s8 %v965
    %v967 = vperm.slane %v959, %v966
    %v968 = vrot.slane %v951, 4
    %v969 = vsel %vm216, %v968, %v927
    %v970 = vrot.slane %v927, 4
    %v971 = vsel %vm216, %v951, %v970
    %v972 = vrot.slane %v955, 4
    %v973 = vsel %vm216, %v972, %v931
    %v974 = vrot.slane %v931, 4
    %v975 = vsel %vm216, %v955, %v974
    %v976 = vrot.slane %v963, 4
    %v977 = vsel %vm216, %v976, %v939
    %v978 = vrot.slane %v939, 4
    %v979 = vsel %vm216, %v963, %v978
    %v980 = vrot.slane %v967, 4
    %v981 = vsel %vm216, %v980, %v943
    %v982 = vrot.slane %v943, 4
    %v983 = vsel %vm216, %v967, %v982
    %v984 = vrot.slane %v685, 4
    %v985 = vsel %vm216, %v984, %v669
    %v986 = vrot.slane %v669, 4
    %v987 = vsel %vm216, %v685, %v986
    %v989 = vunpack.c.l.s4 1983009808
    %v990 = vunpack.c.0.s8 %v989
    %v991 = vperm.slane %v985, %v990
    %v993 = vunpack.c.l.s4 1983009808
    %v994 = vunpack.c.0.s8 %v993
    %v995 = vperm.slane %v987, %v994
    %v996 = vrot.slane %v693, 4
    %v997 = vsel %vm216, %v996, %v677
    %v998 = vrot.slane %v677, 4
    %v999 = vsel %vm216, %v693, %v998
    %v1001 = vunpack.c.l.s4 1983009808
    %v1002 = vunpack.c.0.s8 %v1001
    %v1003 = vperm.slane %v997, %v1002
    %v1005 = vunpack.c.l.s4 1983009808
    %v1006 = vunpack.c.0.s8 %v1005
    %v1007 = vperm.slane %v999, %v1006
    %v1008 = vrot.slane %v717, 4
    %v1009 = vsel %vm216, %v1008, %v701
    %v1010 = vrot.slane %v701, 4
    %v1011 = vsel %vm216, %v717, %v1010
    %v1013 = vunpack.c.l.s4 1983009808
    %v1014 = vunpack.c.0.s8 %v1013
    %v1015 = vperm.slane %v1009, %v1014
    %v1017 = vunpack.c.l.s4 1983009808
    %v1018 = vunpack.c.0.s8 %v1017
    %v1019 = vperm.slane %v1011, %v1018
    %v1020 = vrot.slane %v725, 4
    %v1021 = vsel %vm216, %v1020, %v709
    %v1022 = vrot.slane %v709, 4
    %v1023 = vsel %vm216, %v725, %v1022
    %v1025 = vunpack.c.l.s4 1983009808
    %v1026 = vunpack.c.0.s8 %v1025
    %v1027 = vperm.slane %v1021, %v1026
    %v1029 = vunpack.c.l.s4 1983009808
    %v1030 = vunpack.c.0.s8 %v1029
    %v1031 = vperm.slane %v1023, %v1030
    %v1032 = vrot.slane %v1003, 4
    %v1033 = vsel %vm216, %v1032, %v991
    %v1034 = vrot.slane %v991, 4
    %v1035 = vsel %vm216, %v1003, %v1034
    %v1037 = vunpack.c.l.s4 1934713408
    %v1038 = vunpack.c.0.s8 %v1037
    %v1039 = vperm.slane %v1033, %v1038
    %v1041 = vunpack.c.l.s4 1934713408
    %v1042 = vunpack.c.0.s8 %v1041
    %v1043 = vperm.slane %v1035, %v1042
    %v1044 = vrot.slane %v1007, 4
    %v1045 = vsel %vm216, %v1044, %v995
    %v1046 = vrot.slane %v995, 4
    %v1047 = vsel %vm216, %v1007, %v1046
    %v1049 = vunpack.c.l.s4 1934713408
    %v1050 = vunpack.c.0.s8 %v1049
    %v1051 = vperm.slane %v1045, %v1050
    %v1053 = vunpack.c.l.s4 1934713408
    %v1054 = vunpack.c.0.s8 %v1053
    %v1055 = vperm.slane %v1047, %v1054
    %v1056 = vrot.slane %v1027, 4
    %v1057 = vsel %vm216, %v1056, %v1015
    %v1058 = vrot.slane %v1015, 4
    %v1059 = vsel %vm216, %v1027, %v1058
    %v1061 = vunpack.c.l.s4 1934713408
    %v1062 = vunpack.c.0.s8 %v1061
    %v1063 = vperm.slane %v1057, %v1062
    %v1065 = vunpack.c.l.s4 1934713408
    %v1066 = vunpack.c.0.s8 %v1065
    %v1067 = vperm.slane %v1059, %v1066
    %v1068 = vrot.slane %v1031, 4
    %v1069 = vsel %vm216, %v1068, %v1019
    %v1070 = vrot.slane %v1019, 4
    %v1071 = vsel %vm216, %v1031, %v1070
    %v1073 = vunpack.c.l.s4 1934713408
    %v1074 = vunpack.c.0.s8 %v1073
    %v1075 = vperm.slane %v1069, %v1074
    %v1077 = vunpack.c.l.s4 1934713408
    %v1078 = vunpack.c.0.s8 %v1077
    %v1079 = vperm.slane %v1071, %v1078
    %v1080 = vrot.slane %v1063, 4
    %v1081 = vsel %vm216, %v1080, %v1039
    %v1082 = vrot.slane %v1039, 4
    %v1083 = vsel %vm216, %v1063, %v1082
    %v1084 = vrot.slane %v1067, 4
    %v1085 = vsel %vm216, %v1084, %v1043
    %v1086 = vrot.slane %v1043, 4
    %v1087 = vsel %vm216, %v1067, %v1086
    %v1088 = vrot.slane %v1075, 4
    %v1089 = vsel %vm216, %v1088, %v1051
    %v1090 = vrot.slane %v1051, 4
    %v1091 = vsel %vm216, %v1075, %v1090
    %v1092 = vrot.slane %v1079, 4
    %v1093 = vsel %vm216, %v1092, %v1055
    %v1094 = vrot.slane %v1055, 4
    %v1095 = vsel %vm216, %v1079, %v1094
    %v1096 = vrot.slane %v687, 4
    %v1097 = vsel %vm216, %v1096, %v671
    %v1098 = vrot.slane %v671, 4
    %v1099 = vsel %vm216, %v687, %v1098
    %v1101 = vunpack.c.l.s4 1983009808
    %v1102 = vunpack.c.0.s8 %v1101
    %v1103 = vperm.slane %v1097, %v1102
    %v1105 = vunpack.c.l.s4 1983009808
    %v1106 = vunpack.c.0.s8 %v1105
    %v1107 = vperm.slane %v1099, %v1106
    %v1108 = vrot.slane %v695, 4
    %v1109 = vsel %vm216, %v1108, %v679
    %v1110 = vrot.slane %v679, 4
    %v1111 = vsel %vm216, %v695, %v1110
    %v1113 = vunpack.c.l.s4 1983009808
    %v1114 = vunpack.c.0.s8 %v1113
    %v1115 = vperm.slane %v1109, %v1114
    %v1117 = vunpack.c.l.s4 1983009808
    %v1118 = vunpack.c.0.s8 %v1117
    %v1119 = vperm.slane %v1111, %v1118
    %v1120 = vrot.slane %v719, 4
    %v1121 = vsel %vm216, %v1120, %v703
    %v1122 = vrot.slane %v703, 4
    %v1123 = vsel %vm216, %v719, %v1122
    %v1125 = vunpack.c.l.s4 1983009808
    %v1126 = vunpack.c.0.s8 %v1125
    %v1127 = vperm.slane %v1121, %v1126
    %v1129 = vunpack.c.l.s4 1983009808
    %v1130 = vunpack.c.0.s8 %v1129
    %v1131 = vperm.slane %v1123, %v1130
    %v1132 = vrot.slane %v727, 4
    %v1133 = vsel %vm216, %v1132, %v711
    %v1134 = vrot.slane %v711, 4
    %v1135 = vsel %vm216, %v727, %v1134
    %v1137 = vunpack.c.l.s4 1983009808
    %v1138 = vunpack.c.0.s8 %v1137
    %v1139 = vperm.slane %v1133, %v1138
    %v1141 = vunpack.c.l.s4 1983009808
    %v1142 = vunpack.c.0.s8 %v1141
    %v1143 = vperm.slane %v1135, %v1142
    %v1144 = vrot.slane %v1115, 4
    %v1145 = vsel %vm216, %v1144, %v1103
    %v1146 = vrot.slane %v1103, 4
    %v1147 = vsel %vm216, %v1115, %v1146
    %v1149 = vunpack.c.l.s4 1934713408
    %v1150 = vunpack.c.0.s8 %v1149
    %v1151 = vperm.slane %v1145, %v1150
    %v1153 = vunpack.c.l.s4 1934713408
    %v1154 = vunpack.c.0.s8 %v1153
    %v1155 = vperm.slane %v1147, %v1154
    %v1156 = vrot.slane %v1119, 4
    %v1157 = vsel %vm216, %v1156, %v1107
    %v1158 = vrot.slane %v1107, 4
    %v1159 = vsel %vm216, %v1119, %v1158
    %v1161 = vunpack.c.l.s4 1934713408
    %v1162 = vunpack.c.0.s8 %v1161
    %v1163 = vperm.slane %v1157, %v1162
    %v1165 = vunpack.c.l.s4 1934713408
    %v1166 = vunpack.c.0.s8 %v1165
    %v1167 = vperm.slane %v1159, %v1166
    %v1168 = vrot.slane %v1139, 4
    %v1169 = vsel %vm216, %v1168, %v1127
    %v1170 = vrot.slane %v1127, 4
    %v1171 = vsel %vm216, %v1139, %v1170
    %v1173 = vunpack.c.l.s4 1934713408
    %v1174 = vunpack.c.0.s8 %v1173
    %v1175 = vperm.slane %v1169, %v1174
    %v1177 = vunpack.c.l.s4 1934713408
    %v1178 = vunpack.c.0.s8 %v1177
    %v1179 = vperm.slane %v1171, %v1178
    %v1180 = vrot.slane %v1143, 4
    %v1181 = vsel %vm216, %v1180, %v1131
    %v1182 = vrot.slane %v1131, 4
    %v1183 = vsel %vm216, %v1143, %v1182
    %v1185 = vunpack.c.l.s4 1934713408
    %v1186 = vunpack.c.0.s8 %v1185
    %v1187 = vperm.slane %v1181, %v1186
    %v1189 = vunpack.c.l.s4 1934713408
    %v1190 = vunpack.c.0.s8 %v1189
    %v1191 = vperm.slane %v1183, %v1190
    %v1192 = vrot.slane %v1175, 4
    %v1193 = vsel %vm216, %v1192, %v1151
    %v1194 = vrot.slane %v1151, 4
    %v1195 = vsel %vm216, %v1175, %v1194
    %v1196 = vrot.slane %v1179, 4
    %v1197 = vsel %vm216, %v1196, %v1155
    %v1198 = vrot.slane %v1155, 4
    %v1199 = vsel %vm216, %v1179, %v1198
    %v1200 = vrot.slane %v1187, 4
    %v1201 = vsel %vm216, %v1200, %v1163
    %v1202 = vrot.slane %v1163, 4
    %v1203 = vsel %vm216, %v1187, %v1202
    %v1204 = vrot.slane %v1191, 4
    %v1205 = vsel %vm216, %v1204, %v1167
    %v1206 = vrot.slane %v1167, 4
    %v1207 = vsel %vm216, %v1191, %v1206
    %1212 = vrot.lane.b32.xlu0 %v116, 120
    %v1213 = vpop.permute.xlu0 %1212
    %1214 = vrot.lane.b32.xlu0 %v119, 120
    %v1215 = vpop.permute.xlu0 %1214
    %1216 = vrot.lane.b32.xlu0 %v122, 120
    %v1217 = vpop.permute.xlu0 %1216
    %1218 = vrot.lane.b32.xlu0 %v125, 120
    %v1219 = vpop.permute.xlu0 %1218
    %1224 = vrot.lane.b32.xlu0 %v116, 112
    %v1225 = vpop.permute.xlu0 %1224
    %1226 = vrot.lane.b32.xlu0 %v119, 112
    %v1227 = vpop.permute.xlu0 %1226
    %1228 = vrot.lane.b32.xlu0 %v122, 112
    %v1229 = vpop.permute.xlu0 %1228
    %1230 = vrot.lane.b32.xlu0 %v125, 112
    %v1231 = vpop.permute.xlu0 %1230
    %1236 = vrot.lane.b32.xlu0 %v116, 104
    %v1237 = vpop.permute.xlu0 %1236
    %1238 = vrot.lane.b32.xlu0 %v119, 104
    %v1239 = vpop.permute.xlu0 %1238
    %1240 = vrot.lane.b32.xlu0 %v122, 104
    %v1241 = vpop.permute.xlu0 %1240
    %1242 = vrot.lane.b32.xlu0 %v125, 104
    %v1243 = vpop.permute.xlu0 %1242
    %1248 = vrot.lane.b32.xlu0 %v116, 96
    %v1249 = vpop.permute.xlu0 %1248
    %1250 = vrot.lane.b32.xlu0 %v119, 96
    %v1251 = vpop.permute.xlu0 %1250
    %1252 = vrot.lane.b32.xlu0 %v122, 96
    %v1253 = vpop.permute.xlu0 %1252
    %1254 = vrot.lane.b32.xlu0 %v125, 96
    %v1255 = vpop.permute.xlu0 %1254
    %1260 = vrot.lane.b32.xlu0 %v116, 88
    %v1261 = vpop.permute.xlu0 %1260
    %1262 = vrot.lane.b32.xlu0 %v119, 88
    %v1263 = vpop.permute.xlu0 %1262
    %1264 = vrot.lane.b32.xlu0 %v122, 88
    %v1265 = vpop.permute.xlu0 %1264
    %1266 = vrot.lane.b32.xlu0 %v125, 88
    %v1267 = vpop.permute.xlu0 %1266
    %1272 = vrot.lane.b32.xlu0 %v116, 80
    %v1273 = vpop.permute.xlu0 %1272
    %1274 = vrot.lane.b32.xlu0 %v119, 80
    %v1275 = vpop.permute.xlu0 %1274
    %1276 = vrot.lane.b32.xlu0 %v122, 80
    %v1277 = vpop.permute.xlu0 %1276
    %1278 = vrot.lane.b32.xlu0 %v125, 80
    %v1279 = vpop.permute.xlu0 %1278
    %1284 = vrot.lane.b32.xlu0 %v116, 72
    %v1285 = vpop.permute.xlu0 %1284
    %1286 = vrot.lane.b32.xlu0 %v119, 72
    %v1287 = vpop.permute.xlu0 %1286
    %1288 = vrot.lane.b32.xlu0 %v122, 72
    %v1289 = vpop.permute.xlu0 %1288
    %1290 = vrot.lane.b32.xlu0 %v125, 72
    %v1291 = vpop.permute.xlu0 %1290
    %v1296 = vrot.slane %v1225, 4
    %v1297 = vsel %vm216, %v1296, %v116
    %v1298 = vrot.slane %v116, 4
    %v1299 = vsel %vm216, %v1225, %v1298
    %v1301 = vunpack.c.l.s4 1983009808
    %v1302 = vunpack.c.0.s8 %v1301
    %v1303 = vperm.slane %v1297, %v1302
    %v1305 = vunpack.c.l.s4 1983009808
    %v1306 = vunpack.c.0.s8 %v1305
    %v1307 = vperm.slane %v1299, %v1306
    %v1308 = vrot.slane %v1237, 4
    %v1309 = vsel %vm216, %v1308, %v1213
    %v1310 = vrot.slane %v1213, 4
    %v1311 = vsel %vm216, %v1237, %v1310
    %v1313 = vunpack.c.l.s4 1983009808
    %v1314 = vunpack.c.0.s8 %v1313
    %v1315 = vperm.slane %v1309, %v1314
    %v1317 = vunpack.c.l.s4 1983009808
    %v1318 = vunpack.c.0.s8 %v1317
    %v1319 = vperm.slane %v1311, %v1318
    %v1320 = vrot.slane %v1273, 4
    %v1321 = vsel %vm216, %v1320, %v1249
    %v1322 = vrot.slane %v1249, 4
    %v1323 = vsel %vm216, %v1273, %v1322
    %v1325 = vunpack.c.l.s4 1983009808
    %v1326 = vunpack.c.0.s8 %v1325
    %v1327 = vperm.slane %v1321, %v1326
    %v1329 = vunpack.c.l.s4 1983009808
    %v1330 = vunpack.c.0.s8 %v1329
    %v1331 = vperm.slane %v1323, %v1330
    %v1332 = vrot.slane %v1285, 4
    %v1333 = vsel %vm216, %v1332, %v1261
    %v1334 = vrot.slane %v1261, 4
    %v1335 = vsel %vm216, %v1285, %v1334
    %v1337 = vunpack.c.l.s4 1983009808
    %v1338 = vunpack.c.0.s8 %v1337
    %v1339 = vperm.slane %v1333, %v1338
    %v1341 = vunpack.c.l.s4 1983009808
    %v1342 = vunpack.c.0.s8 %v1341
    %v1343 = vperm.slane %v1335, %v1342
    %v1344 = vrot.slane %v1315, 4
    %v1345 = vsel %vm216, %v1344, %v1303
    %v1346 = vrot.slane %v1303, 4
    %v1347 = vsel %vm216, %v1315, %v1346
    %v1349 = vunpack.c.l.s4 1934713408
    %v1350 = vunpack.c.0.s8 %v1349
    %v1351 = vperm.slane %v1345, %v1350
    %v1353 = vunpack.c.l.s4 1934713408
    %v1354 = vunpack.c.0.s8 %v1353
    %v1355 = vperm.slane %v1347, %v1354
    %v1356 = vrot.slane %v1319, 4
    %v1357 = vsel %vm216, %v1356, %v1307
    %v1358 = vrot.slane %v1307, 4
    %v1359 = vsel %vm216, %v1319, %v1358
    %v1361 = vunpack.c.l.s4 1934713408
    %v1362 = vunpack.c.0.s8 %v1361
    %v1363 = vperm.slane %v1357, %v1362
    %v1365 = vunpack.c.l.s4 1934713408
    %v1366 = vunpack.c.0.s8 %v1365
    %v1367 = vperm.slane %v1359, %v1366
    %v1368 = vrot.slane %v1339, 4
    %v1369 = vsel %vm216, %v1368, %v1327
    %v1370 = vrot.slane %v1327, 4
    %v1371 = vsel %vm216, %v1339, %v1370
    %v1373 = vunpack.c.l.s4 1934713408
    %v1374 = vunpack.c.0.s8 %v1373
    %v1375 = vperm.slane %v1369, %v1374
    %v1377 = vunpack.c.l.s4 1934713408
    %v1378 = vunpack.c.0.s8 %v1377
    %v1379 = vperm.slane %v1371, %v1378
    %v1380 = vrot.slane %v1343, 4
    %v1381 = vsel %vm216, %v1380, %v1331
    %v1382 = vrot.slane %v1331, 4
    %v1383 = vsel %vm216, %v1343, %v1382
    %v1385 = vunpack.c.l.s4 1934713408
    %v1386 = vunpack.c.0.s8 %v1385
    %v1387 = vperm.slane %v1381, %v1386
    %v1389 = vunpack.c.l.s4 1934713408
    %v1390 = vunpack.c.0.s8 %v1389
    %v1391 = vperm.slane %v1383, %v1390
    %v1392 = vrot.slane %v1375, 4
    %v1393 = vsel %vm216, %v1392, %v1351
    %v1394 = vrot.slane %v1351, 4
    %v1395 = vsel %vm216, %v1375, %v1394
    %v1396 = vrot.slane %v1379, 4
    %v1397 = vsel %vm216, %v1396, %v1355
    %v1398 = vrot.slane %v1355, 4
    %v1399 = vsel %vm216, %v1379, %v1398
    %v1400 = vrot.slane %v1387, 4
    %v1401 = vsel %vm216, %v1400, %v1363
    %v1402 = vrot.slane %v1363, 4
    %v1403 = vsel %vm216, %v1387, %v1402
    %v1404 = vrot.slane %v1391, 4
    %v1405 = vsel %vm216, %v1404, %v1367
    %v1406 = vrot.slane %v1367, 4
    %v1407 = vsel %vm216, %v1391, %v1406
    %v1408 = vrot.slane %v1227, 4
    %v1409 = vsel %vm216, %v1408, %v119
    %v1410 = vrot.slane %v119, 4
    %v1411 = vsel %vm216, %v1227, %v1410
    %v1413 = vunpack.c.l.s4 1983009808
    %v1414 = vunpack.c.0.s8 %v1413
    %v1415 = vperm.slane %v1409, %v1414
    %v1417 = vunpack.c.l.s4 1983009808
    %v1418 = vunpack.c.0.s8 %v1417
    %v1419 = vperm.slane %v1411, %v1418
    %v1420 = vrot.slane %v1239, 4
    %v1421 = vsel %vm216, %v1420, %v1215
    %v1422 = vrot.slane %v1215, 4
    %v1423 = vsel %vm216, %v1239, %v1422
    %v1425 = vunpack.c.l.s4 1983009808
    %v1426 = vunpack.c.0.s8 %v1425
    %v1427 = vperm.slane %v1421, %v1426
    %v1429 = vunpack.c.l.s4 1983009808
    %v1430 = vunpack.c.0.s8 %v1429
    %v1431 = vperm.slane %v1423, %v1430
    %v1432 = vrot.slane %v1275, 4
    %v1433 = vsel %vm216, %v1432, %v1251
    %v1434 = vrot.slane %v1251, 4
    %v1435 = vsel %vm216, %v1275, %v1434
    %v1437 = vunpack.c.l.s4 1983009808
    %v1438 = vunpack.c.0.s8 %v1437
    %v1439 = vperm.slane %v1433, %v1438
    %v1441 = vunpack.c.l.s4 1983009808
    %v1442 = vunpack.c.0.s8 %v1441
    %v1443 = vperm.slane %v1435, %v1442
    %v1444 = vrot.slane %v1287, 4
    %v1445 = vsel %vm216, %v1444, %v1263
    %v1446 = vrot.slane %v1263, 4
    %v1447 = vsel %vm216, %v1287, %v1446
    %v1449 = vunpack.c.l.s4 1983009808
    %v1450 = vunpack.c.0.s8 %v1449
    %v1451 = vperm.slane %v1445, %v1450
    %v1453 = vunpack.c.l.s4 1983009808
    %v1454 = vunpack.c.0.s8 %v1453
    %v1455 = vperm.slane %v1447, %v1454
    %v1456 = vrot.slane %v1427, 4
    %v1457 = vsel %vm216, %v1456, %v1415
    %v1458 = vrot.slane %v1415, 4
    %v1459 = vsel %vm216, %v1427, %v1458
    %v1461 = vunpack.c.l.s4 1934713408
    %v1462 = vunpack.c.0.s8 %v1461
    %v1463 = vperm.slane %v1457, %v1462
    %v1465 = vunpack.c.l.s4 1934713408
    %v1466 = vunpack.c.0.s8 %v1465
    %v1467 = vperm.slane %v1459, %v1466
    %v1468 = vrot.slane %v1431, 4
    %v1469 = vsel %vm216, %v1468, %v1419
    %v1470 = vrot.slane %v1419, 4
    %v1471 = vsel %vm216, %v1431, %v1470
    %v1473 = vunpack.c.l.s4 1934713408
    %v1474 = vunpack.c.0.s8 %v1473
    %v1475 = vperm.slane %v1469, %v1474
    %v1477 = vunpack.c.l.s4 1934713408
    %v1478 = vunpack.c.0.s8 %v1477
    %v1479 = vperm.slane %v1471, %v1478
    %v1480 = vrot.slane %v1451, 4
    %v1481 = vsel %vm216, %v1480, %v1439
    %v1482 = vrot.slane %v1439, 4
    %v1483 = vsel %vm216, %v1451, %v1482
    %v1485 = vunpack.c.l.s4 1934713408
    %v1486 = vunpack.c.0.s8 %v1485
    %v1487 = vperm.slane %v1481, %v1486
    %v1489 = vunpack.c.l.s4 1934713408
    %v1490 = vunpack.c.0.s8 %v1489
    %v1491 = vperm.slane %v1483, %v1490
    %v1492 = vrot.slane %v1455, 4
    %v1493 = vsel %vm216, %v1492, %v1443
    %v1494 = vrot.slane %v1443, 4
    %v1495 = vsel %vm216, %v1455, %v1494
    %v1497 = vunpack.c.l.s4 1934713408
    %v1498 = vunpack.c.0.s8 %v1497
    %v1499 = vperm.slane %v1493, %v1498
    %v1501 = vunpack.c.l.s4 1934713408
    %v1502 = vunpack.c.0.s8 %v1501
    %v1503 = vperm.slane %v1495, %v1502
    %v1504 = vrot.slane %v1487, 4
    %v1505 = vsel %vm216, %v1504, %v1463
    %v1506 = vrot.slane %v1463, 4
    %v1507 = vsel %vm216, %v1487, %v1506
    %v1508 = vrot.slane %v1491, 4
    %v1509 = vsel %vm216, %v1508, %v1467
    %v1510 = vrot.slane %v1467, 4
    %v1511 = vsel %vm216, %v1491, %v1510
    %v1512 = vrot.slane %v1499, 4
    %v1513 = vsel %vm216, %v1512, %v1475
    %v1514 = vrot.slane %v1475, 4
    %v1515 = vsel %vm216, %v1499, %v1514
    %v1516 = vrot.slane %v1503, 4
    %v1517 = vsel %vm216, %v1516, %v1479
    %v1518 = vrot.slane %v1479, 4
    %v1519 = vsel %vm216, %v1503, %v1518
    %v1520 = vrot.slane %v1229, 4
    %v1521 = vsel %vm216, %v1520, %v122
    %v1522 = vrot.slane %v122, 4
    %v1523 = vsel %vm216, %v1229, %v1522
    %v1525 = vunpack.c.l.s4 1983009808
    %v1526 = vunpack.c.0.s8 %v1525
    %v1527 = vperm.slane %v1521, %v1526
    %v1529 = vunpack.c.l.s4 1983009808
    %v1530 = vunpack.c.0.s8 %v1529
    %v1531 = vperm.slane %v1523, %v1530
    %v1532 = vrot.slane %v1241, 4
    %v1533 = vsel %vm216, %v1532, %v1217
    %v1534 = vrot.slane %v1217, 4
    %v1535 = vsel %vm216, %v1241, %v1534
    %v1537 = vunpack.c.l.s4 1983009808
    %v1538 = vunpack.c.0.s8 %v1537
    %v1539 = vperm.slane %v1533, %v1538
    %v1541 = vunpack.c.l.s4 1983009808
    %v1542 = vunpack.c.0.s8 %v1541
    %v1543 = vperm.slane %v1535, %v1542
    %v1544 = vrot.slane %v1277, 4
    %v1545 = vsel %vm216, %v1544, %v1253
    %v1546 = vrot.slane %v1253, 4
    %v1547 = vsel %vm216, %v1277, %v1546
    %v1549 = vunpack.c.l.s4 1983009808
    %v1550 = vunpack.c.0.s8 %v1549
    %v1551 = vperm.slane %v1545, %v1550
    %v1553 = vunpack.c.l.s4 1983009808
    %v1554 = vunpack.c.0.s8 %v1553
    %v1555 = vperm.slane %v1547, %v1554
    %v1556 = vrot.slane %v1289, 4
    %v1557 = vsel %vm216, %v1556, %v1265
    %v1558 = vrot.slane %v1265, 4
    %v1559 = vsel %vm216, %v1289, %v1558
    %v1561 = vunpack.c.l.s4 1983009808
    %v1562 = vunpack.c.0.s8 %v1561
    %v1563 = vperm.slane %v1557, %v1562
    %v1565 = vunpack.c.l.s4 1983009808
    %v1566 = vunpack.c.0.s8 %v1565
    %v1567 = vperm.slane %v1559, %v1566
    %v1568 = vrot.slane %v1539, 4
    %v1569 = vsel %vm216, %v1568, %v1527
    %v1570 = vrot.slane %v1527, 4
    %v1571 = vsel %vm216, %v1539, %v1570
    %v1573 = vunpack.c.l.s4 1934713408
    %v1574 = vunpack.c.0.s8 %v1573
    %v1575 = vperm.slane %v1569, %v1574
    %v1577 = vunpack.c.l.s4 1934713408
    %v1578 = vunpack.c.0.s8 %v1577
    %v1579 = vperm.slane %v1571, %v1578
    %v1580 = vrot.slane %v1543, 4
    %v1581 = vsel %vm216, %v1580, %v1531
    %v1582 = vrot.slane %v1531, 4
    %v1583 = vsel %vm216, %v1543, %v1582
    %v1585 = vunpack.c.l.s4 1934713408
    %v1586 = vunpack.c.0.s8 %v1585
    %v1587 = vperm.slane %v1581, %v1586
    %v1589 = vunpack.c.l.s4 1934713408
    %v1590 = vunpack.c.0.s8 %v1589
    %v1591 = vperm.slane %v1583, %v1590
    %v1592 = vrot.slane %v1563, 4
    %v1593 = vsel %vm216, %v1592, %v1551
    %v1594 = vrot.slane %v1551, 4
    %v1595 = vsel %vm216, %v1563, %v1594
    %v1597 = vunpack.c.l.s4 1934713408
    %v1598 = vunpack.c.0.s8 %v1597
    %v1599 = vperm.slane %v1593, %v1598
    %v1601 = vunpack.c.l.s4 1934713408
    %v1602 = vunpack.c.0.s8 %v1601
    %v1603 = vperm.slane %v1595, %v1602
    %v1604 = vrot.slane %v1567, 4
    %v1605 = vsel %vm216, %v1604, %v1555
    %v1606 = vrot.slane %v1555, 4
    %v1607 = vsel %vm216, %v1567, %v1606
    %v1609 = vunpack.c.l.s4 1934713408
    %v1610 = vunpack.c.0.s8 %v1609
    %v1611 = vperm.slane %v1605, %v1610
    %v1613 = vunpack.c.l.s4 1934713408
    %v1614 = vunpack.c.0.s8 %v1613
    %v1615 = vperm.slane %v1607, %v1614
    %v1616 = vrot.slane %v1599, 4
    %v1617 = vsel %vm216, %v1616, %v1575
    %v1618 = vrot.slane %v1575, 4
    %v1619 = vsel %vm216, %v1599, %v1618
    %v1620 = vrot.slane %v1603, 4
    %v1621 = vsel %vm216, %v1620, %v1579
    %v1622 = vrot.slane %v1579, 4
    %v1623 = vsel %vm216, %v1603, %v1622
    %v1624 = vrot.slane %v1611, 4
    %v1625 = vsel %vm216, %v1624, %v1587
    %v1626 = vrot.slane %v1587, 4
    %v1627 = vsel %vm216, %v1611, %v1626
    %v1628 = vrot.slane %v1615, 4
    %v1629 = vsel %vm216, %v1628, %v1591
    %v1630 = vrot.slane %v1591, 4
    %v1631 = vsel %vm216, %v1615, %v1630
    %v1632 = vrot.slane %v1231, 4
    %v1633 = vsel %vm216, %v1632, %v125
    %v1634 = vrot.slane %v125, 4
    %v1635 = vsel %vm216, %v1231, %v1634
    %v1637 = vunpack.c.l.s4 1983009808
    %v1638 = vunpack.c.0.s8 %v1637
    %v1639 = vperm.slane %v1633, %v1638
    %v1641 = vunpack.c.l.s4 1983009808
    %v1642 = vunpack.c.0.s8 %v1641
    %v1643 = vperm.slane %v1635, %v1642
    %v1644 = vrot.slane %v1243, 4
    %v1645 = vsel %vm216, %v1644, %v1219
    %v1646 = vrot.slane %v1219, 4
    %v1647 = vsel %vm216, %v1243, %v1646
    %v1649 = vunpack.c.l.s4 1983009808
    %v1650 = vunpack.c.0.s8 %v1649
    %v1651 = vperm.slane %v1645, %v1650
    %v1653 = vunpack.c.l.s4 1983009808
    %v1654 = vunpack.c.0.s8 %v1653
    %v1655 = vperm.slane %v1647, %v1654
    %v1656 = vrot.slane %v1279, 4
    %v1657 = vsel %vm216, %v1656, %v1255
    %v1658 = vrot.slane %v1255, 4
    %v1659 = vsel %vm216, %v1279, %v1658
    %v1661 = vunpack.c.l.s4 1983009808
    %v1662 = vunpack.c.0.s8 %v1661
    %v1663 = vperm.slane %v1657, %v1662
    %v1665 = vunpack.c.l.s4 1983009808
    %v1666 = vunpack.c.0.s8 %v1665
    %v1667 = vperm.slane %v1659, %v1666
    %v1668 = vrot.slane %v1291, 4
    %v1669 = vsel %vm216, %v1668, %v1267
    %v1670 = vrot.slane %v1267, 4
    %v1671 = vsel %vm216, %v1291, %v1670
    %v1673 = vunpack.c.l.s4 1983009808
    %v1674 = vunpack.c.0.s8 %v1673
    %v1675 = vperm.slane %v1669, %v1674
    %v1677 = vunpack.c.l.s4 1983009808
    %v1678 = vunpack.c.0.s8 %v1677
    %v1679 = vperm.slane %v1671, %v1678
    %v1680 = vrot.slane %v1651, 4
    %v1681 = vsel %vm216, %v1680, %v1639
    %v1682 = vrot.slane %v1639, 4
    %v1683 = vsel %vm216, %v1651, %v1682
    %v1685 = vunpack.c.l.s4 1934713408
    %v1686 = vunpack.c.0.s8 %v1685
    %v1687 = vperm.slane %v1681, %v1686
    %v1689 = vunpack.c.l.s4 1934713408
    %v1690 = vunpack.c.0.s8 %v1689
    %v1691 = vperm.slane %v1683, %v1690
    %v1692 = vrot.slane %v1655, 4
    %v1693 = vsel %vm216, %v1692, %v1643
    %v1694 = vrot.slane %v1643, 4
    %v1695 = vsel %vm216, %v1655, %v1694
    %v1697 = vunpack.c.l.s4 1934713408
    %v1698 = vunpack.c.0.s8 %v1697
    %v1699 = vperm.slane %v1693, %v1698
    %v1701 = vunpack.c.l.s4 1934713408
    %v1702 = vunpack.c.0.s8 %v1701
    %v1703 = vperm.slane %v1695, %v1702
    %v1704 = vrot.slane %v1675, 4
    %v1705 = vsel %vm216, %v1704, %v1663
    %v1706 = vrot.slane %v1663, 4
    %v1707 = vsel %vm216, %v1675, %v1706
    %v1709 = vunpack.c.l.s4 1934713408
    %v1710 = vunpack.c.0.s8 %v1709
    %v1711 = vperm.slane %v1705, %v1710
    %v1713 = vunpack.c.l.s4 1934713408
    %v1714 = vunpack.c.0.s8 %v1713
    %v1715 = vperm.slane %v1707, %v1714
    %v1716 = vrot.slane %v1679, 4
    %v1717 = vsel %vm216, %v1716, %v1667
    %v1718 = vrot.slane %v1667, 4
    %v1719 = vsel %vm216, %v1679, %v1718
    %v1721 = vunpack.c.l.s4 1934713408
    %v1722 = vunpack.c.0.s8 %v1721
    %v1723 = vperm.slane %v1717, %v1722
    %v1725 = vunpack.c.l.s4 1934713408
    %v1726 = vunpack.c.0.s8 %v1725
    %v1727 = vperm.slane %v1719, %v1726
    %v1728 = vrot.slane %v1711, 4
    %v1729 = vsel %vm216, %v1728, %v1687
    %v1730 = vrot.slane %v1687, 4
    %v1731 = vsel %vm216, %v1711, %v1730
    %v1732 = vrot.slane %v1715, 4
    %v1733 = vsel %vm216, %v1732, %v1691
    %v1734 = vrot.slane %v1691, 4
    %v1735 = vsel %vm216, %v1715, %v1734
    %v1736 = vrot.slane %v1723, 4
    %v1737 = vsel %vm216, %v1736, %v1699
    %v1738 = vrot.slane %v1699, 4
    %v1739 = vsel %vm216, %v1723, %v1738
    %v1740 = vrot.slane %v1727, 4
    %v1741 = vsel %vm216, %v1740, %v1703
    %v1742 = vrot.slane %v1703, 4
    %v1743 = vsel %vm216, %v1727, %v1742
    %v1744 = vrot.slane %v317, 4
    %v1745 = vsel %vm216, %v1744, %v313
    %v1746 = vrot.slane %v313, 4
    %v1747 = vsel %vm216, %v317, %v1746
    %v1749 = vunpack.c.l.s4 1983009808
    %v1750 = vunpack.c.0.s8 %v1749
    %v1751 = vperm.slane %v1745, %v1750
    %v1753 = vunpack.c.l.s4 1983009808
    %v1754 = vunpack.c.0.s8 %v1753
    %v1755 = vperm.slane %v1747, %v1754
    %v1756 = vrot.slane %v319, 4
    %v1757 = vsel %vm216, %v1756, %v315
    %v1758 = vrot.slane %v315, 4
    %v1759 = vsel %vm216, %v319, %v1758
    %v1761 = vunpack.c.l.s4 1983009808
    %v1762 = vunpack.c.0.s8 %v1761
    %v1763 = vperm.slane %v1757, %v1762
    %v1765 = vunpack.c.l.s4 1983009808
    %v1766 = vunpack.c.0.s8 %v1765
    %v1767 = vperm.slane %v1759, %v1766
    %v1768 = vrot.slane %v325, 4
    %v1769 = vsel %vm216, %v1768, %v321
    %v1770 = vrot.slane %v321, 4
    %v1771 = vsel %vm216, %v325, %v1770
    %v1773 = vunpack.c.l.s4 1983009808
    %v1774 = vunpack.c.0.s8 %v1773
    %v1775 = vperm.slane %v1769, %v1774
    %v1777 = vunpack.c.l.s4 1983009808
    %v1778 = vunpack.c.0.s8 %v1777
    %v1779 = vperm.slane %v1771, %v1778
    %v1780 = vrot.slane %v327, 4
    %v1781 = vsel %vm216, %v1780, %v323
    %v1782 = vrot.slane %v323, 4
    %v1783 = vsel %vm216, %v327, %v1782
    %v1785 = vunpack.c.l.s4 1983009808
    %v1786 = vunpack.c.0.s8 %v1785
    %v1787 = vperm.slane %v1781, %v1786
    %v1789 = vunpack.c.l.s4 1983009808
    %v1790 = vunpack.c.0.s8 %v1789
    %v1791 = vperm.slane %v1783, %v1790
    %v1792 = vrot.slane %v1763, 4
    %v1793 = vsel %vm216, %v1792, %v1751
    %v1794 = vrot.slane %v1751, 4
    %v1795 = vsel %vm216, %v1763, %v1794
    %v1797 = vunpack.c.l.s4 1934713408
    %v1798 = vunpack.c.0.s8 %v1797
    %v1799 = vperm.slane %v1793, %v1798
    %v1801 = vunpack.c.l.s4 1934713408
    %v1802 = vunpack.c.0.s8 %v1801
    %v1803 = vperm.slane %v1795, %v1802
    %v1804 = vrot.slane %v1767, 4
    %v1805 = vsel %vm216, %v1804, %v1755
    %v1806 = vrot.slane %v1755, 4
    %v1807 = vsel %vm216, %v1767, %v1806
    %v1809 = vunpack.c.l.s4 1934713408
    %v1810 = vunpack.c.0.s8 %v1809
    %v1811 = vperm.slane %v1805, %v1810
    %v1813 = vunpack.c.l.s4 1934713408
    %v1814 = vunpack.c.0.s8 %v1813
    %v1815 = vperm.slane %v1807, %v1814
    %v1816 = vrot.slane %v1787, 4
    %v1817 = vsel %vm216, %v1816, %v1775
    %v1818 = vrot.slane %v1775, 4
    %v1819 = vsel %vm216, %v1787, %v1818
    %v1821 = vunpack.c.l.s4 1934713408
    %v1822 = vunpack.c.0.s8 %v1821
    %v1823 = vperm.slane %v1817, %v1822
    %v1825 = vunpack.c.l.s4 1934713408
    %v1826 = vunpack.c.0.s8 %v1825
    %v1827 = vperm.slane %v1819, %v1826
    %v1828 = vrot.slane %v1791, 4
    %v1829 = vsel %vm216, %v1828, %v1779
    %v1830 = vrot.slane %v1779, 4
    %v1831 = vsel %vm216, %v1791, %v1830
    %v1833 = vunpack.c.l.s4 1934713408
    %v1834 = vunpack.c.0.s8 %v1833
    %v1835 = vperm.slane %v1829, %v1834
    %v1837 = vunpack.c.l.s4 1934713408
    %v1838 = vunpack.c.0.s8 %v1837
    %v1839 = vperm.slane %v1831, %v1838
    %v1840 = vrot.slane %v1823, 4
    %v1841 = vsel %vm216, %v1840, %v1799
    %v1842 = vrot.slane %v1799, 4
    %v1843 = vsel %vm216, %v1823, %v1842
    %v1844 = vrot.slane %v1827, 4
    %v1845 = vsel %vm216, %v1844, %v1803
    %v1846 = vrot.slane %v1803, 4
    %v1847 = vsel %vm216, %v1827, %v1846
    %v1848 = vrot.slane %v1835, 4
    %v1849 = vsel %vm216, %v1848, %v1811
    %v1850 = vrot.slane %v1811, 4
    %v1851 = vsel %vm216, %v1835, %v1850
    %v1852 = vrot.slane %v1839, 4
    %v1853 = vsel %vm216, %v1852, %v1815
    %v1854 = vrot.slane %v1815, 4
    %v1855 = vsel %vm216, %v1839, %v1854
    %v1856 = vrot.slane %v429, 4
    %v1857 = vsel %vm216, %v1856, %v425
    %v1858 = vrot.slane %v425, 4
    %v1859 = vsel %vm216, %v429, %v1858
    %v1861 = vunpack.c.l.s4 1983009808
    %v1862 = vunpack.c.0.s8 %v1861
    %v1863 = vperm.slane %v1857, %v1862
    %v1865 = vunpack.c.l.s4 1983009808
    %v1866 = vunpack.c.0.s8 %v1865
    %v1867 = vperm.slane %v1859, %v1866
    %v1868 = vrot.slane %v431, 4
    %v1869 = vsel %vm216, %v1868, %v427
    %v1870 = vrot.slane %v427, 4
    %v1871 = vsel %vm216, %v431, %v1870
    %v1873 = vunpack.c.l.s4 1983009808
    %v1874 = vunpack.c.0.s8 %v1873
    %v1875 = vperm.slane %v1869, %v1874
    %v1877 = vunpack.c.l.s4 1983009808
    %v1878 = vunpack.c.0.s8 %v1877
    %v1879 = vperm.slane %v1871, %v1878
    %v1880 = vrot.slane %v437, 4
    %v1881 = vsel %vm216, %v1880, %v433
    %v1882 = vrot.slane %v433, 4
    %v1883 = vsel %vm216, %v437, %v1882
    %v1885 = vunpack.c.l.s4 1983009808
    %v1886 = vunpack.c.0.s8 %v1885
    %v1887 = vperm.slane %v1881, %v1886
    %v1889 = vunpack.c.l.s4 1983009808
    %v1890 = vunpack.c.0.s8 %v1889
    %v1891 = vperm.slane %v1883, %v1890
    %v1892 = vrot.slane %v439, 4
    %v1893 = vsel %vm216, %v1892, %v435
    %v1894 = vrot.slane %v435, 4
    %v1895 = vsel %vm216, %v439, %v1894
    %v1897 = vunpack.c.l.s4 1983009808
    %v1898 = vunpack.c.0.s8 %v1897
    %v1899 = vperm.slane %v1893, %v1898
    %v1901 = vunpack.c.l.s4 1983009808
    %v1902 = vunpack.c.0.s8 %v1901
    %v1903 = vperm.slane %v1895, %v1902
    %v1904 = vrot.slane %v1875, 4
    %v1905 = vsel %vm216, %v1904, %v1863
    %v1906 = vrot.slane %v1863, 4
    %v1907 = vsel %vm216, %v1875, %v1906
    %v1909 = vunpack.c.l.s4 1934713408
    %v1910 = vunpack.c.0.s8 %v1909
    %v1911 = vperm.slane %v1905, %v1910
    %v1913 = vunpack.c.l.s4 1934713408
    %v1914 = vunpack.c.0.s8 %v1913
    %v1915 = vperm.slane %v1907, %v1914
    %v1916 = vrot.slane %v1879, 4
    %v1917 = vsel %vm216, %v1916, %v1867
    %v1918 = vrot.slane %v1867, 4
    %v1919 = vsel %vm216, %v1879, %v1918
    %v1921 = vunpack.c.l.s4 1934713408
    %v1922 = vunpack.c.0.s8 %v1921
    %v1923 = vperm.slane %v1917, %v1922
    %v1925 = vunpack.c.l.s4 1934713408
    %v1926 = vunpack.c.0.s8 %v1925
    %v1927 = vperm.slane %v1919, %v1926
    %v1928 = vrot.slane %v1899, 4
    %v1929 = vsel %vm216, %v1928, %v1887
    %v1930 = vrot.slane %v1887, 4
    %v1931 = vsel %vm216, %v1899, %v1930
    %v1933 = vunpack.c.l.s4 1934713408
    %v1934 = vunpack.c.0.s8 %v1933
    %v1935 = vperm.slane %v1929, %v1934
    %v1937 = vunpack.c.l.s4 1934713408
    %v1938 = vunpack.c.0.s8 %v1937
    %v1939 = vperm.slane %v1931, %v1938
    %v1940 = vrot.slane %v1903, 4
    %v1941 = vsel %vm216, %v1940, %v1891
    %v1942 = vrot.slane %v1891, 4
    %v1943 = vsel %vm216, %v1903, %v1942
    %v1945 = vunpack.c.l.s4 1934713408
    %v1946 = vunpack.c.0.s8 %v1945
    %v1947 = vperm.slane %v1941, %v1946
    %v1949 = vunpack.c.l.s4 1934713408
    %v1950 = vunpack.c.0.s8 %v1949
    %v1951 = vperm.slane %v1943, %v1950
    %v1952 = vrot.slane %v1935, 4
    %v1953 = vsel %vm216, %v1952, %v1911
    %v1954 = vrot.slane %v1911, 4
    %v1955 = vsel %vm216, %v1935, %v1954
    %v1956 = vrot.slane %v1939, 4
    %v1957 = vsel %vm216, %v1956, %v1915
    %v1958 = vrot.slane %v1915, 4
    %v1959 = vsel %vm216, %v1939, %v1958
    %v1960 = vrot.slane %v1947, 4
    %v1961 = vsel %vm216, %v1960, %v1923
    %v1962 = vrot.slane %v1923, 4
    %v1963 = vsel %vm216, %v1947, %v1962
    %v1964 = vrot.slane %v1951, 4
    %v1965 = vsel %vm216, %v1964, %v1927
    %v1966 = vrot.slane %v1927, 4
    %v1967 = vsel %vm216, %v1951, %v1966
    %v1968 = vrot.slane %v541, 4
    %v1969 = vsel %vm216, %v1968, %v537
    %v1970 = vrot.slane %v537, 4
    %v1971 = vsel %vm216, %v541, %v1970
    %v1973 = vunpack.c.l.s4 1983009808
    %v1974 = vunpack.c.0.s8 %v1973
    %v1975 = vperm.slane %v1969, %v1974
    %v1977 = vunpack.c.l.s4 1983009808
    %v1978 = vunpack.c.0.s8 %v1977
    %v1979 = vperm.slane %v1971, %v1978
    %v1980 = vrot.slane %v543, 4
    %v1981 = vsel %vm216, %v1980, %v539
    %v1982 = vrot.slane %v539, 4
    %v1983 = vsel %vm216, %v543, %v1982
    %v1985 = vunpack.c.l.s4 1983009808
    %v1986 = vunpack.c.0.s8 %v1985
    %v1987 = vperm.slane %v1981, %v1986
    %v1989 = vunpack.c.l.s4 1983009808
    %v1990 = vunpack.c.0.s8 %v1989
    %v1991 = vperm.slane %v1983, %v1990
    %v1992 = vrot.slane %v549, 4
    %v1993 = vsel %vm216, %v1992, %v545
    %v1994 = vrot.slane %v545, 4
    %v1995 = vsel %vm216, %v549, %v1994
    %v1997 = vunpack.c.l.s4 1983009808
    %v1998 = vunpack.c.0.s8 %v1997
    %v1999 = vperm.slane %v1993, %v1998
    %v2001 = vunpack.c.l.s4 1983009808
    %v2002 = vunpack.c.0.s8 %v2001
    %v2003 = vperm.slane %v1995, %v2002
    %v2004 = vrot.slane %v551, 4
    %v2005 = vsel %vm216, %v2004, %v547
    %v2006 = vrot.slane %v547, 4
    %v2007 = vsel %vm216, %v551, %v2006
    %v2009 = vunpack.c.l.s4 1983009808
    %v2010 = vunpack.c.0.s8 %v2009
    %v2011 = vperm.slane %v2005, %v2010
    %v2013 = vunpack.c.l.s4 1983009808
    %v2014 = vunpack.c.0.s8 %v2013
    %v2015 = vperm.slane %v2007, %v2014
    %v2016 = vrot.slane %v1987, 4
    %v2017 = vsel %vm216, %v2016, %v1975
    %v2018 = vrot.slane %v1975, 4
    %v2019 = vsel %vm216, %v1987, %v2018
    %v2021 = vunpack.c.l.s4 1934713408
    %v2022 = vunpack.c.0.s8 %v2021
    %v2023 = vperm.slane %v2017, %v2022
    %v2025 = vunpack.c.l.s4 1934713408
    %v2026 = vunpack.c.0.s8 %v2025
    %v2027 = vperm.slane %v2019, %v2026
    %v2028 = vrot.slane %v1991, 4
    %v2029 = vsel %vm216, %v2028, %v1979
    %v2030 = vrot.slane %v1979, 4
    %v2031 = vsel %vm216, %v1991, %v2030
    %v2033 = vunpack.c.l.s4 1934713408
    %v2034 = vunpack.c.0.s8 %v2033
    %v2035 = vperm.slane %v2029, %v2034
    %v2037 = vunpack.c.l.s4 1934713408
    %v2038 = vunpack.c.0.s8 %v2037
    %v2039 = vperm.slane %v2031, %v2038
    %v2040 = vrot.slane %v2011, 4
    %v2041 = vsel %vm216, %v2040, %v1999
    %v2042 = vrot.slane %v1999, 4
    %v2043 = vsel %vm216, %v2011, %v2042
    %v2045 = vunpack.c.l.s4 1934713408
    %v2046 = vunpack.c.0.s8 %v2045
    %v2047 = vperm.slane %v2041, %v2046
    %v2049 = vunpack.c.l.s4 1934713408
    %v2050 = vunpack.c.0.s8 %v2049
    %v2051 = vperm.slane %v2043, %v2050
    %v2052 = vrot.slane %v2015, 4
    %v2053 = vsel %vm216, %v2052, %v2003
    %v2054 = vrot.slane %v2003, 4
    %v2055 = vsel %vm216, %v2015, %v2054
    %v2057 = vunpack.c.l.s4 1934713408
    %v2058 = vunpack.c.0.s8 %v2057
    %v2059 = vperm.slane %v2053, %v2058
    %v2061 = vunpack.c.l.s4 1934713408
    %v2062 = vunpack.c.0.s8 %v2061
    %v2063 = vperm.slane %v2055, %v2062
    %v2064 = vrot.slane %v2047, 4
    %v2065 = vsel %vm216, %v2064, %v2023
    %v2066 = vrot.slane %v2023, 4
    %v2067 = vsel %vm216, %v2047, %v2066
    %v2068 = vrot.slane %v2051, 4
    %v2069 = vsel %vm216, %v2068, %v2027
    %v2070 = vrot.slane %v2027, 4
    %v2071 = vsel %vm216, %v2051, %v2070
    %v2072 = vrot.slane %v2059, 4
    %v2073 = vsel %vm216, %v2072, %v2035
    %v2074 = vrot.slane %v2035, 4
    %v2075 = vsel %vm216, %v2059, %v2074
    %v2076 = vrot.slane %v2063, 4
    %v2077 = vsel %vm216, %v2076, %v2039
    %v2078 = vrot.slane %v2039, 4
    %v2079 = vsel %vm216, %v2063, %v2078
    %v2080 = vrot.slane %v653, 4
    %v2081 = vsel %vm216, %v2080, %v649
    %v2082 = vrot.slane %v649, 4
    %v2083 = vsel %vm216, %v653, %v2082
    %v2085 = vunpack.c.l.s4 1983009808
    %v2086 = vunpack.c.0.s8 %v2085
    %v2087 = vperm.slane %v2081, %v2086
    %v2089 = vunpack.c.l.s4 1983009808
    %v2090 = vunpack.c.0.s8 %v2089
    %v2091 = vperm.slane %v2083, %v2090
    %v2092 = vrot.slane %v655, 4
    %v2093 = vsel %vm216, %v2092, %v651
    %v2094 = vrot.slane %v651, 4
    %v2095 = vsel %vm216, %v655, %v2094
    %v2097 = vunpack.c.l.s4 1983009808
    %v2098 = vunpack.c.0.s8 %v2097
    %v2099 = vperm.slane %v2093, %v2098
    %v2101 = vunpack.c.l.s4 1983009808
    %v2102 = vunpack.c.0.s8 %v2101
    %v2103 = vperm.slane %v2095, %v2102
    %v2104 = vrot.slane %v661, 4
    %v2105 = vsel %vm216, %v2104, %v657
    %v2106 = vrot.slane %v657, 4
    %v2107 = vsel %vm216, %v661, %v2106
    %v2109 = vunpack.c.l.s4 1983009808
    %v2110 = vunpack.c.0.s8 %v2109
    %v2111 = vperm.slane %v2105, %v2110
    %v2113 = vunpack.c.l.s4 1983009808
    %v2114 = vunpack.c.0.s8 %v2113
    %v2115 = vperm.slane %v2107, %v2114
    %v2116 = vrot.slane %v663, 4
    %v2117 = vsel %vm216, %v2116, %v659
    %v2118 = vrot.slane %v659, 4
    %v2119 = vsel %vm216, %v663, %v2118
    %v2121 = vunpack.c.l.s4 1983009808
    %v2122 = vunpack.c.0.s8 %v2121
    %v2123 = vperm.slane %v2117, %v2122
    %v2125 = vunpack.c.l.s4 1983009808
    %v2126 = vunpack.c.0.s8 %v2125
    %v2127 = vperm.slane %v2119, %v2126
    %v2128 = vrot.slane %v2099, 4
    %v2129 = vsel %vm216, %v2128, %v2087
    %v2130 = vrot.slane %v2087, 4
    %v2131 = vsel %vm216, %v2099, %v2130
    %v2133 = vunpack.c.l.s4 1934713408
    %v2134 = vunpack.c.0.s8 %v2133
    %v2135 = vperm.slane %v2129, %v2134
    %v2137 = vunpack.c.l.s4 1934713408
    %v2138 = vunpack.c.0.s8 %v2137
    %v2139 = vperm.slane %v2131, %v2138
    %v2140 = vrot.slane %v2103, 4
    %v2141 = vsel %vm216, %v2140, %v2091
    %v2142 = vrot.slane %v2091, 4
    %v2143 = vsel %vm216, %v2103, %v2142
    %v2145 = vunpack.c.l.s4 1934713408
    %v2146 = vunpack.c.0.s8 %v2145
    %v2147 = vperm.slane %v2141, %v2146
    %v2149 = vunpack.c.l.s4 1934713408
    %v2150 = vunpack.c.0.s8 %v2149
    %v2151 = vperm.slane %v2143, %v2150
    %v2152 = vrot.slane %v2123, 4
    %v2153 = vsel %vm216, %v2152, %v2111
    %v2154 = vrot.slane %v2111, 4
    %v2155 = vsel %vm216, %v2123, %v2154
    %v2157 = vunpack.c.l.s4 1934713408
    %v2158 = vunpack.c.0.s8 %v2157
    %v2159 = vperm.slane %v2153, %v2158
    %v2161 = vunpack.c.l.s4 1934713408
    %v2162 = vunpack.c.0.s8 %v2161
    %v2163 = vperm.slane %v2155, %v2162
    %v2164 = vrot.slane %v2127, 4
    %v2165 = vsel %vm216, %v2164, %v2115
    %v2166 = vrot.slane %v2115, 4
    %v2167 = vsel %vm216, %v2127, %v2166
    %v2169 = vunpack.c.l.s4 1934713408
    %v2170 = vunpack.c.0.s8 %v2169
    %v2171 = vperm.slane %v2165, %v2170
    %v2173 = vunpack.c.l.s4 1934713408
    %v2174 = vunpack.c.0.s8 %v2173
    %v2175 = vperm.slane %v2167, %v2174
    %v2176 = vrot.slane %v2159, 4
    %v2177 = vsel %vm216, %v2176, %v2135
    %v2178 = vrot.slane %v2135, 4
    %v2179 = vsel %vm216, %v2159, %v2178
    %v2180 = vrot.slane %v2163, 4
    %v2181 = vsel %vm216, %v2180, %v2139
    %v2182 = vrot.slane %v2139, 4
    %v2183 = vsel %vm216, %v2163, %v2182
    %v2184 = vrot.slane %v2171, 4
    %v2185 = vsel %vm216, %v2184, %v2147
    %v2186 = vrot.slane %v2147, 4
    %v2187 = vsel %vm216, %v2171, %v2186
    %v2188 = vrot.slane %v2175, 4
    %v2189 = vsel %vm216, %v2188, %v2151
    %v2190 = vrot.slane %v2151, 4
    %v2191 = vsel %vm216, %v2175, %v2190
    %v2192 = vrot.slane %v861, 4
    %v2193 = vsel %vm216, %v2192, %v857
    %v2194 = vrot.slane %v857, 4
    %v2195 = vsel %vm216, %v861, %v2194
    %v2197 = vunpack.c.l.s4 1983009808
    %v2198 = vunpack.c.0.s8 %v2197
    %v2199 = vperm.slane %v2193, %v2198
    %v2201 = vunpack.c.l.s4 1983009808
    %v2202 = vunpack.c.0.s8 %v2201
    %v2203 = vperm.slane %v2195, %v2202
    %v2204 = vrot.slane %v863, 4
    %v2205 = vsel %vm216, %v2204, %v859
    %v2206 = vrot.slane %v859, 4
    %v2207 = vsel %vm216, %v863, %v2206
    %v2209 = vunpack.c.l.s4 1983009808
    %v2210 = vunpack.c.0.s8 %v2209
    %v2211 = vperm.slane %v2205, %v2210
    %v2213 = vunpack.c.l.s4 1983009808
    %v2214 = vunpack.c.0.s8 %v2213
    %v2215 = vperm.slane %v2207, %v2214
    %v2216 = vrot.slane %v869, 4
    %v2217 = vsel %vm216, %v2216, %v865
    %v2218 = vrot.slane %v865, 4
    %v2219 = vsel %vm216, %v869, %v2218
    %v2221 = vunpack.c.l.s4 1983009808
    %v2222 = vunpack.c.0.s8 %v2221
    %v2223 = vperm.slane %v2217, %v2222
    %v2225 = vunpack.c.l.s4 1983009808
    %v2226 = vunpack.c.0.s8 %v2225
    %v2227 = vperm.slane %v2219, %v2226
    %v2228 = vrot.slane %v871, 4
    %v2229 = vsel %vm216, %v2228, %v867
    %v2230 = vrot.slane %v867, 4
    %v2231 = vsel %vm216, %v871, %v2230
    %v2233 = vunpack.c.l.s4 1983009808
    %v2234 = vunpack.c.0.s8 %v2233
    %v2235 = vperm.slane %v2229, %v2234
    %v2237 = vunpack.c.l.s4 1983009808
    %v2238 = vunpack.c.0.s8 %v2237
    %v2239 = vperm.slane %v2231, %v2238
    %v2240 = vrot.slane %v2211, 4
    %v2241 = vsel %vm216, %v2240, %v2199
    %v2242 = vrot.slane %v2199, 4
    %v2243 = vsel %vm216, %v2211, %v2242
    %v2245 = vunpack.c.l.s4 1934713408
    %v2246 = vunpack.c.0.s8 %v2245
    %v2247 = vperm.slane %v2241, %v2246
    %v2249 = vunpack.c.l.s4 1934713408
    %v2250 = vunpack.c.0.s8 %v2249
    %v2251 = vperm.slane %v2243, %v2250
    %v2252 = vrot.slane %v2215, 4
    %v2253 = vsel %vm216, %v2252, %v2203
    %v2254 = vrot.slane %v2203, 4
    %v2255 = vsel %vm216, %v2215, %v2254
    %v2257 = vunpack.c.l.s4 1934713408
    %v2258 = vunpack.c.0.s8 %v2257
    %v2259 = vperm.slane %v2253, %v2258
    %v2261 = vunpack.c.l.s4 1934713408
    %v2262 = vunpack.c.0.s8 %v2261
    %v2263 = vperm.slane %v2255, %v2262
    %v2264 = vrot.slane %v2235, 4
    %v2265 = vsel %vm216, %v2264, %v2223
    %v2266 = vrot.slane %v2223, 4
    %v2267 = vsel %vm216, %v2235, %v2266
    %v2269 = vunpack.c.l.s4 1934713408
    %v2270 = vunpack.c.0.s8 %v2269
    %v2271 = vperm.slane %v2265, %v2270
    %v2273 = vunpack.c.l.s4 1934713408
    %v2274 = vunpack.c.0.s8 %v2273
    %v2275 = vperm.slane %v2267, %v2274
    %v2276 = vrot.slane %v2239, 4
    %v2277 = vsel %vm216, %v2276, %v2227
    %v2278 = vrot.slane %v2227, 4
    %v2279 = vsel %vm216, %v2239, %v2278
    %v2281 = vunpack.c.l.s4 1934713408
    %v2282 = vunpack.c.0.s8 %v2281
    %v2283 = vperm.slane %v2277, %v2282
    %v2285 = vunpack.c.l.s4 1934713408
    %v2286 = vunpack.c.0.s8 %v2285
    %v2287 = vperm.slane %v2279, %v2286
    %v2288 = vrot.slane %v2271, 4
    %v2289 = vsel %vm216, %v2288, %v2247
    %v2290 = vrot.slane %v2247, 4
    %v2291 = vsel %vm216, %v2271, %v2290
    %v2292 = vrot.slane %v2275, 4
    %v2293 = vsel %vm216, %v2292, %v2251
    %v2294 = vrot.slane %v2251, 4
    %v2295 = vsel %vm216, %v2275, %v2294
    %v2296 = vrot.slane %v2283, 4
    %v2297 = vsel %vm216, %v2296, %v2259
    %v2298 = vrot.slane %v2259, 4
    %v2299 = vsel %vm216, %v2283, %v2298
    %v2300 = vrot.slane %v2287, 4
    %v2301 = vsel %vm216, %v2300, %v2263
    %v2302 = vrot.slane %v2263, 4
    %v2303 = vsel %vm216, %v2287, %v2302
    %v2304 = vrot.slane %v973, 4
    %v2305 = vsel %vm216, %v2304, %v969
    %v2306 = vrot.slane %v969, 4
    %v2307 = vsel %vm216, %v973, %v2306
    %v2309 = vunpack.c.l.s4 1983009808
    %v2310 = vunpack.c.0.s8 %v2309
    %v2311 = vperm.slane %v2305, %v2310
    %v2313 = vunpack.c.l.s4 1983009808
    %v2314 = vunpack.c.0.s8 %v2313
    %v2315 = vperm.slane %v2307, %v2314
    %v2316 = vrot.slane %v975, 4
    %v2317 = vsel %vm216, %v2316, %v971
    %v2318 = vrot.slane %v971, 4
    %v2319 = vsel %vm216, %v975, %v2318
    %v2321 = vunpack.c.l.s4 1983009808
    %v2322 = vunpack.c.0.s8 %v2321
    %v2323 = vperm.slane %v2317, %v2322
    %v2325 = vunpack.c.l.s4 1983009808
    %v2326 = vunpack.c.0.s8 %v2325
    %v2327 = vperm.slane %v2319, %v2326
    %v2328 = vrot.slane %v981, 4
    %v2329 = vsel %vm216, %v2328, %v977
    %v2330 = vrot.slane %v977, 4
    %v2331 = vsel %vm216, %v981, %v2330
    %v2333 = vunpack.c.l.s4 1983009808
    %v2334 = vunpack.c.0.s8 %v2333
    %v2335 = vperm.slane %v2329, %v2334
    %v2337 = vunpack.c.l.s4 1983009808
    %v2338 = vunpack.c.0.s8 %v2337
    %v2339 = vperm.slane %v2331, %v2338
    %v2340 = vrot.slane %v983, 4
    %v2341 = vsel %vm216, %v2340, %v979
    %v2342 = vrot.slane %v979, 4
    %v2343 = vsel %vm216, %v983, %v2342
    %v2345 = vunpack.c.l.s4 1983009808
    %v2346 = vunpack.c.0.s8 %v2345
    %v2347 = vperm.slane %v2341, %v2346
    %v2349 = vunpack.c.l.s4 1983009808
    %v2350 = vunpack.c.0.s8 %v2349
    %v2351 = vperm.slane %v2343, %v2350
    %v2352 = vrot.slane %v2323, 4
    %v2353 = vsel %vm216, %v2352, %v2311
    %v2354 = vrot.slane %v2311, 4
    %v2355 = vsel %vm216, %v2323, %v2354
    %v2357 = vunpack.c.l.s4 1934713408
    %v2358 = vunpack.c.0.s8 %v2357
    %v2359 = vperm.slane %v2353, %v2358
    %v2361 = vunpack.c.l.s4 1934713408
    %v2362 = vunpack.c.0.s8 %v2361
    %v2363 = vperm.slane %v2355, %v2362
    %v2364 = vrot.slane %v2327, 4
    %v2365 = vsel %vm216, %v2364, %v2315
    %v2366 = vrot.slane %v2315, 4
    %v2367 = vsel %vm216, %v2327, %v2366
    %v2369 = vunpack.c.l.s4 1934713408
    %v2370 = vunpack.c.0.s8 %v2369
    %v2371 = vperm.slane %v2365, %v2370
    %v2373 = vunpack.c.l.s4 1934713408
    %v2374 = vunpack.c.0.s8 %v2373
    %v2375 = vperm.slane %v2367, %v2374
    %v2376 = vrot.slane %v2347, 4
    %v2377 = vsel %vm216, %v2376, %v2335
    %v2378 = vrot.slane %v2335, 4
    %v2379 = vsel %vm216, %v2347, %v2378
    %v2381 = vunpack.c.l.s4 1934713408
    %v2382 = vunpack.c.0.s8 %v2381
    %v2383 = vperm.slane %v2377, %v2382
    %v2385 = vunpack.c.l.s4 1934713408
    %v2386 = vunpack.c.0.s8 %v2385
    %v2387 = vperm.slane %v2379, %v2386
    %v2388 = vrot.slane %v2351, 4
    %v2389 = vsel %vm216, %v2388, %v2339
    %v2390 = vrot.slane %v2339, 4
    %v2391 = vsel %vm216, %v2351, %v2390
    %v2393 = vunpack.c.l.s4 1934713408
    %v2394 = vunpack.c.0.s8 %v2393
    %v2395 = vperm.slane %v2389, %v2394
    %v2397 = vunpack.c.l.s4 1934713408
    %v2398 = vunpack.c.0.s8 %v2397
    %v2399 = vperm.slane %v2391, %v2398
    %v2400 = vrot.slane %v2383, 4
    %v2401 = vsel %vm216, %v2400, %v2359
    %v2402 = vrot.slane %v2359, 4
    %v2403 = vsel %vm216, %v2383, %v2402
    %v2404 = vrot.slane %v2387, 4
    %v2405 = vsel %vm216, %v2404, %v2363
    %v2406 = vrot.slane %v2363, 4
    %v2407 = vsel %vm216, %v2387, %v2406
    %v2408 = vrot.slane %v2395, 4
    %v2409 = vsel %vm216, %v2408, %v2371
    %v2410 = vrot.slane %v2371, 4
    %v2411 = vsel %vm216, %v2395, %v2410
    %v2412 = vrot.slane %v2399, 4
    %v2413 = vsel %vm216, %v2412, %v2375
    %v2414 = vrot.slane %v2375, 4
    %v2415 = vsel %vm216, %v2399, %v2414
    %v2416 = vrot.slane %v1085, 4
    %v2417 = vsel %vm216, %v2416, %v1081
    %v2418 = vrot.slane %v1081, 4
    %v2419 = vsel %vm216, %v1085, %v2418
    %v2421 = vunpack.c.l.s4 1983009808
    %v2422 = vunpack.c.0.s8 %v2421
    %v2423 = vperm.slane %v2417, %v2422
    %v2425 = vunpack.c.l.s4 1983009808
    %v2426 = vunpack.c.0.s8 %v2425
    %v2427 = vperm.slane %v2419, %v2426
    %v2428 = vrot.slane %v1087, 4
    %v2429 = vsel %vm216, %v2428, %v1083
    %v2430 = vrot.slane %v1083, 4
    %v2431 = vsel %vm216, %v1087, %v2430
    %v2433 = vunpack.c.l.s4 1983009808
    %v2434 = vunpack.c.0.s8 %v2433
    %v2435 = vperm.slane %v2429, %v2434
    %v2437 = vunpack.c.l.s4 1983009808
    %v2438 = vunpack.c.0.s8 %v2437
    %v2439 = vperm.slane %v2431, %v2438
    %v2440 = vrot.slane %v1093, 4
    %v2441 = vsel %vm216, %v2440, %v1089
    %v2442 = vrot.slane %v1089, 4
    %v2443 = vsel %vm216, %v1093, %v2442
    %v2445 = vunpack.c.l.s4 1983009808
    %v2446 = vunpack.c.0.s8 %v2445
    %v2447 = vperm.slane %v2441, %v2446
    %v2449 = vunpack.c.l.s4 1983009808
    %v2450 = vunpack.c.0.s8 %v2449
    %v2451 = vperm.slane %v2443, %v2450
    %v2452 = vrot.slane %v1095, 4
    %v2453 = vsel %vm216, %v2452, %v1091
    %v2454 = vrot.slane %v1091, 4
    %v2455 = vsel %vm216, %v1095, %v2454
    %v2457 = vunpack.c.l.s4 1983009808
    %v2458 = vunpack.c.0.s8 %v2457
    %v2459 = vperm.slane %v2453, %v2458
    %v2461 = vunpack.c.l.s4 1983009808
    %v2462 = vunpack.c.0.s8 %v2461
    %v2463 = vperm.slane %v2455, %v2462
    %v2464 = vrot.slane %v2435, 4
    %v2465 = vsel %vm216, %v2464, %v2423
    %v2466 = vrot.slane %v2423, 4
    %v2467 = vsel %vm216, %v2435, %v2466
    %v2469 = vunpack.c.l.s4 1934713408
    %v2470 = vunpack.c.0.s8 %v2469
    %v2471 = vperm.slane %v2465, %v2470
    %v2473 = vunpack.c.l.s4 1934713408
    %v2474 = vunpack.c.0.s8 %v2473
    %v2475 = vperm.slane %v2467, %v2474
    %v2476 = vrot.slane %v2439, 4
    %v2477 = vsel %vm216, %v2476, %v2427
    %v2478 = vrot.slane %v2427, 4
    %v2479 = vsel %vm216, %v2439, %v2478
    %v2481 = vunpack.c.l.s4 1934713408
    %v2482 = vunpack.c.0.s8 %v2481
    %v2483 = vperm.slane %v2477, %v2482
    %v2485 = vunpack.c.l.s4 1934713408
    %v2486 = vunpack.c.0.s8 %v2485
    %v2487 = vperm.slane %v2479, %v2486
    %v2488 = vrot.slane %v2459, 4
    %v2489 = vsel %vm216, %v2488, %v2447
    %v2490 = vrot.slane %v2447, 4
    %v2491 = vsel %vm216, %v2459, %v2490
    %v2493 = vunpack.c.l.s4 1934713408
    %v2494 = vunpack.c.0.s8 %v2493
    %v2495 = vperm.slane %v2489, %v2494
    %v2497 = vunpack.c.l.s4 1934713408
    %v2498 = vunpack.c.0.s8 %v2497
    %v2499 = vperm.slane %v2491, %v2498
    %v2500 = vrot.slane %v2463, 4
    %v2501 = vsel %vm216, %v2500, %v2451
    %v2502 = vrot.slane %v2451, 4
    %v2503 = vsel %vm216, %v2463, %v2502
    %v2505 = vunpack.c.l.s4 1934713408
    %v2506 = vunpack.c.0.s8 %v2505
    %v2507 = vperm.slane %v2501, %v2506
    %v2509 = vunpack.c.l.s4 1934713408
    %v2510 = vunpack.c.0.s8 %v2509
    %v2511 = vperm.slane %v2503, %v2510
    %v2512 = vrot.slane %v2495, 4
    %v2513 = vsel %vm216, %v2512, %v2471
    %v2514 = vrot.slane %v2471, 4
    %v2515 = vsel %vm216, %v2495, %v2514
    %v2516 = vrot.slane %v2499, 4
    %v2517 = vsel %vm216, %v2516, %v2475
    %v2518 = vrot.slane %v2475, 4
    %v2519 = vsel %vm216, %v2499, %v2518
    %v2520 = vrot.slane %v2507, 4
    %v2521 = vsel %vm216, %v2520, %v2483
    %v2522 = vrot.slane %v2483, 4
    %v2523 = vsel %vm216, %v2507, %v2522
    %v2524 = vrot.slane %v2511, 4
    %v2525 = vsel %vm216, %v2524, %v2487
    %v2526 = vrot.slane %v2487, 4
    %v2527 = vsel %vm216, %v2511, %v2526
    %v2528 = vrot.slane %v1197, 4
    %v2529 = vsel %vm216, %v2528, %v1193
    %v2530 = vrot.slane %v1193, 4
    %v2531 = vsel %vm216, %v1197, %v2530
    %v2533 = vunpack.c.l.s4 1983009808
    %v2534 = vunpack.c.0.s8 %v2533
    %v2535 = vperm.slane %v2529, %v2534
    %v2537 = vunpack.c.l.s4 1983009808
    %v2538 = vunpack.c.0.s8 %v2537
    %v2539 = vperm.slane %v2531, %v2538
    %v2540 = vrot.slane %v1199, 4
    %v2541 = vsel %vm216, %v2540, %v1195
    %v2542 = vrot.slane %v1195, 4
    %v2543 = vsel %vm216, %v1199, %v2542
    %v2545 = vunpack.c.l.s4 1983009808
    %v2546 = vunpack.c.0.s8 %v2545
    %v2547 = vperm.slane %v2541, %v2546
    %v2549 = vunpack.c.l.s4 1983009808
    %v2550 = vunpack.c.0.s8 %v2549
    %v2551 = vperm.slane %v2543, %v2550
    %v2552 = vrot.slane %v1205, 4
    %v2553 = vsel %vm216, %v2552, %v1201
    %v2554 = vrot.slane %v1201, 4
    %v2555 = vsel %vm216, %v1205, %v2554
    %v2557 = vunpack.c.l.s4 1983009808
    %v2558 = vunpack.c.0.s8 %v2557
    %v2559 = vperm.slane %v2553, %v2558
    %v2561 = vunpack.c.l.s4 1983009808
    %v2562 = vunpack.c.0.s8 %v2561
    %v2563 = vperm.slane %v2555, %v2562
    %v2564 = vrot.slane %v1207, 4
    %v2565 = vsel %vm216, %v2564, %v1203
    %v2566 = vrot.slane %v1203, 4
    %v2567 = vsel %vm216, %v1207, %v2566
    %v2569 = vunpack.c.l.s4 1983009808
    %v2570 = vunpack.c.0.s8 %v2569
    %v2571 = vperm.slane %v2565, %v2570
    %v2573 = vunpack.c.l.s4 1983009808
    %v2574 = vunpack.c.0.s8 %v2573
    %v2575 = vperm.slane %v2567, %v2574
    %v2576 = vrot.slane %v2547, 4
    %v2577 = vsel %vm216, %v2576, %v2535
    %v2578 = vrot.slane %v2535, 4
    %v2579 = vsel %vm216, %v2547, %v2578
    %v2581 = vunpack.c.l.s4 1934713408
    %v2582 = vunpack.c.0.s8 %v2581
    %v2583 = vperm.slane %v2577, %v2582
    %v2585 = vunpack.c.l.s4 1934713408
    %v2586 = vunpack.c.0.s8 %v2585
    %v2587 = vperm.slane %v2579, %v2586
    %v2588 = vrot.slane %v2551, 4
    %v2589 = vsel %vm216, %v2588, %v2539
    %v2590 = vrot.slane %v2539, 4
    %v2591 = vsel %vm216, %v2551, %v2590
    %v2593 = vunpack.c.l.s4 1934713408
    %v2594 = vunpack.c.0.s8 %v2593
    %v2595 = vperm.slane %v2589, %v2594
    %v2597 = vunpack.c.l.s4 1934713408
    %v2598 = vunpack.c.0.s8 %v2597
    %v2599 = vperm.slane %v2591, %v2598
    %v2600 = vrot.slane %v2571, 4
    %v2601 = vsel %vm216, %v2600, %v2559
    %v2602 = vrot.slane %v2559, 4
    %v2603 = vsel %vm216, %v2571, %v2602
    %v2605 = vunpack.c.l.s4 1934713408
    %v2606 = vunpack.c.0.s8 %v2605
    %v2607 = vperm.slane %v2601, %v2606
    %v2609 = vunpack.c.l.s4 1934713408
    %v2610 = vunpack.c.0.s8 %v2609
    %v2611 = vperm.slane %v2603, %v2610
    %v2612 = vrot.slane %v2575, 4
    %v2613 = vsel %vm216, %v2612, %v2563
    %v2614 = vrot.slane %v2563, 4
    %v2615 = vsel %vm216, %v2575, %v2614
    %v2617 = vunpack.c.l.s4 1934713408
    %v2618 = vunpack.c.0.s8 %v2617
    %v2619 = vperm.slane %v2613, %v2618
    %v2621 = vunpack.c.l.s4 1934713408
    %v2622 = vunpack.c.0.s8 %v2621
    %v2623 = vperm.slane %v2615, %v2622
    %v2624 = vrot.slane %v2607, 4
    %v2625 = vsel %vm216, %v2624, %v2583
    %v2626 = vrot.slane %v2583, 4
    %v2627 = vsel %vm216, %v2607, %v2626
    %v2628 = vrot.slane %v2611, 4
    %v2629 = vsel %vm216, %v2628, %v2587
    %v2630 = vrot.slane %v2587, 4
    %v2631 = vsel %vm216, %v2611, %v2630
    %v2632 = vrot.slane %v2619, 4
    %v2633 = vsel %vm216, %v2632, %v2595
    %v2634 = vrot.slane %v2595, 4
    %v2635 = vsel %vm216, %v2619, %v2634
    %v2636 = vrot.slane %v2623, 4
    %v2637 = vsel %vm216, %v2636, %v2599
    %v2638 = vrot.slane %v2599, 4
    %v2639 = vsel %vm216, %v2623, %v2638
    %v2640 = vrot.slane %v1397, 4
    %v2641 = vsel %vm216, %v2640, %v1393
    %v2642 = vrot.slane %v1393, 4
    %v2643 = vsel %vm216, %v1397, %v2642
    %v2645 = vunpack.c.l.s4 1983009808
    %v2646 = vunpack.c.0.s8 %v2645
    %v2647 = vperm.slane %v2641, %v2646
    %v2649 = vunpack.c.l.s4 1983009808
    %v2650 = vunpack.c.0.s8 %v2649
    %v2651 = vperm.slane %v2643, %v2650
    %v2652 = vrot.slane %v1399, 4
    %v2653 = vsel %vm216, %v2652, %v1395
    %v2654 = vrot.slane %v1395, 4
    %v2655 = vsel %vm216, %v1399, %v2654
    %v2657 = vunpack.c.l.s4 1983009808
    %v2658 = vunpack.c.0.s8 %v2657
    %v2659 = vperm.slane %v2653, %v2658
    %v2661 = vunpack.c.l.s4 1983009808
    %v2662 = vunpack.c.0.s8 %v2661
    %v2663 = vperm.slane %v2655, %v2662
    %v2664 = vrot.slane %v1405, 4
    %v2665 = vsel %vm216, %v2664, %v1401
    %v2666 = vrot.slane %v1401, 4
    %v2667 = vsel %vm216, %v1405, %v2666
    %v2669 = vunpack.c.l.s4 1983009808
    %v2670 = vunpack.c.0.s8 %v2669
    %v2671 = vperm.slane %v2665, %v2670
    %v2673 = vunpack.c.l.s4 1983009808
    %v2674 = vunpack.c.0.s8 %v2673
    %v2675 = vperm.slane %v2667, %v2674
    %v2676 = vrot.slane %v1407, 4
    %v2677 = vsel %vm216, %v2676, %v1403
    %v2678 = vrot.slane %v1403, 4
    %v2679 = vsel %vm216, %v1407, %v2678
    %v2681 = vunpack.c.l.s4 1983009808
    %v2682 = vunpack.c.0.s8 %v2681
    %v2683 = vperm.slane %v2677, %v2682
    %v2685 = vunpack.c.l.s4 1983009808
    %v2686 = vunpack.c.0.s8 %v2685
    %v2687 = vperm.slane %v2679, %v2686
    %v2688 = vrot.slane %v2659, 4
    %v2689 = vsel %vm216, %v2688, %v2647
    %v2690 = vrot.slane %v2647, 4
    %v2691 = vsel %vm216, %v2659, %v2690
    %v2693 = vunpack.c.l.s4 1934713408
    %v2694 = vunpack.c.0.s8 %v2693
    %v2695 = vperm.slane %v2689, %v2694
    %v2697 = vunpack.c.l.s4 1934713408
    %v2698 = vunpack.c.0.s8 %v2697
    %v2699 = vperm.slane %v2691, %v2698
    %v2700 = vrot.slane %v2663, 4
    %v2701 = vsel %vm216, %v2700, %v2651
    %v2702 = vrot.slane %v2651, 4
    %v2703 = vsel %vm216, %v2663, %v2702
    %v2705 = vunpack.c.l.s4 1934713408
    %v2706 = vunpack.c.0.s8 %v2705
    %v2707 = vperm.slane %v2701, %v2706
    %v2709 = vunpack.c.l.s4 1934713408
    %v2710 = vunpack.c.0.s8 %v2709
    %v2711 = vperm.slane %v2703, %v2710
    %v2712 = vrot.slane %v2683, 4
    %v2713 = vsel %vm216, %v2712, %v2671
    %v2714 = vrot.slane %v2671, 4
    %v2715 = vsel %vm216, %v2683, %v2714
    %v2717 = vunpack.c.l.s4 1934713408
    %v2718 = vunpack.c.0.s8 %v2717
    %v2719 = vperm.slane %v2713, %v2718
    %v2721 = vunpack.c.l.s4 1934713408
    %v2722 = vunpack.c.0.s8 %v2721
    %v2723 = vperm.slane %v2715, %v2722
    %v2724 = vrot.slane %v2687, 4
    %v2725 = vsel %vm216, %v2724, %v2675
    %v2726 = vrot.slane %v2675, 4
    %v2727 = vsel %vm216, %v2687, %v2726
    %v2729 = vunpack.c.l.s4 1934713408
    %v2730 = vunpack.c.0.s8 %v2729
    %v2731 = vperm.slane %v2725, %v2730
    %v2733 = vunpack.c.l.s4 1934713408
    %v2734 = vunpack.c.0.s8 %v2733
    %v2735 = vperm.slane %v2727, %v2734
    %v2736 = vrot.slane %v2719, 4
    %v2737 = vsel %vm216, %v2736, %v2695
    %v2738 = vrot.slane %v2695, 4
    %v2739 = vsel %vm216, %v2719, %v2738
    %v2740 = vrot.slane %v2723, 4
    %v2741 = vsel %vm216, %v2740, %v2699
    %v2742 = vrot.slane %v2699, 4
    %v2743 = vsel %vm216, %v2723, %v2742
    %v2744 = vrot.slane %v2731, 4
    %v2745 = vsel %vm216, %v2744, %v2707
    %v2746 = vrot.slane %v2707, 4
    %v2747 = vsel %vm216, %v2731, %v2746
    %v2748 = vrot.slane %v2735, 4
    %v2749 = vsel %vm216, %v2748, %v2711
    %v2750 = vrot.slane %v2711, 4
    %v2751 = vsel %vm216, %v2735, %v2750
    %v2752 = vrot.slane %v1509, 4
    %v2753 = vsel %vm216, %v2752, %v1505
    %v2754 = vrot.slane %v1505, 4
    %v2755 = vsel %vm216, %v1509, %v2754
    %v2757 = vunpack.c.l.s4 1983009808
    %v2758 = vunpack.c.0.s8 %v2757
    %v2759 = vperm.slane %v2753, %v2758
    %v2761 = vunpack.c.l.s4 1983009808
    %v2762 = vunpack.c.0.s8 %v2761
    %v2763 = vperm.slane %v2755, %v2762
    %v2764 = vrot.slane %v1511, 4
    %v2765 = vsel %vm216, %v2764, %v1507
    %v2766 = vrot.slane %v1507, 4
    %v2767 = vsel %vm216, %v1511, %v2766
    %v2769 = vunpack.c.l.s4 1983009808
    %v2770 = vunpack.c.0.s8 %v2769
    %v2771 = vperm.slane %v2765, %v2770
    %v2773 = vunpack.c.l.s4 1983009808
    %v2774 = vunpack.c.0.s8 %v2773
    %v2775 = vperm.slane %v2767, %v2774
    %v2776 = vrot.slane %v1517, 4
    %v2777 = vsel %vm216, %v2776, %v1513
    %v2778 = vrot.slane %v1513, 4
    %v2779 = vsel %vm216, %v1517, %v2778
    %v2781 = vunpack.c.l.s4 1983009808
    %v2782 = vunpack.c.0.s8 %v2781
    %v2783 = vperm.slane %v2777, %v2782
    %v2785 = vunpack.c.l.s4 1983009808
    %v2786 = vunpack.c.0.s8 %v2785
    %v2787 = vperm.slane %v2779, %v2786
    %v2788 = vrot.slane %v1519, 4
    %v2789 = vsel %vm216, %v2788, %v1515
    %v2790 = vrot.slane %v1515, 4
    %v2791 = vsel %vm216, %v1519, %v2790
    %v2793 = vunpack.c.l.s4 1983009808
    %v2794 = vunpack.c.0.s8 %v2793
    %v2795 = vperm.slane %v2789, %v2794
    %v2797 = vunpack.c.l.s4 1983009808
    %v2798 = vunpack.c.0.s8 %v2797
    %v2799 = vperm.slane %v2791, %v2798
    %v2800 = vrot.slane %v2771, 4
    %v2801 = vsel %vm216, %v2800, %v2759
    %v2802 = vrot.slane %v2759, 4
    %v2803 = vsel %vm216, %v2771, %v2802
    %v2805 = vunpack.c.l.s4 1934713408
    %v2806 = vunpack.c.0.s8 %v2805
    %v2807 = vperm.slane %v2801, %v2806
    %v2809 = vunpack.c.l.s4 1934713408
    %v2810 = vunpack.c.0.s8 %v2809
    %v2811 = vperm.slane %v2803, %v2810
    %v2812 = vrot.slane %v2775, 4
    %v2813 = vsel %vm216, %v2812, %v2763
    %v2814 = vrot.slane %v2763, 4
    %v2815 = vsel %vm216, %v2775, %v2814
    %v2817 = vunpack.c.l.s4 1934713408
    %v2818 = vunpack.c.0.s8 %v2817
    %v2819 = vperm.slane %v2813, %v2818
    %v2821 = vunpack.c.l.s4 1934713408
    %v2822 = vunpack.c.0.s8 %v2821
    %v2823 = vperm.slane %v2815, %v2822
    %v2824 = vrot.slane %v2795, 4
    %v2825 = vsel %vm216, %v2824, %v2783
    %v2826 = vrot.slane %v2783, 4
    %v2827 = vsel %vm216, %v2795, %v2826
    %v2829 = vunpack.c.l.s4 1934713408
    %v2830 = vunpack.c.0.s8 %v2829
    %v2831 = vperm.slane %v2825, %v2830
    %v2833 = vunpack.c.l.s4 1934713408
    %v2834 = vunpack.c.0.s8 %v2833
    %v2835 = vperm.slane %v2827, %v2834
    %v2836 = vrot.slane %v2799, 4
    %v2837 = vsel %vm216, %v2836, %v2787
    %v2838 = vrot.slane %v2787, 4
    %v2839 = vsel %vm216, %v2799, %v2838
    %v2841 = vunpack.c.l.s4 1934713408
    %v2842 = vunpack.c.0.s8 %v2841
    %v2843 = vperm.slane %v2837, %v2842
    %v2845 = vunpack.c.l.s4 1934713408
    %v2846 = vunpack.c.0.s8 %v2845
    %v2847 = vperm.slane %v2839, %v2846
    %v2848 = vrot.slane %v2831, 4
    %v2849 = vsel %vm216, %v2848, %v2807
    %v2850 = vrot.slane %v2807, 4
    %v2851 = vsel %vm216, %v2831, %v2850
    %v2852 = vrot.slane %v2835, 4
    %v2853 = vsel %vm216, %v2852, %v2811
    %v2854 = vrot.slane %v2811, 4
    %v2855 = vsel %vm216, %v2835, %v2854
    %v2856 = vrot.slane %v2843, 4
    %v2857 = vsel %vm216, %v2856, %v2819
    %v2858 = vrot.slane %v2819, 4
    %v2859 = vsel %vm216, %v2843, %v2858
    %v2860 = vrot.slane %v2847, 4
    %v2861 = vsel %vm216, %v2860, %v2823
    %v2862 = vrot.slane %v2823, 4
    %v2863 = vsel %vm216, %v2847, %v2862
    %v2864 = vrot.slane %v1621, 4
    %v2865 = vsel %vm216, %v2864, %v1617
    %v2866 = vrot.slane %v1617, 4
    %v2867 = vsel %vm216, %v1621, %v2866
    %v2869 = vunpack.c.l.s4 1983009808
    %v2870 = vunpack.c.0.s8 %v2869
    %v2871 = vperm.slane %v2865, %v2870
    %v2873 = vunpack.c.l.s4 1983009808
    %v2874 = vunpack.c.0.s8 %v2873
    %v2875 = vperm.slane %v2867, %v2874
    %v2876 = vrot.slane %v1623, 4
    %v2877 = vsel %vm216, %v2876, %v1619
    %v2878 = vrot.slane %v1619, 4
    %v2879 = vsel %vm216, %v1623, %v2878
    %v2881 = vunpack.c.l.s4 1983009808
    %v2882 = vunpack.c.0.s8 %v2881
    %v2883 = vperm.slane %v2877, %v2882
    %v2885 = vunpack.c.l.s4 1983009808
    %v2886 = vunpack.c.0.s8 %v2885
    %v2887 = vperm.slane %v2879, %v2886
    %v2888 = vrot.slane %v1629, 4
    %v2889 = vsel %vm216, %v2888, %v1625
    %v2890 = vrot.slane %v1625, 4
    %v2891 = vsel %vm216, %v1629, %v2890
    %v2893 = vunpack.c.l.s4 1983009808
    %v2894 = vunpack.c.0.s8 %v2893
    %v2895 = vperm.slane %v2889, %v2894
    %v2897 = vunpack.c.l.s4 1983009808
    %v2898 = vunpack.c.0.s8 %v2897
    %v2899 = vperm.slane %v2891, %v2898
    %v2900 = vrot.slane %v1631, 4
    %v2901 = vsel %vm216, %v2900, %v1627
    %v2902 = vrot.slane %v1627, 4
    %v2903 = vsel %vm216, %v1631, %v2902
    %v2905 = vunpack.c.l.s4 1983009808
    %v2906 = vunpack.c.0.s8 %v2905
    %v2907 = vperm.slane %v2901, %v2906
    %v2909 = vunpack.c.l.s4 1983009808
    %v2910 = vunpack.c.0.s8 %v2909
    %v2911 = vperm.slane %v2903, %v2910
    %v2912 = vrot.slane %v2883, 4
    %v2913 = vsel %vm216, %v2912, %v2871
    %v2914 = vrot.slane %v2871, 4
    %v2915 = vsel %vm216, %v2883, %v2914
    %v2917 = vunpack.c.l.s4 1934713408
    %v2918 = vunpack.c.0.s8 %v2917
    %v2919 = vperm.slane %v2913, %v2918
    %v2921 = vunpack.c.l.s4 1934713408
    %v2922 = vunpack.c.0.s8 %v2921
    %v2923 = vperm.slane %v2915, %v2922
    %v2924 = vrot.slane %v2887, 4
    %v2925 = vsel %vm216, %v2924, %v2875
    %v2926 = vrot.slane %v2875, 4
    %v2927 = vsel %vm216, %v2887, %v2926
    %v2929 = vunpack.c.l.s4 1934713408
    %v2930 = vunpack.c.0.s8 %v2929
    %v2931 = vperm.slane %v2925, %v2930
    %v2933 = vunpack.c.l.s4 1934713408
    %v2934 = vunpack.c.0.s8 %v2933
    %v2935 = vperm.slane %v2927, %v2934
    %v2936 = vrot.slane %v2907, 4
    %v2937 = vsel %vm216, %v2936, %v2895
    %v2938 = vrot.slane %v2895, 4
    %v2939 = vsel %vm216, %v2907, %v2938
    %v2941 = vunpack.c.l.s4 1934713408
    %v2942 = vunpack.c.0.s8 %v2941
    %v2943 = vperm.slane %v2937, %v2942
    %v2945 = vunpack.c.l.s4 1934713408
    %v2946 = vunpack.c.0.s8 %v2945
    %v2947 = vperm.slane %v2939, %v2946
    %v2948 = vrot.slane %v2911, 4
    %v2949 = vsel %vm216, %v2948, %v2899
    %v2950 = vrot.slane %v2899, 4
    %v2951 = vsel %vm216, %v2911, %v2950
    %v2953 = vunpack.c.l.s4 1934713408
    %v2954 = vunpack.c.0.s8 %v2953
    %v2955 = vperm.slane %v2949, %v2954
    %v2957 = vunpack.c.l.s4 1934713408
    %v2958 = vunpack.c.0.s8 %v2957
    %v2959 = vperm.slane %v2951, %v2958
    %v2960 = vrot.slane %v2943, 4
    %v2961 = vsel %vm216, %v2960, %v2919
    %v2962 = vrot.slane %v2919, 4
    %v2963 = vsel %vm216, %v2943, %v2962
    %v2964 = vrot.slane %v2947, 4
    %v2965 = vsel %vm216, %v2964, %v2923
    %v2966 = vrot.slane %v2923, 4
    %v2967 = vsel %vm216, %v2947, %v2966
    %v2968 = vrot.slane %v2955, 4
    %v2969 = vsel %vm216, %v2968, %v2931
    %v2970 = vrot.slane %v2931, 4
    %v2971 = vsel %vm216, %v2955, %v2970
    %v2972 = vrot.slane %v2959, 4
    %v2973 = vsel %vm216, %v2972, %v2935
    %v2974 = vrot.slane %v2935, 4
    %v2975 = vsel %vm216, %v2959, %v2974
    %v2976 = vrot.slane %v1733, 4
    %v2977 = vsel %vm216, %v2976, %v1729
    %v2978 = vrot.slane %v1729, 4
    %v2979 = vsel %vm216, %v1733, %v2978
    %v2981 = vunpack.c.l.s4 1983009808
    %v2982 = vunpack.c.0.s8 %v2981
    %v2983 = vperm.slane %v2977, %v2982
    %v2985 = vunpack.c.l.s4 1983009808
    %v2986 = vunpack.c.0.s8 %v2985
    %v2987 = vperm.slane %v2979, %v2986
    %v2988 = vrot.slane %v1735, 4
    %v2989 = vsel %vm216, %v2988, %v1731
    %v2990 = vrot.slane %v1731, 4
    %v2991 = vsel %vm216, %v1735, %v2990
    %v2993 = vunpack.c.l.s4 1983009808
    %v2994 = vunpack.c.0.s8 %v2993
    %v2995 = vperm.slane %v2989, %v2994
    %v2997 = vunpack.c.l.s4 1983009808
    %v2998 = vunpack.c.0.s8 %v2997
    %v2999 = vperm.slane %v2991, %v2998
    %v3000 = vrot.slane %v1741, 4
    %v3001 = vsel %vm216, %v3000, %v1737
    %v3002 = vrot.slane %v1737, 4
    %v3003 = vsel %vm216, %v1741, %v3002
    %v3005 = vunpack.c.l.s4 1983009808
    %v3006 = vunpack.c.0.s8 %v3005
    %v3007 = vperm.slane %v3001, %v3006
    %v3009 = vunpack.c.l.s4 1983009808
    %v3010 = vunpack.c.0.s8 %v3009
    %v3011 = vperm.slane %v3003, %v3010
    %v3012 = vrot.slane %v1743, 4
    %v3013 = vsel %vm216, %v3012, %v1739
    %v3014 = vrot.slane %v1739, 4
    %v3015 = vsel %vm216, %v1743, %v3014
    %v3017 = vunpack.c.l.s4 1983009808
    %v3018 = vunpack.c.0.s8 %v3017
    %v3019 = vperm.slane %v3013, %v3018
    %v3021 = vunpack.c.l.s4 1983009808
    %v3022 = vunpack.c.0.s8 %v3021
    %v3023 = vperm.slane %v3015, %v3022
    %v3024 = vrot.slane %v2995, 4
    %v3025 = vsel %vm216, %v3024, %v2983
    %v3026 = vrot.slane %v2983, 4
    %v3027 = vsel %vm216, %v2995, %v3026
    %v3029 = vunpack.c.l.s4 1934713408
    %v3030 = vunpack.c.0.s8 %v3029
    %v3031 = vperm.slane %v3025, %v3030
    %v3033 = vunpack.c.l.s4 1934713408
    %v3034 = vunpack.c.0.s8 %v3033
    %v3035 = vperm.slane %v3027, %v3034
    %v3036 = vrot.slane %v2999, 4
    %v3037 = vsel %vm216, %v3036, %v2987
    %v3038 = vrot.slane %v2987, 4
    %v3039 = vsel %vm216, %v2999, %v3038
    %v3041 = vunpack.c.l.s4 1934713408
    %v3042 = vunpack.c.0.s8 %v3041
    %v3043 = vperm.slane %v3037, %v3042
    %v3045 = vunpack.c.l.s4 1934713408
    %v3046 = vunpack.c.0.s8 %v3045
    %v3047 = vperm.slane %v3039, %v3046
    %v3048 = vrot.slane %v3019, 4
    %v3049 = vsel %vm216, %v3048, %v3007
    %v3050 = vrot.slane %v3007, 4
    %v3051 = vsel %vm216, %v3019, %v3050
    %v3053 = vunpack.c.l.s4 1934713408
    %v3054 = vunpack.c.0.s8 %v3053
    %v3055 = vperm.slane %v3049, %v3054
    %v3057 = vunpack.c.l.s4 1934713408
    %v3058 = vunpack.c.0.s8 %v3057
    %v3059 = vperm.slane %v3051, %v3058
    %v3060 = vrot.slane %v3023, 4
    %v3061 = vsel %vm216, %v3060, %v3011
    %v3062 = vrot.slane %v3011, 4
    %v3063 = vsel %vm216, %v3023, %v3062
    %v3065 = vunpack.c.l.s4 1934713408
    %v3066 = vunpack.c.0.s8 %v3065
    %v3067 = vperm.slane %v3061, %v3066
    %v3069 = vunpack.c.l.s4 1934713408
    %v3070 = vunpack.c.0.s8 %v3069
    %v3071 = vperm.slane %v3063, %v3070
    %v3072 = vrot.slane %v3055, 4
    %v3073 = vsel %vm216, %v3072, %v3031
    %v3074 = vrot.slane %v3031, 4
    %v3075 = vsel %vm216, %v3055, %v3074
    %v3076 = vrot.slane %v3059, 4
    %v3077 = vsel %vm216, %v3076, %v3035
    %v3078 = vrot.slane %v3035, 4
    %v3079 = vsel %vm216, %v3059, %v3078
    %v3080 = vrot.slane %v3067, 4
    %v3081 = vsel %vm216, %v3080, %v3043
    %v3082 = vrot.slane %v3043, 4
    %v3083 = vsel %vm216, %v3067, %v3082
    %v3084 = vrot.slane %v3071, 4
    %v3085 = vsel %vm216, %v3084, %v3047
    %v3086 = vrot.slane %v3047, 4
    %v3087 = vsel %vm216, %v3071, %v3086
    %vm3088 = vcmask 64512
    %v3090 = vsel %vm3088, %v1841, 0
    %v3093 = vsel %vm3088, %v1953, 0
    %v3096 = vsel %vm3088, %v2289, 0
    %v3099 = vsel %vm3088, %v2401, 0
    %3101 = vmatpush.xpose.msra.mxu0 0.0
    %3102 = vmatpush.xpose.msra.mxu0 0.0
    %3103 = vmatpush.xpose.msra.mxu0 0.0
    %3104 = vmatpush.xpose.msra.mxu0 0.0
    %3105 = vmatpush.xpose.msra.mxu0 0.0
    %3106 = vmatpush.xpose.msra.mxu0 0.0
    %3107 = vmatpush.xpose.msra.mxu0 0.0
    %3108 = vmatpush.xpose.msra.mxu0 0.0
    %3109 = vmatpush.xpose.msra.mxu0 0.0
    %3110 = vmatpush.xpose.msra.mxu0 0.0
    %3111 = vmatpush.xpose.msra.mxu0 0.0
    %3112 = vmatpush.xpose.msra.mxu0 0.0
    %3113 = vmatpush.xpose.msra.mxu0 0.0
    %3114 = vmatpush.xpose.msra.mxu0 0.0
    %3115 = vmatpush.xpose.msra.mxu0 %v3099
    %3116 = vmatpush.xpose.msra.mxu0 %v3096
    %3117 = vmatmul.f32.gmra.mxu0 %v3090
    %v3118 = vpop.f32.mrf.mxu0
    %v3119 = vadd.f32 0.0, %v3118
    %3120 = vmatmul.f32.gmra.mxu0 %v3093
    %v3121 = vpop.f32.mrf.mxu0
    %v3122 = vadd.f32 0.0, %v3121
    %3123 = vdwg.mxu0
    %v3125 = vsel %vm3088, %v1843, 0
    %v3128 = vsel %vm3088, %v1955, 0
    %v3131 = vsel %vm3088, %v2291, 0
    %v3134 = vsel %vm3088, %v2403, 0
    %3136 = vmatpush.xpose.msra.mxu0 0.0
    %3137 = vmatpush.xpose.msra.mxu0 0.0
    %3138 = vmatpush.xpose.msra.mxu0 0.0
    %3139 = vmatpush.xpose.msra.mxu0 0.0
    %3140 = vmatpush.xpose.msra.mxu0 0.0
    %3141 = vmatpush.xpose.msra.mxu0 0.0
    %3142 = vmatpush.xpose.msra.mxu0 0.0
    %3143 = vmatpush.xpose.msra.mxu0 0.0
    %3144 = vmatpush.xpose.msra.mxu0 0.0
    %3145 = vmatpush.xpose.msra.mxu0 0.0
    %3146 = vmatpush.xpose.msra.mxu0 0.0
    %3147 = vmatpush.xpose.msra.mxu0 0.0
    %3148 = vmatpush.xpose.msra.mxu0 0.0
    %3149 = vmatpush.xpose.msra.mxu0 0.0
    %3150 = vmatpush.xpose.msra.mxu0 %v3134
    %3151 = vmatpush.xpose.msra.mxu0 %v3131
    %3152 = vmatmul.f32.gmra.mxu0 %v3125
    %v3153 = vpop.f32.mrf.mxu0
    %v3154 = vadd.f32 0.0, %v3153
    %3155 = vmatmul.f32.gmra.mxu0 %v3128
    %v3156 = vpop.f32.mrf.mxu0
    %v3157 = vadd.f32 0.0, %v3156
    %3158 = vdwg.mxu0
    %v3160 = vsel %vm3088, %v1845, 0
    %v3163 = vsel %vm3088, %v1957, 0
    %v3166 = vsel %vm3088, %v2293, 0
    %v3169 = vsel %vm3088, %v2405, 0
    %3171 = vmatpush.xpose.msra.mxu0 0.0
    %3172 = vmatpush.xpose.msra.mxu0 0.0
    %3173 = vmatpush.xpose.msra.mxu0 0.0
    %3174 = vmatpush.xpose.msra.mxu0 0.0
    %3175 = vmatpush.xpose.msra.mxu0 0.0
    %3176 = vmatpush.xpose.msra.mxu0 0.0
    %3177 = vmatpush.xpose.msra.mxu0 0.0
    %3178 = vmatpush.xpose.msra.mxu0 0.0
    %3179 = vmatpush.xpose.msra.mxu0 0.0
    %3180 = vmatpush.xpose.msra.mxu0 0.0
    %3181 = vmatpush.xpose.msra.mxu0 0.0
    %3182 = vmatpush.xpose.msra.mxu0 0.0
    %3183 = vmatpush.xpose.msra.mxu0 0.0
    %3184 = vmatpush.xpose.msra.mxu0 0.0
    %3185 = vmatpush.xpose.msra.mxu0 %v3169
    %3186 = vmatpush.xpose.msra.mxu0 %v3166
    %3187 = vmatmul.f32.gmra.mxu0 %v3160
    %v3188 = vpop.f32.mrf.mxu0
    %v3189 = vadd.f32 0.0, %v3188
    %3190 = vmatmul.f32.gmra.mxu0 %v3163
    %v3191 = vpop.f32.mrf.mxu0
    %v3192 = vadd.f32 0.0, %v3191
    %3193 = vdwg.mxu0
    %v3195 = vsel %vm3088, %v1847, 0
    %v3198 = vsel %vm3088, %v1959, 0
    %v3201 = vsel %vm3088, %v2295, 0
    %v3204 = vsel %vm3088, %v2407, 0
    %3206 = vmatpush.xpose.msra.mxu0 0.0
    %3207 = vmatpush.xpose.msra.mxu0 0.0
    %3208 = vmatpush.xpose.msra.mxu0 0.0
    %3209 = vmatpush.xpose.msra.mxu0 0.0
    %3210 = vmatpush.xpose.msra.mxu0 0.0
    %3211 = vmatpush.xpose.msra.mxu0 0.0
    %3212 = vmatpush.xpose.msra.mxu0 0.0
    %3213 = vmatpush.xpose.msra.mxu0 0.0
    %3214 = vmatpush.xpose.msra.mxu0 0.0
    %3215 = vmatpush.xpose.msra.mxu0 0.0
    %3216 = vmatpush.xpose.msra.mxu0 0.0
    %3217 = vmatpush.xpose.msra.mxu0 0.0
    %3218 = vmatpush.xpose.msra.mxu0 0.0
    %3219 = vmatpush.xpose.msra.mxu0 0.0
    %3220 = vmatpush.xpose.msra.mxu0 %v3204
    %3221 = vmatpush.xpose.msra.mxu0 %v3201
    %3222 = vmatmul.f32.gmra.mxu0 %v3195
    %v3223 = vpop.f32.mrf.mxu0
    %v3224 = vadd.f32 0.0, %v3223
    %3225 = vmatmul.f32.gmra.mxu0 %v3198
    %v3226 = vpop.f32.mrf.mxu0
    %v3227 = vadd.f32 0.0, %v3226
    %3228 = vdwg.mxu0
    %v3230 = vsel %vm3088, %v1849, 0
    %v3233 = vsel %vm3088, %v1961, 0
    %v3236 = vsel %vm3088, %v2297, 0
    %v3239 = vsel %vm3088, %v2409, 0
    %3241 = vmatpush.xpose.msra.mxu0 0.0
    %3242 = vmatpush.xpose.msra.mxu0 0.0
    %3243 = vmatpush.xpose.msra.mxu0 0.0
    %3244 = vmatpush.xpose.msra.mxu0 0.0
    %3245 = vmatpush.xpose.msra.mxu0 0.0
    %3246 = vmatpush.xpose.msra.mxu0 0.0
    %3247 = vmatpush.xpose.msra.mxu0 0.0
    %3248 = vmatpush.xpose.msra.mxu0 0.0
    %3249 = vmatpush.xpose.msra.mxu0 0.0
    %3250 = vmatpush.xpose.msra.mxu0 0.0
    %3251 = vmatpush.xpose.msra.mxu0 0.0
    %3252 = vmatpush.xpose.msra.mxu0 0.0
    %3253 = vmatpush.xpose.msra.mxu0 0.0
    %3254 = vmatpush.xpose.msra.mxu0 0.0
    %3255 = vmatpush.xpose.msra.mxu0 %v3239
    %3256 = vmatpush.xpose.msra.mxu0 %v3236
    %3257 = vmatmul.f32.gmra.mxu0 %v3230
    %v3258 = vpop.f32.mrf.mxu0
    %v3259 = vadd.f32 0.0, %v3258
    %3260 = vmatmul.f32.gmra.mxu0 %v3233
    %v3261 = vpop.f32.mrf.mxu0
    %v3262 = vadd.f32 0.0, %v3261
    %3263 = vdwg.mxu0
    %v3265 = vsel %vm3088, %v1851, 0
    %v3268 = vsel %vm3088, %v1963, 0
    %v3271 = vsel %vm3088, %v2299, 0
    %v3274 = vsel %vm3088, %v2411, 0
    %3276 = vmatpush.xpose.msra.mxu0 0.0
    %3277 = vmatpush.xpose.msra.mxu0 0.0
    %3278 = vmatpush.xpose.msra.mxu0 0.0
    %3279 = vmatpush.xpose.msra.mxu0 0.0
    %3280 = vmatpush.xpose.msra.mxu0 0.0
    %3281 = vmatpush.xpose.msra.mxu0 0.0
    %3282 = vmatpush.xpose.msra.mxu0 0.0
    %3283 = vmatpush.xpose.msra.mxu0 0.0
    %3284 = vmatpush.xpose.msra.mxu0 0.0
    %3285 = vmatpush.xpose.msra.mxu0 0.0
    %3286 = vmatpush.xpose.msra.mxu0 0.0
    %3287 = vmatpush.xpose.msra.mxu0 0.0
    %3288 = vmatpush.xpose.msra.mxu0 0.0
    %3289 = vmatpush.xpose.msra.mxu0 0.0
    %3290 = vmatpush.xpose.msra.mxu0 %v3274
    %3291 = vmatpush.xpose.msra.mxu0 %v3271
    %3292 = vmatmul.f32.gmra.mxu0 %v3265
    %v3293 = vpop.f32.mrf.mxu0
    %v3294 = vadd.f32 0.0, %v3293
    %3295 = vmatmul.f32.gmra.mxu0 %v3268
    %v3296 = vpop.f32.mrf.mxu0
    %v3297 = vadd.f32 0.0, %v3296
    %3298 = vdwg.mxu0
    %v3300 = vsel %vm3088, %v1853, 0
    %v3303 = vsel %vm3088, %v1965, 0
    %v3306 = vsel %vm3088, %v2301, 0
    %v3309 = vsel %vm3088, %v2413, 0
    %3311 = vmatpush.xpose.msra.mxu0 0.0
    %3312 = vmatpush.xpose.msra.mxu0 0.0
    %3313 = vmatpush.xpose.msra.mxu0 0.0
    %3314 = vmatpush.xpose.msra.mxu0 0.0
    %3315 = vmatpush.xpose.msra.mxu0 0.0
    %3316 = vmatpush.xpose.msra.mxu0 0.0
    %3317 = vmatpush.xpose.msra.mxu0 0.0
    %3318 = vmatpush.xpose.msra.mxu0 0.0
    %3319 = vmatpush.xpose.msra.mxu0 0.0
    %3320 = vmatpush.xpose.msra.mxu0 0.0
    %3321 = vmatpush.xpose.msra.mxu0 0.0
    %3322 = vmatpush.xpose.msra.mxu0 0.0
    %3323 = vmatpush.xpose.msra.mxu0 0.0
    %3324 = vmatpush.xpose.msra.mxu0 0.0
    %3325 = vmatpush.xpose.msra.mxu0 %v3309
    %3326 = vmatpush.xpose.msra.mxu0 %v3306
    %3327 = vmatmul.f32.gmra.mxu0 %v3300
    %v3328 = vpop.f32.mrf.mxu0
    %v3329 = vadd.f32 0.0, %v3328
    %3330 = vmatmul.f32.gmra.mxu0 %v3303
    %v3331 = vpop.f32.mrf.mxu0
    %v3332 = vadd.f32 0.0, %v3331
    %3333 = vdwg.mxu0
    %v3335 = vsel %vm3088, %v1855, 0
    %v3338 = vsel %vm3088, %v1967, 0
    %v3341 = vsel %vm3088, %v2303, 0
    %v3344 = vsel %vm3088, %v2415, 0
    %3346 = vmatpush.xpose.msra.mxu0 0.0
    %3347 = vmatpush.xpose.msra.mxu0 0.0
    %3348 = vmatpush.xpose.msra.mxu0 0.0
    %3349 = vmatpush.xpose.msra.mxu0 0.0
    %3350 = vmatpush.xpose.msra.mxu0 0.0
    %3351 = vmatpush.xpose.msra.mxu0 0.0
    %3352 = vmatpush.xpose.msra.mxu0 0.0
    %3353 = vmatpush.xpose.msra.mxu0 0.0
    %3354 = vmatpush.xpose.msra.mxu0 0.0
    %3355 = vmatpush.xpose.msra.mxu0 0.0
    %3356 = vmatpush.xpose.msra.mxu0 0.0
    %3357 = vmatpush.xpose.msra.mxu0 0.0
    %3358 = vmatpush.xpose.msra.mxu0 0.0
    %3359 = vmatpush.xpose.msra.mxu0 0.0
    %3360 = vmatpush.xpose.msra.mxu0 %v3344
    %3361 = vmatpush.xpose.msra.mxu0 %v3341
    %3362 = vmatmul.f32.gmra.mxu0 %v3335
    %v3363 = vpop.f32.mrf.mxu0
    %v3364 = vadd.f32 0.0, %v3363
    %3365 = vmatmul.f32.gmra.mxu0 %v3338
    %v3366 = vpop.f32.mrf.mxu0
    %v3367 = vadd.f32 0.0, %v3366
    %3368 = vdwg.mxu0
    %v3370 = vsel %vm3088, %v2065, 0
    %v3373 = vsel %vm3088, %v2177, 0
    %v3376 = vsel %vm3088, %v2513, 0
    %v3379 = vsel %vm3088, %v2625, 0
    %3381 = vmatpush.xpose.msra.mxu0 0.0
    %3382 = vmatpush.xpose.msra.mxu0 0.0
    %3383 = vmatpush.xpose.msra.mxu0 0.0
    %3384 = vmatpush.xpose.msra.mxu0 0.0
    %3385 = vmatpush.xpose.msra.mxu0 0.0
    %3386 = vmatpush.xpose.msra.mxu0 0.0
    %3387 = vmatpush.xpose.msra.mxu0 0.0
    %3388 = vmatpush.xpose.msra.mxu0 0.0
    %3389 = vmatpush.xpose.msra.mxu0 0.0
    %3390 = vmatpush.xpose.msra.mxu0 0.0
    %3391 = vmatpush.xpose.msra.mxu0 0.0
    %3392 = vmatpush.xpose.msra.mxu0 0.0
    %3393 = vmatpush.xpose.msra.mxu0 0.0
    %3394 = vmatpush.xpose.msra.mxu0 0.0
    %3395 = vmatpush.xpose.msra.mxu0 %v3379
    %3396 = vmatpush.xpose.msra.mxu0 %v3376
    %3397 = vmatmul.f32.gmra.mxu0 %v3370
    %v3398 = vpop.f32.mrf.mxu0
    %v3399 = vadd.f32 0.0, %v3398
    %3400 = vmatmul.f32.gmra.mxu0 %v3373
    %v3401 = vpop.f32.mrf.mxu0
    %v3402 = vadd.f32 0.0, %v3401
    %3403 = vdwg.mxu0
    %v3405 = vsel %vm3088, %v2067, 0
    %v3408 = vsel %vm3088, %v2179, 0
    %v3411 = vsel %vm3088, %v2515, 0
    %v3414 = vsel %vm3088, %v2627, 0
    %3416 = vmatpush.xpose.msra.mxu0 0.0
    %3417 = vmatpush.xpose.msra.mxu0 0.0
    %3418 = vmatpush.xpose.msra.mxu0 0.0
    %3419 = vmatpush.xpose.msra.mxu0 0.0
    %3420 = vmatpush.xpose.msra.mxu0 0.0
    %3421 = vmatpush.xpose.msra.mxu0 0.0
    %3422 = vmatpush.xpose.msra.mxu0 0.0
    %3423 = vmatpush.xpose.msra.mxu0 0.0
    %3424 = vmatpush.xpose.msra.mxu0 0.0
    %3425 = vmatpush.xpose.msra.mxu0 0.0
    %3426 = vmatpush.xpose.msra.mxu0 0.0
    %3427 = vmatpush.xpose.msra.mxu0 0.0
    %3428 = vmatpush.xpose.msra.mxu0 0.0
    %3429 = vmatpush.xpose.msra.mxu0 0.0
    %3430 = vmatpush.xpose.msra.mxu0 %v3414
    %3431 = vmatpush.xpose.msra.mxu0 %v3411
    %3432 = vmatmul.f32.gmra.mxu0 %v3405
    %v3433 = vpop.f32.mrf.mxu0
    %v3434 = vadd.f32 0.0, %v3433
    %3435 = vmatmul.f32.gmra.mxu0 %v3408
    %v3436 = vpop.f32.mrf.mxu0
    %v3437 = vadd.f32 0.0, %v3436
    %3438 = vdwg.mxu0
    %v3440 = vsel %vm3088, %v2069, 0
    %v3443 = vsel %vm3088, %v2181, 0
    %v3446 = vsel %vm3088, %v2517, 0
    %v3449 = vsel %vm3088, %v2629, 0
    %3451 = vmatpush.xpose.msra.mxu0 0.0
    %3452 = vmatpush.xpose.msra.mxu0 0.0
    %3453 = vmatpush.xpose.msra.mxu0 0.0
    %3454 = vmatpush.xpose.msra.mxu0 0.0
    %3455 = vmatpush.xpose.msra.mxu0 0.0
    %3456 = vmatpush.xpose.msra.mxu0 0.0
    %3457 = vmatpush.xpose.msra.mxu0 0.0
    %3458 = vmatpush.xpose.msra.mxu0 0.0
    %3459 = vmatpush.xpose.msra.mxu0 0.0
    %3460 = vmatpush.xpose.msra.mxu0 0.0
    %3461 = vmatpush.xpose.msra.mxu0 0.0
    %3462 = vmatpush.xpose.msra.mxu0 0.0
    %3463 = vmatpush.xpose.msra.mxu0 0.0
    %3464 = vmatpush.xpose.msra.mxu0 0.0
    %3465 = vmatpush.xpose.msra.mxu0 %v3449
    %3466 = vmatpush.xpose.msra.mxu0 %v3446
    %3467 = vmatmul.f32.gmra.mxu0 %v3440
    %v3468 = vpop.f32.mrf.mxu0
    %v3469 = vadd.f32 0.0, %v3468
    %3470 = vmatmul.f32.gmra.mxu0 %v3443
    %v3471 = vpop.f32.mrf.mxu0
    %v3472 = vadd.f32 0.0, %v3471
    %3473 = vdwg.mxu0
    %v3475 = vsel %vm3088, %v2071, 0
    %v3478 = vsel %vm3088, %v2183, 0
    %v3481 = vsel %vm3088, %v2519, 0
    %v3484 = vsel %vm3088, %v2631, 0
    %3486 = vmatpush.xpose.msra.mxu0 0.0
    %3487 = vmatpush.xpose.msra.mxu0 0.0
    %3488 = vmatpush.xpose.msra.mxu0 0.0
    %3489 = vmatpush.xpose.msra.mxu0 0.0
    %3490 = vmatpush.xpose.msra.mxu0 0.0
    %3491 = vmatpush.xpose.msra.mxu0 0.0
    %3492 = vmatpush.xpose.msra.mxu0 0.0
    %3493 = vmatpush.xpose.msra.mxu0 0.0
    %3494 = vmatpush.xpose.msra.mxu0 0.0
    %3495 = vmatpush.xpose.msra.mxu0 0.0
    %3496 = vmatpush.xpose.msra.mxu0 0.0
    %3497 = vmatpush.xpose.msra.mxu0 0.0
    %3498 = vmatpush.xpose.msra.mxu0 0.0
    %3499 = vmatpush.xpose.msra.mxu0 0.0
    %3500 = vmatpush.xpose.msra.mxu0 %v3484
    %3501 = vmatpush.xpose.msra.mxu0 %v3481
    %3502 = vmatmul.f32.gmra.mxu0 %v3475
    %v3503 = vpop.f32.mrf.mxu0
    %v3504 = vadd.f32 0.0, %v3503
    %3505 = vmatmul.f32.gmra.mxu0 %v3478
    %v3506 = vpop.f32.mrf.mxu0
    %v3507 = vadd.f32 0.0, %v3506
    %3508 = vdwg.mxu0
    %v3510 = vsel %vm3088, %v2073, 0
    %v3513 = vsel %vm3088, %v2185, 0
    %v3516 = vsel %vm3088, %v2521, 0
    %v3519 = vsel %vm3088, %v2633, 0
    %3521 = vmatpush.xpose.msra.mxu0 0.0
    %3522 = vmatpush.xpose.msra.mxu0 0.0
    %3523 = vmatpush.xpose.msra.mxu0 0.0
    %3524 = vmatpush.xpose.msra.mxu0 0.0
    %3525 = vmatpush.xpose.msra.mxu0 0.0
    %3526 = vmatpush.xpose.msra.mxu0 0.0
    %3527 = vmatpush.xpose.msra.mxu0 0.0
    %3528 = vmatpush.xpose.msra.mxu0 0.0
    %3529 = vmatpush.xpose.msra.mxu0 0.0
    %3530 = vmatpush.xpose.msra.mxu0 0.0
    %3531 = vmatpush.xpose.msra.mxu0 0.0
    %3532 = vmatpush.xpose.msra.mxu0 0.0
    %3533 = vmatpush.xpose.msra.mxu0 0.0
    %3534 = vmatpush.xpose.msra.mxu0 0.0
    %3535 = vmatpush.xpose.msra.mxu0 %v3519
    %3536 = vmatpush.xpose.msra.mxu0 %v3516
    %3537 = vmatmul.f32.gmra.mxu0 %v3510
    %v3538 = vpop.f32.mrf.mxu0
    %v3539 = vadd.f32 0.0, %v3538
    %3540 = vmatmul.f32.gmra.mxu0 %v3513
    %v3541 = vpop.f32.mrf.mxu0
    %v3542 = vadd.f32 0.0, %v3541
    %3543 = vdwg.mxu0
    %v3545 = vsel %vm3088, %v2075, 0
    %v3548 = vsel %vm3088, %v2187, 0
    %v3551 = vsel %vm3088, %v2523, 0
    %v3554 = vsel %vm3088, %v2635, 0
    %3556 = vmatpush.xpose.msra.mxu0 0.0
    %3557 = vmatpush.xpose.msra.mxu0 0.0
    %3558 = vmatpush.xpose.msra.mxu0 0.0
    %3559 = vmatpush.xpose.msra.mxu0 0.0
    %3560 = vmatpush.xpose.msra.mxu0 0.0
    %3561 = vmatpush.xpose.msra.mxu0 0.0
    %3562 = vmatpush.xpose.msra.mxu0 0.0
    %3563 = vmatpush.xpose.msra.mxu0 0.0
    %3564 = vmatpush.xpose.msra.mxu0 0.0
    %3565 = vmatpush.xpose.msra.mxu0 0.0
    %3566 = vmatpush.xpose.msra.mxu0 0.0
    %3567 = vmatpush.xpose.msra.mxu0 0.0
    %3568 = vmatpush.xpose.msra.mxu0 0.0
    %3569 = vmatpush.xpose.msra.mxu0 0.0
    %3570 = vmatpush.xpose.msra.mxu0 %v3554
    %3571 = vmatpush.xpose.msra.mxu0 %v3551
    %3572 = vmatmul.f32.gmra.mxu0 %v3545
    %v3573 = vpop.f32.mrf.mxu0
    %v3574 = vadd.f32 0.0, %v3573
    %3575 = vmatmul.f32.gmra.mxu0 %v3548
    %v3576 = vpop.f32.mrf.mxu0
    %v3577 = vadd.f32 0.0, %v3576
    %3578 = vdwg.mxu0
    %v3580 = vsel %vm3088, %v2077, 0
    %v3583 = vsel %vm3088, %v2189, 0
    %v3586 = vsel %vm3088, %v2525, 0
    %v3589 = vsel %vm3088, %v2637, 0
    %3591 = vmatpush.xpose.msra.mxu0 0.0
    %3592 = vmatpush.xpose.msra.mxu0 0.0
    %3593 = vmatpush.xpose.msra.mxu0 0.0
    %3594 = vmatpush.xpose.msra.mxu0 0.0
    %3595 = vmatpush.xpose.msra.mxu0 0.0
    %3596 = vmatpush.xpose.msra.mxu0 0.0
    %3597 = vmatpush.xpose.msra.mxu0 0.0
    %3598 = vmatpush.xpose.msra.mxu0 0.0
    %3599 = vmatpush.xpose.msra.mxu0 0.0
    %3600 = vmatpush.xpose.msra.mxu0 0.0
    %3601 = vmatpush.xpose.msra.mxu0 0.0
    %3602 = vmatpush.xpose.msra.mxu0 0.0
    %3603 = vmatpush.xpose.msra.mxu0 0.0
    %3604 = vmatpush.xpose.msra.mxu0 0.0
    %3605 = vmatpush.xpose.msra.mxu0 %v3589
    %3606 = vmatpush.xpose.msra.mxu0 %v3586
    %3607 = vmatmul.f32.gmra.mxu0 %v3580
    %v3608 = vpop.f32.mrf.mxu0
    %v3609 = vadd.f32 0.0, %v3608
    %3610 = vmatmul.f32.gmra.mxu0 %v3583
    %v3611 = vpop.f32.mrf.mxu0
    %v3612 = vadd.f32 0.0, %v3611
    %3613 = vdwg.mxu0
    %v3615 = vsel %vm3088, %v2079, 0
    %v3618 = vsel %vm3088, %v2191, 0
    %v3621 = vsel %vm3088, %v2527, 0
    %v3624 = vsel %vm3088, %v2639, 0
    %3626 = vmatpush.xpose.msra.mxu0 0.0
    %3627 = vmatpush.xpose.msra.mxu0 0.0
    %3628 = vmatpush.xpose.msra.mxu0 0.0
    %3629 = vmatpush.xpose.msra.mxu0 0.0
    %3630 = vmatpush.xpose.msra.mxu0 0.0
    %3631 = vmatpush.xpose.msra.mxu0 0.0
    %3632 = vmatpush.xpose.msra.mxu0 0.0
    %3633 = vmatpush.xpose.msra.mxu0 0.0
    %3634 = vmatpush.xpose.msra.mxu0 0.0
    %3635 = vmatpush.xpose.msra.mxu0 0.0
    %3636 = vmatpush.xpose.msra.mxu0 0.0
    %3637 = vmatpush.xpose.msra.mxu0 0.0
    %3638 = vmatpush.xpose.msra.mxu0 0.0
    %3639 = vmatpush.xpose.msra.mxu0 0.0
    %3640 = vmatpush.xpose.msra.mxu0 %v3624
    %3641 = vmatpush.xpose.msra.mxu0 %v3621
    %3642 = vmatmul.f32.gmra.mxu0 %v3615
    %v3643 = vpop.f32.mrf.mxu0
    %v3644 = vadd.f32 0.0, %v3643
    %3645 = vmatmul.f32.gmra.mxu0 %v3618
    %v3646 = vpop.f32.mrf.mxu0
    %v3647 = vadd.f32 0.0, %v3646
    %3648 = vdwg.mxu0
    %vm3649 = vcmask 130048
    %v3650 = vsel %vm3649, %v3119, -inf
    %3651 = vmax.xlane.f32.xlu0 %v3650
    %v3652 = vpop.xlane.xlu0 %3651
    %v3653 = vsel %vm3649, %v3122, -inf
    %3654 = vmax.xlane.f32.xlu0 %v3653
    %v3655 = vpop.xlane.xlu0 %3654
    %v3656 = vsel %vm3649, %v3154, -inf
    %3657 = vmax.xlane.f32.xlu0 %v3656
    %v3658 = vpop.xlane.xlu0 %3657
    %v3659 = vsel %vm3649, %v3157, -inf
    %3660 = vmax.xlane.f32.xlu0 %v3659
    %v3661 = vpop.xlane.xlu0 %3660
    %v3662 = vsel %vm3649, %v3189, -inf
    %3663 = vmax.xlane.f32.xlu0 %v3662
    %v3664 = vpop.xlane.xlu0 %3663
    %v3665 = vsel %vm3649, %v3192, -inf
    %3666 = vmax.xlane.f32.xlu0 %v3665
    %v3667 = vpop.xlane.xlu0 %3666
    %v3668 = vsel %vm3649, %v3224, -inf
    %3669 = vmax.xlane.f32.xlu0 %v3668
    %v3670 = vpop.xlane.xlu0 %3669
    %v3671 = vsel %vm3649, %v3227, -inf
    %3672 = vmax.xlane.f32.xlu0 %v3671
    %v3673 = vpop.xlane.xlu0 %3672
    %v3674 = vsel %vm3649, %v3259, -inf
    %3675 = vmax.xlane.f32.xlu0 %v3674
    %v3676 = vpop.xlane.xlu0 %3675
    %v3677 = vsel %vm3649, %v3262, -inf
    %3678 = vmax.xlane.f32.xlu0 %v3677
    %v3679 = vpop.xlane.xlu0 %3678
    %v3680 = vsel %vm3649, %v3294, -inf
    %3681 = vmax.xlane.f32.xlu0 %v3680
    %v3682 = vpop.xlane.xlu0 %3681
    %v3683 = vsel %vm3649, %v3297, -inf
    %3684 = vmax.xlane.f32.xlu0 %v3683
    %v3685 = vpop.xlane.xlu0 %3684
    %v3686 = vsel %vm3649, %v3329, -inf
    %3687 = vmax.xlane.f32.xlu0 %v3686
    %v3688 = vpop.xlane.xlu0 %3687
    %v3689 = vsel %vm3649, %v3332, -inf
    %3690 = vmax.xlane.f32.xlu0 %v3689
    %v3691 = vpop.xlane.xlu0 %3690
    %v3692 = vsel %vm3649, %v3364, -inf
    %3693 = vmax.xlane.f32.xlu0 %v3692
    %v3694 = vpop.xlane.xlu0 %3693
    %v3695 = vsel %vm3649, %v3367, -inf
    %3696 = vmax.xlane.f32.xlu0 %v3695
    %v3697 = vpop.xlane.xlu0 %3696
    %v3698 = vsel %vm3649, %v3399, -inf
    %3699 = vmax.xlane.f32.xlu0 %v3698
    %v3700 = vpop.xlane.xlu0 %3699
    %v3701 = vsel %vm3649, %v3402, -inf
    %3702 = vmax.xlane.f32.xlu0 %v3701
    %v3703 = vpop.xlane.xlu0 %3702
    %v3704 = vsel %vm3649, %v3434, -inf
    %3705 = vmax.xlane.f32.xlu0 %v3704
    %v3706 = vpop.xlane.xlu0 %3705
    %v3707 = vsel %vm3649, %v3437, -inf
    %3708 = vmax.xlane.f32.xlu0 %v3707
    %v3709 = vpop.xlane.xlu0 %3708
    %v3710 = vsel %vm3649, %v3469, -inf
    %3711 = vmax.xlane.f32.xlu0 %v3710
    %v3712 = vpop.xlane.xlu0 %3711
    %v3713 = vsel %vm3649, %v3472, -inf
    %3714 = vmax.xlane.f32.xlu0 %v3713
    %v3715 = vpop.xlane.xlu0 %3714
    %v3716 = vsel %vm3649, %v3504, -inf
    %3717 = vmax.xlane.f32.xlu0 %v3716
    %v3718 = vpop.xlane.xlu0 %3717
    %v3719 = vsel %vm3649, %v3507, -inf
    %3720 = vmax.xlane.f32.xlu0 %v3719
    %v3721 = vpop.xlane.xlu0 %3720
    %v3722 = vsel %vm3649, %v3539, -inf
    %3723 = vmax.xlane.f32.xlu0 %v3722
    %v3724 = vpop.xlane.xlu0 %3723
    %v3725 = vsel %vm3649, %v3542, -inf
    %3726 = vmax.xlane.f32.xlu0 %v3725
    %v3727 = vpop.xlane.xlu0 %3726
    %v3728 = vsel %vm3649, %v3574, -inf
    %3729 = vmax.xlane.f32.xlu0 %v3728
    %v3730 = vpop.xlane.xlu0 %3729
    %v3731 = vsel %vm3649, %v3577, -inf
    %3732 = vmax.xlane.f32.xlu0 %v3731
    %v3733 = vpop.xlane.xlu0 %3732
    %v3734 = vsel %vm3649, %v3609, -inf
    %3735 = vmax.xlane.f32.xlu0 %v3734
    %v3736 = vpop.xlane.xlu0 %3735
    %v3737 = vsel %vm3649, %v3612, -inf
    %3738 = vmax.xlane.f32.xlu0 %v3737
    %v3739 = vpop.xlane.xlu0 %3738
    %v3740 = vsel %vm3649, %v3644, -inf
    %3741 = vmax.xlane.f32.xlu0 %v3740
    %v3742 = vpop.xlane.xlu0 %3741
    %v3743 = vsel %vm3649, %v3647, -inf
    %3744 = vmax.xlane.f32.xlu0 %v3743
    %v3745 = vpop.xlane.xlu0 %3744
    %v3746 = vsub.f32 %v3119, %v3652
    %v3747 = vsub.f32 %v3122, %v3655
    %v3748 = vsub.f32 %v3154, %v3658
    %v3749 = vsub.f32 %v3157, %v3661
    %v3750 = vsub.f32 %v3189, %v3664
    %v3751 = vsub.f32 %v3192, %v3667
    %v3752 = vsub.f32 %v3224, %v3670
    %v3753 = vsub.f32 %v3227, %v3673
    %v3754 = vsub.f32 %v3259, %v3676
    %v3755 = vsub.f32 %v3262, %v3679
    %v3756 = vsub.f32 %v3294, %v3682
    %v3757 = vsub.f32 %v3297, %v3685
    %v3758 = vsub.f32 %v3329, %v3688
    %v3759 = vsub.f32 %v3332, %v3691
    %v3760 = vsub.f32 %v3364, %v3694
    %v3761 = vsub.f32 %v3367, %v3697
    %v3762 = vsub.f32 %v3399, %v3700
    %v3763 = vsub.f32 %v3402, %v3703
    %v3764 = vsub.f32 %v3434, %v3706
    %v3765 = vsub.f32 %v3437, %v3709
    %v3766 = vsub.f32 %v3469, %v3712
    %v3767 = vsub.f32 %v3472, %v3715
    %v3768 = vsub.f32 %v3504, %v3718
    %v3769 = vsub.f32 %v3507, %v3721
    %v3770 = vsub.f32 %v3539, %v3724
    %v3771 = vsub.f32 %v3542, %v3727
    %v3772 = vsub.f32 %v3574, %v3730
    %v3773 = vsub.f32 %v3577, %v3733
    %v3774 = vsub.f32 %v3609, %v3736
    %v3775 = vsub.f32 %v3612, %v3739
    %v3776 = vsub.f32 %v3644, %v3742
    %v3777 = vsub.f32 %v3647, %v3745
    %v3778 = vmul.f32 %v3746, 1.442695
    %v3779 = vpow.pop %v3778
    %v3780 = vmul.f32 %v3747, 1.442695
    %v3781 = vpow.pop %v3780
    %v3782 = vmul.f32 %v3748, 1.442695
    %v3783 = vpow.pop %v3782
    %v3784 = vmul.f32 %v3749, 1.442695
    %v3785 = vpow.pop %v3784
    %v3786 = vmul.f32 %v3750, 1.442695
    %v3787 = vpow.pop %v3786
    %v3788 = vmul.f32 %v3751, 1.442695
    %v3789 = vpow.pop %v3788
    %v3790 = vmul.f32 %v3752, 1.442695
    %v3791 = vpow.pop %v3790
    %v3792 = vmul.f32 %v3753, 1.442695
    %v3793 = vpow.pop %v3792
    %v3794 = vmul.f32 %v3754, 1.442695
    %v3795 = vpow.pop %v3794
    %v3796 = vmul.f32 %v3755, 1.442695
    %v3797 = vpow.pop %v3796
    %v3798 = vmul.f32 %v3756, 1.442695
    %v3799 = vpow.pop %v3798
    %v3800 = vmul.f32 %v3757, 1.442695
    %v3801 = vpow.pop %v3800
    %v3802 = vmul.f32 %v3758, 1.442695
    %v3803 = vpow.pop %v3802
    %v3804 = vmul.f32 %v3759, 1.442695
    %v3805 = vpow.pop %v3804
    %v3806 = vmul.f32 %v3760, 1.442695
    %v3807 = vpow.pop %v3806
    %v3808 = vmul.f32 %v3761, 1.442695
    %v3809 = vpow.pop %v3808
    %v3810 = vmul.f32 %v3762, 1.442695
    %v3811 = vpow.pop %v3810
    %v3812 = vmul.f32 %v3763, 1.442695
    %v3813 = vpow.pop %v3812
    %v3814 = vmul.f32 %v3764, 1.442695
    %v3815 = vpow.pop %v3814
    %v3816 = vmul.f32 %v3765, 1.442695
    %v3817 = vpow.pop %v3816
    %v3818 = vmul.f32 %v3766, 1.442695
    %v3819 = vpow.pop %v3818
    %v3820 = vmul.f32 %v3767, 1.442695
    %v3821 = vpow.pop %v3820
    %v3822 = vmul.f32 %v3768, 1.442695
    %v3823 = vpow.pop %v3822
    %v3824 = vmul.f32 %v3769, 1.442695
    %v3825 = vpow.pop %v3824
    %v3826 = vmul.f32 %v3770, 1.442695
    %v3827 = vpow.pop %v3826
    %v3828 = vmul.f32 %v3771, 1.442695
    %v3829 = vpow.pop %v3828
    %v3830 = vmul.f32 %v3772, 1.442695
    %v3831 = vpow.pop %v3830
    %v3832 = vmul.f32 %v3773, 1.442695
    %v3833 = vpow.pop %v3832
    %v3834 = vmul.f32 %v3774, 1.442695
    %v3835 = vpow.pop %v3834
    %v3836 = vmul.f32 %v3775, 1.442695
    %v3837 = vpow.pop %v3836
    %v3838 = vmul.f32 %v3776, 1.442695
    %v3839 = vpow.pop %v3838
    %v3840 = vmul.f32 %v3777, 1.442695
    %v3841 = vpow.pop %v3840
    %v3842 = vsel %vm3649, %v3779, 0.0
    %3843 = vadd.xlane.f32.xlu0 %v3842
    %v3844 = vpop.xlane.xlu0 %3843
    %v3845 = vsel %vm3649, %v3781, 0.0
    %3846 = vadd.xlane.f32.xlu0 %v3845
    %v3847 = vpop.xlane.xlu0 %3846
    %v3848 = vsel %vm3649, %v3783, 0.0
    %3849 = vadd.xlane.f32.xlu0 %v3848
    %v3850 = vpop.xlane.xlu0 %3849
    %v3851 = vsel %vm3649, %v3785, 0.0
    %3852 = vadd.xlane.f32.xlu0 %v3851
    %v3853 = vpop.xlane.xlu0 %3852
    %v3854 = vsel %vm3649, %v3787, 0.0
    %3855 = vadd.xlane.f32.xlu0 %v3854
    %v3856 = vpop.xlane.xlu0 %3855
    %v3857 = vsel %vm3649, %v3789, 0.0
    %3858 = vadd.xlane.f32.xlu0 %v3857
    %v3859 = vpop.xlane.xlu0 %3858
    %v3860 = vsel %vm3649, %v3791, 0.0
    %3861 = vadd.xlane.f32.xlu0 %v3860
    %v3862 = vpop.xlane.xlu0 %3861
    %v3863 = vsel %vm3649, %v3793, 0.0
    %3864 = vadd.xlane.f32.xlu0 %v3863
    %v3865 = vpop.xlane.xlu0 %3864
    %v3866 = vsel %vm3649, %v3795, 0.0
    %3867 = vadd.xlane.f32.xlu0 %v3866
    %v3868 = vpop.xlane.xlu0 %3867
    %v3869 = vsel %vm3649, %v3797, 0.0
    %3870 = vadd.xlane.f32.xlu0 %v3869
    %v3871 = vpop.xlane.xlu0 %3870
    %v3872 = vsel %vm3649, %v3799, 0.0
    %3873 = vadd.xlane.f32.xlu0 %v3872
    %v3874 = vpop.xlane.xlu0 %3873
    %v3875 = vsel %vm3649, %v3801, 0.0
    %3876 = vadd.xlane.f32.xlu0 %v3875
    %v3877 = vpop.xlane.xlu0 %3876
    %v3878 = vsel %vm3649, %v3803, 0.0
    %3879 = vadd.xlane.f32.xlu0 %v3878
    %v3880 = vpop.xlane.xlu0 %3879
    %v3881 = vsel %vm3649, %v3805, 0.0
    %3882 = vadd.xlane.f32.xlu0 %v3881
    %v3883 = vpop.xlane.xlu0 %3882
    %v3884 = vsel %vm3649, %v3807, 0.0
    %3885 = vadd.xlane.f32.xlu0 %v3884
    %v3886 = vpop.xlane.xlu0 %3885
    %v3887 = vsel %vm3649, %v3809, 0.0
    %3888 = vadd.xlane.f32.xlu0 %v3887
    %v3889 = vpop.xlane.xlu0 %3888
    %v3890 = vsel %vm3649, %v3811, 0.0
    %3891 = vadd.xlane.f32.xlu0 %v3890
    %v3892 = vpop.xlane.xlu0 %3891
    %v3893 = vsel %vm3649, %v3813, 0.0
    %3894 = vadd.xlane.f32.xlu0 %v3893
    %v3895 = vpop.xlane.xlu0 %3894
    %v3896 = vsel %vm3649, %v3815, 0.0
    %3897 = vadd.xlane.f32.xlu0 %v3896
    %v3898 = vpop.xlane.xlu0 %3897
    %v3899 = vsel %vm3649, %v3817, 0.0
    %3900 = vadd.xlane.f32.xlu0 %v3899
    %v3901 = vpop.xlane.xlu0 %3900
    %v3902 = vsel %vm3649, %v3819, 0.0
    %3903 = vadd.xlane.f32.xlu0 %v3902
    %v3904 = vpop.xlane.xlu0 %3903
    %v3905 = vsel %vm3649, %v3821, 0.0
    %3906 = vadd.xlane.f32.xlu0 %v3905
    %v3907 = vpop.xlane.xlu0 %3906
    %v3908 = vsel %vm3649, %v3823, 0.0
    %3909 = vadd.xlane.f32.xlu0 %v3908
    %v3910 = vpop.xlane.xlu0 %3909
    %v3911 = vsel %vm3649, %v3825, 0.0
    %3912 = vadd.xlane.f32.xlu0 %v3911
    %v3913 = vpop.xlane.xlu0 %3912
    %v3914 = vsel %vm3649, %v3827, 0.0
    %3915 = vadd.xlane.f32.xlu0 %v3914
    %v3916 = vpop.xlane.xlu0 %3915
    %v3917 = vsel %vm3649, %v3829, 0.0
    %3918 = vadd.xlane.f32.xlu0 %v3917
    %v3919 = vpop.xlane.xlu0 %3918
    %v3920 = vsel %vm3649, %v3831, 0.0
    %3921 = vadd.xlane.f32.xlu0 %v3920
    %v3922 = vpop.xlane.xlu0 %3921
    %v3923 = vsel %vm3649, %v3833, 0.0
    %3924 = vadd.xlane.f32.xlu0 %v3923
    %v3925 = vpop.xlane.xlu0 %3924
    %v3926 = vsel %vm3649, %v3835, 0.0
    %3927 = vadd.xlane.f32.xlu0 %v3926
    %v3928 = vpop.xlane.xlu0 %3927
    %v3929 = vsel %vm3649, %v3837, 0.0
    %3930 = vadd.xlane.f32.xlu0 %v3929
    %v3931 = vpop.xlane.xlu0 %3930
    %v3932 = vsel %vm3649, %v3839, 0.0
    %3933 = vadd.xlane.f32.xlu0 %v3932
    %v3934 = vpop.xlane.xlu0 %3933
    %v3935 = vsel %vm3649, %v3841, 0.0
    %3936 = vadd.xlane.f32.xlu0 %v3935
    %v3937 = vpop.xlane.xlu0 %3936
    %v3938 = vrcp.pop %v3844
    %v3939 = vmul.f32 %v3844, %v3938
    %v3940 = vsub.f32 1.0, %v3939
    %v3941 = vmul.f32 %v3938, %v3940
    %v3942 = vadd.f32 %v3938, %v3941
    %vm3943 = vweird.f32 %v3844
    %vm3944 = vweird.f32 %v3938
    %vm3945 = vmor %vm3943, %vm3944
    %v3946 = vsel %vm3945, %v3938, %v3942
    %v3947 = vand.u32 2147483647, %v3844
    %vm3948 = vcmp.eq.f32.partialorder %v3947, 8.507059e+37
    %v3949 = vand.u32 %v3844, 2147483648
    %v3950 = vor.u32 1.1754944e-38, %v3949
    %v3951 = vsel %vm3948, %v3950, %v3946
    %v3952 = vmul.f32 %v3779, %v3951
    %v3953 = vrcp.pop %v3847
    %v3954 = vmul.f32 %v3847, %v3953
    %v3955 = vsub.f32 1.0, %v3954
    %v3956 = vmul.f32 %v3953, %v3955
    %v3957 = vadd.f32 %v3953, %v3956
    %vm3958 = vweird.f32 %v3847
    %vm3959 = vweird.f32 %v3953
    %vm3960 = vmor %vm3958, %vm3959
    %v3961 = vsel %vm3960, %v3953, %v3957
    %v3962 = vand.u32 2147483647, %v3847
    %vm3963 = vcmp.eq.f32.partialorder %v3962, 8.507059e+37
    %v3964 = vand.u32 %v3847, 2147483648
    %v3965 = vor.u32 1.1754944e-38, %v3964
    %v3966 = vsel %vm3963, %v3965, %v3961
    %v3967 = vmul.f32 %v3781, %v3966
    %v3968 = vrcp.pop %v3850
    %v3969 = vmul.f32 %v3850, %v3968
    %v3970 = vsub.f32 1.0, %v3969
    %v3971 = vmul.f32 %v3968, %v3970
    %v3972 = vadd.f32 %v3968, %v3971
    %vm3973 = vweird.f32 %v3850
    %vm3974 = vweird.f32 %v3968
    %vm3975 = vmor %vm3973, %vm3974
    %v3976 = vsel %vm3975, %v3968, %v3972
    %v3977 = vand.u32 2147483647, %v3850
    %vm3978 = vcmp.eq.f32.partialorder %v3977, 8.507059e+37
    %v3979 = vand.u32 %v3850, 2147483648
    %v3980 = vor.u32 1.1754944e-38, %v3979
    %v3981 = vsel %vm3978, %v3980, %v3976
    %v3982 = vmul.f32 %v3783, %v3981
    %v3983 = vrcp.pop %v3853
    %v3984 = vmul.f32 %v3853, %v3983
    %v3985 = vsub.f32 1.0, %v3984
    %v3986 = vmul.f32 %v3983, %v3985
    %v3987 = vadd.f32 %v3983, %v3986
    %vm3988 = vweird.f32 %v3853
    %vm3989 = vweird.f32 %v3983
    %vm3990 = vmor %vm3988, %vm3989
    %v3991 = vsel %vm3990, %v3983, %v3987
    %v3992 = vand.u32 2147483647, %v3853
    %vm3993 = vcmp.eq.f32.partialorder %v3992, 8.507059e+37
    %v3994 = vand.u32 %v3853, 2147483648
    %v3995 = vor.u32 1.1754944e-38, %v3994
    %v3996 = vsel %vm3993, %v3995, %v3991
    %v3997 = vmul.f32 %v3785, %v3996
    %v3998 = vrcp.pop %v3856
    %v3999 = vmul.f32 %v3856, %v3998
    %v4000 = vsub.f32 1.0, %v3999
    %v4001 = vmul.f32 %v3998, %v4000
    %v4002 = vadd.f32 %v3998, %v4001
    %vm4003 = vweird.f32 %v3856
    %vm4004 = vweird.f32 %v3998
    %vm4005 = vmor %vm4003, %vm4004
    %v4006 = vsel %vm4005, %v3998, %v4002
    %v4007 = vand.u32 2147483647, %v3856
    %vm4008 = vcmp.eq.f32.partialorder %v4007, 8.507059e+37
    %v4009 = vand.u32 %v3856, 2147483648
    %v4010 = vor.u32 1.1754944e-38, %v4009
    %v4011 = vsel %vm4008, %v4010, %v4006
    %v4012 = vmul.f32 %v3787, %v4011
    %v4013 = vrcp.pop %v3859
    %v4014 = vmul.f32 %v3859, %v4013
    %v4015 = vsub.f32 1.0, %v4014
    %v4016 = vmul.f32 %v4013, %v4015
    %v4017 = vadd.f32 %v4013, %v4016
    %vm4018 = vweird.f32 %v3859
    %vm4019 = vweird.f32 %v4013
    %vm4020 = vmor %vm4018, %vm4019
    %v4021 = vsel %vm4020, %v4013, %v4017
    %v4022 = vand.u32 2147483647, %v3859
    %vm4023 = vcmp.eq.f32.partialorder %v4022, 8.507059e+37
    %v4024 = vand.u32 %v3859, 2147483648
    %v4025 = vor.u32 1.1754944e-38, %v4024
    %v4026 = vsel %vm4023, %v4025, %v4021
    %v4027 = vmul.f32 %v3789, %v4026
    %v4028 = vrcp.pop %v3862
    %v4029 = vmul.f32 %v3862, %v4028
    %v4030 = vsub.f32 1.0, %v4029
    %v4031 = vmul.f32 %v4028, %v4030
    %v4032 = vadd.f32 %v4028, %v4031
    %vm4033 = vweird.f32 %v3862
    %vm4034 = vweird.f32 %v4028
    %vm4035 = vmor %vm4033, %vm4034
    %v4036 = vsel %vm4035, %v4028, %v4032
    %v4037 = vand.u32 2147483647, %v3862
    %vm4038 = vcmp.eq.f32.partialorder %v4037, 8.507059e+37
    %v4039 = vand.u32 %v3862, 2147483648
    %v4040 = vor.u32 1.1754944e-38, %v4039
    %v4041 = vsel %vm4038, %v4040, %v4036
    %v4042 = vmul.f32 %v3791, %v4041
    %v4043 = vrcp.pop %v3865
    %v4044 = vmul.f32 %v3865, %v4043
    %v4045 = vsub.f32 1.0, %v4044
    %v4046 = vmul.f32 %v4043, %v4045
    %v4047 = vadd.f32 %v4043, %v4046
    %vm4048 = vweird.f32 %v3865
    %vm4049 = vweird.f32 %v4043
    %vm4050 = vmor %vm4048, %vm4049
    %v4051 = vsel %vm4050, %v4043, %v4047
    %v4052 = vand.u32 2147483647, %v3865
    %vm4053 = vcmp.eq.f32.partialorder %v4052, 8.507059e+37
    %v4054 = vand.u32 %v3865, 2147483648
    %v4055 = vor.u32 1.1754944e-38, %v4054
    %v4056 = vsel %vm4053, %v4055, %v4051
    %v4057 = vmul.f32 %v3793, %v4056
    %v4058 = vrcp.pop %v3868
    %v4059 = vmul.f32 %v3868, %v4058
    %v4060 = vsub.f32 1.0, %v4059
    %v4061 = vmul.f32 %v4058, %v4060
    %v4062 = vadd.f32 %v4058, %v4061
    %vm4063 = vweird.f32 %v3868
    %vm4064 = vweird.f32 %v4058
    %vm4065 = vmor %vm4063, %vm4064
    %v4066 = vsel %vm4065, %v4058, %v4062
    %v4067 = vand.u32 2147483647, %v3868
    %vm4068 = vcmp.eq.f32.partialorder %v4067, 8.507059e+37
    %v4069 = vand.u32 %v3868, 2147483648
    %v4070 = vor.u32 1.1754944e-38, %v4069
    %v4071 = vsel %vm4068, %v4070, %v4066
    %v4072 = vmul.f32 %v3795, %v4071
    %v4073 = vrcp.pop %v3871
    %v4074 = vmul.f32 %v3871, %v4073
    %v4075 = vsub.f32 1.0, %v4074
    %v4076 = vmul.f32 %v4073, %v4075
    %v4077 = vadd.f32 %v4073, %v4076
    %vm4078 = vweird.f32 %v3871
    %vm4079 = vweird.f32 %v4073
    %vm4080 = vmor %vm4078, %vm4079
    %v4081 = vsel %vm4080, %v4073, %v4077
    %v4082 = vand.u32 2147483647, %v3871
    %vm4083 = vcmp.eq.f32.partialorder %v4082, 8.507059e+37
    %v4084 = vand.u32 %v3871, 2147483648
    %v4085 = vor.u32 1.1754944e-38, %v4084
    %v4086 = vsel %vm4083, %v4085, %v4081
    %v4087 = vmul.f32 %v3797, %v4086
    %v4088 = vrcp.pop %v3874
    %v4089 = vmul.f32 %v3874, %v4088
    %v4090 = vsub.f32 1.0, %v4089
    %v4091 = vmul.f32 %v4088, %v4090
    %v4092 = vadd.f32 %v4088, %v4091
    %vm4093 = vweird.f32 %v3874
    %vm4094 = vweird.f32 %v4088
    %vm4095 = vmor %vm4093, %vm4094
    %v4096 = vsel %vm4095, %v4088, %v4092
    %v4097 = vand.u32 2147483647, %v3874
    %vm4098 = vcmp.eq.f32.partialorder %v4097, 8.507059e+37
    %v4099 = vand.u32 %v3874, 2147483648
    %v4100 = vor.u32 1.1754944e-38, %v4099
    %v4101 = vsel %vm4098, %v4100, %v4096
    %v4102 = vmul.f32 %v3799, %v4101
    %v4103 = vrcp.pop %v3877
    %v4104 = vmul.f32 %v3877, %v4103
    %v4105 = vsub.f32 1.0, %v4104
    %v4106 = vmul.f32 %v4103, %v4105
    %v4107 = vadd.f32 %v4103, %v4106
    %vm4108 = vweird.f32 %v3877
    %vm4109 = vweird.f32 %v4103
    %vm4110 = vmor %vm4108, %vm4109
    %v4111 = vsel %vm4110, %v4103, %v4107
    %v4112 = vand.u32 2147483647, %v3877
    %vm4113 = vcmp.eq.f32.partialorder %v4112, 8.507059e+37
    %v4114 = vand.u32 %v3877, 2147483648
    %v4115 = vor.u32 1.1754944e-38, %v4114
    %v4116 = vsel %vm4113, %v4115, %v4111
    %v4117 = vmul.f32 %v3801, %v4116
    %v4118 = vrcp.pop %v3880
    %v4119 = vmul.f32 %v3880, %v4118
    %v4120 = vsub.f32 1.0, %v4119
    %v4121 = vmul.f32 %v4118, %v4120
    %v4122 = vadd.f32 %v4118, %v4121
    %vm4123 = vweird.f32 %v3880
    %vm4124 = vweird.f32 %v4118
    %vm4125 = vmor %vm4123, %vm4124
    %v4126 = vsel %vm4125, %v4118, %v4122
    %v4127 = vand.u32 2147483647, %v3880
    %vm4128 = vcmp.eq.f32.partialorder %v4127, 8.507059e+37
    %v4129 = vand.u32 %v3880, 2147483648
    %v4130 = vor.u32 1.1754944e-38, %v4129
    %v4131 = vsel %vm4128, %v4130, %v4126
    %v4132 = vmul.f32 %v3803, %v4131
    %v4133 = vrcp.pop %v3883
    %v4134 = vmul.f32 %v3883, %v4133
    %v4135 = vsub.f32 1.0, %v4134
    %v4136 = vmul.f32 %v4133, %v4135
    %v4137 = vadd.f32 %v4133, %v4136
    %vm4138 = vweird.f32 %v3883
    %vm4139 = vweird.f32 %v4133
    %vm4140 = vmor %vm4138, %vm4139
    %v4141 = vsel %vm4140, %v4133, %v4137
    %v4142 = vand.u32 2147483647, %v3883
    %vm4143 = vcmp.eq.f32.partialorder %v4142, 8.507059e+37
    %v4144 = vand.u32 %v3883, 2147483648
    %v4145 = vor.u32 1.1754944e-38, %v4144
    %v4146 = vsel %vm4143, %v4145, %v4141
    %v4147 = vmul.f32 %v3805, %v4146
    %v4148 = vrcp.pop %v3886
    %v4149 = vmul.f32 %v3886, %v4148
    %v4150 = vsub.f32 1.0, %v4149
    %v4151 = vmul.f32 %v4148, %v4150
    %v4152 = vadd.f32 %v4148, %v4151
    %vm4153 = vweird.f32 %v3886
    %vm4154 = vweird.f32 %v4148
    %vm4155 = vmor %vm4153, %vm4154
    %v4156 = vsel %vm4155, %v4148, %v4152
    %v4157 = vand.u32 2147483647, %v3886
    %vm4158 = vcmp.eq.f32.partialorder %v4157, 8.507059e+37
    %v4159 = vand.u32 %v3886, 2147483648
    %v4160 = vor.u32 1.1754944e-38, %v4159
    %v4161 = vsel %vm4158, %v4160, %v4156
    %v4162 = vmul.f32 %v3807, %v4161
    %v4163 = vrcp.pop %v3889
    %v4164 = vmul.f32 %v3889, %v4163
    %v4165 = vsub.f32 1.0, %v4164
    %v4166 = vmul.f32 %v4163, %v4165
    %v4167 = vadd.f32 %v4163, %v4166
    %vm4168 = vweird.f32 %v3889
    %vm4169 = vweird.f32 %v4163
    %vm4170 = vmor %vm4168, %vm4169
    %v4171 = vsel %vm4170, %v4163, %v4167
    %v4172 = vand.u32 2147483647, %v3889
    %vm4173 = vcmp.eq.f32.partialorder %v4172, 8.507059e+37
    %v4174 = vand.u32 %v3889, 2147483648
    %v4175 = vor.u32 1.1754944e-38, %v4174
    %v4176 = vsel %vm4173, %v4175, %v4171
    %v4177 = vmul.f32 %v3809, %v4176
    %v4178 = vrcp.pop %v3892
    %v4179 = vmul.f32 %v3892, %v4178
    %v4180 = vsub.f32 1.0, %v4179
    %v4181 = vmul.f32 %v4178, %v4180
    %v4182 = vadd.f32 %v4178, %v4181
    %vm4183 = vweird.f32 %v3892
    %vm4184 = vweird.f32 %v4178
    %vm4185 = vmor %vm4183, %vm4184
    %v4186 = vsel %vm4185, %v4178, %v4182
    %v4187 = vand.u32 2147483647, %v3892
    %vm4188 = vcmp.eq.f32.partialorder %v4187, 8.507059e+37
    %v4189 = vand.u32 %v3892, 2147483648
    %v4190 = vor.u32 1.1754944e-38, %v4189
    %v4191 = vsel %vm4188, %v4190, %v4186
    %v4192 = vmul.f32 %v3811, %v4191
    %v4193 = vrcp.pop %v3895
    %v4194 = vmul.f32 %v3895, %v4193
    %v4195 = vsub.f32 1.0, %v4194
    %v4196 = vmul.f32 %v4193, %v4195
    %v4197 = vadd.f32 %v4193, %v4196
    %vm4198 = vweird.f32 %v3895
    %vm4199 = vweird.f32 %v4193
    %vm4200 = vmor %vm4198, %vm4199
    %v4201 = vsel %vm4200, %v4193, %v4197
    %v4202 = vand.u32 2147483647, %v3895
    %vm4203 = vcmp.eq.f32.partialorder %v4202, 8.507059e+37
    %v4204 = vand.u32 %v3895, 2147483648
    %v4205 = vor.u32 1.1754944e-38, %v4204
    %v4206 = vsel %vm4203, %v4205, %v4201
    %v4207 = vmul.f32 %v3813, %v4206
    %v4208 = vrcp.pop %v3898
    %v4209 = vmul.f32 %v3898, %v4208
    %v4210 = vsub.f32 1.0, %v4209
    %v4211 = vmul.f32 %v4208, %v4210
    %v4212 = vadd.f32 %v4208, %v4211
    %vm4213 = vweird.f32 %v3898
    %vm4214 = vweird.f32 %v4208
    %vm4215 = vmor %vm4213, %vm4214
    %v4216 = vsel %vm4215, %v4208, %v4212
    %v4217 = vand.u32 2147483647, %v3898
    %vm4218 = vcmp.eq.f32.partialorder %v4217, 8.507059e+37
    %v4219 = vand.u32 %v3898, 2147483648
    %v4220 = vor.u32 1.1754944e-38, %v4219
    %v4221 = vsel %vm4218, %v4220, %v4216
    %v4222 = vmul.f32 %v3815, %v4221
    %v4223 = vrcp.pop %v3901
    %v4224 = vmul.f32 %v3901, %v4223
    %v4225 = vsub.f32 1.0, %v4224
    %v4226 = vmul.f32 %v4223, %v4225
    %v4227 = vadd.f32 %v4223, %v4226
    %vm4228 = vweird.f32 %v3901
    %vm4229 = vweird.f32 %v4223
    %vm4230 = vmor %vm4228, %vm4229
    %v4231 = vsel %vm4230, %v4223, %v4227
    %v4232 = vand.u32 2147483647, %v3901
    %vm4233 = vcmp.eq.f32.partialorder %v4232, 8.507059e+37
    %v4234 = vand.u32 %v3901, 2147483648
    %v4235 = vor.u32 1.1754944e-38, %v4234
    %v4236 = vsel %vm4233, %v4235, %v4231
    %v4237 = vmul.f32 %v3817, %v4236
    %v4238 = vrcp.pop %v3904
    %v4239 = vmul.f32 %v3904, %v4238
    %v4240 = vsub.f32 1.0, %v4239
    %v4241 = vmul.f32 %v4238, %v4240
    %v4242 = vadd.f32 %v4238, %v4241
    %vm4243 = vweird.f32 %v3904
    %vm4244 = vweird.f32 %v4238
    %vm4245 = vmor %vm4243, %vm4244
    %v4246 = vsel %vm4245, %v4238, %v4242
    %v4247 = vand.u32 2147483647, %v3904
    %vm4248 = vcmp.eq.f32.partialorder %v4247, 8.507059e+37
    %v4249 = vand.u32 %v3904, 2147483648
    %v4250 = vor.u32 1.1754944e-38, %v4249
    %v4251 = vsel %vm4248, %v4250, %v4246
    %v4252 = vmul.f32 %v3819, %v4251
    %v4253 = vrcp.pop %v3907
    %v4254 = vmul.f32 %v3907, %v4253
    %v4255 = vsub.f32 1.0, %v4254
    %v4256 = vmul.f32 %v4253, %v4255
    %v4257 = vadd.f32 %v4253, %v4256
    %vm4258 = vweird.f32 %v3907
    %vm4259 = vweird.f32 %v4253
    %vm4260 = vmor %vm4258, %vm4259
    %v4261 = vsel %vm4260, %v4253, %v4257
    %v4262 = vand.u32 2147483647, %v3907
    %vm4263 = vcmp.eq.f32.partialorder %v4262, 8.507059e+37
    %v4264 = vand.u32 %v3907, 2147483648
    %v4265 = vor.u32 1.1754944e-38, %v4264
    %v4266 = vsel %vm4263, %v4265, %v4261
    %v4267 = vmul.f32 %v3821, %v4266
    %v4268 = vrcp.pop %v3910
    %v4269 = vmul.f32 %v3910, %v4268
    %v4270 = vsub.f32 1.0, %v4269
    %v4271 = vmul.f32 %v4268, %v4270
    %v4272 = vadd.f32 %v4268, %v4271
    %vm4273 = vweird.f32 %v3910
    %vm4274 = vweird.f32 %v4268
    %vm4275 = vmor %vm4273, %vm4274
    %v4276 = vsel %vm4275, %v4268, %v4272
    %v4277 = vand.u32 2147483647, %v3910
    %vm4278 = vcmp.eq.f32.partialorder %v4277, 8.507059e+37
    %v4279 = vand.u32 %v3910, 2147483648
    %v4280 = vor.u32 1.1754944e-38, %v4279
    %v4281 = vsel %vm4278, %v4280, %v4276
    %v4282 = vmul.f32 %v3823, %v4281
    %v4283 = vrcp.pop %v3913
    %v4284 = vmul.f32 %v3913, %v4283
    %v4285 = vsub.f32 1.0, %v4284
    %v4286 = vmul.f32 %v4283, %v4285
    %v4287 = vadd.f32 %v4283, %v4286
    %vm4288 = vweird.f32 %v3913
    %vm4289 = vweird.f32 %v4283
    %vm4290 = vmor %vm4288, %vm4289
    %v4291 = vsel %vm4290, %v4283, %v4287
    %v4292 = vand.u32 2147483647, %v3913
    %vm4293 = vcmp.eq.f32.partialorder %v4292, 8.507059e+37
    %v4294 = vand.u32 %v3913, 2147483648
    %v4295 = vor.u32 1.1754944e-38, %v4294
    %v4296 = vsel %vm4293, %v4295, %v4291
    %v4297 = vmul.f32 %v3825, %v4296
    %v4298 = vrcp.pop %v3916
    %v4299 = vmul.f32 %v3916, %v4298
    %v4300 = vsub.f32 1.0, %v4299
    %v4301 = vmul.f32 %v4298, %v4300
    %v4302 = vadd.f32 %v4298, %v4301
    %vm4303 = vweird.f32 %v3916
    %vm4304 = vweird.f32 %v4298
    %vm4305 = vmor %vm4303, %vm4304
    %v4306 = vsel %vm4305, %v4298, %v4302
    %v4307 = vand.u32 2147483647, %v3916
    %vm4308 = vcmp.eq.f32.partialorder %v4307, 8.507059e+37
    %v4309 = vand.u32 %v3916, 2147483648
    %v4310 = vor.u32 1.1754944e-38, %v4309
    %v4311 = vsel %vm4308, %v4310, %v4306
    %v4312 = vmul.f32 %v3827, %v4311
    %v4313 = vrcp.pop %v3919
    %v4314 = vmul.f32 %v3919, %v4313
    %v4315 = vsub.f32 1.0, %v4314
    %v4316 = vmul.f32 %v4313, %v4315
    %v4317 = vadd.f32 %v4313, %v4316
    %vm4318 = vweird.f32 %v3919
    %vm4319 = vweird.f32 %v4313
    %vm4320 = vmor %vm4318, %vm4319
    %v4321 = vsel %vm4320, %v4313, %v4317
    %v4322 = vand.u32 2147483647, %v3919
    %vm4323 = vcmp.eq.f32.partialorder %v4322, 8.507059e+37
    %v4324 = vand.u32 %v3919, 2147483648
    %v4325 = vor.u32 1.1754944e-38, %v4324
    %v4326 = vsel %vm4323, %v4325, %v4321
    %v4327 = vmul.f32 %v3829, %v4326
    %v4328 = vrcp.pop %v3922
    %v4329 = vmul.f32 %v3922, %v4328
    %v4330 = vsub.f32 1.0, %v4329
    %v4331 = vmul.f32 %v4328, %v4330
    %v4332 = vadd.f32 %v4328, %v4331
    %vm4333 = vweird.f32 %v3922
    %vm4334 = vweird.f32 %v4328
    %vm4335 = vmor %vm4333, %vm4334
    %v4336 = vsel %vm4335, %v4328, %v4332
    %v4337 = vand.u32 2147483647, %v3922
    %vm4338 = vcmp.eq.f32.partialorder %v4337, 8.507059e+37
    %v4339 = vand.u32 %v3922, 2147483648
    %v4340 = vor.u32 1.1754944e-38, %v4339
    %v4341 = vsel %vm4338, %v4340, %v4336
    %v4342 = vmul.f32 %v3831, %v4341
    %v4343 = vrcp.pop %v3925
    %v4344 = vmul.f32 %v3925, %v4343
    %v4345 = vsub.f32 1.0, %v4344
    %v4346 = vmul.f32 %v4343, %v4345
    %v4347 = vadd.f32 %v4343, %v4346
    %vm4348 = vweird.f32 %v3925
    %vm4349 = vweird.f32 %v4343
    %vm4350 = vmor %vm4348, %vm4349
    %v4351 = vsel %vm4350, %v4343, %v4347
    %v4352 = vand.u32 2147483647, %v3925
    %vm4353 = vcmp.eq.f32.partialorder %v4352, 8.507059e+37
    %v4354 = vand.u32 %v3925, 2147483648
    %v4355 = vor.u32 1.1754944e-38, %v4354
    %v4356 = vsel %vm4353, %v4355, %v4351
    %v4357 = vmul.f32 %v3833, %v4356
    %v4358 = vrcp.pop %v3928
    %v4359 = vmul.f32 %v3928, %v4358
    %v4360 = vsub.f32 1.0, %v4359
    %v4361 = vmul.f32 %v4358, %v4360
    %v4362 = vadd.f32 %v4358, %v4361
    %vm4363 = vweird.f32 %v3928
    %vm4364 = vweird.f32 %v4358
    %vm4365 = vmor %vm4363, %vm4364
    %v4366 = vsel %vm4365, %v4358, %v4362
    %v4367 = vand.u32 2147483647, %v3928
    %vm4368 = vcmp.eq.f32.partialorder %v4367, 8.507059e+37
    %v4369 = vand.u32 %v3928, 2147483648
    %v4370 = vor.u32 1.1754944e-38, %v4369
    %v4371 = vsel %vm4368, %v4370, %v4366
    %v4372 = vmul.f32 %v3835, %v4371
    %v4373 = vrcp.pop %v3931
    %v4374 = vmul.f32 %v3931, %v4373
    %v4375 = vsub.f32 1.0, %v4374
    %v4376 = vmul.f32 %v4373, %v4375
    %v4377 = vadd.f32 %v4373, %v4376
    %vm4378 = vweird.f32 %v3931
    %vm4379 = vweird.f32 %v4373
    %vm4380 = vmor %vm4378, %vm4379
    %v4381 = vsel %vm4380, %v4373, %v4377
    %v4382 = vand.u32 2147483647, %v3931
    %vm4383 = vcmp.eq.f32.partialorder %v4382, 8.507059e+37
    %v4384 = vand.u32 %v3931, 2147483648
    %v4385 = vor.u32 1.1754944e-38, %v4384
    %v4386 = vsel %vm4383, %v4385, %v4381
    %v4387 = vmul.f32 %v3837, %v4386
    %v4388 = vrcp.pop %v3934
    %v4389 = vmul.f32 %v3934, %v4388
    %v4390 = vsub.f32 1.0, %v4389
    %v4391 = vmul.f32 %v4388, %v4390
    %v4392 = vadd.f32 %v4388, %v4391
    %vm4393 = vweird.f32 %v3934
    %vm4394 = vweird.f32 %v4388
    %vm4395 = vmor %vm4393, %vm4394
    %v4396 = vsel %vm4395, %v4388, %v4392
    %v4397 = vand.u32 2147483647, %v3934
    %vm4398 = vcmp.eq.f32.partialorder %v4397, 8.507059e+37
    %v4399 = vand.u32 %v3934, 2147483648
    %v4400 = vor.u32 1.1754944e-38, %v4399
    %v4401 = vsel %vm4398, %v4400, %v4396
    %v4402 = vmul.f32 %v3839, %v4401
    %v4403 = vrcp.pop %v3937
    %v4404 = vmul.f32 %v3937, %v4403
    %v4405 = vsub.f32 1.0, %v4404
    %v4406 = vmul.f32 %v4403, %v4405
    %v4407 = vadd.f32 %v4403, %v4406
    %vm4408 = vweird.f32 %v3937
    %vm4409 = vweird.f32 %v4403
    %vm4410 = vmor %vm4408, %vm4409
    %v4411 = vsel %vm4410, %v4403, %v4407
    %v4412 = vand.u32 2147483647, %v3937
    %vm4413 = vcmp.eq.f32.partialorder %v4412, 8.507059e+37
    %v4414 = vand.u32 %v3937, 2147483648
    %v4415 = vor.u32 1.1754944e-38, %v4414
    %v4416 = vsel %vm4413, %v4415, %v4411
    %v4417 = vmul.f32 %v3841, %v4416
    %v4419 = vsel %vm3649, %v3952, 0
    %v4422 = vsel %vm3649, %v3967, 0
    %4424 = vmatpush.msra.mxu0 0.0
    %4425 = vmatpush.msra.mxu0 0.0
    %4426 = vmatpush.msra.mxu0 0.0
    %4427 = vmatpush.msra.mxu0 0.0
    %4428 = vmatpush.msra.mxu0 0.0
    %4429 = vmatpush.msra.mxu0 0.0
    %4430 = vmatpush.msra.mxu0 0.0
    %4431 = vmatpush.msra.mxu0 0.0
    %4432 = vmatpush.msra.mxu0 0.0
    %4433 = vmatpush.msra.mxu0 0.0
    %4434 = vmatpush.msra.mxu0 0.0
    %4435 = vmatpush.msra.mxu0 0.0
    %4436 = vmatpush.msra.mxu0 0.0
    %4437 = vmatpush.msra.mxu0 0.0
    %4438 = vmatpush.msra.mxu0 %v2849
    %4439 = vmatpush.msra.mxu0 %v2737
    %4440 = vmatmul.f32.gmra.mxu0 %v4419
    %v4441 = vpop.f32.mrf.mxu0
    %v4442 = vadd.f32 0.0, %v4441
    %4443 = vmatmul.f32.gmra.mxu0 %v4422
    %v4444 = vpop.f32.mrf.mxu0
    %v4445 = vadd.f32 0.0, %v4444
    %4446 = vdwg.mxu0
    %v4448 = vsel %vm3649, %v3982, 0
    %v4451 = vsel %vm3649, %v3997, 0
    %4453 = vmatpush.msra.mxu0 0.0
    %4454 = vmatpush.msra.mxu0 0.0
    %4455 = vmatpush.msra.mxu0 0.0
    %4456 = vmatpush.msra.mxu0 0.0
    %4457 = vmatpush.msra.mxu0 0.0
    %4458 = vmatpush.msra.mxu0 0.0
    %4459 = vmatpush.msra.mxu0 0.0
    %4460 = vmatpush.msra.mxu0 0.0
    %4461 = vmatpush.msra.mxu0 0.0
    %4462 = vmatpush.msra.mxu0 0.0
    %4463 = vmatpush.msra.mxu0 0.0
    %4464 = vmatpush.msra.mxu0 0.0
    %4465 = vmatpush.msra.mxu0 0.0
    %4466 = vmatpush.msra.mxu0 0.0
    %4467 = vmatpush.msra.mxu0 %v2851
    %4468 = vmatpush.msra.mxu0 %v2739
    %4469 = vmatmul.f32.gmra.mxu0 %v4448
    %v4470 = vpop.f32.mrf.mxu0
    %v4471 = vadd.f32 0.0, %v4470
    %4472 = vmatmul.f32.gmra.mxu0 %v4451
    %v4473 = vpop.f32.mrf.mxu0
    %v4474 = vadd.f32 0.0, %v4473
    %4475 = vdwg.mxu0
    %v4477 = vsel %vm3649, %v4012, 0
    %v4480 = vsel %vm3649, %v4027, 0
    %4482 = vmatpush.msra.mxu0 0.0
    %4483 = vmatpush.msra.mxu0 0.0
    %4484 = vmatpush.msra.mxu0 0.0
    %4485 = vmatpush.msra.mxu0 0.0
    %4486 = vmatpush.msra.mxu0 0.0
    %4487 = vmatpush.msra.mxu0 0.0
    %4488 = vmatpush.msra.mxu0 0.0
    %4489 = vmatpush.msra.mxu0 0.0
    %4490 = vmatpush.msra.mxu0 0.0
    %4491 = vmatpush.msra.mxu0 0.0
    %4492 = vmatpush.msra.mxu0 0.0
    %4493 = vmatpush.msra.mxu0 0.0
    %4494 = vmatpush.msra.mxu0 0.0
    %4495 = vmatpush.msra.mxu0 0.0
    %4496 = vmatpush.msra.mxu0 %v2853
    %4497 = vmatpush.msra.mxu0 %v2741
    %4498 = vmatmul.f32.gmra.mxu0 %v4477
    %v4499 = vpop.f32.mrf.mxu0
    %v4500 = vadd.f32 0.0, %v4499
    %4501 = vmatmul.f32.gmra.mxu0 %v4480
    %v4502 = vpop.f32.mrf.mxu0
    %v4503 = vadd.f32 0.0, %v4502
    %4504 = vdwg.mxu0
    %v4506 = vsel %vm3649, %v4042, 0
    %v4509 = vsel %vm3649, %v4057, 0
    %4511 = vmatpush.msra.mxu0 0.0
    %4512 = vmatpush.msra.mxu0 0.0
    %4513 = vmatpush.msra.mxu0 0.0
    %4514 = vmatpush.msra.mxu0 0.0
    %4515 = vmatpush.msra.mxu0 0.0
    %4516 = vmatpush.msra.mxu0 0.0
    %4517 = vmatpush.msra.mxu0 0.0
    %4518 = vmatpush.msra.mxu0 0.0
    %4519 = vmatpush.msra.mxu0 0.0
    %4520 = vmatpush.msra.mxu0 0.0
    %4521 = vmatpush.msra.mxu0 0.0
    %4522 = vmatpush.msra.mxu0 0.0
    %4523 = vmatpush.msra.mxu0 0.0
    %4524 = vmatpush.msra.mxu0 0.0
    %4525 = vmatpush.msra.mxu0 %v2855
    %4526 = vmatpush.msra.mxu0 %v2743
    %4527 = vmatmul.f32.gmra.mxu0 %v4506
    %v4528 = vpop.f32.mrf.mxu0
    %v4529 = vadd.f32 0.0, %v4528
    %4530 = vmatmul.f32.gmra.mxu0 %v4509
    %v4531 = vpop.f32.mrf.mxu0
    %v4532 = vadd.f32 0.0, %v4531
    %4533 = vdwg.mxu0
    %v4535 = vsel %vm3649, %v4072, 0
    %v4538 = vsel %vm3649, %v4087, 0
    %4540 = vmatpush.msra.mxu0 0.0
    %4541 = vmatpush.msra.mxu0 0.0
    %4542 = vmatpush.msra.mxu0 0.0
    %4543 = vmatpush.msra.mxu0 0.0
    %4544 = vmatpush.msra.mxu0 0.0
    %4545 = vmatpush.msra.mxu0 0.0
    %4546 = vmatpush.msra.mxu0 0.0
    %4547 = vmatpush.msra.mxu0 0.0
    %4548 = vmatpush.msra.mxu0 0.0
    %4549 = vmatpush.msra.mxu0 0.0
    %4550 = vmatpush.msra.mxu0 0.0
    %4551 = vmatpush.msra.mxu0 0.0
    %4552 = vmatpush.msra.mxu0 0.0
    %4553 = vmatpush.msra.mxu0 0.0
    %4554 = vmatpush.msra.mxu0 %v2857
    %4555 = vmatpush.msra.mxu0 %v2745
    %4556 = vmatmul.f32.gmra.mxu0 %v4535
    %v4557 = vpop.f32.mrf.mxu0
    %v4558 = vadd.f32 0.0, %v4557
    %4559 = vmatmul.f32.gmra.mxu0 %v4538
    %v4560 = vpop.f32.mrf.mxu0
    %v4561 = vadd.f32 0.0, %v4560
    %4562 = vdwg.mxu0
    %v4564 = vsel %vm3649, %v4102, 0
    %v4567 = vsel %vm3649, %v4117, 0
    %4569 = vmatpush.msra.mxu0 0.0
    %4570 = vmatpush.msra.mxu0 0.0
    %4571 = vmatpush.msra.mxu0 0.0
    %4572 = vmatpush.msra.mxu0 0.0
    %4573 = vmatpush.msra.mxu0 0.0
    %4574 = vmatpush.msra.mxu0 0.0
    %4575 = vmatpush.msra.mxu0 0.0
    %4576 = vmatpush.msra.mxu0 0.0
    %4577 = vmatpush.msra.mxu0 0.0
    %4578 = vmatpush.msra.mxu0 0.0
    %4579 = vmatpush.msra.mxu0 0.0
    %4580 = vmatpush.msra.mxu0 0.0
    %4581 = vmatpush.msra.mxu0 0.0
    %4582 = vmatpush.msra.mxu0 0.0
    %4583 = vmatpush.msra.mxu0 %v2859
    %4584 = vmatpush.msra.mxu0 %v2747
    %4585 = vmatmul.f32.gmra.mxu0 %v4564
    %v4586 = vpop.f32.mrf.mxu0
    %v4587 = vadd.f32 0.0, %v4586
    %4588 = vmatmul.f32.gmra.mxu0 %v4567
    %v4589 = vpop.f32.mrf.mxu0
    %v4590 = vadd.f32 0.0, %v4589
    %4591 = vdwg.mxu0
    %v4593 = vsel %vm3649, %v4132, 0
    %v4596 = vsel %vm3649, %v4147, 0
    %4598 = vmatpush.msra.mxu0 0.0
    %4599 = vmatpush.msra.mxu0 0.0
    %4600 = vmatpush.msra.mxu0 0.0
    %4601 = vmatpush.msra.mxu0 0.0
    %4602 = vmatpush.msra.mxu0 0.0
    %4603 = vmatpush.msra.mxu0 0.0
    %4604 = vmatpush.msra.mxu0 0.0
    %4605 = vmatpush.msra.mxu0 0.0
    %4606 = vmatpush.msra.mxu0 0.0
    %4607 = vmatpush.msra.mxu0 0.0
    %4608 = vmatpush.msra.mxu0 0.0
    %4609 = vmatpush.msra.mxu0 0.0
    %4610 = vmatpush.msra.mxu0 0.0
    %4611 = vmatpush.msra.mxu0 0.0
    %4612 = vmatpush.msra.mxu0 %v2861
    %4613 = vmatpush.msra.mxu0 %v2749
    %4614 = vmatmul.f32.gmra.mxu0 %v4593
    %v4615 = vpop.f32.mrf.mxu0
    %v4616 = vadd.f32 0.0, %v4615
    %4617 = vmatmul.f32.gmra.mxu0 %v4596
    %v4618 = vpop.f32.mrf.mxu0
    %v4619 = vadd.f32 0.0, %v4618
    %4620 = vdwg.mxu0
    %v4622 = vsel %vm3649, %v4162, 0
    %v4625 = vsel %vm3649, %v4177, 0
    %4627 = vmatpush.msra.mxu0 0.0
    %4628 = vmatpush.msra.mxu0 0.0
    %4629 = vmatpush.msra.mxu0 0.0
    %4630 = vmatpush.msra.mxu0 0.0
    %4631 = vmatpush.msra.mxu0 0.0
    %4632 = vmatpush.msra.mxu0 0.0
    %4633 = vmatpush.msra.mxu0 0.0
    %4634 = vmatpush.msra.mxu0 0.0
    %4635 = vmatpush.msra.mxu0 0.0
    %4636 = vmatpush.msra.mxu0 0.0
    %4637 = vmatpush.msra.mxu0 0.0
    %4638 = vmatpush.msra.mxu0 0.0
    %4639 = vmatpush.msra.mxu0 0.0
    %4640 = vmatpush.msra.mxu0 0.0
    %4641 = vmatpush.msra.mxu0 %v2863
    %4642 = vmatpush.msra.mxu0 %v2751
    %4643 = vmatmul.f32.gmra.mxu0 %v4622
    %v4644 = vpop.f32.mrf.mxu0
    %v4645 = vadd.f32 0.0, %v4644
    %4646 = vmatmul.f32.gmra.mxu0 %v4625
    %v4647 = vpop.f32.mrf.mxu0
    %v4648 = vadd.f32 0.0, %v4647
    %4649 = vdwg.mxu0
    %v4651 = vsel %vm3649, %v4192, 0
    %v4654 = vsel %vm3649, %v4207, 0
    %4656 = vmatpush.msra.mxu0 0.0
    %4657 = vmatpush.msra.mxu0 0.0
    %4658 = vmatpush.msra.mxu0 0.0
    %4659 = vmatpush.msra.mxu0 0.0
    %4660 = vmatpush.msra.mxu0 0.0
    %4661 = vmatpush.msra.mxu0 0.0
    %4662 = vmatpush.msra.mxu0 0.0
    %4663 = vmatpush.msra.mxu0 0.0
    %4664 = vmatpush.msra.mxu0 0.0
    %4665 = vmatpush.msra.mxu0 0.0
    %4666 = vmatpush.msra.mxu0 0.0
    %4667 = vmatpush.msra.mxu0 0.0
    %4668 = vmatpush.msra.mxu0 0.0
    %4669 = vmatpush.msra.mxu0 0.0
    %4670 = vmatpush.msra.mxu0 %v3073
    %4671 = vmatpush.msra.mxu0 %v2961
    %4672 = vmatmul.f32.gmra.mxu0 %v4651
    %v4673 = vpop.f32.mrf.mxu0
    %v4674 = vadd.f32 0.0, %v4673
    %4675 = vmatmul.f32.gmra.mxu0 %v4654
    %v4676 = vpop.f32.mrf.mxu0
    %v4677 = vadd.f32 0.0, %v4676
    %4678 = vdwg.mxu0
    %v4680 = vsel %vm3649, %v4222, 0
    %v4683 = vsel %vm3649, %v4237, 0
    %4685 = vmatpush.msra.mxu0 0.0
    %4686 = vmatpush.msra.mxu0 0.0
    %4687 = vmatpush.msra.mxu0 0.0
    %4688 = vmatpush.msra.mxu0 0.0
    %4689 = vmatpush.msra.mxu0 0.0
    %4690 = vmatpush.msra.mxu0 0.0
    %4691 = vmatpush.msra.mxu0 0.0
    %4692 = vmatpush.msra.mxu0 0.0
    %4693 = vmatpush.msra.mxu0 0.0
    %4694 = vmatpush.msra.mxu0 0.0
    %4695 = vmatpush.msra.mxu0 0.0
    %4696 = vmatpush.msra.mxu0 0.0
    %4697 = vmatpush.msra.mxu0 0.0
    %4698 = vmatpush.msra.mxu0 0.0
    %4699 = vmatpush.msra.mxu0 %v3075
    %4700 = vmatpush.msra.mxu0 %v2963
    %4701 = vmatmul.f32.gmra.mxu0 %v4680
    %v4702 = vpop.f32.mrf.mxu0
    %v4703 = vadd.f32 0.0, %v4702
    %4704 = vmatmul.f32.gmra.mxu0 %v4683
    %v4705 = vpop.f32.mrf.mxu0
    %v4706 = vadd.f32 0.0, %v4705
    %4707 = vdwg.mxu0
    %v4709 = vsel %vm3649, %v4252, 0
    %v4712 = vsel %vm3649, %v4267, 0
    %4714 = vmatpush.msra.mxu0 0.0
    %4715 = vmatpush.msra.mxu0 0.0
    %4716 = vmatpush.msra.mxu0 0.0
    %4717 = vmatpush.msra.mxu0 0.0
    %4718 = vmatpush.msra.mxu0 0.0
    %4719 = vmatpush.msra.mxu0 0.0
    %4720 = vmatpush.msra.mxu0 0.0
    %4721 = vmatpush.msra.mxu0 0.0
    %4722 = vmatpush.msra.mxu0 0.0
    %4723 = vmatpush.msra.mxu0 0.0
    %4724 = vmatpush.msra.mxu0 0.0
    %4725 = vmatpush.msra.mxu0 0.0
    %4726 = vmatpush.msra.mxu0 0.0
    %4727 = vmatpush.msra.mxu0 0.0
    %4728 = vmatpush.msra.mxu0 %v3077
    %4729 = vmatpush.msra.mxu0 %v2965
    %4730 = vmatmul.f32.gmra.mxu0 %v4709
    %v4731 = vpop.f32.mrf.mxu0
    %v4732 = vadd.f32 0.0, %v4731
    %4733 = vmatmul.f32.gmra.mxu0 %v4712
    %v4734 = vpop.f32.mrf.mxu0
    %v4735 = vadd.f32 0.0, %v4734
    %4736 = vdwg.mxu0
    %v4738 = vsel %vm3649, %v4282, 0
    %v4741 = vsel %vm3649, %v4297, 0
    %4743 = vmatpush.msra.mxu0 0.0
    %4744 = vmatpush.msra.mxu0 0.0
    %4745 = vmatpush.msra.mxu0 0.0
    %4746 = vmatpush.msra.mxu0 0.0
    %4747 = vmatpush.msra.mxu0 0.0
    %4748 = vmatpush.msra.mxu0 0.0
    %4749 = vmatpush.msra.mxu0 0.0
    %4750 = vmatpush.msra.mxu0 0.0
    %4751 = vmatpush.msra.mxu0 0.0
    %4752 = vmatpush.msra.mxu0 0.0
    %4753 = vmatpush.msra.mxu0 0.0
    %4754 = vmatpush.msra.mxu0 0.0
    %4755 = vmatpush.msra.mxu0 0.0
    %4756 = vmatpush.msra.mxu0 0.0
    %4757 = vmatpush.msra.mxu0 %v3079
    %4758 = vmatpush.msra.mxu0 %v2967
    %4759 = vmatmul.f32.gmra.mxu0 %v4738
    %v4760 = vpop.f32.mrf.mxu0
    %v4761 = vadd.f32 0.0, %v4760
    %4762 = vmatmul.f32.gmra.mxu0 %v4741
    %v4763 = vpop.f32.mrf.mxu0
    %v4764 = vadd.f32 0.0, %v4763
    %4765 = vdwg.mxu0
    %v4767 = vsel %vm3649, %v4312, 0
    %v4770 = vsel %vm3649, %v4327, 0
    %4772 = vmatpush.msra.mxu0 0.0
    %4773 = vmatpush.msra.mxu0 0.0
    %4774 = vmatpush.msra.mxu0 0.0
    %4775 = vmatpush.msra.mxu0 0.0
    %4776 = vmatpush.msra.mxu0 0.0
    %4777 = vmatpush.msra.mxu0 0.0
    %4778 = vmatpush.msra.mxu0 0.0
    %4779 = vmatpush.msra.mxu0 0.0
    %4780 = vmatpush.msra.mxu0 0.0
    %4781 = vmatpush.msra.mxu0 0.0
    %4782 = vmatpush.msra.mxu0 0.0
    %4783 = vmatpush.msra.mxu0 0.0
    %4784 = vmatpush.msra.mxu0 0.0
    %4785 = vmatpush.msra.mxu0 0.0
    %4786 = vmatpush.msra.mxu0 %v3081
    %4787 = vmatpush.msra.mxu0 %v2969
    %4788 = vmatmul.f32.gmra.mxu0 %v4767
    %v4789 = vpop.f32.mrf.mxu0
    %v4790 = vadd.f32 0.0, %v4789
    %4791 = vmatmul.f32.gmra.mxu0 %v4770
    %v4792 = vpop.f32.mrf.mxu0
    %v4793 = vadd.f32 0.0, %v4792
    %4794 = vdwg.mxu0
    %v4796 = vsel %vm3649, %v4342, 0
    %v4799 = vsel %vm3649, %v4357, 0
    %4801 = vmatpush.msra.mxu0 0.0
    %4802 = vmatpush.msra.mxu0 0.0
    %4803 = vmatpush.msra.mxu0 0.0
    %4804 = vmatpush.msra.mxu0 0.0
    %4805 = vmatpush.msra.mxu0 0.0
    %4806 = vmatpush.msra.mxu0 0.0
    %4807 = vmatpush.msra.mxu0 0.0
    %4808 = vmatpush.msra.mxu0 0.0
    %4809 = vmatpush.msra.mxu0 0.0
    %4810 = vmatpush.msra.mxu0 0.0
    %4811 = vmatpush.msra.mxu0 0.0
    %4812 = vmatpush.msra.mxu0 0.0
    %4813 = vmatpush.msra.mxu0 0.0
    %4814 = vmatpush.msra.mxu0 0.0
    %4815 = vmatpush.msra.mxu0 %v3083
    %4816 = vmatpush.msra.mxu0 %v2971
    %4817 = vmatmul.f32.gmra.mxu0 %v4796
    %v4818 = vpop.f32.mrf.mxu0
    %v4819 = vadd.f32 0.0, %v4818
    %4820 = vmatmul.f32.gmra.mxu0 %v4799
    %v4821 = vpop.f32.mrf.mxu0
    %v4822 = vadd.f32 0.0, %v4821
    %4823 = vdwg.mxu0
    %v4825 = vsel %vm3649, %v4372, 0
    %v4828 = vsel %vm3649, %v4387, 0
    %4830 = vmatpush.msra.mxu0 0.0
    %4831 = vmatpush.msra.mxu0 0.0
    %4832 = vmatpush.msra.mxu0 0.0
    %4833 = vmatpush.msra.mxu0 0.0
    %4834 = vmatpush.msra.mxu0 0.0
    %4835 = vmatpush.msra.mxu0 0.0
    %4836 = vmatpush.msra.mxu0 0.0
    %4837 = vmatpush.msra.mxu0 0.0
    %4838 = vmatpush.msra.mxu0 0.0
    %4839 = vmatpush.msra.mxu0 0.0
    %4840 = vmatpush.msra.mxu0 0.0
    %4841 = vmatpush.msra.mxu0 0.0
    %4842 = vmatpush.msra.mxu0 0.0
    %4843 = vmatpush.msra.mxu0 0.0
    %4844 = vmatpush.msra.mxu0 %v3085
    %4845 = vmatpush.msra.mxu0 %v2973
    %4846 = vmatmul.f32.gmra.mxu0 %v4825
    %v4847 = vpop.f32.mrf.mxu0
    %v4848 = vadd.f32 0.0, %v4847
    %4849 = vmatmul.f32.gmra.mxu0 %v4828
    %v4850 = vpop.f32.mrf.mxu0
    %v4851 = vadd.f32 0.0, %v4850
    %4852 = vdwg.mxu0
    %v4854 = vsel %vm3649, %v4402, 0
    %v4857 = vsel %vm3649, %v4417, 0
    %4859 = vmatpush.msra.mxu0 0.0
    %4860 = vmatpush.msra.mxu0 0.0
    %4861 = vmatpush.msra.mxu0 0.0
    %4862 = vmatpush.msra.mxu0 0.0
    %4863 = vmatpush.msra.mxu0 0.0
    %4864 = vmatpush.msra.mxu0 0.0
    %4865 = vmatpush.msra.mxu0 0.0
    %4866 = vmatpush.msra.mxu0 0.0
    %4867 = vmatpush.msra.mxu0 0.0
    %4868 = vmatpush.msra.mxu0 0.0
    %4869 = vmatpush.msra.mxu0 0.0
    %4870 = vmatpush.msra.mxu0 0.0
    %4871 = vmatpush.msra.mxu0 0.0
    %4872 = vmatpush.msra.mxu0 0.0
    %4873 = vmatpush.msra.mxu0 %v3087
    %4874 = vmatpush.msra.mxu0 %v2975
    %4875 = vmatmul.f32.gmra.mxu0 %v4854
    %v4876 = vpop.f32.mrf.mxu0
    %v4877 = vadd.f32 0.0, %v4876
    %4878 = vmatmul.f32.gmra.mxu0 %v4857
    %v4879 = vpop.f32.mrf.mxu0
    %v4880 = vadd.f32 0.0, %v4879
    %4881 = vdwg.mxu0
    %v4882 = vrot.slane %v4500, 4
    %v4883 = vsel %vm216, %v4882, %v4442
    %v4884 = vrot.slane %v4442, 4
    %v4885 = vsel %vm216, %v4500, %v4884
    %v4887 = vunpack.c.l.s4 1983009808
    %v4888 = vunpack.c.0.s8 %v4887
    %v4889 = vperm.slane %v4883, %v4888
    %v4891 = vunpack.c.l.s4 1983009808
    %v4892 = vunpack.c.0.s8 %v4891
    %v4893 = vperm.slane %v4885, %v4892
    %v4894 = vrot.slane %v4529, 4
    %v4895 = vsel %vm216, %v4894, %v4471
    %v4896 = vrot.slane %v4471, 4
    %v4897 = vsel %vm216, %v4529, %v4896
    %v4899 = vunpack.c.l.s4 1983009808
    %v4900 = vunpack.c.0.s8 %v4899
    %v4901 = vperm.slane %v4895, %v4900
    %v4903 = vunpack.c.l.s4 1983009808
    %v4904 = vunpack.c.0.s8 %v4903
    %v4905 = vperm.slane %v4897, %v4904
    %v4906 = vrot.slane %v4616, 4
    %v4907 = vsel %vm216, %v4906, %v4558
    %v4908 = vrot.slane %v4558, 4
    %v4909 = vsel %vm216, %v4616, %v4908
    %v4911 = vunpack.c.l.s4 1983009808
    %v4912 = vunpack.c.0.s8 %v4911
    %v4913 = vperm.slane %v4907, %v4912
    %v4915 = vunpack.c.l.s4 1983009808
    %v4916 = vunpack.c.0.s8 %v4915
    %v4917 = vperm.slane %v4909, %v4916
    %v4918 = vrot.slane %v4645, 4
    %v4919 = vsel %vm216, %v4918, %v4587
    %v4920 = vrot.slane %v4587, 4
    %v4921 = vsel %vm216, %v4645, %v4920
    %v4923 = vunpack.c.l.s4 1983009808
    %v4924 = vunpack.c.0.s8 %v4923
    %v4925 = vperm.slane %v4919, %v4924
    %v4927 = vunpack.c.l.s4 1983009808
    %v4928 = vunpack.c.0.s8 %v4927
    %v4929 = vperm.slane %v4921, %v4928
    %v4930 = vrot.slane %v4901, 4
    %v4931 = vsel %vm216, %v4930, %v4889
    %v4932 = vrot.slane %v4889, 4
    %v4933 = vsel %vm216, %v4901, %v4932
    %v4935 = vunpack.c.l.s4 1934713408
    %v4936 = vunpack.c.0.s8 %v4935
    %v4937 = vperm.slane %v4931, %v4936
    %v4939 = vunpack.c.l.s4 1934713408
    %v4940 = vunpack.c.0.s8 %v4939
    %v4941 = vperm.slane %v4933, %v4940
    %v4942 = vrot.slane %v4905, 4
    %v4943 = vsel %vm216, %v4942, %v4893
    %v4944 = vrot.slane %v4893, 4
    %v4945 = vsel %vm216, %v4905, %v4944
    %v4947 = vunpack.c.l.s4 1934713408
    %v4948 = vunpack.c.0.s8 %v4947
    %v4949 = vperm.slane %v4943, %v4948
    %v4951 = vunpack.c.l.s4 1934713408
    %v4952 = vunpack.c.0.s8 %v4951
    %v4953 = vperm.slane %v4945, %v4952
    %v4954 = vrot.slane %v4925, 4
    %v4955 = vsel %vm216, %v4954, %v4913
    %v4956 = vrot.slane %v4913, 4
    %v4957 = vsel %vm216, %v4925, %v4956
    %v4959 = vunpack.c.l.s4 1934713408
    %v4960 = vunpack.c.0.s8 %v4959
    %v4961 = vperm.slane %v4955, %v4960
    %v4963 = vunpack.c.l.s4 1934713408
    %v4964 = vunpack.c.0.s8 %v4963
    %v4965 = vperm.slane %v4957, %v4964
    %v4966 = vrot.slane %v4929, 4
    %v4967 = vsel %vm216, %v4966, %v4917
    %v4968 = vrot.slane %v4917, 4
    %v4969 = vsel %vm216, %v4929, %v4968
    %v4971 = vunpack.c.l.s4 1934713408
    %v4972 = vunpack.c.0.s8 %v4971
    %v4973 = vperm.slane %v4967, %v4972
    %v4975 = vunpack.c.l.s4 1934713408
    %v4976 = vunpack.c.0.s8 %v4975
    %v4977 = vperm.slane %v4969, %v4976
    %v4978 = vrot.slane %v4961, 4
    %v4979 = vsel %vm216, %v4978, %v4937
    %v4980 = vrot.slane %v4937, 4
    %v4981 = vsel %vm216, %v4961, %v4980
    %v4982 = vrot.slane %v4965, 4
    %v4983 = vsel %vm216, %v4982, %v4941
    %v4984 = vrot.slane %v4941, 4
    %v4985 = vsel %vm216, %v4965, %v4984
    %v4986 = vrot.slane %v4973, 4
    %v4987 = vsel %vm216, %v4986, %v4949
    %v4988 = vrot.slane %v4949, 4
    %v4989 = vsel %vm216, %v4973, %v4988
    %v4990 = vrot.slane %v4977, 4
    %v4991 = vsel %vm216, %v4990, %v4953
    %v4992 = vrot.slane %v4953, 4
    %v4993 = vsel %vm216, %v4977, %v4992
    %v4994 = vrot.slane %v4503, 4
    %v4995 = vsel %vm216, %v4994, %v4445
    %v4996 = vrot.slane %v4445, 4
    %v4997 = vsel %vm216, %v4503, %v4996
    %v4999 = vunpack.c.l.s4 1983009808
    %v5000 = vunpack.c.0.s8 %v4999
    %v5001 = vperm.slane %v4995, %v5000
    %v5003 = vunpack.c.l.s4 1983009808
    %v5004 = vunpack.c.0.s8 %v5003
    %v5005 = vperm.slane %v4997, %v5004
    %v5006 = vrot.slane %v4532, 4
    %v5007 = vsel %vm216, %v5006, %v4474
    %v5008 = vrot.slane %v4474, 4
    %v5009 = vsel %vm216, %v4532, %v5008
    %v5011 = vunpack.c.l.s4 1983009808
    %v5012 = vunpack.c.0.s8 %v5011
    %v5013 = vperm.slane %v5007, %v5012
    %v5015 = vunpack.c.l.s4 1983009808
    %v5016 = vunpack.c.0.s8 %v5015
    %v5017 = vperm.slane %v5009, %v5016
    %v5018 = vrot.slane %v4619, 4
    %v5019 = vsel %vm216, %v5018, %v4561
    %v5020 = vrot.slane %v4561, 4
    %v5021 = vsel %vm216, %v4619, %v5020
    %v5023 = vunpack.c.l.s4 1983009808
    %v5024 = vunpack.c.0.s8 %v5023
    %v5025 = vperm.slane %v5019, %v5024
    %v5027 = vunpack.c.l.s4 1983009808
    %v5028 = vunpack.c.0.s8 %v5027
    %v5029 = vperm.slane %v5021, %v5028
    %v5030 = vrot.slane %v4648, 4
    %v5031 = vsel %vm216, %v5030, %v4590
    %v5032 = vrot.slane %v4590, 4
    %v5033 = vsel %vm216, %v4648, %v5032
    %v5035 = vunpack.c.l.s4 1983009808
    %v5036 = vunpack.c.0.s8 %v5035
    %v5037 = vperm.slane %v5031, %v5036
    %v5039 = vunpack.c.l.s4 1983009808
    %v5040 = vunpack.c.0.s8 %v5039
    %v5041 = vperm.slane %v5033, %v5040
    %v5042 = vrot.slane %v5013, 4
    %v5043 = vsel %vm216, %v5042, %v5001
    %v5044 = vrot.slane %v5001, 4
    %v5045 = vsel %vm216, %v5013, %v5044
    %v5047 = vunpack.c.l.s4 1934713408
    %v5048 = vunpack.c.0.s8 %v5047
    %v5049 = vperm.slane %v5043, %v5048
    %v5051 = vunpack.c.l.s4 1934713408
    %v5052 = vunpack.c.0.s8 %v5051
    %v5053 = vperm.slane %v5045, %v5052
    %v5054 = vrot.slane %v5017, 4
    %v5055 = vsel %vm216, %v5054, %v5005
    %v5056 = vrot.slane %v5005, 4
    %v5057 = vsel %vm216, %v5017, %v5056
    %v5059 = vunpack.c.l.s4 1934713408
    %v5060 = vunpack.c.0.s8 %v5059
    %v5061 = vperm.slane %v5055, %v5060
    %v5063 = vunpack.c.l.s4 1934713408
    %v5064 = vunpack.c.0.s8 %v5063
    %v5065 = vperm.slane %v5057, %v5064
    %v5066 = vrot.slane %v5037, 4
    %v5067 = vsel %vm216, %v5066, %v5025
    %v5068 = vrot.slane %v5025, 4
    %v5069 = vsel %vm216, %v5037, %v5068
    %v5071 = vunpack.c.l.s4 1934713408
    %v5072 = vunpack.c.0.s8 %v5071
    %v5073 = vperm.slane %v5067, %v5072
    %v5075 = vunpack.c.l.s4 1934713408
    %v5076 = vunpack.c.0.s8 %v5075
    %v5077 = vperm.slane %v5069, %v5076
    %v5078 = vrot.slane %v5041, 4
    %v5079 = vsel %vm216, %v5078, %v5029
    %v5080 = vrot.slane %v5029, 4
    %v5081 = vsel %vm216, %v5041, %v5080
    %v5083 = vunpack.c.l.s4 1934713408
    %v5084 = vunpack.c.0.s8 %v5083
    %v5085 = vperm.slane %v5079, %v5084
    %v5087 = vunpack.c.l.s4 1934713408
    %v5088 = vunpack.c.0.s8 %v5087
    %v5089 = vperm.slane %v5081, %v5088
    %v5090 = vrot.slane %v5073, 4
    %v5091 = vsel %vm216, %v5090, %v5049
    %v5092 = vrot.slane %v5049, 4
    %v5093 = vsel %vm216, %v5073, %v5092
    %v5094 = vrot.slane %v5077, 4
    %v5095 = vsel %vm216, %v5094, %v5053
    %v5096 = vrot.slane %v5053, 4
    %v5097 = vsel %vm216, %v5077, %v5096
    %v5098 = vrot.slane %v5085, 4
    %v5099 = vsel %vm216, %v5098, %v5061
    %v5100 = vrot.slane %v5061, 4
    %v5101 = vsel %vm216, %v5085, %v5100
    %v5102 = vrot.slane %v5089, 4
    %v5103 = vsel %vm216, %v5102, %v5065
    %v5104 = vrot.slane %v5065, 4
    %v5105 = vsel %vm216, %v5089, %v5104
    %v5106 = vrot.slane %v4732, 4
    %v5107 = vsel %vm216, %v5106, %v4674
    %v5108 = vrot.slane %v4674, 4
    %v5109 = vsel %vm216, %v4732, %v5108
    %v5111 = vunpack.c.l.s4 1983009808
    %v5112 = vunpack.c.0.s8 %v5111
    %v5113 = vperm.slane %v5107, %v5112
    %v5115 = vunpack.c.l.s4 1983009808
    %v5116 = vunpack.c.0.s8 %v5115
    %v5117 = vperm.slane %v5109, %v5116
    %v5118 = vrot.slane %v4761, 4
    %v5119 = vsel %vm216, %v5118, %v4703
    %v5120 = vrot.slane %v4703, 4
    %v5121 = vsel %vm216, %v4761, %v5120
    %v5123 = vunpack.c.l.s4 1983009808
    %v5124 = vunpack.c.0.s8 %v5123
    %v5125 = vperm.slane %v5119, %v5124
    %v5127 = vunpack.c.l.s4 1983009808
    %v5128 = vunpack.c.0.s8 %v5127
    %v5129 = vperm.slane %v5121, %v5128
    %v5130 = vrot.slane %v4848, 4
    %v5131 = vsel %vm216, %v5130, %v4790
    %v5132 = vrot.slane %v4790, 4
    %v5133 = vsel %vm216, %v4848, %v5132
    %v5135 = vunpack.c.l.s4 1983009808
    %v5136 = vunpack.c.0.s8 %v5135
    %v5137 = vperm.slane %v5131, %v5136
    %v5139 = vunpack.c.l.s4 1983009808
    %v5140 = vunpack.c.0.s8 %v5139
    %v5141 = vperm.slane %v5133, %v5140
    %v5142 = vrot.slane %v4877, 4
    %v5143 = vsel %vm216, %v5142, %v4819
    %v5144 = vrot.slane %v4819, 4
    %v5145 = vsel %vm216, %v4877, %v5144
    %v5147 = vunpack.c.l.s4 1983009808
    %v5148 = vunpack.c.0.s8 %v5147
    %v5149 = vperm.slane %v5143, %v5148
    %v5151 = vunpack.c.l.s4 1983009808
    %v5152 = vunpack.c.0.s8 %v5151
    %v5153 = vperm.slane %v5145, %v5152
    %v5154 = vrot.slane %v5125, 4
    %v5155 = vsel %vm216, %v5154, %v5113
    %v5156 = vrot.slane %v5113, 4
    %v5157 = vsel %vm216, %v5125, %v5156
    %v5159 = vunpack.c.l.s4 1934713408
    %v5160 = vunpack.c.0.s8 %v5159
    %v5161 = vperm.slane %v5155, %v5160
    %v5163 = vunpack.c.l.s4 1934713408
    %v5164 = vunpack.c.0.s8 %v5163
    %v5165 = vperm.slane %v5157, %v5164
    %v5166 = vrot.slane %v5129, 4
    %v5167 = vsel %vm216, %v5166, %v5117
    %v5168 = vrot.slane %v5117, 4
    %v5169 = vsel %vm216, %v5129, %v5168
    %v5171 = vunpack.c.l.s4 1934713408
    %v5172 = vunpack.c.0.s8 %v5171
    %v5173 = vperm.slane %v5167, %v5172
    %v5175 = vunpack.c.l.s4 1934713408
    %v5176 = vunpack.c.0.s8 %v5175
    %v5177 = vperm.slane %v5169, %v5176
    %v5178 = vrot.slane %v5149, 4
    %v5179 = vsel %vm216, %v5178, %v5137
    %v5180 = vrot.slane %v5137, 4
    %v5181 = vsel %vm216, %v5149, %v5180
    %v5183 = vunpack.c.l.s4 1934713408
    %v5184 = vunpack.c.0.s8 %v5183
    %v5185 = vperm.slane %v5179, %v5184
    %v5187 = vunpack.c.l.s4 1934713408
    %v5188 = vunpack.c.0.s8 %v5187
    %v5189 = vperm.slane %v5181, %v5188
    %v5190 = vrot.slane %v5153, 4
    %v5191 = vsel %vm216, %v5190, %v5141
    %v5192 = vrot.slane %v5141, 4
    %v5193 = vsel %vm216, %v5153, %v5192
    %v5195 = vunpack.c.l.s4 1934713408
    %v5196 = vunpack.c.0.s8 %v5195
    %v5197 = vperm.slane %v5191, %v5196
    %v5199 = vunpack.c.l.s4 1934713408
    %v5200 = vunpack.c.0.s8 %v5199
    %v5201 = vperm.slane %v5193, %v5200
    %v5202 = vrot.slane %v5185, 4
    %v5203 = vsel %vm216, %v5202, %v5161
    %v5204 = vrot.slane %v5161, 4
    %v5205 = vsel %vm216, %v5185, %v5204
    %v5206 = vrot.slane %v5189, 4
    %v5207 = vsel %vm216, %v5206, %v5165
    %v5208 = vrot.slane %v5165, 4
    %v5209 = vsel %vm216, %v5189, %v5208
    %v5210 = vrot.slane %v5197, 4
    %v5211 = vsel %vm216, %v5210, %v5173
    %v5212 = vrot.slane %v5173, 4
    %v5213 = vsel %vm216, %v5197, %v5212
    %v5214 = vrot.slane %v5201, 4
    %v5215 = vsel %vm216, %v5214, %v5177
    %v5216 = vrot.slane %v5177, 4
    %v5217 = vsel %vm216, %v5201, %v5216
    %v5218 = vrot.slane %v4735, 4
    %v5219 = vsel %vm216, %v5218, %v4677
    %v5220 = vrot.slane %v4677, 4
    %v5221 = vsel %vm216, %v4735, %v5220
    %v5223 = vunpack.c.l.s4 1983009808
    %v5224 = vunpack.c.0.s8 %v5223
    %v5225 = vperm.slane %v5219, %v5224
    %v5227 = vunpack.c.l.s4 1983009808
    %v5228 = vunpack.c.0.s8 %v5227
    %v5229 = vperm.slane %v5221, %v5228
    %v5230 = vrot.slane %v4764, 4
    %v5231 = vsel %vm216, %v5230, %v4706
    %v5232 = vrot.slane %v4706, 4
    %v5233 = vsel %vm216, %v4764, %v5232
    %v5235 = vunpack.c.l.s4 1983009808
    %v5236 = vunpack.c.0.s8 %v5235
    %v5237 = vperm.slane %v5231, %v5236
    %v5239 = vunpack.c.l.s4 1983009808
    %v5240 = vunpack.c.0.s8 %v5239
    %v5241 = vperm.slane %v5233, %v5240
    %v5242 = vrot.slane %v4851, 4
    %v5243 = vsel %vm216, %v5242, %v4793
    %v5244 = vrot.slane %v4793, 4
    %v5245 = vsel %vm216, %v4851, %v5244
    %v5247 = vunpack.c.l.s4 1983009808
    %v5248 = vunpack.c.0.s8 %v5247
    %v5249 = vperm.slane %v5243, %v5248
    %v5251 = vunpack.c.l.s4 1983009808
    %v5252 = vunpack.c.0.s8 %v5251
    %v5253 = vperm.slane %v5245, %v5252
    %v5254 = vrot.slane %v4880, 4
    %v5255 = vsel %vm216, %v5254, %v4822
    %v5256 = vrot.slane %v4822, 4
    %v5257 = vsel %vm216, %v4880, %v5256
    %v5259 = vunpack.c.l.s4 1983009808
    %v5260 = vunpack.c.0.s8 %v5259
    %v5261 = vperm.slane %v5255, %v5260
    %v5263 = vunpack.c.l.s4 1983009808
    %v5264 = vunpack.c.0.s8 %v5263
    %v5265 = vperm.slane %v5257, %v5264
    %v5266 = vrot.slane %v5237, 4
    %v5267 = vsel %vm216, %v5266, %v5225
    %v5268 = vrot.slane %v5225, 4
    %v5269 = vsel %vm216, %v5237, %v5268
    %v5271 = vunpack.c.l.s4 1934713408
    %v5272 = vunpack.c.0.s8 %v5271
    %v5273 = vperm.slane %v5267, %v5272
    %v5275 = vunpack.c.l.s4 1934713408
    %v5276 = vunpack.c.0.s8 %v5275
    %v5277 = vperm.slane %v5269, %v5276
    %v5278 = vrot.slane %v5241, 4
    %v5279 = vsel %vm216, %v5278, %v5229
    %v5280 = vrot.slane %v5229, 4
    %v5281 = vsel %vm216, %v5241, %v5280
    %v5283 = vunpack.c.l.s4 1934713408
    %v5284 = vunpack.c.0.s8 %v5283
    %v5285 = vperm.slane %v5279, %v5284
    %v5287 = vunpack.c.l.s4 1934713408
    %v5288 = vunpack.c.0.s8 %v5287
    %v5289 = vperm.slane %v5281, %v5288
    %v5290 = vrot.slane %v5261, 4
    %v5291 = vsel %vm216, %v5290, %v5249
    %v5292 = vrot.slane %v5249, 4
    %v5293 = vsel %vm216, %v5261, %v5292
    %v5295 = vunpack.c.l.s4 1934713408
    %v5296 = vunpack.c.0.s8 %v5295
    %v5297 = vperm.slane %v5291, %v5296
    %v5299 = vunpack.c.l.s4 1934713408
    %v5300 = vunpack.c.0.s8 %v5299
    %v5301 = vperm.slane %v5293, %v5300
    %v5302 = vrot.slane %v5265, 4
    %v5303 = vsel %vm216, %v5302, %v5253
    %v5304 = vrot.slane %v5253, 4
    %v5305 = vsel %vm216, %v5265, %v5304
    %v5307 = vunpack.c.l.s4 1934713408
    %v5308 = vunpack.c.0.s8 %v5307
    %v5309 = vperm.slane %v5303, %v5308
    %v5311 = vunpack.c.l.s4 1934713408
    %v5312 = vunpack.c.0.s8 %v5311
    %v5313 = vperm.slane %v5305, %v5312
    %v5314 = vrot.slane %v5297, 4
    %v5315 = vsel %vm216, %v5314, %v5273
    %v5316 = vrot.slane %v5273, 4
    %v5317 = vsel %vm216, %v5297, %v5316
    %v5318 = vrot.slane %v5301, 4
    %v5319 = vsel %vm216, %v5318, %v5277
    %v5320 = vrot.slane %v5277, 4
    %v5321 = vsel %vm216, %v5301, %v5320
    %v5322 = vrot.slane %v5309, 4
    %v5323 = vsel %vm216, %v5322, %v5285
    %v5324 = vrot.slane %v5285, 4
    %v5325 = vsel %vm216, %v5309, %v5324
    %v5326 = vrot.slane %v5313, 4
    %v5327 = vsel %vm216, %v5326, %v5289
    %v5328 = vrot.slane %v5289, 4
    %v5329 = vsel %vm216, %v5313, %v5328
    %v5330 = vrot.slane %v4983, 4
    %v5331 = vsel %vm216, %v5330, %v4979
    %v5332 = vrot.slane %v4979, 4
    %v5333 = vsel %vm216, %v4983, %v5332
    %v5335 = vunpack.c.l.s4 1983009808
    %v5336 = vunpack.c.0.s8 %v5335
    %v5337 = vperm.slane %v5331, %v5336
    %v5339 = vunpack.c.l.s4 1983009808
    %v5340 = vunpack.c.0.s8 %v5339
    %v5341 = vperm.slane %v5333, %v5340
    %v5342 = vrot.slane %v4985, 4
    %v5343 = vsel %vm216, %v5342, %v4981
    %v5344 = vrot.slane %v4981, 4
    %v5345 = vsel %vm216, %v4985, %v5344
    %v5347 = vunpack.c.l.s4 1983009808
    %v5348 = vunpack.c.0.s8 %v5347
    %v5349 = vperm.slane %v5343, %v5348
    %v5351 = vunpack.c.l.s4 1983009808
    %v5352 = vunpack.c.0.s8 %v5351
    %v5353 = vperm.slane %v5345, %v5352
    %v5354 = vrot.slane %v4991, 4
    %v5355 = vsel %vm216, %v5354, %v4987
    %v5356 = vrot.slane %v4987, 4
    %v5357 = vsel %vm216, %v4991, %v5356
    %v5359 = vunpack.c.l.s4 1983009808
    %v5360 = vunpack.c.0.s8 %v5359
    %v5361 = vperm.slane %v5355, %v5360
    %v5363 = vunpack.c.l.s4 1983009808
    %v5364 = vunpack.c.0.s8 %v5363
    %v5365 = vperm.slane %v5357, %v5364
    %v5366 = vrot.slane %v4993, 4
    %v5367 = vsel %vm216, %v5366, %v4989
    %v5368 = vrot.slane %v4989, 4
    %v5369 = vsel %vm216, %v4993, %v5368
    %v5371 = vunpack.c.l.s4 1983009808
    %v5372 = vunpack.c.0.s8 %v5371
    %v5373 = vperm.slane %v5367, %v5372
    %v5375 = vunpack.c.l.s4 1983009808
    %v5376 = vunpack.c.0.s8 %v5375
    %v5377 = vperm.slane %v5369, %v5376
    %v5378 = vrot.slane %v5349, 4
    %v5379 = vsel %vm216, %v5378, %v5337
    %v5380 = vrot.slane %v5337, 4
    %v5381 = vsel %vm216, %v5349, %v5380
    %v5383 = vunpack.c.l.s4 1934713408
    %v5384 = vunpack.c.0.s8 %v5383
    %v5385 = vperm.slane %v5379, %v5384
    %v5387 = vunpack.c.l.s4 1934713408
    %v5388 = vunpack.c.0.s8 %v5387
    %v5389 = vperm.slane %v5381, %v5388
    %v5390 = vrot.slane %v5353, 4
    %v5391 = vsel %vm216, %v5390, %v5341
    %v5392 = vrot.slane %v5341, 4
    %v5393 = vsel %vm216, %v5353, %v5392
    %v5395 = vunpack.c.l.s4 1934713408
    %v5396 = vunpack.c.0.s8 %v5395
    %v5397 = vperm.slane %v5391, %v5396
    %v5399 = vunpack.c.l.s4 1934713408
    %v5400 = vunpack.c.0.s8 %v5399
    %v5401 = vperm.slane %v5393, %v5400
    %v5402 = vrot.slane %v5373, 4
    %v5403 = vsel %vm216, %v5402, %v5361
    %v5404 = vrot.slane %v5361, 4
    %v5405 = vsel %vm216, %v5373, %v5404
    %v5407 = vunpack.c.l.s4 1934713408
    %v5408 = vunpack.c.0.s8 %v5407
    %v5409 = vperm.slane %v5403, %v5408
    %v5411 = vunpack.c.l.s4 1934713408
    %v5412 = vunpack.c.0.s8 %v5411
    %v5413 = vperm.slane %v5405, %v5412
    %v5414 = vrot.slane %v5377, 4
    %v5415 = vsel %vm216, %v5414, %v5365
    %v5416 = vrot.slane %v5365, 4
    %v5417 = vsel %vm216, %v5377, %v5416
    %v5419 = vunpack.c.l.s4 1934713408
    %v5420 = vunpack.c.0.s8 %v5419
    %v5421 = vperm.slane %v5415, %v5420
    %v5423 = vunpack.c.l.s4 1934713408
    %v5424 = vunpack.c.0.s8 %v5423
    %v5425 = vperm.slane %v5417, %v5424
    %v5426 = vrot.slane %v5409, 4
    %v5427 = vsel %vm216, %v5426, %v5385
    %v5428 = vrot.slane %v5385, 4
    %v5429 = vsel %vm216, %v5409, %v5428
    %v5430 = vrot.slane %v5413, 4
    %v5431 = vsel %vm216, %v5430, %v5389
    %v5432 = vrot.slane %v5389, 4
    %v5433 = vsel %vm216, %v5413, %v5432
    %v5434 = vrot.slane %v5421, 4
    %v5435 = vsel %vm216, %v5434, %v5397
    %v5436 = vrot.slane %v5397, 4
    %v5437 = vsel %vm216, %v5421, %v5436
    %v5438 = vrot.slane %v5425, 4
    %v5439 = vsel %vm216, %v5438, %v5401
    %v5440 = vrot.slane %v5401, 4
    %v5441 = vsel %vm216, %v5425, %v5440
    %v5442 = vrot.slane %v5095, 4
    %v5443 = vsel %vm216, %v5442, %v5091
    %v5444 = vrot.slane %v5091, 4
    %v5445 = vsel %vm216, %v5095, %v5444
    %v5447 = vunpack.c.l.s4 1983009808
    %v5448 = vunpack.c.0.s8 %v5447
    %v5449 = vperm.slane %v5443, %v5448
    %v5451 = vunpack.c.l.s4 1983009808
    %v5452 = vunpack.c.0.s8 %v5451
    %v5453 = vperm.slane %v5445, %v5452
    %v5454 = vrot.slane %v5097, 4
    %v5455 = vsel %vm216, %v5454, %v5093
    %v5456 = vrot.slane %v5093, 4
    %v5457 = vsel %vm216, %v5097, %v5456
    %v5459 = vunpack.c.l.s4 1983009808
    %v5460 = vunpack.c.0.s8 %v5459
    %v5461 = vperm.slane %v5455, %v5460
    %v5463 = vunpack.c.l.s4 1983009808
    %v5464 = vunpack.c.0.s8 %v5463
    %v5465 = vperm.slane %v5457, %v5464
    %v5466 = vrot.slane %v5103, 4
    %v5467 = vsel %vm216, %v5466, %v5099
    %v5468 = vrot.slane %v5099, 4
    %v5469 = vsel %vm216, %v5103, %v5468
    %v5471 = vunpack.c.l.s4 1983009808
    %v5472 = vunpack.c.0.s8 %v5471
    %v5473 = vperm.slane %v5467, %v5472
    %v5475 = vunpack.c.l.s4 1983009808
    %v5476 = vunpack.c.0.s8 %v5475
    %v5477 = vperm.slane %v5469, %v5476
    %v5478 = vrot.slane %v5105, 4
    %v5479 = vsel %vm216, %v5478, %v5101
    %v5480 = vrot.slane %v5101, 4
    %v5481 = vsel %vm216, %v5105, %v5480
    %v5483 = vunpack.c.l.s4 1983009808
    %v5484 = vunpack.c.0.s8 %v5483
    %v5485 = vperm.slane %v5479, %v5484
    %v5487 = vunpack.c.l.s4 1983009808
    %v5488 = vunpack.c.0.s8 %v5487
    %v5489 = vperm.slane %v5481, %v5488
    %v5490 = vrot.slane %v5461, 4
    %v5491 = vsel %vm216, %v5490, %v5449
    %v5492 = vrot.slane %v5449, 4
    %v5493 = vsel %vm216, %v5461, %v5492
    %v5495 = vunpack.c.l.s4 1934713408
    %v5496 = vunpack.c.0.s8 %v5495
    %v5497 = vperm.slane %v5491, %v5496
    %v5499 = vunpack.c.l.s4 1934713408
    %v5500 = vunpack.c.0.s8 %v5499
    %v5501 = vperm.slane %v5493, %v5500
    %v5502 = vrot.slane %v5465, 4
    %v5503 = vsel %vm216, %v5502, %v5453
    %v5504 = vrot.slane %v5453, 4
    %v5505 = vsel %vm216, %v5465, %v5504
    %v5507 = vunpack.c.l.s4 1934713408
    %v5508 = vunpack.c.0.s8 %v5507
    %v5509 = vperm.slane %v5503, %v5508
    %v5511 = vunpack.c.l.s4 1934713408
    %v5512 = vunpack.c.0.s8 %v5511
    %v5513 = vperm.slane %v5505, %v5512
    %v5514 = vrot.slane %v5485, 4
    %v5515 = vsel %vm216, %v5514, %v5473
    %v5516 = vrot.slane %v5473, 4
    %v5517 = vsel %vm216, %v5485, %v5516
    %v5519 = vunpack.c.l.s4 1934713408
    %v5520 = vunpack.c.0.s8 %v5519
    %v5521 = vperm.slane %v5515, %v5520
    %v5523 = vunpack.c.l.s4 1934713408
    %v5524 = vunpack.c.0.s8 %v5523
    %v5525 = vperm.slane %v5517, %v5524
    %v5526 = vrot.slane %v5489, 4
    %v5527 = vsel %vm216, %v5526, %v5477
    %v5528 = vrot.slane %v5477, 4
    %v5529 = vsel %vm216, %v5489, %v5528
    %v5531 = vunpack.c.l.s4 1934713408
    %v5532 = vunpack.c.0.s8 %v5531
    %v5533 = vperm.slane %v5527, %v5532
    %v5535 = vunpack.c.l.s4 1934713408
    %v5536 = vunpack.c.0.s8 %v5535
    %v5537 = vperm.slane %v5529, %v5536
    %v5538 = vrot.slane %v5521, 4
    %v5539 = vsel %vm216, %v5538, %v5497
    %v5540 = vrot.slane %v5497, 4
    %v5541 = vsel %vm216, %v5521, %v5540
    %v5542 = vrot.slane %v5525, 4
    %v5543 = vsel %vm216, %v5542, %v5501
    %v5544 = vrot.slane %v5501, 4
    %v5545 = vsel %vm216, %v5525, %v5544
    %v5546 = vrot.slane %v5533, 4
    %v5547 = vsel %vm216, %v5546, %v5509
    %v5548 = vrot.slane %v5509, 4
    %v5549 = vsel %vm216, %v5533, %v5548
    %v5550 = vrot.slane %v5537, 4
    %v5551 = vsel %vm216, %v5550, %v5513
    %v5552 = vrot.slane %v5513, 4
    %v5553 = vsel %vm216, %v5537, %v5552
    %v5554 = vrot.slane %v5207, 4
    %v5555 = vsel %vm216, %v5554, %v5203
    %v5556 = vrot.slane %v5203, 4
    %v5557 = vsel %vm216, %v5207, %v5556
    %v5559 = vunpack.c.l.s4 1983009808
    %v5560 = vunpack.c.0.s8 %v5559
    %v5561 = vperm.slane %v5555, %v5560
    %v5563 = vunpack.c.l.s4 1983009808
    %v5564 = vunpack.c.0.s8 %v5563
    %v5565 = vperm.slane %v5557, %v5564
    %v5566 = vrot.slane %v5209, 4
    %v5567 = vsel %vm216, %v5566, %v5205
    %v5568 = vrot.slane %v5205, 4
    %v5569 = vsel %vm216, %v5209, %v5568
    %v5571 = vunpack.c.l.s4 1983009808
    %v5572 = vunpack.c.0.s8 %v5571
    %v5573 = vperm.slane %v5567, %v5572
    %v5575 = vunpack.c.l.s4 1983009808
    %v5576 = vunpack.c.0.s8 %v5575
    %v5577 = vperm.slane %v5569, %v5576
    %v5578 = vrot.slane %v5215, 4
    %v5579 = vsel %vm216, %v5578, %v5211
    %v5580 = vrot.slane %v5211, 4
    %v5581 = vsel %vm216, %v5215, %v5580
    %v5583 = vunpack.c.l.s4 1983009808
    %v5584 = vunpack.c.0.s8 %v5583
    %v5585 = vperm.slane %v5579, %v5584
    %v5587 = vunpack.c.l.s4 1983009808
    %v5588 = vunpack.c.0.s8 %v5587
    %v5589 = vperm.slane %v5581, %v5588
    %v5590 = vrot.slane %v5217, 4
    %v5591 = vsel %vm216, %v5590, %v5213
    %v5592 = vrot.slane %v5213, 4
    %v5593 = vsel %vm216, %v5217, %v5592
    %v5595 = vunpack.c.l.s4 1983009808
    %v5596 = vunpack.c.0.s8 %v5595
    %v5597 = vperm.slane %v5591, %v5596
    %v5599 = vunpack.c.l.s4 1983009808
    %v5600 = vunpack.c.0.s8 %v5599
    %v5601 = vperm.slane %v5593, %v5600
    %v5602 = vrot.slane %v5573, 4
    %v5603 = vsel %vm216, %v5602, %v5561
    %v5604 = vrot.slane %v5561, 4
    %v5605 = vsel %vm216, %v5573, %v5604
    %v5607 = vunpack.c.l.s4 1934713408
    %v5608 = vunpack.c.0.s8 %v5607
    %v5609 = vperm.slane %v5603, %v5608
    %v5611 = vunpack.c.l.s4 1934713408
    %v5612 = vunpack.c.0.s8 %v5611
    %v5613 = vperm.slane %v5605, %v5612
    %v5614 = vrot.slane %v5577, 4
    %v5615 = vsel %vm216, %v5614, %v5565
    %v5616 = vrot.slane %v5565, 4
    %v5617 = vsel %vm216, %v5577, %v5616
    %v5619 = vunpack.c.l.s4 1934713408
    %v5620 = vunpack.c.0.s8 %v5619
    %v5621 = vperm.slane %v5615, %v5620
    %v5623 = vunpack.c.l.s4 1934713408
    %v5624 = vunpack.c.0.s8 %v5623
    %v5625 = vperm.slane %v5617, %v5624
    %v5626 = vrot.slane %v5597, 4
    %v5627 = vsel %vm216, %v5626, %v5585
    %v5628 = vrot.slane %v5585, 4
    %v5629 = vsel %vm216, %v5597, %v5628
    %v5631 = vunpack.c.l.s4 1934713408
    %v5632 = vunpack.c.0.s8 %v5631
    %v5633 = vperm.slane %v5627, %v5632
    %v5635 = vunpack.c.l.s4 1934713408
    %v5636 = vunpack.c.0.s8 %v5635
    %v5637 = vperm.slane %v5629, %v5636
    %v5638 = vrot.slane %v5601, 4
    %v5639 = vsel %vm216, %v5638, %v5589
    %v5640 = vrot.slane %v5589, 4
    %v5641 = vsel %vm216, %v5601, %v5640
    %v5643 = vunpack.c.l.s4 1934713408
    %v5644 = vunpack.c.0.s8 %v5643
    %v5645 = vperm.slane %v5639, %v5644
    %v5647 = vunpack.c.l.s4 1934713408
    %v5648 = vunpack.c.0.s8 %v5647
    %v5649 = vperm.slane %v5641, %v5648
    %v5650 = vrot.slane %v5633, 4
    %v5651 = vsel %vm216, %v5650, %v5609
    %v5652 = vrot.slane %v5609, 4
    %v5653 = vsel %vm216, %v5633, %v5652
    %v5654 = vrot.slane %v5637, 4
    %v5655 = vsel %vm216, %v5654, %v5613
    %v5656 = vrot.slane %v5613, 4
    %v5657 = vsel %vm216, %v5637, %v5656
    %v5658 = vrot.slane %v5645, 4
    %v5659 = vsel %vm216, %v5658, %v5621
    %v5660 = vrot.slane %v5621, 4
    %v5661 = vsel %vm216, %v5645, %v5660
    %v5662 = vrot.slane %v5649, 4
    %v5663 = vsel %vm216, %v5662, %v5625
    %v5664 = vrot.slane %v5625, 4
    %v5665 = vsel %vm216, %v5649, %v5664
    %v5666 = vrot.slane %v5319, 4
    %v5667 = vsel %vm216, %v5666, %v5315
    %v5668 = vrot.slane %v5315, 4
    %v5669 = vsel %vm216, %v5319, %v5668
    %v5671 = vunpack.c.l.s4 1983009808
    %v5672 = vunpack.c.0.s8 %v5671
    %v5673 = vperm.slane %v5667, %v5672
    %v5675 = vunpack.c.l.s4 1983009808
    %v5676 = vunpack.c.0.s8 %v5675
    %v5677 = vperm.slane %v5669, %v5676
    %v5678 = vrot.slane %v5321, 4
    %v5679 = vsel %vm216, %v5678, %v5317
    %v5680 = vrot.slane %v5317, 4
    %v5681 = vsel %vm216, %v5321, %v5680
    %v5683 = vunpack.c.l.s4 1983009808
    %v5684 = vunpack.c.0.s8 %v5683
    %v5685 = vperm.slane %v5679, %v5684
    %v5687 = vunpack.c.l.s4 1983009808
    %v5688 = vunpack.c.0.s8 %v5687
    %v5689 = vperm.slane %v5681, %v5688
    %v5690 = vrot.slane %v5327, 4
    %v5691 = vsel %vm216, %v5690, %v5323
    %v5692 = vrot.slane %v5323, 4
    %v5693 = vsel %vm216, %v5327, %v5692
    %v5695 = vunpack.c.l.s4 1983009808
    %v5696 = vunpack.c.0.s8 %v5695
    %v5697 = vperm.slane %v5691, %v5696
    %v5699 = vunpack.c.l.s4 1983009808
    %v5700 = vunpack.c.0.s8 %v5699
    %v5701 = vperm.slane %v5693, %v5700
    %v5702 = vrot.slane %v5329, 4
    %v5703 = vsel %vm216, %v5702, %v5325
    %v5704 = vrot.slane %v5325, 4
    %v5705 = vsel %vm216, %v5329, %v5704
    %v5707 = vunpack.c.l.s4 1983009808
    %v5708 = vunpack.c.0.s8 %v5707
    %v5709 = vperm.slane %v5703, %v5708
    %v5711 = vunpack.c.l.s4 1983009808
    %v5712 = vunpack.c.0.s8 %v5711
    %v5713 = vperm.slane %v5705, %v5712
    %v5714 = vrot.slane %v5685, 4
    %v5715 = vsel %vm216, %v5714, %v5673
    %v5716 = vrot.slane %v5673, 4
    %v5717 = vsel %vm216, %v5685, %v5716
    %v5719 = vunpack.c.l.s4 1934713408
    %v5720 = vunpack.c.0.s8 %v5719
    %v5721 = vperm.slane %v5715, %v5720
    %v5723 = vunpack.c.l.s4 1934713408
    %v5724 = vunpack.c.0.s8 %v5723
    %v5725 = vperm.slane %v5717, %v5724
    %v5726 = vrot.slane %v5689, 4
    %v5727 = vsel %vm216, %v5726, %v5677
    %v5728 = vrot.slane %v5677, 4
    %v5729 = vsel %vm216, %v5689, %v5728
    %v5731 = vunpack.c.l.s4 1934713408
    %v5732 = vunpack.c.0.s8 %v5731
    %v5733 = vperm.slane %v5727, %v5732
    %v5735 = vunpack.c.l.s4 1934713408
    %v5736 = vunpack.c.0.s8 %v5735
    %v5737 = vperm.slane %v5729, %v5736
    %v5738 = vrot.slane %v5709, 4
    %v5739 = vsel %vm216, %v5738, %v5697
    %v5740 = vrot.slane %v5697, 4
    %v5741 = vsel %vm216, %v5709, %v5740
    %v5743 = vunpack.c.l.s4 1934713408
    %v5744 = vunpack.c.0.s8 %v5743
    %v5745 = vperm.slane %v5739, %v5744
    %v5747 = vunpack.c.l.s4 1934713408
    %v5748 = vunpack.c.0.s8 %v5747
    %v5749 = vperm.slane %v5741, %v5748
    %v5750 = vrot.slane %v5713, 4
    %v5751 = vsel %vm216, %v5750, %v5701
    %v5752 = vrot.slane %v5701, 4
    %v5753 = vsel %vm216, %v5713, %v5752
    %v5755 = vunpack.c.l.s4 1934713408
    %v5756 = vunpack.c.0.s8 %v5755
    %v5757 = vperm.slane %v5751, %v5756
    %v5759 = vunpack.c.l.s4 1934713408
    %v5760 = vunpack.c.0.s8 %v5759
    %v5761 = vperm.slane %v5753, %v5760
    %v5762 = vrot.slane %v5745, 4
    %v5763 = vsel %vm216, %v5762, %v5721
    %v5764 = vrot.slane %v5721, 4
    %v5765 = vsel %vm216, %v5745, %v5764
    %v5766 = vrot.slane %v5749, 4
    %v5767 = vsel %vm216, %v5766, %v5725
    %v5768 = vrot.slane %v5725, 4
    %v5769 = vsel %vm216, %v5749, %v5768
    %v5770 = vrot.slane %v5757, 4
    %v5771 = vsel %vm216, %v5770, %v5733
    %v5772 = vrot.slane %v5733, 4
    %v5773 = vsel %vm216, %v5757, %v5772
    %v5774 = vrot.slane %v5761, 4
    %v5775 = vsel %vm216, %v5774, %v5737
    %v5776 = vrot.slane %v5737, 4
    %v5777 = vsel %vm216, %v5761, %v5776
    %5782 = vrot.lane.b32.xlu0 %v5429, 8
    %v5783 = vpop.permute.xlu0 %5782
    %5784 = vrot.lane.b32.xlu0 %v5541, 8
    %v5785 = vpop.permute.xlu0 %5784
    %5786 = vrot.lane.b32.xlu0 %v5653, 8
    %v5787 = vpop.permute.xlu0 %5786
    %5788 = vrot.lane.b32.xlu0 %v5765, 8
    %v5789 = vpop.permute.xlu0 %5788
    %5798 = vrot.lane.b32.xlu0 %v5431, 16
    %v5799 = vpop.permute.xlu0 %5798
    %5800 = vrot.lane.b32.xlu0 %v5543, 16
    %v5801 = vpop.permute.xlu0 %5800
    %5802 = vrot.lane.b32.xlu0 %v5655, 16
    %v5803 = vpop.permute.xlu0 %5802
    %5804 = vrot.lane.b32.xlu0 %v5767, 16
    %v5805 = vpop.permute.xlu0 %5804
    %5814 = vrot.lane.b32.xlu0 %v5433, 24
    %v5815 = vpop.permute.xlu0 %5814
    %5816 = vrot.lane.b32.xlu0 %v5545, 24
    %v5817 = vpop.permute.xlu0 %5816
    %5818 = vrot.lane.b32.xlu0 %v5657, 24
    %v5819 = vpop.permute.xlu0 %5818
    %5820 = vrot.lane.b32.xlu0 %v5769, 24
    %v5821 = vpop.permute.xlu0 %5820
    %5830 = vrot.lane.b32.xlu0 %v5435, 32
    %v5831 = vpop.permute.xlu0 %5830
    %5832 = vrot.lane.b32.xlu0 %v5547, 32
    %v5833 = vpop.permute.xlu0 %5832
    %5834 = vrot.lane.b32.xlu0 %v5659, 32
    %v5835 = vpop.permute.xlu0 %5834
    %5836 = vrot.lane.b32.xlu0 %v5771, 32
    %v5837 = vpop.permute.xlu0 %5836
    %5846 = vrot.lane.b32.xlu0 %v5437, 40
    %v5847 = vpop.permute.xlu0 %5846
    %5848 = vrot.lane.b32.xlu0 %v5549, 40
    %v5849 = vpop.permute.xlu0 %5848
    %5850 = vrot.lane.b32.xlu0 %v5661, 40
    %v5851 = vpop.permute.xlu0 %5850
    %5852 = vrot.lane.b32.xlu0 %v5773, 40
    %v5853 = vpop.permute.xlu0 %5852
    %5862 = vrot.lane.b32.xlu0 %v5439, 48
    %v5863 = vpop.permute.xlu0 %5862
    %5864 = vrot.lane.b32.xlu0 %v5551, 48
    %v5865 = vpop.permute.xlu0 %5864
    %5866 = vrot.lane.b32.xlu0 %v5663, 48
    %v5867 = vpop.permute.xlu0 %5866
    %5868 = vrot.lane.b32.xlu0 %v5775, 48
    %v5869 = vpop.permute.xlu0 %5868
    %5878 = vrot.lane.b32.xlu0 %v5441, 56
    %v5879 = vpop.permute.xlu0 %5878
    %5880 = vrot.lane.b32.xlu0 %v5553, 56
    %v5881 = vpop.permute.xlu0 %5880
    %5882 = vrot.lane.b32.xlu0 %v5665, 56
    %v5883 = vpop.permute.xlu0 %5882
    %5884 = vrot.lane.b32.xlu0 %v5777, 56
    %v5885 = vpop.permute.xlu0 %5884
    %v5890 = vsel %vm3088, %v5427, %v5783
    %v5891 = vsel %vm3088, %v5539, %v5785
    %v5892 = vsel %vm3088, %v5651, %v5787
    %v5893 = vsel %vm3088, %v5763, %v5789
    %v5894 = vsel %vm3649, %v5890, %v5799
    %v5895 = vsel %vm3649, %v5891, %v5801
    %v5896 = vsel %vm3649, %v5892, %v5803
    %v5897 = vsel %vm3649, %v5893, %v5805
    %vm5898 = vcmask 195584
    %v5899 = vsel %vm5898, %v5894, %v5815
    %v5900 = vsel %vm5898, %v5895, %v5817
    %v5901 = vsel %vm5898, %v5896, %v5819
    %v5902 = vsel %vm5898, %v5897, %v5821
    %v5903 = vsel %vm56, %v5899, %v5831
    %v5904 = vsel %vm56, %v5900, %v5833
    %v5905 = vsel %vm56, %v5901, %v5835
    %v5906 = vsel %vm56, %v5902, %v5837
    %vm5907 = vcmask 326656
    %v5908 = vsel %vm5907, %v5903, %v5847
    %v5909 = vsel %vm5907, %v5904, %v5849
    %v5910 = vsel %vm5907, %v5905, %v5851
    %v5911 = vsel %vm5907, %v5906, %v5853
    %vm5912 = vcmask 392192
    %v5913 = vsel %vm5912, %v5908, %v5863
    %v5914 = vsel %vm5912, %v5909, %v5865
    %v5915 = vsel %vm5912, %v5910, %v5867
    %v5916 = vsel %vm5912, %v5911, %v5869
    %vm5917 = vcmask 457728
    %v5918 = vsel %vm5917, %v5913, %v5879
    %v5919 = vsel %vm5917, %v5914, %v5881
    %v5920 = vsel %vm5917, %v5915, %v5883
    %v5921 = vsel %vm5917, %v5916, %v5885
    %vm5922 = vcmask 523264
    %5923 = vst.msk [vmem:[#allocation7] sm:$0xff] %vm5922, %v5918
    %5924 = vst.msk [vmem:[#allocation7 + $0x8] sm:$0xff] %vm5922, %v5919
    %5925 = vst.msk [vmem:[#allocation7 + $0x10] sm:$0xff] %vm5922, %v5920
    %5926 = vst.msk [vmem:[#allocation7 + $0x18] sm:$0xff] %vm5922, %v5921
    // Predicated region
    $region18: #{tpu_custom_call.1} parent=1 // pred_check
      _
    $region19: #{tpu_custom_call.1} parent=1 // pred_check_branch
      %5928 = sbr.rel (0) target = $region21
    $region20: #{tpu_custom_call.1} parent=1 // pred_region
      %5930 = vsyncadd [#allocation4], 0
      %s5931 = sshll.u32 [#allocation7], 4
      %s5932 = int_to_ptr.vmem [resolvable:$true] %s5931
      %s5933 = sshll.u32 %s2, 4
      %s5934 = int_to_ptr.hbm [resolvable:$true] %s5933
      %5939 = dma.vmem_to_hbm [thread:$0]  %s5932, 512, %s5934, [#allocation4], 128, 128, 8
    $region21: #{tpu_custom_call.1} parent=1 // pred_fallthru
      _
    // Predicated region
    $region22: #{tpu_custom_call.1} parent=1 // pred_check
      _
    $region23: #{tpu_custom_call.1} parent=1 // pred_check_branch
      %5941 = sbr.rel (0) target = $region25
    $region24: #{tpu_custom_call.1} parent=1 // pred_region
      %5943 = dma.done [#allocation4], 512
    $region25: #{tpu_custom_call.1} parent=1 // pred_fallthru
      _
    %5944 = vsyncpa [#allocation3], 1
    %5945 = vsyncpa [#allocation6], 1
    %5946 = vsyncpa [#allocation4], 1

// kernel: tpu_custom_call.1
$region0: #{tpu_custom_call.1}
  #allocation0 [shape = 'u32[]', space=smem, size = 0x4, offset = 0x4, fixed_abs, tag = 'smem constant byte address 0x4 - core index']
  #allocation1 [shape = 'u32[72,128]{1,0:T(1,128)}', space=vmem, size = 0x9000, scoped, tag = 'internal scratch']
  %s0 = inlined_call_operand.hbm [shape: f32[2,16,32], index: 0, kind: input, shape index: {}]
  %s1 = inlined_call_operand.hbm [shape: f32[32,192], index: 1, kind: input, shape index: {}]
  %s2 = inlined_call_operand.hbm [shape: f32[2,16,64], index: 2, kind: output, shape index: {}]
  %s3 = sld [smem:[#allocation0]]
  $region26: #{tpu_custom_call.1} parent=0
    _
  %s5 = ssub.s32 1, %s3
  %s6 = scalar_select 0, %s5, %s3
  $region1: #{tpu_custom_call.1} parent=0
    #allocation2 [shape = 'u8[16384]{0}', space=vmem, size = 0x4000, scoped, tag = 'input window, operand 0, single buffered']
    #allocation3 [shape = 's32[1]{0}', space=sflag, size = 0x4, scoped, tag = 'scoped memory for tpu_custom_call.1']
    #allocation4 [shape = 's32[1]{0}', space=sflag, size = 0x4, scoped, tag = 'scoped memory for tpu_custom_call.1']
    #allocation5 [shape = 'u8[32768]{0}', space=vmem, size = 0x8000, scoped, tag = 'input window, operand 1, single buffered']
    #allocation6 [shape = 's32[1]{0}', space=sflag, size = 0x4, scoped, tag = 'scoped memory for tpu_custom_call.1']
    #allocation7 [shape = 'u8[16384]{0}', space=vmem, size = 0x4000, scoped, tag = 'output window, operand 0, single buffered']
    %7 = vsyncpa [#allocation3], 0
    %8 = vsyncpa [#allocation6], 0
    %9 = vsyncpa [#allocation4], 0
    // Predicated region
    $region2: #{tpu_custom_call.1} parent=1 // pred_check
      _
    $region3: #{tpu_custom_call.1} parent=1 // pred_check_branch
      %11 = sbr.rel (0) target = $region5
    $region4: #{tpu_custom_call.1} parent=1 // pred_region
      %13 = vsyncadd [#allocation3], 0
      %s14 = sshll.u32 %s0, 4
      %s15 = int_to_ptr.hbm [resolvable:$true] %s14
      %s16 = sshll.u32 [#allocation2], 4
      %s17 = int_to_ptr.vmem [resolvable:$true] %s16
      %22 = dma.hbm_to_vmem [thread:$0]  %s15, 512, %s17, [#allocation3], 128, 128, 8
    $region5: #{tpu_custom_call.1} parent=1 // pred_fallthru
      _
    // Predicated region
    $region6: #{tpu_custom_call.1} parent=1 // pred_check
      _
    $region7: #{tpu_custom_call.1} parent=1 // pred_check_branch
      %24 = sbr.rel (0) target = $region9
    $region8: #{tpu_custom_call.1} parent=1 // pred_region
      %26 = vsyncadd [#allocation6], 0
      %s27 = sshll.u32 %s1, 4
      %s28 = int_to_ptr.hbm [resolvable:$true] %s27
      %s29 = sshll.u32 [#allocation5], 4
      %s30 = int_to_ptr.vmem [resolvable:$true] %s29
      %35 = dma.hbm_to_vmem [thread:$0]  %s28, 1024, %s30, [#allocation6], 256, 256, 16
    $region9: #{tpu_custom_call.1} parent=1 // pred_fallthru
      _
    // Predicated region
    $region10: #{tpu_custom_call.1} parent=1 // pred_check
      _
    $region11: #{tpu_custom_call.1} parent=1 // pred_check_branch
      %37 = sbr.rel (0) target = $region13
    $region12: #{tpu_custom_call.1} parent=1 // pred_region
      %39 = dma.done [#allocation3], 512
    $region13: #{tpu_custom_call.1} parent=1 // pred_fallthru
      _
    // Predicated region
    $region14: #{tpu_custom_call.1} parent=1 // pred_check
      _
    $region15: #{tpu_custom_call.1} parent=1 // pred_check_branch
      %41 = sbr.rel (0) target = $region17
    $region16: #{tpu_custom_call.1} parent=1 // pred_region
      %43 = dma.done [#allocation6], 1024
    $region17: #{tpu_custom_call.1} parent=1 // pred_fallthru
      _
    %v44 = vld [vmem:[#allocation2] sm:$0xff]
    %v45 = vld [vmem:[#allocation2 + $0x8] sm:$0xff]
    %v46 = vld [vmem:[#allocation2 + $0x10] sm:$0xff]
    %v47 = vld [vmem:[#allocation2 + $0x18] sm:$0xff]
    %v48 = vld [vmem:[#allocation5] sm:$0xff]
    %v49 = vld [vmem:[#allocation5 + $0x8] sm:$0xff]
    %v50 = vld [vmem:[#allocation5 + $0x10] sm:$0xff]
    %v51 = vld [vmem:[#allocation5 + $0x18] sm:$0xff]
    %v52 = vld [vmem:[#allocation5 + $0x20] sm:$0xff]
    %v53 = vld [vmem:[#allocation5 + $0x28] sm:$0xff]
    %v54 = vld [vmem:[#allocation5 + $0x30] sm:$0xff]
    %v55 = vld [vmem:[#allocation5 + $0x38] sm:$0xff]
    %vm56 = vcmask 261120
    %v58 = vsel %vm56, %v44, 0
    %v61 = vsel %vm56, %v45, 0
    %v64 = vsel %vm56, %v46, 0
    %v67 = vsel %vm56, %v47, 0
    %69 = vmatpush.msra.mxu0 0.0
    %70 = vmatpush.msra.mxu0 0.0
    %71 = vmatpush.msra.mxu0 0.0
    %72 = vmatpush.msra.mxu0 0.0
    %73 = vmatpush.msra.mxu0 0.0
    %74 = vmatpush.msra.mxu0 0.0
    %75 = vmatpush.msra.mxu0 0.0
    %76 = vmatpush.msra.mxu0 0.0
    %77 = vmatpush.msra.mxu0 0.0
    %78 = vmatpush.msra.mxu0 0.0
    %79 = vmatpush.msra.mxu0 0.0
    %80 = vmatpush.msra.mxu0 0.0
    %81 = vmatpush.msra.mxu0 %v54
    %82 = vmatpush.msra.mxu0 %v52
    %83 = vmatpush.msra.mxu0 %v50
    %84 = vmatpush.msra.mxu0 %v48
    %85 = vmatmul.f32.gmra.mxu0 %v58
    %v86 = vpop.f32.mrf.mxu0
    %v87 = vadd.f32 0.0, %v86
    %88 = vmatmul.f32.gmra.mxu0 %v61
    %v89 = vpop.f32.mrf.mxu0
    %v90 = vadd.f32 0.0, %v89
    %91 = vmatmul.f32.gmra.mxu0 %v64
    %v92 = vpop.f32.mrf.mxu0
    %v93 = vadd.f32 0.0, %v92
    %94 = vmatmul.f32.gmra.mxu0 %v67
    %v95 = vpop.f32.mrf.mxu0
    %v96 = vadd.f32 0.0, %v95
    %97 = vdwg.mxu0
    %98 = vmatpush.msra.mxu0 0.0
    %99 = vmatpush.msra.mxu0 0.0
    %100 = vmatpush.msra.mxu0 0.0
    %101 = vmatpush.msra.mxu0 0.0
    %102 = vmatpush.msra.mxu0 0.0
    %103 = vmatpush.msra.mxu0 0.0
    %104 = vmatpush.msra.mxu0 0.0
    %105 = vmatpush.msra.mxu0 0.0
    %106 = vmatpush.msra.mxu0 0.0
    %107 = vmatpush.msra.mxu0 0.0
    %108 = vmatpush.msra.mxu0 0.0
    %109 = vmatpush.msra.mxu0 0.0
    %110 = vmatpush.msra.mxu0 %v55
    %111 = vmatpush.msra.mxu0 %v53
    %112 = vmatpush.msra.mxu0 %v51
    %113 = vmatpush.msra.mxu0 %v49
    %114 = vmatmul.f32.gmra.mxu0 %v58
    %v115 = vpop.f32.mrf.mxu0
    %v116 = vadd.f32 0.0, %v115
    %117 = vmatmul.f32.gmra.mxu0 %v61
    %v118 = vpop.f32.mrf.mxu0
    %v119 = vadd.f32 0.0, %v118
    %120 = vmatmul.f32.gmra.mxu0 %v64
    %v121 = vpop.f32.mrf.mxu0
    %v122 = vadd.f32 0.0, %v121
    %123 = vmatmul.f32.gmra.mxu0 %v67
    %v124 = vpop.f32.mrf.mxu0
    %v125 = vadd.f32 0.0, %v124
    %126 = vdwg.mxu0
    %131 = vrot.lane.b32.xlu0 %v87, 120
    %v132 = vpop.permute.xlu0 %131
    %133 = vrot.lane.b32.xlu0 %v90, 120
    %v134 = vpop.permute.xlu0 %133
    %135 = vrot.lane.b32.xlu0 %v93, 120
    %v136 = vpop.permute.xlu0 %135
    %137 = vrot.lane.b32.xlu0 %v96, 120
    %v138 = vpop.permute.xlu0 %137
    %143 = vrot.lane.b32.xlu0 %v87, 112
    %v144 = vpop.permute.xlu0 %143
    %145 = vrot.lane.b32.xlu0 %v90, 112
    %v146 = vpop.permute.xlu0 %145
    %147 = vrot.lane.b32.xlu0 %v93, 112
    %v148 = vpop.permute.xlu0 %147
    %149 = vrot.lane.b32.xlu0 %v96, 112
    %v150 = vpop.permute.xlu0 %149
    %155 = vrot.lane.b32.xlu0 %v87, 104
    %v156 = vpop.permute.xlu0 %155
    %157 = vrot.lane.b32.xlu0 %v90, 104
    %v158 = vpop.permute.xlu0 %157
    %159 = vrot.lane.b32.xlu0 %v93, 104
    %v160 = vpop.permute.xlu0 %159
    %161 = vrot.lane.b32.xlu0 %v96, 104
    %v162 = vpop.permute.xlu0 %161
    %167 = vrot.lane.b32.xlu0 %v87, 96
    %v168 = vpop.permute.xlu0 %167
    %169 = vrot.lane.b32.xlu0 %v90, 96
    %v170 = vpop.permute.xlu0 %169
    %171 = vrot.lane.b32.xlu0 %v93, 96
    %v172 = vpop.permute.xlu0 %171
    %173 = vrot.lane.b32.xlu0 %v96, 96
    %v174 = vpop.permute.xlu0 %173
    %179 = vrot.lane.b32.xlu0 %v87, 88
    %v180 = vpop.permute.xlu0 %179
    %181 = vrot.lane.b32.xlu0 %v90, 88
    %v182 = vpop.permute.xlu0 %181
    %183 = vrot.lane.b32.xlu0 %v93, 88
    %v184 = vpop.permute.xlu0 %183
    %185 = vrot.lane.b32.xlu0 %v96, 88
    %v186 = vpop.permute.xlu0 %185
    %191 = vrot.lane.b32.xlu0 %v87, 80
    %v192 = vpop.permute.xlu0 %191
    %193 = vrot.lane.b32.xlu0 %v90, 80
    %v194 = vpop.permute.xlu0 %193
    %195 = vrot.lane.b32.xlu0 %v93, 80
    %v196 = vpop.permute.xlu0 %195
    %197 = vrot.lane.b32.xlu0 %v96, 80
    %v198 = vpop.permute.xlu0 %197
    %203 = vrot.lane.b32.xlu0 %v87, 72
    %v204 = vpop.permute.xlu0 %203
    %205 = vrot.lane.b32.xlu0 %v90, 72
    %v206 = vpop.permute.xlu0 %205
    %207 = vrot.lane.b32.xlu0 %v93, 72
    %v208 = vpop.permute.xlu0 %207
    %209 = vrot.lane.b32.xlu0 %v96, 72
    %v210 = vpop.permute.xlu0 %209
    %v215 = vrot.slane %v144, 4
    %vm216 = vcmask 1047556
    %v217 = vsel %vm216, %v215, %v87
    %v218 = vrot.slane %v87, 4
    %v219 = vsel %vm216, %v144, %v218
    %v221 = vunpack.c.l.s4 1983009808
    %v222 = vunpack.c.0.s8 %v221
    %v223 = vperm.slane %v217, %v222
    %v225 = vunpack.c.l.s4 1983009808
    %v226 = vunpack.c.0.s8 %v225
    %v227 = vperm.slane %v219, %v226
    %v228 = vrot.slane %v156, 4
    %v229 = vsel %vm216, %v228, %v132
    %v230 = vrot.slane %v132, 4
    %v231 = vsel %vm216, %v156, %v230
    %v233 = vunpack.c.l.s4 1983009808
    %v234 = vunpack.c.0.s8 %v233
    %v235 = vperm.slane %v229, %v234
    %v237 = vunpack.c.l.s4 1983009808
    %v238 = vunpack.c.0.s8 %v237
    %v239 = vperm.slane %v231, %v238
    %v240 = vrot.slane %v192, 4
    %v241 = vsel %vm216, %v240, %v168
    %v242 = vrot.slane %v168, 4
    %v243 = vsel %vm216, %v192, %v242
    %v245 = vunpack.c.l.s4 1983009808
    %v246 = vunpack.c.0.s8 %v245
    %v247 = vperm.slane %v241, %v246
    %v249 = vunpack.c.l.s4 1983009808
    %v250 = vunpack.c.0.s8 %v249
    %v251 = vperm.slane %v243, %v250
    %v252 = vrot.slane %v204, 4
    %v253 = vsel %vm216, %v252, %v180
    %v254 = vrot.slane %v180, 4
    %v255 = vsel %vm216, %v204, %v254
    %v257 = vunpack.c.l.s4 1983009808
    %v258 = vunpack.c.0.s8 %v257
    %v259 = vperm.slane %v253, %v258
    %v261 = vunpack.c.l.s4 1983009808
    %v262 = vunpack.c.0.s8 %v261
    %v263 = vperm.slane %v255, %v262
    %v264 = vrot.slane %v235, 4
    %v265 = vsel %vm216, %v264, %v223
    %v266 = vrot.slane %v223, 4
    %v267 = vsel %vm216, %v235, %v266
    %v269 = vunpack.c.l.s4 1934713408
    %v270 = vunpack.c.0.s8 %v269
    %v271 = vperm.slane %v265, %v270
    %v273 = vunpack.c.l.s4 1934713408
    %v274 = vunpack.c.0.s8 %v273
    %v275 = vperm.slane %v267, %v274
    %v276 = vrot.slane %v239, 4
    %v277 = vsel %vm216, %v276, %v227
    %v278 = vrot.slane %v227, 4
    %v279 = vsel %vm216, %v239, %v278
    %v281 = vunpack.c.l.s4 1934713408
    %v282 = vunpack.c.0.s8 %v281
    %v283 = vperm.slane %v277, %v282
    %v285 = vunpack.c.l.s4 1934713408
    %v286 = vunpack.c.0.s8 %v285
    %v287 = vperm.slane %v279, %v286
    %v288 = vrot.slane %v259, 4
    %v289 = vsel %vm216, %v288, %v247
    %v290 = vrot.slane %v247, 4
    %v291 = vsel %vm216, %v259, %v290
    %v293 = vunpack.c.l.s4 1934713408
    %v294 = vunpack.c.0.s8 %v293
    %v295 = vperm.slane %v289, %v294
    %v297 = vunpack.c.l.s4 1934713408
    %v298 = vunpack.c.0.s8 %v297
    %v299 = vperm.slane %v291, %v298
    %v300 = vrot.slane %v263, 4
    %v301 = vsel %vm216, %v300, %v251
    %v302 = vrot.slane %v251, 4
    %v303 = vsel %vm216, %v263, %v302
    %v305 = vunpack.c.l.s4 1934713408
    %v306 = vunpack.c.0.s8 %v305
    %v307 = vperm.slane %v301, %v306
    %v309 = vunpack.c.l.s4 1934713408
    %v310 = vunpack.c.0.s8 %v309
    %v311 = vperm.slane %v303, %v310
    %v312 = vrot.slane %v295, 4
    %v313 = vsel %vm216, %v312, %v271
    %v314 = vrot.slane %v271, 4
    %v315 = vsel %vm216, %v295, %v314
    %v316 = vrot.slane %v299, 4
    %v317 = vsel %vm216, %v316, %v275
    %v318 = vrot.slane %v275, 4
    %v319 = vsel %vm216, %v299, %v318
    %v320 = vrot.slane %v307, 4
    %v321 = vsel %vm216, %v320, %v283
    %v322 = vrot.slane %v283, 4
    %v323 = vsel %vm216, %v307, %v322
    %v324 = vrot.slane %v311, 4
    %v325 = vsel %vm216, %v324, %v287
    %v326 = vrot.slane %v287, 4
    %v327 = vsel %vm216, %v311, %v326
    %v328 = vrot.slane %v146, 4
    %v329 = vsel %vm216, %v328, %v90
    %v330 = vrot.slane %v90, 4
    %v331 = vsel %vm216, %v146, %v330
    %v333 = vunpack.c.l.s4 1983009808
    %v334 = vunpack.c.0.s8 %v333
    %v335 = vperm.slane %v329, %v334
    %v337 = vunpack.c.l.s4 1983009808
    %v338 = vunpack.c.0.s8 %v337
    %v339 = vperm.slane %v331, %v338
    %v340 = vrot.slane %v158, 4
    %v341 = vsel %vm216, %v340, %v134
    %v342 = vrot.slane %v134, 4
    %v343 = vsel %vm216, %v158, %v342
    %v345 = vunpack.c.l.s4 1983009808
    %v346 = vunpack.c.0.s8 %v345
    %v347 = vperm.slane %v341, %v346
    %v349 = vunpack.c.l.s4 1983009808
    %v350 = vunpack.c.0.s8 %v349
    %v351 = vperm.slane %v343, %v350
    %v352 = vrot.slane %v194, 4
    %v353 = vsel %vm216, %v352, %v170
    %v354 = vrot.slane %v170, 4
    %v355 = vsel %vm216, %v194, %v354
    %v357 = vunpack.c.l.s4 1983009808
    %v358 = vunpack.c.0.s8 %v357
    %v359 = vperm.slane %v353, %v358
    %v361 = vunpack.c.l.s4 1983009808
    %v362 = vunpack.c.0.s8 %v361
    %v363 = vperm.slane %v355, %v362
    %v364 = vrot.slane %v206, 4
    %v365 = vsel %vm216, %v364, %v182
    %v366 = vrot.slane %v182, 4
    %v367 = vsel %vm216, %v206, %v366
    %v369 = vunpack.c.l.s4 1983009808
    %v370 = vunpack.c.0.s8 %v369
    %v371 = vperm.slane %v365, %v370
    %v373 = vunpack.c.l.s4 1983009808
    %v374 = vunpack.c.0.s8 %v373
    %v375 = vperm.slane %v367, %v374
    %v376 = vrot.slane %v347, 4
    %v377 = vsel %vm216, %v376, %v335
    %v378 = vrot.slane %v335, 4
    %v379 = vsel %vm216, %v347, %v378
    %v381 = vunpack.c.l.s4 1934713408
    %v382 = vunpack.c.0.s8 %v381
    %v383 = vperm.slane %v377, %v382
    %v385 = vunpack.c.l.s4 1934713408
    %v386 = vunpack.c.0.s8 %v385
    %v387 = vperm.slane %v379, %v386
    %v388 = vrot.slane %v351, 4
    %v389 = vsel %vm216, %v388, %v339
    %v390 = vrot.slane %v339, 4
    %v391 = vsel %vm216, %v351, %v390
    %v393 = vunpack.c.l.s4 1934713408
    %v394 = vunpack.c.0.s8 %v393
    %v395 = vperm.slane %v389, %v394
    %v397 = vunpack.c.l.s4 1934713408
    %v398 = vunpack.c.0.s8 %v397
    %v399 = vperm.slane %v391, %v398
    %v400 = vrot.slane %v371, 4
    %v401 = vsel %vm216, %v400, %v359
    %v402 = vrot.slane %v359, 4
    %v403 = vsel %vm216, %v371, %v402
    %v405 = vunpack.c.l.s4 1934713408
    %v406 = vunpack.c.0.s8 %v405
    %v407 = vperm.slane %v401, %v406
    %v409 = vunpack.c.l.s4 1934713408
    %v410 = vunpack.c.0.s8 %v409
    %v411 = vperm.slane %v403, %v410
    %v412 = vrot.slane %v375, 4
    %v413 = vsel %vm216, %v412, %v363
    %v414 = vrot.slane %v363, 4
    %v415 = vsel %vm216, %v375, %v414
    %v417 = vunpack.c.l.s4 1934713408
    %v418 = vunpack.c.0.s8 %v417
    %v419 = vperm.slane %v413, %v418
    %v421 = vunpack.c.l.s4 1934713408
    %v422 = vunpack.c.0.s8 %v421
    %v423 = vperm.slane %v415, %v422
    %v424 = vrot.slane %v407, 4
    %v425 = vsel %vm216, %v424, %v383
    %v426 = vrot.slane %v383, 4
    %v427 = vsel %vm216, %v407, %v426
    %v428 = vrot.slane %v411, 4
    %v429 = vsel %vm216, %v428, %v387
    %v430 = vrot.slane %v387, 4
    %v431 = vsel %vm216, %v411, %v430
    %v432 = vrot.slane %v419, 4
    %v433 = vsel %vm216, %v432, %v395
    %v434 = vrot.slane %v395, 4
    %v435 = vsel %vm216, %v419, %v434
    %v436 = vrot.slane %v423, 4
    %v437 = vsel %vm216, %v436, %v399
    %v438 = vrot.slane %v399, 4
    %v439 = vsel %vm216, %v423, %v438
    %v440 = vrot.slane %v148, 4
    %v441 = vsel %vm216, %v440, %v93
    %v442 = vrot.slane %v93, 4
    %v443 = vsel %vm216, %v148, %v442
    %v445 = vunpack.c.l.s4 1983009808
    %v446 = vunpack.c.0.s8 %v445
    %v447 = vperm.slane %v441, %v446
    %v449 = vunpack.c.l.s4 1983009808
    %v450 = vunpack.c.0.s8 %v449
    %v451 = vperm.slane %v443, %v450
    %v452 = vrot.slane %v160, 4
    %v453 = vsel %vm216, %v452, %v136
    %v454 = vrot.slane %v136, 4
    %v455 = vsel %vm216, %v160, %v454
    %v457 = vunpack.c.l.s4 1983009808
    %v458 = vunpack.c.0.s8 %v457
    %v459 = vperm.slane %v453, %v458
    %v461 = vunpack.c.l.s4 1983009808
    %v462 = vunpack.c.0.s8 %v461
    %v463 = vperm.slane %v455, %v462
    %v464 = vrot.slane %v196, 4
    %v465 = vsel %vm216, %v464, %v172
    %v466 = vrot.slane %v172, 4
    %v467 = vsel %vm216, %v196, %v466
    %v469 = vunpack.c.l.s4 1983009808
    %v470 = vunpack.c.0.s8 %v469
    %v471 = vperm.slane %v465, %v470
    %v473 = vunpack.c.l.s4 1983009808
    %v474 = vunpack.c.0.s8 %v473
    %v475 = vperm.slane %v467, %v474
    %v476 = vrot.slane %v208, 4
    %v477 = vsel %vm216, %v476, %v184
    %v478 = vrot.slane %v184, 4
    %v479 = vsel %vm216, %v208, %v478
    %v481 = vunpack.c.l.s4 1983009808
    %v482 = vunpack.c.0.s8 %v481
    %v483 = vperm.slane %v477, %v482
    %v485 = vunpack.c.l.s4 1983009808
    %v486 = vunpack.c.0.s8 %v485
    %v487 = vperm.slane %v479, %v486
    %v488 = vrot.slane %v459, 4
    %v489 = vsel %vm216, %v488, %v447
    %v490 = vrot.slane %v447, 4
    %v491 = vsel %vm216, %v459, %v490
    %v493 = vunpack.c.l.s4 1934713408
    %v494 = vunpack.c.0.s8 %v493
    %v495 = vperm.slane %v489, %v494
    %v497 = vunpack.c.l.s4 1934713408
    %v498 = vunpack.c.0.s8 %v497
    %v499 = vperm.slane %v491, %v498
    %v500 = vrot.slane %v463, 4
    %v501 = vsel %vm216, %v500, %v451
    %v502 = vrot.slane %v451, 4
    %v503 = vsel %vm216, %v463, %v502
    %v505 = vunpack.c.l.s4 1934713408
    %v506 = vunpack.c.0.s8 %v505
    %v507 = vperm.slane %v501, %v506
    %v509 = vunpack.c.l.s4 1934713408
    %v510 = vunpack.c.0.s8 %v509
    %v511 = vperm.slane %v503, %v510
    %v512 = vrot.slane %v483, 4
    %v513 = vsel %vm216, %v512, %v471
    %v514 = vrot.slane %v471, 4
    %v515 = vsel %vm216, %v483, %v514
    %v517 = vunpack.c.l.s4 1934713408
    %v518 = vunpack.c.0.s8 %v517
    %v519 = vperm.slane %v513, %v518
    %v521 = vunpack.c.l.s4 1934713408
    %v522 = vunpack.c.0.s8 %v521
    %v523 = vperm.slane %v515, %v522
    %v524 = vrot.slane %v487, 4
    %v525 = vsel %vm216, %v524, %v475
    %v526 = vrot.slane %v475, 4
    %v527 = vsel %vm216, %v487, %v526
    %v529 = vunpack.c.l.s4 1934713408
    %v530 = vunpack.c.0.s8 %v529
    %v531 = vperm.slane %v525, %v530
    %v533 = vunpack.c.l.s4 1934713408
    %v534 = vunpack.c.0.s8 %v533
    %v535 = vperm.slane %v527, %v534
    %v536 = vrot.slane %v519, 4
    %v537 = vsel %vm216, %v536, %v495
    %v538 = vrot.slane %v495, 4
    %v539 = vsel %vm216, %v519, %v538
    %v540 = vrot.slane %v523, 4
    %v541 = vsel %vm216, %v540, %v499
    %v542 = vrot.slane %v499, 4
    %v543 = vsel %vm216, %v523, %v542
    %v544 = vrot.slane %v531, 4
    %v545 = vsel %vm216, %v544, %v507
    %v546 = vrot.slane %v507, 4
    %v547 = vsel %vm216, %v531, %v546
    %v548 = vrot.slane %v535, 4
    %v549 = vsel %vm216, %v548, %v511
    %v550 = vrot.slane %v511, 4
    %v551 = vsel %vm216, %v535, %v550
    %v552 = vrot.slane %v150, 4
    %v553 = vsel %vm216, %v552, %v96
    %v554 = vrot.slane %v96, 4
    %v555 = vsel %vm216, %v150, %v554
    %v557 = vunpack.c.l.s4 1983009808
    %v558 = vunpack.c.0.s8 %v557
    %v559 = vperm.slane %v553, %v558
    %v561 = vunpack.c.l.s4 1983009808
    %v562 = vunpack.c.0.s8 %v561
    %v563 = vperm.slane %v555, %v562
    %v564 = vrot.slane %v162, 4
    %v565 = vsel %vm216, %v564, %v138
    %v566 = vrot.slane %v138, 4
    %v567 = vsel %vm216, %v162, %v566
    %v569 = vunpack.c.l.s4 1983009808
    %v570 = vunpack.c.0.s8 %v569
    %v571 = vperm.slane %v565, %v570
    %v573 = vunpack.c.l.s4 1983009808
    %v574 = vunpack.c.0.s8 %v573
    %v575 = vperm.slane %v567, %v574
    %v576 = vrot.slane %v198, 4
    %v577 = vsel %vm216, %v576, %v174
    %v578 = vrot.slane %v174, 4
    %v579 = vsel %vm216, %v198, %v578
    %v581 = vunpack.c.l.s4 1983009808
    %v582 = vunpack.c.0.s8 %v581
    %v583 = vperm.slane %v577, %v582
    %v585 = vunpack.c.l.s4 1983009808
    %v586 = vunpack.c.0.s8 %v585
    %v587 = vperm.slane %v579, %v586
    %v588 = vrot.slane %v210, 4
    %v589 = vsel %vm216, %v588, %v186
    %v590 = vrot.slane %v186, 4
    %v591 = vsel %vm216, %v210, %v590
    %v593 = vunpack.c.l.s4 1983009808
    %v594 = vunpack.c.0.s8 %v593
    %v595 = vperm.slane %v589, %v594
    %v597 = vunpack.c.l.s4 1983009808
    %v598 = vunpack.c.0.s8 %v597
    %v599 = vperm.slane %v591, %v598
    %v600 = vrot.slane %v571, 4
    %v601 = vsel %vm216, %v600, %v559
    %v602 = vrot.slane %v559, 4
    %v603 = vsel %vm216, %v571, %v602
    %v605 = vunpack.c.l.s4 1934713408
    %v606 = vunpack.c.0.s8 %v605
    %v607 = vperm.slane %v601, %v606
    %v609 = vunpack.c.l.s4 1934713408
    %v610 = vunpack.c.0.s8 %v609
    %v611 = vperm.slane %v603, %v610
    %v612 = vrot.slane %v575, 4
    %v613 = vsel %vm216, %v612, %v563
    %v614 = vrot.slane %v563, 4
    %v615 = vsel %vm216, %v575, %v614
    %v617 = vunpack.c.l.s4 1934713408
    %v618 = vunpack.c.0.s8 %v617
    %v619 = vperm.slane %v613, %v618
    %v621 = vunpack.c.l.s4 1934713408
    %v622 = vunpack.c.0.s8 %v621
    %v623 = vperm.slane %v615, %v622
    %v624 = vrot.slane %v595, 4
    %v625 = vsel %vm216, %v624, %v583
    %v626 = vrot.slane %v583, 4
    %v627 = vsel %vm216, %v595, %v626
    %v629 = vunpack.c.l.s4 1934713408
    %v630 = vunpack.c.0.s8 %v629
    %v631 = vperm.slane %v625, %v630
    %v633 = vunpack.c.l.s4 1934713408
    %v634 = vunpack.c.0.s8 %v633
    %v635 = vperm.slane %v627, %v634
    %v636 = vrot.slane %v599, 4
    %v637 = vsel %vm216, %v636, %v587
    %v638 = vrot.slane %v587, 4
    %v639 = vsel %vm216, %v599, %v638
    %v641 = vunpack.c.l.s4 1934713408
    %v642 = vunpack.c.0.s8 %v641
    %v643 = vperm.slane %v637, %v642
    %v645 = vunpack.c.l.s4 1934713408
    %v646 = vunpack.c.0.s8 %v645
    %v647 = vperm.slane %v639, %v646
    %v648 = vrot.slane %v631, 4
    %v649 = vsel %vm216, %v648, %v607
    %v650 = vrot.slane %v607, 4
    %v651 = vsel %vm216, %v631, %v650
    %v652 = vrot.slane %v635, 4
    %v653 = vsel %vm216, %v652, %v611
    %v654 = vrot.slane %v611, 4
    %v655 = vsel %vm216, %v635, %v654
    %v656 = vrot.slane %v643, 4
    %v657 = vsel %vm216, %v656, %v619
    %v658 = vrot.slane %v619, 4
    %v659 = vsel %vm216, %v643, %v658
    %v660 = vrot.slane %v647, 4
    %v661 = vsel %vm216, %v660, %v623
    %v662 = vrot.slane %v623, 4
    %v663 = vsel %vm216, %v647, %v662
    %664 = vrot.lane.b32.xlu0 %v87, 64
    %v665 = vpop.permute.xlu0 %664
    %666 = vrot.lane.b32.xlu0 %v90, 64
    %v667 = vpop.permute.xlu0 %666
    %668 = vrot.lane.b32.xlu0 %v93, 64
    %v669 = vpop.permute.xlu0 %668
    %670 = vrot.lane.b32.xlu0 %v96, 64
    %v671 = vpop.permute.xlu0 %670
    %672 = vrot.lane.b32.xlu0 %v132, 64
    %v673 = vpop.permute.xlu0 %672
    %674 = vrot.lane.b32.xlu0 %v134, 64
    %v675 = vpop.permute.xlu0 %674
    %676 = vrot.lane.b32.xlu0 %v136, 64
    %v677 = vpop.permute.xlu0 %676
    %678 = vrot.lane.b32.xlu0 %v138, 64
    %v679 = vpop.permute.xlu0 %678
    %680 = vrot.lane.b32.xlu0 %v144, 64
    %v681 = vpop.permute.xlu0 %680
    %682 = vrot.lane.b32.xlu0 %v146, 64
    %v683 = vpop.permute.xlu0 %682
    %684 = vrot.lane.b32.xlu0 %v148, 64
    %v685 = vpop.permute.xlu0 %684
    %686 = vrot.lane.b32.xlu0 %v150, 64
    %v687 = vpop.permute.xlu0 %686
    %688 = vrot.lane.b32.xlu0 %v156, 64
    %v689 = vpop.permute.xlu0 %688
    %690 = vrot.lane.b32.xlu0 %v158, 64
    %v691 = vpop.permute.xlu0 %690
    %692 = vrot.lane.b32.xlu0 %v160, 64
    %v693 = vpop.permute.xlu0 %692
    %694 = vrot.lane.b32.xlu0 %v162, 64
    %v695 = vpop.permute.xlu0 %694
    %696 = vrot.lane.b32.xlu0 %v168, 64
    %v697 = vpop.permute.xlu0 %696
    %698 = vrot.lane.b32.xlu0 %v170, 64
    %v699 = vpop.permute.xlu0 %698
    %700 = vrot.lane.b32.xlu0 %v172, 64
    %v701 = vpop.permute.xlu0 %700
    %702 = vrot.lane.b32.xlu0 %v174, 64
    %v703 = vpop.permute.xlu0 %702
    %704 = vrot.lane.b32.xlu0 %v180, 64
    %v705 = vpop.permute.xlu0 %704
    %706 = vrot.lane.b32.xlu0 %v182, 64
    %v707 = vpop.permute.xlu0 %706
    %708 = vrot.lane.b32.xlu0 %v184, 64
    %v709 = vpop.permute.xlu0 %708
    %710 = vrot.lane.b32.xlu0 %v186, 64
    %v711 = vpop.permute.xlu0 %710
    %712 = vrot.lane.b32.xlu0 %v192, 64
    %v713 = vpop.permute.xlu0 %712
    %714 = vrot.lane.b32.xlu0 %v194, 64
    %v715 = vpop.permute.xlu0 %714
    %716 = vrot.lane.b32.xlu0 %v196, 64
    %v717 = vpop.permute.xlu0 %716
    %718 = vrot.lane.b32.xlu0 %v198, 64
    %v719 = vpop.permute.xlu0 %718
    %720 = vrot.lane.b32.xlu0 %v204, 64
    %v721 = vpop.permute.xlu0 %720
    %722 = vrot.lane.b32.xlu0 %v206, 64
    %v723 = vpop.permute.xlu0 %722
    %724 = vrot.lane.b32.xlu0 %v208, 64
    %v725 = vpop.permute.xlu0 %724
    %726 = vrot.lane.b32.xlu0 %v210, 64
    %v727 = vpop.permute.xlu0 %726
    %v760 = vrot.slane %v681, 4
    %v761 = vsel %vm216, %v760, %v665
    %v762 = vrot.slane %v665, 4
    %v763 = vsel %vm216, %v681, %v762
    %v765 = vunpack.c.l.s4 1983009808
    %v766 = vunpack.c.0.s8 %v765
    %v767 = vperm.slane %v761, %v766
    %v769 = vunpack.c.l.s4 1983009808
    %v770 = vunpack.c.0.s8 %v769
    %v771 = vperm.slane %v763, %v770
    %v772 = vrot.slane %v689, 4
    %v773 = vsel %vm216, %v772, %v673
    %v774 = vrot.slane %v673, 4
    %v775 = vsel %vm216, %v689, %v774
    %v777 = vunpack.c.l.s4 1983009808
    %v778 = vunpack.c.0.s8 %v777
    %v779 = vperm.slane %v773, %v778
    %v781 = vunpack.c.l.s4 1983009808
    %v782 = vunpack.c.0.s8 %v781
    %v783 = vperm.slane %v775, %v782
    %v784 = vrot.slane %v713, 4
    %v785 = vsel %vm216, %v784, %v697
    %v786 = vrot.slane %v697, 4
    %v787 = vsel %vm216, %v713, %v786
    %v789 = vunpack.c.l.s4 1983009808
    %v790 = vunpack.c.0.s8 %v789
    %v791 = vperm.slane %v785, %v790
    %v793 = vunpack.c.l.s4 1983009808
    %v794 = vunpack.c.0.s8 %v793
    %v795 = vperm.slane %v787, %v794
    %v796 = vrot.slane %v721, 4
    %v797 = vsel %vm216, %v796, %v705
    %v798 = vrot.slane %v705, 4
    %v799 = vsel %vm216, %v721, %v798
    %v801 = vunpack.c.l.s4 1983009808
    %v802 = vunpack.c.0.s8 %v801
    %v803 = vperm.slane %v797, %v802
    %v805 = vunpack.c.l.s4 1983009808
    %v806 = vunpack.c.0.s8 %v805
    %v807 = vperm.slane %v799, %v806
    %v808 = vrot.slane %v779, 4
    %v809 = vsel %vm216, %v808, %v767
    %v810 = vrot.slane %v767, 4
    %v811 = vsel %vm216, %v779, %v810
    %v813 = vunpack.c.l.s4 1934713408
    %v814 = vunpack.c.0.s8 %v813
    %v815 = vperm.slane %v809, %v814
    %v817 = vunpack.c.l.s4 1934713408
    %v818 = vunpack.c.0.s8 %v817
    %v819 = vperm.slane %v811, %v818
    %v820 = vrot.slane %v783, 4
    %v821 = vsel %vm216, %v820, %v771
    %v822 = vrot.slane %v771, 4
    %v823 = vsel %vm216, %v783, %v822
    %v825 = vunpack.c.l.s4 1934713408
    %v826 = vunpack.c.0.s8 %v825
    %v827 = vperm.slane %v821, %v826
    %v829 = vunpack.c.l.s4 1934713408
    %v830 = vunpack.c.0.s8 %v829
    %v831 = vperm.slane %v823, %v830
    %v832 = vrot.slane %v803, 4
    %v833 = vsel %vm216, %v832, %v791
    %v834 = vrot.slane %v791, 4
    %v835 = vsel %vm216, %v803, %v834
    %v837 = vunpack.c.l.s4 1934713408
    %v838 = vunpack.c.0.s8 %v837
    %v839 = vperm.slane %v833, %v838
    %v841 = vunpack.c.l.s4 1934713408
    %v842 = vunpack.c.0.s8 %v841
    %v843 = vperm.slane %v835, %v842
    %v844 = vrot.slane %v807, 4
    %v845 = vsel %vm216, %v844, %v795
    %v846 = vrot.slane %v795, 4
    %v847 = vsel %vm216, %v807, %v846
    %v849 = vunpack.c.l.s4 1934713408
    %v850 = vunpack.c.0.s8 %v849
    %v851 = vperm.slane %v845, %v850
    %v853 = vunpack.c.l.s4 1934713408
    %v854 = vunpack.c.0.s8 %v853
    %v855 = vperm.slane %v847, %v854
    %v856 = vrot.slane %v839, 4
    %v857 = vsel %vm216, %v856, %v815
    %v858 = vrot.slane %v815, 4
    %v859 = vsel %vm216, %v839, %v858
    %v860 = vrot.slane %v843, 4
    %v861 = vsel %vm216, %v860, %v819
    %v862 = vrot.slane %v819, 4
    %v863 = vsel %vm216, %v843, %v862
    %v864 = vrot.slane %v851, 4
    %v865 = vsel %vm216, %v864, %v827
    %v866 = vrot.slane %v827, 4
    %v867 = vsel %vm216, %v851, %v866
    %v868 = vrot.slane %v855, 4
    %v869 = vsel %vm216, %v868, %v831
    %v870 = vrot.slane %v831, 4
    %v871 = vsel %vm216, %v855, %v870
    %v872 = vrot.slane %v683, 4
    %v873 = vsel %vm216, %v872, %v667
    %v874 = vrot.slane %v667, 4
    %v875 = vsel %vm216, %v683, %v874
    %v877 = vunpack.c.l.s4 1983009808
    %v878 = vunpack.c.0.s8 %v877
    %v879 = vperm.slane %v873, %v878
    %v881 = vunpack.c.l.s4 1983009808
    %v882 = vunpack.c.0.s8 %v881
    %v883 = vperm.slane %v875, %v882
    %v884 = vrot.slane %v691, 4
    %v885 = vsel %vm216, %v884, %v675
    %v886 = vrot.slane %v675, 4
    %v887 = vsel %vm216, %v691, %v886
    %v889 = vunpack.c.l.s4 1983009808
    %v890 = vunpack.c.0.s8 %v889
    %v891 = vperm.slane %v885, %v890
    %v893 = vunpack.c.l.s4 1983009808
    %v894 = vunpack.c.0.s8 %v893
    %v895 = vperm.slane %v887, %v894
    %v896 = vrot.slane %v715, 4
    %v897 = vsel %vm216, %v896, %v699
    %v898 = vrot.slane %v699, 4
    %v899 = vsel %vm216, %v715, %v898
    %v901 = vunpack.c.l.s4 1983009808
    %v902 = vunpack.c.0.s8 %v901
    %v903 = vperm.slane %v897, %v902
    %v905 = vunpack.c.l.s4 1983009808
    %v906 = vunpack.c.0.s8 %v905
    %v907 = vperm.slane %v899, %v906
    %v908 = vrot.slane %v723, 4
    %v909 = vsel %vm216, %v908, %v707
    %v910 = vrot.slane %v707, 4
    %v911 = vsel %vm216, %v723, %v910
    %v913 = vunpack.c.l.s4 1983009808
    %v914 = vunpack.c.0.s8 %v913
    %v915 = vperm.slane %v909, %v914
    %v917 = vunpack.c.l.s4 1983009808
    %v918 = vunpack.c.0.s8 %v917
    %v919 = vperm.slane %v911, %v918
    %v920 = vrot.slane %v891, 4
    %v921 = vsel %vm216, %v920, %v879
    %v922 = vrot.slane %v879, 4
    %v923 = vsel %vm216, %v891, %v922
    %v925 = vunpack.c.l.s4 1934713408
    %v926 = vunpack.c.0.s8 %v925
    %v927 = vperm.slane %v921, %v926
    %v929 = vunpack.c.l.s4 1934713408
    %v930 = vunpack.c.0.s8 %v929
    %v931 = vperm.slane %v923, %v930
    %v932 = vrot.slane %v895, 4
    %v933 = vsel %vm216, %v932, %v883
    %v934 = vrot.slane %v883, 4
    %v935 = vsel %vm216, %v895, %v934
    %v937 = vunpack.c.l.s4 1934713408
    %v938 = vunpack.c.0.s8 %v937
    %v939 = vperm.slane %v933, %v938
    %v941 = vunpack.c.l.s4 1934713408
    %v942 = vunpack.c.0.s8 %v941
    %v943 = vperm.slane %v935, %v942
    %v944 = vrot.slane %v915, 4
    %v945 = vsel %vm216, %v944, %v903
    %v946 = vrot.slane %v903, 4
    %v947 = vsel %vm216, %v915, %v946
    %v949 = vunpack.c.l.s4 1934713408
    %v950 = vunpack.c.0.s8 %v949
    %v951 = vperm.slane %v945, %v950
    %v953 = vunpack.c.l.s4 1934713408
    %v954 = vunpack.c.0.s8 %v953
    %v955 = vperm.slane %v947, %v954
    %v956 = vrot.slane %v919, 4
    %v957 = vsel %vm216, %v956, %v907
    %v958 = vrot.slane %v907, 4
    %v959 = vsel %vm216, %v919, %v958
    %v961 = vunpack.c.l.s4 1934713408
    %v962 = vunpack.c.0.s8 %v961
    %v963 = vperm.slane %v957, %v962
    %v965 = vunpack.c.l.s4 1934713408
    %v966 = vunpack.c.0.s8 %v965
    %v967 = vperm.slane %v959, %v966
    %v968 = vrot.slane %v951, 4
    %v969 = vsel %vm216, %v968, %v927
    %v970 = vrot.slane %v927, 4
    %v971 = vsel %vm216, %v951, %v970
    %v972 = vrot.slane %v955, 4
    %v973 = vsel %vm216, %v972, %v931
    %v974 = vrot.slane %v931, 4
    %v975 = vsel %vm216, %v955, %v974
    %v976 = vrot.slane %v963, 4
    %v977 = vsel %vm216, %v976, %v939
    %v978 = vrot.slane %v939, 4
    %v979 = vsel %vm216, %v963, %v978
    %v980 = vrot.slane %v967, 4
    %v981 = vsel %vm216, %v980, %v943
    %v982 = vrot.slane %v943, 4
    %v983 = vsel %vm216, %v967, %v982
    %v984 = vrot.slane %v685, 4
    %v985 = vsel %vm216, %v984, %v669
    %v986 = vrot.slane %v669, 4
    %v987 = vsel %vm216, %v685, %v986
    %v989 = vunpack.c.l.s4 1983009808
    %v990 = vunpack.c.0.s8 %v989
    %v991 = vperm.slane %v985, %v990
    %v993 = vunpack.c.l.s4 1983009808
    %v994 = vunpack.c.0.s8 %v993
    %v995 = vperm.slane %v987, %v994
    %v996 = vrot.slane %v693, 4
    %v997 = vsel %vm216, %v996, %v677
    %v998 = vrot.slane %v677, 4
    %v999 = vsel %vm216, %v693, %v998
    %v1001 = vunpack.c.l.s4 1983009808
    %v1002 = vunpack.c.0.s8 %v1001
    %v1003 = vperm.slane %v997, %v1002
    %v1005 = vunpack.c.l.s4 1983009808
    %v1006 = vunpack.c.0.s8 %v1005
    %v1007 = vperm.slane %v999, %v1006
    %v1008 = vrot.slane %v717, 4
    %v1009 = vsel %vm216, %v1008, %v701
    %v1010 = vrot.slane %v701, 4
    %v1011 = vsel %vm216, %v717, %v1010
    %v1013 = vunpack.c.l.s4 1983009808
    %v1014 = vunpack.c.0.s8 %v1013
    %v1015 = vperm.slane %v1009, %v1014
    %v1017 = vunpack.c.l.s4 1983009808
    %v1018 = vunpack.c.0.s8 %v1017
    %v1019 = vperm.slane %v1011, %v1018
    %v1020 = vrot.slane %v725, 4
    %v1021 = vsel %vm216, %v1020, %v709
    %v1022 = vrot.slane %v709, 4
    %v1023 = vsel %vm216, %v725, %v1022
    %v1025 = vunpack.c.l.s4 1983009808
    %v1026 = vunpack.c.0.s8 %v1025
    %v1027 = vperm.slane %v1021, %v1026
    %v1029 = vunpack.c.l.s4 1983009808
    %v1030 = vunpack.c.0.s8 %v1029
    %v1031 = vperm.slane %v1023, %v1030
    %v1032 = vrot.slane %v1003, 4
    %v1033 = vsel %vm216, %v1032, %v991
    %v1034 = vrot.slane %v991, 4
    %v1035 = vsel %vm216, %v1003, %v1034
    %v1037 = vunpack.c.l.s4 1934713408
    %v1038 = vunpack.c.0.s8 %v1037
    %v1039 = vperm.slane %v1033, %v1038
    %v1041 = vunpack.c.l.s4 1934713408
    %v1042 = vunpack.c.0.s8 %v1041
    %v1043 = vperm.slane %v1035, %v1042
    %v1044 = vrot.slane %v1007, 4
    %v1045 = vsel %vm216, %v1044, %v995
    %v1046 = vrot.slane %v995, 4
    %v1047 = vsel %vm216, %v1007, %v1046
    %v1049 = vunpack.c.l.s4 1934713408
    %v1050 = vunpack.c.0.s8 %v1049
    %v1051 = vperm.slane %v1045, %v1050
    %v1053 = vunpack.c.l.s4 1934713408
    %v1054 = vunpack.c.0.s8 %v1053
    %v1055 = vperm.slane %v1047, %v1054
    %v1056 = vrot.slane %v1027, 4
    %v1057 = vsel %vm216, %v1056, %v1015
    %v1058 = vrot.slane %v1015, 4
    %v1059 = vsel %vm216, %v1027, %v1058
    %v1061 = vunpack.c.l.s4 1934713408
    %v1062 = vunpack.c.0.s8 %v1061
    %v1063 = vperm.slane %v1057, %v1062
    %v1065 = vunpack.c.l.s4 1934713408
    %v1066 = vunpack.c.0.s8 %v1065
    %v1067 = vperm.slane %v1059, %v1066
    %v1068 = vrot.slane %v1031, 4
    %v1069 = vsel %vm216, %v1068, %v1019
    %v1070 = vrot.slane %v1019, 4
    %v1071 = vsel %vm216, %v1031, %v1070
    %v1073 = vunpack.c.l.s4 1934713408
    %v1074 = vunpack.c.0.s8 %v1073
    %v1075 = vperm.slane %v1069, %v1074
    %v1077 = vunpack.c.l.s4 1934713408
    %v1078 = vunpack.c.0.s8 %v1077
    %v1079 = vperm.slane %v1071, %v1078
    %v1080 = vrot.slane %v1063, 4
    %v1081 = vsel %vm216, %v1080, %v1039
    %v1082 = vrot.slane %v1039, 4
    %v1083 = vsel %vm216, %v1063, %v1082
    %v1084 = vrot.slane %v1067, 4
    %v1085 = vsel %vm216, %v1084, %v1043
    %v1086 = vrot.slane %v1043, 4
    %v1087 = vsel %vm216, %v1067, %v1086
    %v1088 = vrot.slane %v1075, 4
    %v1089 = vsel %vm216, %v1088, %v1051
    %v1090 = vrot.slane %v1051, 4
    %v1091 = vsel %vm216, %v1075, %v1090
    %v1092 = vrot.slane %v1079, 4
    %v1093 = vsel %vm216, %v1092, %v1055
    %v1094 = vrot.slane %v1055, 4
    %v1095 = vsel %vm216, %v1079, %v1094
    %v1096 = vrot.slane %v687, 4
    %v1097 = vsel %vm216, %v1096, %v671
    %v1098 = vrot.slane %v671, 4
    %v1099 = vsel %vm216, %v687, %v1098
    %v1101 = vunpack.c.l.s4 1983009808
    %v1102 = vunpack.c.0.s8 %v1101
    %v1103 = vperm.slane %v1097, %v1102
    %v1105 = vunpack.c.l.s4 1983009808
    %v1106 = vunpack.c.0.s8 %v1105
    %v1107 = vperm.slane %v1099, %v1106
    %v1108 = vrot.slane %v695, 4
    %v1109 = vsel %vm216, %v1108, %v679
    %v1110 = vrot.slane %v679, 4
    %v1111 = vsel %vm216, %v695, %v1110
    %v1113 = vunpack.c.l.s4 1983009808
    %v1114 = vunpack.c.0.s8 %v1113
    %v1115 = vperm.slane %v1109, %v1114
    %v1117 = vunpack.c.l.s4 1983009808
    %v1118 = vunpack.c.0.s8 %v1117
    %v1119 = vperm.slane %v1111, %v1118
    %v1120 = vrot.slane %v719, 4
    %v1121 = vsel %vm216, %v1120, %v703
    %v1122 = vrot.slane %v703, 4
    %v1123 = vsel %vm216, %v719, %v1122
    %v1125 = vunpack.c.l.s4 1983009808
    %v1126 = vunpack.c.0.s8 %v1125
    %v1127 = vperm.slane %v1121, %v1126
    %v1129 = vunpack.c.l.s4 1983009808
    %v1130 = vunpack.c.0.s8 %v1129
    %v1131 = vperm.slane %v1123, %v1130
    %v1132 = vrot.slane %v727, 4
    %v1133 = vsel %vm216, %v1132, %v711
    %v1134 = vrot.slane %v711, 4
    %v1135 = vsel %vm216, %v727, %v1134
    %v1137 = vunpack.c.l.s4 1983009808
    %v1138 = vunpack.c.0.s8 %v1137
    %v1139 = vperm.slane %v1133, %v1138
    %v1141 = vunpack.c.l.s4 1983009808
    %v1142 = vunpack.c.0.s8 %v1141
    %v1143 = vperm.slane %v1135, %v1142
    %v1144 = vrot.slane %v1115, 4
    %v1145 = vsel %vm216, %v1144, %v1103
    %v1146 = vrot.slane %v1103, 4
    %v1147 = vsel %vm216, %v1115, %v1146
    %v1149 = vunpack.c.l.s4 1934713408
    %v1150 = vunpack.c.0.s8 %v1149
    %v1151 = vperm.slane %v1145, %v1150
    %v1153 = vunpack.c.l.s4 1934713408
    %v1154 = vunpack.c.0.s8 %v1153
    %v1155 = vperm.slane %v1147, %v1154
    %v1156 = vrot.slane %v1119, 4
    %v1157 = vsel %vm216, %v1156, %v1107
    %v1158 = vrot.slane %v1107, 4
    %v1159 = vsel %vm216, %v1119, %v1158
    %v1161 = vunpack.c.l.s4 1934713408
    %v1162 = vunpack.c.0.s8 %v1161
    %v1163 = vperm.slane %v1157, %v1162
    %v1165 = vunpack.c.l.s4 1934713408
    %v1166 = vunpack.c.0.s8 %v1165
    %v1167 = vperm.slane %v1159, %v1166
    %v1168 = vrot.slane %v1139, 4
    %v1169 = vsel %vm216, %v1168, %v1127
    %v1170 = vrot.slane %v1127, 4
    %v1171 = vsel %vm216, %v1139, %v1170
    %v1173 = vunpack.c.l.s4 1934713408
    %v1174 = vunpack.c.0.s8 %v1173
    %v1175 = vperm.slane %v1169, %v1174
    %v1177 = vunpack.c.l.s4 1934713408
    %v1178 = vunpack.c.0.s8 %v1177
    %v1179 = vperm.slane %v1171, %v1178
    %v1180 = vrot.slane %v1143, 4
    %v1181 = vsel %vm216, %v1180, %v1131
    %v1182 = vrot.slane %v1131, 4
    %v1183 = vsel %vm216, %v1143, %v1182
    %v1185 = vunpack.c.l.s4 1934713408
    %v1186 = vunpack.c.0.s8 %v1185
    %v1187 = vperm.slane %v1181, %v1186
    %v1189 = vunpack.c.l.s4 1934713408
    %v1190 = vunpack.c.0.s8 %v1189
    %v1191 = vperm.slane %v1183, %v1190
    %v1192 = vrot.slane %v1175, 4
    %v1193 = vsel %vm216, %v1192, %v1151
    %v1194 = vrot.slane %v1151, 4
    %v1195 = vsel %vm216, %v1175, %v1194
    %v1196 = vrot.slane %v1179, 4
    %v1197 = vsel %vm216, %v1196, %v1155
    %v1198 = vrot.slane %v1155, 4
    %v1199 = vsel %vm216, %v1179, %v1198
    %v1200 = vrot.slane %v1187, 4
    %v1201 = vsel %vm216, %v1200, %v1163
    %v1202 = vrot.slane %v1163, 4
    %v1203 = vsel %vm216, %v1187, %v1202
    %v1204 = vrot.slane %v1191, 4
    %v1205 = vsel %vm216, %v1204, %v1167
    %v1206 = vrot.slane %v1167, 4
    %v1207 = vsel %vm216, %v1191, %v1206
    %1212 = vrot.lane.b32.xlu0 %v116, 120
    %v1213 = vpop.permute.xlu0 %1212
    %1214 = vrot.lane.b32.xlu0 %v119, 120
    %v1215 = vpop.permute.xlu0 %1214
    %1216 = vrot.lane.b32.xlu0 %v122, 120
    %v1217 = vpop.permute.xlu0 %1216
    %1218 = vrot.lane.b32.xlu0 %v125, 120
    %v1219 = vpop.permute.xlu0 %1218
    %1224 = vrot.lane.b32.xlu0 %v116, 112
    %v1225 = vpop.permute.xlu0 %1224
    %1226 = vrot.lane.b32.xlu0 %v119, 112
    %v1227 = vpop.permute.xlu0 %1226
    %1228 = vrot.lane.b32.xlu0 %v122, 112
    %v1229 = vpop.permute.xlu0 %1228
    %1230 = vrot.lane.b32.xlu0 %v125, 112
    %v1231 = vpop.permute.xlu0 %1230
    %1236 = vrot.lane.b32.xlu0 %v116, 104
    %v1237 = vpop.permute.xlu0 %1236
    %1238 = vrot.lane.b32.xlu0 %v119, 104
    %v1239 = vpop.permute.xlu0 %1238
    %1240 = vrot.lane.b32.xlu0 %v122, 104
    %v1241 = vpop.permute.xlu0 %1240
    %1242 = vrot.lane.b32.xlu0 %v125, 104
    %v1243 = vpop.permute.xlu0 %1242
    %1248 = vrot.lane.b32.xlu0 %v116, 96
    %v1249 = vpop.permute.xlu0 %1248
    %1250 = vrot.lane.b32.xlu0 %v119, 96
    %v1251 = vpop.permute.xlu0 %1250
    %1252 = vrot.lane.b32.xlu0 %v122, 96
    %v1253 = vpop.permute.xlu0 %1252
    %1254 = vrot.lane.b32.xlu0 %v125, 96
    %v1255 = vpop.permute.xlu0 %1254
    %1260 = vrot.lane.b32.xlu0 %v116, 88
    %v1261 = vpop.permute.xlu0 %1260
    %1262 = vrot.lane.b32.xlu0 %v119, 88
    %v1263 = vpop.permute.xlu0 %1262
    %1264 = vrot.lane.b32.xlu0 %v122, 88
    %v1265 = vpop.permute.xlu0 %1264
    %1266 = vrot.lane.b32.xlu0 %v125, 88
    %v1267 = vpop.permute.xlu0 %1266
    %1272 = vrot.lane.b32.xlu0 %v116, 80
    %v1273 = vpop.permute.xlu0 %1272
    %1274 = vrot.lane.b32.xlu0 %v119, 80
    %v1275 = vpop.permute.xlu0 %1274
    %1276 = vrot.lane.b32.xlu0 %v122, 80
    %v1277 = vpop.permute.xlu0 %1276
    %1278 = vrot.lane.b32.xlu0 %v125, 80
    %v1279 = vpop.permute.xlu0 %1278
    %1284 = vrot.lane.b32.xlu0 %v116, 72
    %v1285 = vpop.permute.xlu0 %1284
    %1286 = vrot.lane.b32.xlu0 %v119, 72
    %v1287 = vpop.permute.xlu0 %1286
    %1288 = vrot.lane.b32.xlu0 %v122, 72
    %v1289 = vpop.permute.xlu0 %1288
    %1290 = vrot.lane.b32.xlu0 %v125, 72
    %v1291 = vpop.permute.xlu0 %1290
    %v1296 = vrot.slane %v1225, 4
    %v1297 = vsel %vm216, %v1296, %v116
    %v1298 = vrot.slane %v116, 4
    %v1299 = vsel %vm216, %v1225, %v1298
    %v1301 = vunpack.c.l.s4 1983009808
    %v1302 = vunpack.c.0.s8 %v1301
    %v1303 = vperm.slane %v1297, %v1302
    %v1305 = vunpack.c.l.s4 1983009808
    %v1306 = vunpack.c.0.s8 %v1305
    %v1307 = vperm.slane %v1299, %v1306
    %v1308 = vrot.slane %v1237, 4
    %v1309 = vsel %vm216, %v1308, %v1213
    %v1310 = vrot.slane %v1213, 4
    %v1311 = vsel %vm216, %v1237, %v1310
    %v1313 = vunpack.c.l.s4 1983009808
    %v1314 = vunpack.c.0.s8 %v1313
    %v1315 = vperm.slane %v1309, %v1314
    %v1317 = vunpack.c.l.s4 1983009808
    %v1318 = vunpack.c.0.s8 %v1317
    %v1319 = vperm.slane %v1311, %v1318
    %v1320 = vrot.slane %v1273, 4
    %v1321 = vsel %vm216, %v1320, %v1249
    %v1322 = vrot.slane %v1249, 4
    %v1323 = vsel %vm216, %v1273, %v1322
    %v1325 = vunpack.c.l.s4 1983009808
    %v1326 = vunpack.c.0.s8 %v1325
    %v1327 = vperm.slane %v1321, %v1326
    %v1329 = vunpack.c.l.s4 1983009808
    %v1330 = vunpack.c.0.s8 %v1329
    %v1331 = vperm.slane %v1323, %v1330
    %v1332 = vrot.slane %v1285, 4
    %v1333 = vsel %vm216, %v1332, %v1261
    %v1334 = vrot.slane %v1261, 4
    %v1335 = vsel %vm216, %v1285, %v1334
    %v1337 = vunpack.c.l.s4 1983009808
    %v1338 = vunpack.c.0.s8 %v1337
    %v1339 = vperm.slane %v1333, %v1338
    %v1341 = vunpack.c.l.s4 1983009808
    %v1342 = vunpack.c.0.s8 %v1341
    %v1343 = vperm.slane %v1335, %v1342
    %v1344 = vrot.slane %v1315, 4
    %v1345 = vsel %vm216, %v1344, %v1303
    %v1346 = vrot.slane %v1303, 4
    %v1347 = vsel %vm216, %v1315, %v1346
    %v1349 = vunpack.c.l.s4 1934713408
    %v1350 = vunpack.c.0.s8 %v1349
    %v1351 = vperm.slane %v1345, %v1350
    %v1353 = vunpack.c.l.s4 1934713408
    %v1354 = vunpack.c.0.s8 %v1353
    %v1355 = vperm.slane %v1347, %v1354
    %v1356 = vrot.slane %v1319, 4
    %v1357 = vsel %vm216, %v1356, %v1307
    %v1358 = vrot.slane %v1307, 4
    %v1359 = vsel %vm216, %v1319, %v1358
    %v1361 = vunpack.c.l.s4 1934713408
    %v1362 = vunpack.c.0.s8 %v1361
    %v1363 = vperm.slane %v1357, %v1362
    %v1365 = vunpack.c.l.s4 1934713408
    %v1366 = vunpack.c.0.s8 %v1365
    %v1367 = vperm.slane %v1359, %v1366
    %v1368 = vrot.slane %v1339, 4
    %v1369 = vsel %vm216, %v1368, %v1327
    %v1370 = vrot.slane %v1327, 4
    %v1371 = vsel %vm216, %v1339, %v1370
    %v1373 = vunpack.c.l.s4 1934713408
    %v1374 = vunpack.c.0.s8 %v1373
    %v1375 = vperm.slane %v1369, %v1374
    %v1377 = vunpack.c.l.s4 1934713408
    %v1378 = vunpack.c.0.s8 %v1377
    %v1379 = vperm.slane %v1371, %v1378
    %v1380 = vrot.slane %v1343, 4
    %v1381 = vsel %vm216, %v1380, %v1331
    %v1382 = vrot.slane %v1331, 4
    %v1383 = vsel %vm216, %v1343, %v1382
    %v1385 = vunpack.c.l.s4 1934713408
    %v1386 = vunpack.c.0.s8 %v1385
    %v1387 = vperm.slane %v1381, %v1386
    %v1389 = vunpack.c.l.s4 1934713408
    %v1390 = vunpack.c.0.s8 %v1389
    %v1391 = vperm.slane %v1383, %v1390
    %v1392 = vrot.slane %v1375, 4
    %v1393 = vsel %vm216, %v1392, %v1351
    %v1394 = vrot.slane %v1351, 4
    %v1395 = vsel %vm216, %v1375, %v1394
    %v1396 = vrot.slane %v1379, 4
    %v1397 = vsel %vm216, %v1396, %v1355
    %v1398 = vrot.slane %v1355, 4
    %v1399 = vsel %vm216, %v1379, %v1398
    %v1400 = vrot.slane %v1387, 4
    %v1401 = vsel %vm216, %v1400, %v1363
    %v1402 = vrot.slane %v1363, 4
    %v1403 = vsel %vm216, %v1387, %v1402
    %v1404 = vrot.slane %v1391, 4
    %v1405 = vsel %vm216, %v1404, %v1367
    %v1406 = vrot.slane %v1367, 4
    %v1407 = vsel %vm216, %v1391, %v1406
    %v1408 = vrot.slane %v1227, 4
    %v1409 = vsel %vm216, %v1408, %v119
    %v1410 = vrot.slane %v119, 4
    %v1411 = vsel %vm216, %v1227, %v1410
    %v1413 = vunpack.c.l.s4 1983009808
    %v1414 = vunpack.c.0.s8 %v1413
    %v1415 = vperm.slane %v1409, %v1414
    %v1417 = vunpack.c.l.s4 1983009808
    %v1418 = vunpack.c.0.s8 %v1417
    %v1419 = vperm.slane %v1411, %v1418
    %v1420 = vrot.slane %v1239, 4
    %v1421 = vsel %vm216, %v1420, %v1215
    %v1422 = vrot.slane %v1215, 4
    %v1423 = vsel %vm216, %v1239, %v1422
    %v1425 = vunpack.c.l.s4 1983009808
    %v1426 = vunpack.c.0.s8 %v1425
    %v1427 = vperm.slane %v1421, %v1426
    %v1429 = vunpack.c.l.s4 1983009808
    %v1430 = vunpack.c.0.s8 %v1429
    %v1431 = vperm.slane %v1423, %v1430
    %v1432 = vrot.slane %v1275, 4
    %v1433 = vsel %vm216, %v1432, %v1251
    %v1434 = vrot.slane %v1251, 4
    %v1435 = vsel %vm216, %v1275, %v1434
    %v1437 = vunpack.c.l.s4 1983009808
    %v1438 = vunpack.c.0.s8 %v1437
    %v1439 = vperm.slane %v1433, %v1438
    %v1441 = vunpack.c.l.s4 1983009808
    %v1442 = vunpack.c.0.s8 %v1441
    %v1443 = vperm.slane %v1435, %v1442
    %v1444 = vrot.slane %v1287, 4
    %v1445 = vsel %vm216, %v1444, %v1263
    %v1446 = vrot.slane %v1263, 4
    %v1447 = vsel %vm216, %v1287, %v1446
    %v1449 = vunpack.c.l.s4 1983009808
    %v1450 = vunpack.c.0.s8 %v1449
    %v1451 = vperm.slane %v1445, %v1450
    %v1453 = vunpack.c.l.s4 1983009808
    %v1454 = vunpack.c.0.s8 %v1453
    %v1455 = vperm.slane %v1447, %v1454
    %v1456 = vrot.slane %v1427, 4
    %v1457 = vsel %vm216, %v1456, %v1415
    %v1458 = vrot.slane %v1415, 4
    %v1459 = vsel %vm216, %v1427, %v1458
    %v1461 = vunpack.c.l.s4 1934713408
    %v1462 = vunpack.c.0.s8 %v1461
    %v1463 = vperm.slane %v1457, %v1462
    %v1465 = vunpack.c.l.s4 1934713408
    %v1466 = vunpack.c.0.s8 %v1465
    %v1467 = vperm.slane %v1459, %v1466
    %v1468 = vrot.slane %v1431, 4
    %v1469 = vsel %vm216, %v1468, %v1419
    %v1470 = vrot.slane %v1419, 4
    %v1471 = vsel %vm216, %v1431, %v1470
    %v1473 = vunpack.c.l.s4 1934713408
    %v1474 = vunpack.c.0.s8 %v1473
    %v1475 = vperm.slane %v1469, %v1474
    %v1477 = vunpack.c.l.s4 1934713408
    %v1478 = vunpack.c.0.s8 %v1477
    %v1479 = vperm.slane %v1471, %v1478
    %v1480 = vrot.slane %v1451, 4
    %v1481 = vsel %vm216, %v1480, %v1439
    %v1482 = vrot.slane %v1439, 4
    %v1483 = vsel %vm216, %v1451, %v1482
    %v1485 = vunpack.c.l.s4 1934713408
    %v1486 = vunpack.c.0.s8 %v1485
    %v1487 = vperm.slane %v1481, %v1486
    %v1489 = vunpack.c.l.s4 1934713408
    %v1490 = vunpack.c.0.s8 %v1489
    %v1491 = vperm.slane %v1483, %v1490
    %v1492 = vrot.slane %v1455, 4
    %v1493 = vsel %vm216, %v1492, %v1443
    %v1494 = vrot.slane %v1443, 4
    %v1495 = vsel %vm216, %v1455, %v1494
    %v1497 = vunpack.c.l.s4 1934713408
    %v1498 = vunpack.c.0.s8 %v1497
    %v1499 = vperm.slane %v1493, %v1498
    %v1501 = vunpack.c.l.s4 1934713408
    %v1502 = vunpack.c.0.s8 %v1501
    %v1503 = vperm.slane %v1495, %v1502
    %v1504 = vrot.slane %v1487, 4
    %v1505 = vsel %vm216, %v1504, %v1463
    %v1506 = vrot.slane %v1463, 4
    %v1507 = vsel %vm216, %v1487, %v1506
    %v1508 = vrot.slane %v1491, 4
    %v1509 = vsel %vm216, %v1508, %v1467
    %v1510 = vrot.slane %v1467, 4
    %v1511 = vsel %vm216, %v1491, %v1510
    %v1512 = vrot.slane %v1499, 4
    %v1513 = vsel %vm216, %v1512, %v1475
    %v1514 = vrot.slane %v1475, 4
    %v1515 = vsel %vm216, %v1499, %v1514
    %v1516 = vrot.slane %v1503, 4
    %v1517 = vsel %vm216, %v1516, %v1479
    %v1518 = vrot.slane %v1479, 4
    %v1519 = vsel %vm216, %v1503, %v1518
    %v1520 = vrot.slane %v1229, 4
    %v1521 = vsel %vm216, %v1520, %v122
    %v1522 = vrot.slane %v122, 4
    %v1523 = vsel %vm216, %v1229, %v1522
    %v1525 = vunpack.c.l.s4 1983009808
    %v1526 = vunpack.c.0.s8 %v1525
    %v1527 = vperm.slane %v1521, %v1526
    %v1529 = vunpack.c.l.s4 1983009808
    %v1530 = vunpack.c.0.s8 %v1529
    %v1531 = vperm.slane %v1523, %v1530
    %v1532 = vrot.slane %v1241, 4
    %v1533 = vsel %vm216, %v1532, %v1217
    %v1534 = vrot.slane %v1217, 4
    %v1535 = vsel %vm216, %v1241, %v1534
    %v1537 = vunpack.c.l.s4 1983009808
    %v1538 = vunpack.c.0.s8 %v1537
    %v1539 = vperm.slane %v1533, %v1538
    %v1541 = vunpack.c.l.s4 1983009808
    %v1542 = vunpack.c.0.s8 %v1541
    %v1543 = vperm.slane %v1535, %v1542
    %v1544 = vrot.slane %v1277, 4
    %v1545 = vsel %vm216, %v1544, %v1253
    %v1546 = vrot.slane %v1253, 4
    %v1547 = vsel %vm216, %v1277, %v1546
    %v1549 = vunpack.c.l.s4 1983009808
    %v1550 = vunpack.c.0.s8 %v1549
    %v1551 = vperm.slane %v1545, %v1550
    %v1553 = vunpack.c.l.s4 1983009808
    %v1554 = vunpack.c.0.s8 %v1553
    %v1555 = vperm.slane %v1547, %v1554
    %v1556 = vrot.slane %v1289, 4
    %v1557 = vsel %vm216, %v1556, %v1265
    %v1558 = vrot.slane %v1265, 4
    %v1559 = vsel %vm216, %v1289, %v1558
    %v1561 = vunpack.c.l.s4 1983009808
    %v1562 = vunpack.c.0.s8 %v1561
    %v1563 = vperm.slane %v1557, %v1562
    %v1565 = vunpack.c.l.s4 1983009808
    %v1566 = vunpack.c.0.s8 %v1565
    %v1567 = vperm.slane %v1559, %v1566
    %v1568 = vrot.slane %v1539, 4
    %v1569 = vsel %vm216, %v1568, %v1527
    %v1570 = vrot.slane %v1527, 4
    %v1571 = vsel %vm216, %v1539, %v1570
    %v1573 = vunpack.c.l.s4 1934713408
    %v1574 = vunpack.c.0.s8 %v1573
    %v1575 = vperm.slane %v1569, %v1574
    %v1577 = vunpack.c.l.s4 1934713408
    %v1578 = vunpack.c.0.s8 %v1577
    %v1579 = vperm.slane %v1571, %v1578
    %v1580 = vrot.slane %v1543, 4
    %v1581 = vsel %vm216, %v1580, %v1531
    %v1582 = vrot.slane %v1531, 4
    %v1583 = vsel %vm216, %v1543, %v1582
    %v1585 = vunpack.c.l.s4 1934713408
    %v1586 = vunpack.c.0.s8 %v1585
    %v1587 = vperm.slane %v1581, %v1586
    %v1589 = vunpack.c.l.s4 1934713408
    %v1590 = vunpack.c.0.s8 %v1589
    %v1591 = vperm.slane %v1583, %v1590
    %v1592 = vrot.slane %v1563, 4
    %v1593 = vsel %vm216, %v1592, %v1551
    %v1594 = vrot.slane %v1551, 4
    %v1595 = vsel %vm216, %v1563, %v1594
    %v1597 = vunpack.c.l.s4 1934713408
    %v1598 = vunpack.c.0.s8 %v1597
    %v1599 = vperm.slane %v1593, %v1598
    %v1601 = vunpack.c.l.s4 1934713408
    %v1602 = vunpack.c.0.s8 %v1601
    %v1603 = vperm.slane %v1595, %v1602
    %v1604 = vrot.slane %v1567, 4
    %v1605 = vsel %vm216, %v1604, %v1555
    %v1606 = vrot.slane %v1555, 4
    %v1607 = vsel %vm216, %v1567, %v1606
    %v1609 = vunpack.c.l.s4 1934713408
    %v1610 = vunpack.c.0.s8 %v1609
    %v1611 = vperm.slane %v1605, %v1610
    %v1613 = vunpack.c.l.s4 1934713408
    %v1614 = vunpack.c.0.s8 %v1613
    %v1615 = vperm.slane %v1607, %v1614
    %v1616 = vrot.slane %v1599, 4
    %v1617 = vsel %vm216, %v1616, %v1575
    %v1618 = vrot.slane %v1575, 4
    %v1619 = vsel %vm216, %v1599, %v1618
    %v1620 = vrot.slane %v1603, 4
    %v1621 = vsel %vm216, %v1620, %v1579
    %v1622 = vrot.slane %v1579, 4
    %v1623 = vsel %vm216, %v1603, %v1622
    %v1624 = vrot.slane %v1611, 4
    %v1625 = vsel %vm216, %v1624, %v1587
    %v1626 = vrot.slane %v1587, 4
    %v1627 = vsel %vm216, %v1611, %v1626
    %v1628 = vrot.slane %v1615, 4
    %v1629 = vsel %vm216, %v1628, %v1591
    %v1630 = vrot.slane %v1591, 4
    %v1631 = vsel %vm216, %v1615, %v1630
    %v1632 = vrot.slane %v1231, 4
    %v1633 = vsel %vm216, %v1632, %v125
    %v1634 = vrot.slane %v125, 4
    %v1635 = vsel %vm216, %v1231, %v1634
    %v1637 = vunpack.c.l.s4 1983009808
    %v1638 = vunpack.c.0.s8 %v1637
    %v1639 = vperm.slane %v1633, %v1638
    %v1641 = vunpack.c.l.s4 1983009808
    %v1642 = vunpack.c.0.s8 %v1641
    %v1643 = vperm.slane %v1635, %v1642
    %v1644 = vrot.slane %v1243, 4
    %v1645 = vsel %vm216, %v1644, %v1219
    %v1646 = vrot.slane %v1219, 4
    %v1647 = vsel %vm216, %v1243, %v1646
    %v1649 = vunpack.c.l.s4 1983009808
    %v1650 = vunpack.c.0.s8 %v1649
    %v1651 = vperm.slane %v1645, %v1650
    %v1653 = vunpack.c.l.s4 1983009808
    %v1654 = vunpack.c.0.s8 %v1653
    %v1655 = vperm.slane %v1647, %v1654
    %v1656 = vrot.slane %v1279, 4
    %v1657 = vsel %vm216, %v1656, %v1255
    %v1658 = vrot.slane %v1255, 4
    %v1659 = vsel %vm216, %v1279, %v1658
    %v1661 = vunpack.c.l.s4 1983009808
    %v1662 = vunpack.c.0.s8 %v1661
    %v1663 = vperm.slane %v1657, %v1662
    %v1665 = vunpack.c.l.s4 1983009808
    %v1666 = vunpack.c.0.s8 %v1665
    %v1667 = vperm.slane %v1659, %v1666
    %v1668 = vrot.slane %v1291, 4
    %v1669 = vsel %vm216, %v1668, %v1267
    %v1670 = vrot.slane %v1267, 4
    %v1671 = vsel %vm216, %v1291, %v1670
    %v1673 = vunpack.c.l.s4 1983009808
    %v1674 = vunpack.c.0.s8 %v1673
    %v1675 = vperm.slane %v1669, %v1674
    %v1677 = vunpack.c.l.s4 1983009808
    %v1678 = vunpack.c.0.s8 %v1677
    %v1679 = vperm.slane %v1671, %v1678
    %v1680 = vrot.slane %v1651, 4
    %v1681 = vsel %vm216, %v1680, %v1639
    %v1682 = vrot.slane %v1639, 4
    %v1683 = vsel %vm216, %v1651, %v1682
    %v1685 = vunpack.c.l.s4 1934713408
    %v1686 = vunpack.c.0.s8 %v1685
    %v1687 = vperm.slane %v1681, %v1686
    %v1689 = vunpack.c.l.s4 1934713408
    %v1690 = vunpack.c.0.s8 %v1689
    %v1691 = vperm.slane %v1683, %v1690
    %v1692 = vrot.slane %v1655, 4
    %v1693 = vsel %vm216, %v1692, %v1643
    %v1694 = vrot.slane %v1643, 4
    %v1695 = vsel %vm216, %v1655, %v1694
    %v1697 = vunpack.c.l.s4 1934713408
    %v1698 = vunpack.c.0.s8 %v1697
    %v1699 = vperm.slane %v1693, %v1698
    %v1701 = vunpack.c.l.s4 1934713408
    %v1702 = vunpack.c.0.s8 %v1701
    %v1703 = vperm.slane %v1695, %v1702
    %v1704 = vrot.slane %v1675, 4
    %v1705 = vsel %vm216, %v1704, %v1663
    %v1706 = vrot.slane %v1663, 4
    %v1707 = vsel %vm216, %v1675, %v1706
    %v1709 = vunpack.c.l.s4 1934713408
    %v1710 = vunpack.c.0.s8 %v1709
    %v1711 = vperm.slane %v1705, %v1710
    %v1713 = vunpack.c.l.s4 1934713408
    %v1714 = vunpack.c.0.s8 %v1713
    %v1715 = vperm.slane %v1707, %v1714
    %v1716 = vrot.slane %v1679, 4
    %v1717 = vsel %vm216, %v1716, %v1667
    %v1718 = vrot.slane %v1667, 4
    %v1719 = vsel %vm216, %v1679, %v1718
    %v1721 = vunpack.c.l.s4 1934713408
    %v1722 = vunpack.c.0.s8 %v1721
    %v1723 = vperm.slane %v1717, %v1722
    %v1725 = vunpack.c.l.s4 1934713408
    %v1726 = vunpack.c.0.s8 %v1725
    %v1727 = vperm.slane %v1719, %v1726
    %v1728 = vrot.slane %v1711, 4
    %v1729 = vsel %vm216, %v1728, %v1687
    %v1730 = vrot.slane %v1687, 4
    %v1731 = vsel %vm216, %v1711, %v1730
    %v1732 = vrot.slane %v1715, 4
    %v1733 = vsel %vm216, %v1732, %v1691
    %v1734 = vrot.slane %v1691, 4
    %v1735 = vsel %vm216, %v1715, %v1734
    %v1736 = vrot.slane %v1723, 4
    %v1737 = vsel %vm216, %v1736, %v1699
    %v1738 = vrot.slane %v1699, 4
    %v1739 = vsel %vm216, %v1723, %v1738
    %v1740 = vrot.slane %v1727, 4
    %v1741 = vsel %vm216, %v1740, %v1703
    %v1742 = vrot.slane %v1703, 4
    %v1743 = vsel %vm216, %v1727, %v1742
    %v1744 = vrot.slane %v317, 4
    %v1745 = vsel %vm216, %v1744, %v313
    %v1746 = vrot.slane %v313, 4
    %v1747 = vsel %vm216, %v317, %v1746
    %v1749 = vunpack.c.l.s4 1983009808
    %v1750 = vunpack.c.0.s8 %v1749
    %v1751 = vperm.slane %v1745, %v1750
    %v1753 = vunpack.c.l.s4 1983009808
    %v1754 = vunpack.c.0.s8 %v1753
    %v1755 = vperm.slane %v1747, %v1754
    %v1756 = vrot.slane %v319, 4
    %v1757 = vsel %vm216, %v1756, %v315
    %v1758 = vrot.slane %v315, 4
    %v1759 = vsel %vm216, %v319, %v1758
    %v1761 = vunpack.c.l.s4 1983009808
    %v1762 = vunpack.c.0.s8 %v1761
    %v1763 = vperm.slane %v1757, %v1762
    %v1765 = vunpack.c.l.s4 1983009808
    %v1766 = vunpack.c.0.s8 %v1765
    %v1767 = vperm.slane %v1759, %v1766
    %v1768 = vrot.slane %v325, 4
    %v1769 = vsel %vm216, %v1768, %v321
    %v1770 = vrot.slane %v321, 4
    %v1771 = vsel %vm216, %v325, %v1770
    %v1773 = vunpack.c.l.s4 1983009808
    %v1774 = vunpack.c.0.s8 %v1773
    %v1775 = vperm.slane %v1769, %v1774
    %v1777 = vunpack.c.l.s4 1983009808
    %v1778 = vunpack.c.0.s8 %v1777
    %v1779 = vperm.slane %v1771, %v1778
    %v1780 = vrot.slane %v327, 4
    %v1781 = vsel %vm216, %v1780, %v323
    %v1782 = vrot.slane %v323, 4
    %v1783 = vsel %vm216, %v327, %v1782
    %v1785 = vunpack.c.l.s4 1983009808
    %v1786 = vunpack.c.0.s8 %v1785
    %v1787 = vperm.slane %v1781, %v1786
    %v1789 = vunpack.c.l.s4 1983009808
    %v1790 = vunpack.c.0.s8 %v1789
    %v1791 = vperm.slane %v1783, %v1790
    %v1792 = vrot.slane %v1763, 4
    %v1793 = vsel %vm216, %v1792, %v1751
    %v1794 = vrot.slane %v1751, 4
    %v1795 = vsel %vm216, %v1763, %v1794
    %v1797 = vunpack.c.l.s4 1934713408
    %v1798 = vunpack.c.0.s8 %v1797
    %v1799 = vperm.slane %v1793, %v1798
    %v1801 = vunpack.c.l.s4 1934713408
    %v1802 = vunpack.c.0.s8 %v1801
    %v1803 = vperm.slane %v1795, %v1802
    %v1804 = vrot.slane %v1767, 4
    %v1805 = vsel %vm216, %v1804, %v1755
    %v1806 = vrot.slane %v1755, 4
    %v1807 = vsel %vm216, %v1767, %v1806
    %v1809 = vunpack.c.l.s4 1934713408
    %v1810 = vunpack.c.0.s8 %v1809
    %v1811 = vperm.slane %v1805, %v1810
    %v1813 = vunpack.c.l.s4 1934713408
    %v1814 = vunpack.c.0.s8 %v1813
    %v1815 = vperm.slane %v1807, %v1814
    %v1816 = vrot.slane %v1787, 4
    %v1817 = vsel %vm216, %v1816, %v1775
    %v1818 = vrot.slane %v1775, 4
    %v1819 = vsel %vm216, %v1787, %v1818
    %v1821 = vunpack.c.l.s4 1934713408
    %v1822 = vunpack.c.0.s8 %v1821
    %v1823 = vperm.slane %v1817, %v1822
    %v1825 = vunpack.c.l.s4 1934713408
    %v1826 = vunpack.c.0.s8 %v1825
    %v1827 = vperm.slane %v1819, %v1826
    %v1828 = vrot.slane %v1791, 4
    %v1829 = vsel %vm216, %v1828, %v1779
    %v1830 = vrot.slane %v1779, 4
    %v1831 = vsel %vm216, %v1791, %v1830
    %v1833 = vunpack.c.l.s4 1934713408
    %v1834 = vunpack.c.0.s8 %v1833
    %v1835 = vperm.slane %v1829, %v1834
    %v1837 = vunpack.c.l.s4 1934713408
    %v1838 = vunpack.c.0.s8 %v1837
    %v1839 = vperm.slane %v1831, %v1838
    %v1840 = vrot.slane %v1823, 4
    %v1841 = vsel %vm216, %v1840, %v1799
    %v1842 = vrot.slane %v1799, 4
    %v1843 = vsel %vm216, %v1823, %v1842
    %v1844 = vrot.slane %v1827, 4
    %v1845 = vsel %vm216, %v1844, %v1803
    %v1846 = vrot.slane %v1803, 4
    %v1847 = vsel %vm216, %v1827, %v1846
    %v1848 = vrot.slane %v1835, 4
    %v1849 = vsel %vm216, %v1848, %v1811
    %v1850 = vrot.slane %v1811, 4
    %v1851 = vsel %vm216, %v1835, %v1850
    %v1852 = vrot.slane %v1839, 4
    %v1853 = vsel %vm216, %v1852, %v1815
    %v1854 = vrot.slane %v1815, 4
    %v1855 = vsel %vm216, %v1839, %v1854
    %v1856 = vrot.slane %v429, 4
    %v1857 = vsel %vm216, %v1856, %v425
    %v1858 = vrot.slane %v425, 4
    %v1859 = vsel %vm216, %v429, %v1858
    %v1861 = vunpack.c.l.s4 1983009808
    %v1862 = vunpack.c.0.s8 %v1861
    %v1863 = vperm.slane %v1857, %v1862
    %v1865 = vunpack.c.l.s4 1983009808
    %v1866 = vunpack.c.0.s8 %v1865
    %v1867 = vperm.slane %v1859, %v1866
    %v1868 = vrot.slane %v431, 4
    %v1869 = vsel %vm216, %v1868, %v427
    %v1870 = vrot.slane %v427, 4
    %v1871 = vsel %vm216, %v431, %v1870
    %v1873 = vunpack.c.l.s4 1983009808
    %v1874 = vunpack.c.0.s8 %v1873
    %v1875 = vperm.slane %v1869, %v1874
    %v1877 = vunpack.c.l.s4 1983009808
    %v1878 = vunpack.c.0.s8 %v1877
    %v1879 = vperm.slane %v1871, %v1878
    %v1880 = vrot.slane %v437, 4
    %v1881 = vsel %vm216, %v1880, %v433
    %v1882 = vrot.slane %v433, 4
    %v1883 = vsel %vm216, %v437, %v1882
    %v1885 = vunpack.c.l.s4 1983009808
    %v1886 = vunpack.c.0.s8 %v1885
    %v1887 = vperm.slane %v1881, %v1886
    %v1889 = vunpack.c.l.s4 1983009808
    %v1890 = vunpack.c.0.s8 %v1889
    %v1891 = vperm.slane %v1883, %v1890
    %v1892 = vrot.slane %v439, 4
    %v1893 = vsel %vm216, %v1892, %v435
    %v1894 = vrot.slane %v435, 4
    %v1895 = vsel %vm216, %v439, %v1894
    %v1897 = vunpack.c.l.s4 1983009808
    %v1898 = vunpack.c.0.s8 %v1897
    %v1899 = vperm.slane %v1893, %v1898
    %v1901 = vunpack.c.l.s4 1983009808
    %v1902 = vunpack.c.0.s8 %v1901
    %v1903 = vperm.slane %v1895, %v1902
    %v1904 = vrot.slane %v1875, 4
    %v1905 = vsel %vm216, %v1904, %v1863
    %v1906 = vrot.slane %v1863, 4
    %v1907 = vsel %vm216, %v1875, %v1906
    %v1909 = vunpack.c.l.s4 1934713408
    %v1910 = vunpack.c.0.s8 %v1909
    %v1911 = vperm.slane %v1905, %v1910
    %v1913 = vunpack.c.l.s4 1934713408
    %v1914 = vunpack.c.0.s8 %v1913
    %v1915 = vperm.slane %v1907, %v1914
    %v1916 = vrot.slane %v1879, 4
    %v1917 = vsel %vm216, %v1916, %v1867
    %v1918 = vrot.slane %v1867, 4
    %v1919 = vsel %vm216, %v1879, %v1918
    %v1921 = vunpack.c.l.s4 1934713408
    %v1922 = vunpack.c.0.s8 %v1921
    %v1923 = vperm.slane %v1917, %v1922
    %v1925 = vunpack.c.l.s4 1934713408
    %v1926 = vunpack.c.0.s8 %v1925
    %v1927 = vperm.slane %v1919, %v1926
    %v1928 = vrot.slane %v1899, 4
    %v1929 = vsel %vm216, %v1928, %v1887
    %v1930 = vrot.slane %v1887, 4
    %v1931 = vsel %vm216, %v1899, %v1930
    %v1933 = vunpack.c.l.s4 1934713408
    %v1934 = vunpack.c.0.s8 %v1933
    %v1935 = vperm.slane %v1929, %v1934
    %v1937 = vunpack.c.l.s4 1934713408
    %v1938 = vunpack.c.0.s8 %v1937
    %v1939 = vperm.slane %v1931, %v1938
    %v1940 = vrot.slane %v1903, 4
    %v1941 = vsel %vm216, %v1940, %v1891
    %v1942 = vrot.slane %v1891, 4
    %v1943 = vsel %vm216, %v1903, %v1942
    %v1945 = vunpack.c.l.s4 1934713408
    %v1946 = vunpack.c.0.s8 %v1945
    %v1947 = vperm.slane %v1941, %v1946
    %v1949 = vunpack.c.l.s4 1934713408
    %v1950 = vunpack.c.0.s8 %v1949
    %v1951 = vperm.slane %v1943, %v1950
    %v1952 = vrot.slane %v1935, 4
    %v1953 = vsel %vm216, %v1952, %v1911
    %v1954 = vrot.slane %v1911, 4
    %v1955 = vsel %vm216, %v1935, %v1954
    %v1956 = vrot.slane %v1939, 4
    %v1957 = vsel %vm216, %v1956, %v1915
    %v1958 = vrot.slane %v1915, 4
    %v1959 = vsel %vm216, %v1939, %v1958
    %v1960 = vrot.slane %v1947, 4
    %v1961 = vsel %vm216, %v1960, %v1923
    %v1962 = vrot.slane %v1923, 4
    %v1963 = vsel %vm216, %v1947, %v1962
    %v1964 = vrot.slane %v1951, 4
    %v1965 = vsel %vm216, %v1964, %v1927
    %v1966 = vrot.slane %v1927, 4
    %v1967 = vsel %vm216, %v1951, %v1966
    %v1968 = vrot.slane %v541, 4
    %v1969 = vsel %vm216, %v1968, %v537
    %v1970 = vrot.slane %v537, 4
    %v1971 = vsel %vm216, %v541, %v1970
    %v1973 = vunpack.c.l.s4 1983009808
    %v1974 = vunpack.c.0.s8 %v1973
    %v1975 = vperm.slane %v1969, %v1974
    %v1977 = vunpack.c.l.s4 1983009808
    %v1978 = vunpack.c.0.s8 %v1977
    %v1979 = vperm.slane %v1971, %v1978
    %v1980 = vrot.slane %v543, 4
    %v1981 = vsel %vm216, %v1980, %v539
    %v1982 = vrot.slane %v539, 4
    %v1983 = vsel %vm216, %v543, %v1982
    %v1985 = vunpack.c.l.s4 1983009808
    %v1986 = vunpack.c.0.s8 %v1985
    %v1987 = vperm.slane %v1981, %v1986
    %v1989 = vunpack.c.l.s4 1983009808
    %v1990 = vunpack.c.0.s8 %v1989
    %v1991 = vperm.slane %v1983, %v1990
    %v1992 = vrot.slane %v549, 4
    %v1993 = vsel %vm216, %v1992, %v545
    %v1994 = vrot.slane %v545, 4
    %v1995 = vsel %vm216, %v549, %v1994
    %v1997 = vunpack.c.l.s4 1983009808
    %v1998 = vunpack.c.0.s8 %v1997
    %v1999 = vperm.slane %v1993, %v1998
    %v2001 = vunpack.c.l.s4 1983009808
    %v2002 = vunpack.c.0.s8 %v2001
    %v2003 = vperm.slane %v1995, %v2002
    %v2004 = vrot.slane %v551, 4
    %v2005 = vsel %vm216, %v2004, %v547
    %v2006 = vrot.slane %v547, 4
    %v2007 = vsel %vm216, %v551, %v2006
    %v2009 = vunpack.c.l.s4 1983009808
    %v2010 = vunpack.c.0.s8 %v2009
    %v2011 = vperm.slane %v2005, %v2010
    %v2013 = vunpack.c.l.s4 1983009808
    %v2014 = vunpack.c.0.s8 %v2013
    %v2015 = vperm.slane %v2007, %v2014
    %v2016 = vrot.slane %v1987, 4
    %v2017 = vsel %vm216, %v2016, %v1975
    %v2018 = vrot.slane %v1975, 4
    %v2019 = vsel %vm216, %v1987, %v2018
    %v2021 = vunpack.c.l.s4 1934713408
    %v2022 = vunpack.c.0.s8 %v2021
    %v2023 = vperm.slane %v2017, %v2022
    %v2025 = vunpack.c.l.s4 1934713408
    %v2026 = vunpack.c.0.s8 %v2025
    %v2027 = vperm.slane %v2019, %v2026
    %v2028 = vrot.slane %v1991, 4
    %v2029 = vsel %vm216, %v2028, %v1979
    %v2030 = vrot.slane %v1979, 4
    %v2031 = vsel %vm216, %v1991, %v2030
    %v2033 = vunpack.c.l.s4 1934713408
    %v2034 = vunpack.c.0.s8 %v2033
    %v2035 = vperm.slane %v2029, %v2034
    %v2037 = vunpack.c.l.s4 1934713408
    %v2038 = vunpack.c.0.s8 %v2037
    %v2039 = vperm.slane %v2031, %v2038
    %v2040 = vrot.slane %v2011, 4
    %v2041 = vsel %vm216, %v2040, %v1999
    %v2042 = vrot.slane %v1999, 4
    %v2043 = vsel %vm216, %v2011, %v2042
    %v2045 = vunpack.c.l.s4 1934713408
    %v2046 = vunpack.c.0.s8 %v2045
    %v2047 = vperm.slane %v2041, %v2046
    %v2049 = vunpack.c.l.s4 1934713408
    %v2050 = vunpack.c.0.s8 %v2049
    %v2051 = vperm.slane %v2043, %v2050
    %v2052 = vrot.slane %v2015, 4
    %v2053 = vsel %vm216, %v2052, %v2003
    %v2054 = vrot.slane %v2003, 4
    %v2055 = vsel %vm216, %v2015, %v2054
    %v2057 = vunpack.c.l.s4 1934713408
    %v2058 = vunpack.c.0.s8 %v2057
    %v2059 = vperm.slane %v2053, %v2058
    %v2061 = vunpack.c.l.s4 1934713408
    %v2062 = vunpack.c.0.s8 %v2061
    %v2063 = vperm.slane %v2055, %v2062
    %v2064 = vrot.slane %v2047, 4
    %v2065 = vsel %vm216, %v2064, %v2023
    %v2066 = vrot.slane %v2023, 4
    %v2067 = vsel %vm216, %v2047, %v2066
    %v2068 = vrot.slane %v2051, 4
    %v2069 = vsel %vm216, %v2068, %v2027
    %v2070 = vrot.slane %v2027, 4
    %v2071 = vsel %vm216, %v2051, %v2070
    %v2072 = vrot.slane %v2059, 4
    %v2073 = vsel %vm216, %v2072, %v2035
    %v2074 = vrot.slane %v2035, 4
    %v2075 = vsel %vm216, %v2059, %v2074
    %v2076 = vrot.slane %v2063, 4
    %v2077 = vsel %vm216, %v2076, %v2039
    %v2078 = vrot.slane %v2039, 4
    %v2079 = vsel %vm216, %v2063, %v2078
    %v2080 = vrot.slane %v653, 4
    %v2081 = vsel %vm216, %v2080, %v649
    %v2082 = vrot.slane %v649, 4
    %v2083 = vsel %vm216, %v653, %v2082
    %v2085 = vunpack.c.l.s4 1983009808
    %v2086 = vunpack.c.0.s8 %v2085
    %v2087 = vperm.slane %v2081, %v2086
    %v2089 = vunpack.c.l.s4 1983009808
    %v2090 = vunpack.c.0.s8 %v2089
    %v2091 = vperm.slane %v2083, %v2090
    %v2092 = vrot.slane %v655, 4
    %v2093 = vsel %vm216, %v2092, %v651
    %v2094 = vrot.slane %v651, 4
    %v2095 = vsel %vm216, %v655, %v2094
    %v2097 = vunpack.c.l.s4 1983009808
    %v2098 = vunpack.c.0.s8 %v2097
    %v2099 = vperm.slane %v2093, %v2098
    %v2101 = vunpack.c.l.s4 1983009808
    %v2102 = vunpack.c.0.s8 %v2101
    %v2103 = vperm.slane %v2095, %v2102
    %v2104 = vrot.slane %v661, 4
    %v2105 = vsel %vm216, %v2104, %v657
    %v2106 = vrot.slane %v657, 4
    %v2107 = vsel %vm216, %v661, %v2106
    %v2109 = vunpack.c.l.s4 1983009808
    %v2110 = vunpack.c.0.s8 %v2109
    %v2111 = vperm.slane %v2105, %v2110
    %v2113 = vunpack.c.l.s4 1983009808
    %v2114 = vunpack.c.0.s8 %v2113
    %v2115 = vperm.slane %v2107, %v2114
    %v2116 = vrot.slane %v663, 4
    %v2117 = vsel %vm216, %v2116, %v659
    %v2118 = vrot.slane %v659, 4
    %v2119 = vsel %vm216, %v663, %v2118
    %v2121 = vunpack.c.l.s4 1983009808
    %v2122 = vunpack.c.0.s8 %v2121
    %v2123 = vperm.slane %v2117, %v2122
    %v2125 = vunpack.c.l.s4 1983009808
    %v2126 = vunpack.c.0.s8 %v2125
    %v2127 = vperm.slane %v2119, %v2126
    %v2128 = vrot.slane %v2099, 4
    %v2129 = vsel %vm216, %v2128, %v2087
    %v2130 = vrot.slane %v2087, 4
    %v2131 = vsel %vm216, %v2099, %v2130
    %v2133 = vunpack.c.l.s4 1934713408
    %v2134 = vunpack.c.0.s8 %v2133
    %v2135 = vperm.slane %v2129, %v2134
    %v2137 = vunpack.c.l.s4 1934713408
    %v2138 = vunpack.c.0.s8 %v2137
    %v2139 = vperm.slane %v2131, %v2138
    %v2140 = vrot.slane %v2103, 4
    %v2141 = vsel %vm216, %v2140, %v2091
    %v2142 = vrot.slane %v2091, 4
    %v2143 = vsel %vm216, %v2103, %v2142
    %v2145 = vunpack.c.l.s4 1934713408
    %v2146 = vunpack.c.0.s8 %v2145
    %v2147 = vperm.slane %v2141, %v2146
    %v2149 = vunpack.c.l.s4 1934713408
    %v2150 = vunpack.c.0.s8 %v2149
    %v2151 = vperm.slane %v2143, %v2150
    %v2152 = vrot.slane %v2123, 4
    %v2153 = vsel %vm216, %v2152, %v2111
    %v2154 = vrot.slane %v2111, 4
    %v2155 = vsel %vm216, %v2123, %v2154
    %v2157 = vunpack.c.l.s4 1934713408
    %v2158 = vunpack.c.0.s8 %v2157
    %v2159 = vperm.slane %v2153, %v2158
    %v2161 = vunpack.c.l.s4 1934713408
    %v2162 = vunpack.c.0.s8 %v2161
    %v2163 = vperm.slane %v2155, %v2162
    %v2164 = vrot.slane %v2127, 4
    %v2165 = vsel %vm216, %v2164, %v2115
    %v2166 = vrot.slane %v2115, 4
    %v2167 = vsel %vm216, %v2127, %v2166
    %v2169 = vunpack.c.l.s4 1934713408
    %v2170 = vunpack.c.0.s8 %v2169
    %v2171 = vperm.slane %v2165, %v2170
    %v2173 = vunpack.c.l.s4 1934713408
    %v2174 = vunpack.c.0.s8 %v2173
    %v2175 = vperm.slane %v2167, %v2174
    %v2176 = vrot.slane %v2159, 4
    %v2177 = vsel %vm216, %v2176, %v2135
    %v2178 = vrot.slane %v2135, 4
    %v2179 = vsel %vm216, %v2159, %v2178
    %v2180 = vrot.slane %v2163, 4
    %v2181 = vsel %vm216, %v2180, %v2139
    %v2182 = vrot.slane %v2139, 4
    %v2183 = vsel %vm216, %v2163, %v2182
    %v2184 = vrot.slane %v2171, 4
    %v2185 = vsel %vm216, %v2184, %v2147
    %v2186 = vrot.slane %v2147, 4
    %v2187 = vsel %vm216, %v2171, %v2186
    %v2188 = vrot.slane %v2175, 4
    %v2189 = vsel %vm216, %v2188, %v2151
    %v2190 = vrot.slane %v2151, 4
    %v2191 = vsel %vm216, %v2175, %v2190
    %v2192 = vrot.slane %v861, 4
    %v2193 = vsel %vm216, %v2192, %v857
    %v2194 = vrot.slane %v857, 4
    %v2195 = vsel %vm216, %v861, %v2194
    %v2197 = vunpack.c.l.s4 1983009808
    %v2198 = vunpack.c.0.s8 %v2197
    %v2199 = vperm.slane %v2193, %v2198
    %v2201 = vunpack.c.l.s4 1983009808
    %v2202 = vunpack.c.0.s8 %v2201
    %v2203 = vperm.slane %v2195, %v2202
    %v2204 = vrot.slane %v863, 4
    %v2205 = vsel %vm216, %v2204, %v859
    %v2206 = vrot.slane %v859, 4
    %v2207 = vsel %vm216, %v863, %v2206
    %v2209 = vunpack.c.l.s4 1983009808
    %v2210 = vunpack.c.0.s8 %v2209
    %v2211 = vperm.slane %v2205, %v2210
    %v2213 = vunpack.c.l.s4 1983009808
    %v2214 = vunpack.c.0.s8 %v2213
    %v2215 = vperm.slane %v2207, %v2214
    %v2216 = vrot.slane %v869, 4
    %v2217 = vsel %vm216, %v2216, %v865
    %v2218 = vrot.slane %v865, 4
    %v2219 = vsel %vm216, %v869, %v2218
    %v2221 = vunpack.c.l.s4 1983009808
    %v2222 = vunpack.c.0.s8 %v2221
    %v2223 = vperm.slane %v2217, %v2222
    %v2225 = vunpack.c.l.s4 1983009808
    %v2226 = vunpack.c.0.s8 %v2225
    %v2227 = vperm.slane %v2219, %v2226
    %v2228 = vrot.slane %v871, 4
    %v2229 = vsel %vm216, %v2228, %v867
    %v2230 = vrot.slane %v867, 4
    %v2231 = vsel %vm216, %v871, %v2230
    %v2233 = vunpack.c.l.s4 1983009808
    %v2234 = vunpack.c.0.s8 %v2233
    %v2235 = vperm.slane %v2229, %v2234
    %v2237 = vunpack.c.l.s4 1983009808
    %v2238 = vunpack.c.0.s8 %v2237
    %v2239 = vperm.slane %v2231, %v2238
    %v2240 = vrot.slane %v2211, 4
    %v2241 = vsel %vm216, %v2240, %v2199
    %v2242 = vrot.slane %v2199, 4
    %v2243 = vsel %vm216, %v2211, %v2242
    %v2245 = vunpack.c.l.s4 1934713408
    %v2246 = vunpack.c.0.s8 %v2245
    %v2247 = vperm.slane %v2241, %v2246
    %v2249 = vunpack.c.l.s4 1934713408
    %v2250 = vunpack.c.0.s8 %v2249
    %v2251 = vperm.slane %v2243, %v2250
    %v2252 = vrot.slane %v2215, 4
    %v2253 = vsel %vm216, %v2252, %v2203
    %v2254 = vrot.slane %v2203, 4
    %v2255 = vsel %vm216, %v2215, %v2254
    %v2257 = vunpack.c.l.s4 1934713408
    %v2258 = vunpack.c.0.s8 %v2257
    %v2259 = vperm.slane %v2253, %v2258
    %v2261 = vunpack.c.l.s4 1934713408
    %v2262 = vunpack.c.0.s8 %v2261
    %v2263 = vperm.slane %v2255, %v2262
    %v2264 = vrot.slane %v2235, 4
    %v2265 = vsel %vm216, %v2264, %v2223
    %v2266 = vrot.slane %v2223, 4
    %v2267 = vsel %vm216, %v2235, %v2266
    %v2269 = vunpack.c.l.s4 1934713408
    %v2270 = vunpack.c.0.s8 %v2269
    %v2271 = vperm.slane %v2265, %v2270
    %v2273 = vunpack.c.l.s4 1934713408
    %v2274 = vunpack.c.0.s8 %v2273
    %v2275 = vperm.slane %v2267, %v2274
    %v2276 = vrot.slane %v2239, 4
    %v2277 = vsel %vm216, %v2276, %v2227
    %v2278 = vrot.slane %v2227, 4
    %v2279 = vsel %vm216, %v2239, %v2278
    %v2281 = vunpack.c.l.s4 1934713408
    %v2282 = vunpack.c.0.s8 %v2281
    %v2283 = vperm.slane %v2277, %v2282
    %v2285 = vunpack.c.l.s4 1934713408
    %v2286 = vunpack.c.0.s8 %v2285
    %v2287 = vperm.slane %v2279, %v2286
    %v2288 = vrot.slane %v2271, 4
    %v2289 = vsel %vm216, %v2288, %v2247
    %v2290 = vrot.slane %v2247, 4
    %v2291 = vsel %vm216, %v2271, %v2290
    %v2292 = vrot.slane %v2275, 4
    %v2293 = vsel %vm216, %v2292, %v2251
    %v2294 = vrot.slane %v2251, 4
    %v2295 = vsel %vm216, %v2275, %v2294
    %v2296 = vrot.slane %v2283, 4
    %v2297 = vsel %vm216, %v2296, %v2259
    %v2298 = vrot.slane %v2259, 4
    %v2299 = vsel %vm216, %v2283, %v2298
    %v2300 = vrot.slane %v2287, 4
    %v2301 = vsel %vm216, %v2300, %v2263
    %v2302 = vrot.slane %v2263, 4
    %v2303 = vsel %vm216, %v2287, %v2302
    %v2304 = vrot.slane %v973, 4
    %v2305 = vsel %vm216, %v2304, %v969
    %v2306 = vrot.slane %v969, 4
    %v2307 = vsel %vm216, %v973, %v2306
    %v2309 = vunpack.c.l.s4 1983009808
    %v2310 = vunpack.c.0.s8 %v2309
    %v2311 = vperm.slane %v2305, %v2310
    %v2313 = vunpack.c.l.s4 1983009808
    %v2314 = vunpack.c.0.s8 %v2313
    %v2315 = vperm.slane %v2307, %v2314
    %v2316 = vrot.slane %v975, 4
    %v2317 = vsel %vm216, %v2316, %v971
    %v2318 = vrot.slane %v971, 4
    %v2319 = vsel %vm216, %v975, %v2318
    %v2321 = vunpack.c.l.s4 1983009808
    %v2322 = vunpack.c.0.s8 %v2321
    %v2323 = vperm.slane %v2317, %v2322
    %v2325 = vunpack.c.l.s4 1983009808
    %v2326 = vunpack.c.0.s8 %v2325
    %v2327 = vperm.slane %v2319, %v2326
    %v2328 = vrot.slane %v981, 4
    %v2329 = vsel %vm216, %v2328, %v977
    %v2330 = vrot.slane %v977, 4
    %v2331 = vsel %vm216, %v981, %v2330
    %v2333 = vunpack.c.l.s4 1983009808
    %v2334 = vunpack.c.0.s8 %v2333
    %v2335 = vperm.slane %v2329, %v2334
    %v2337 = vunpack.c.l.s4 1983009808
    %v2338 = vunpack.c.0.s8 %v2337
    %v2339 = vperm.slane %v2331, %v2338
    %v2340 = vrot.slane %v983, 4
    %v2341 = vsel %vm216, %v2340, %v979
    %v2342 = vrot.slane %v979, 4
    %v2343 = vsel %vm216, %v983, %v2342
    %v2345 = vunpack.c.l.s4 1983009808
    %v2346 = vunpack.c.0.s8 %v2345
    %v2347 = vperm.slane %v2341, %v2346
    %v2349 = vunpack.c.l.s4 1983009808
    %v2350 = vunpack.c.0.s8 %v2349
    %v2351 = vperm.slane %v2343, %v2350
    %v2352 = vrot.slane %v2323, 4
    %v2353 = vsel %vm216, %v2352, %v2311
    %v2354 = vrot.slane %v2311, 4
    %v2355 = vsel %vm216, %v2323, %v2354
    %v2357 = vunpack.c.l.s4 1934713408
    %v2358 = vunpack.c.0.s8 %v2357
    %v2359 = vperm.slane %v2353, %v2358
    %v2361 = vunpack.c.l.s4 1934713408
    %v2362 = vunpack.c.0.s8 %v2361
    %v2363 = vperm.slane %v2355, %v2362
    %v2364 = vrot.slane %v2327, 4
    %v2365 = vsel %vm216, %v2364, %v2315
    %v2366 = vrot.slane %v2315, 4
    %v2367 = vsel %vm216, %v2327, %v2366
    %v2369 = vunpack.c.l.s4 1934713408
    %v2370 = vunpack.c.0.s8 %v2369
    %v2371 = vperm.slane %v2365, %v2370
    %v2373 = vunpack.c.l.s4 1934713408
    %v2374 = vunpack.c.0.s8 %v2373
    %v2375 = vperm.slane %v2367, %v2374
    %v2376 = vrot.slane %v2347, 4
    %v2377 = vsel %vm216, %v2376, %v2335
    %v2378 = vrot.slane %v2335, 4
    %v2379 = vsel %vm216, %v2347, %v2378
    %v2381 = vunpack.c.l.s4 1934713408
    %v2382 = vunpack.c.0.s8 %v2381
    %v2383 = vperm.slane %v2377, %v2382
    %v2385 = vunpack.c.l.s4 1934713408
    %v2386 = vunpack.c.0.s8 %v2385
    %v2387 = vperm.slane %v2379, %v2386
    %v2388 = vrot.slane %v2351, 4
    %v2389 = vsel %vm216, %v2388, %v2339
    %v2390 = vrot.slane %v2339, 4
    %v2391 = vsel %vm216, %v2351, %v2390
    %v2393 = vunpack.c.l.s4 1934713408
    %v2394 = vunpack.c.0.s8 %v2393
    %v2395 = vperm.slane %v2389, %v2394
    %v2397 = vunpack.c.l.s4 1934713408
    %v2398 = vunpack.c.0.s8 %v2397
    %v2399 = vperm.slane %v2391, %v2398
    %v2400 = vrot.slane %v2383, 4
    %v2401 = vsel %vm216, %v2400, %v2359
    %v2402 = vrot.slane %v2359, 4
    %v2403 = vsel %vm216, %v2383, %v2402
    %v2404 = vrot.slane %v2387, 4
    %v2405 = vsel %vm216, %v2404, %v2363
    %v2406 = vrot.slane %v2363, 4
    %v2407 = vsel %vm216, %v2387, %v2406
    %v2408 = vrot.slane %v2395, 4
    %v2409 = vsel %vm216, %v2408, %v2371
    %v2410 = vrot.slane %v2371, 4
    %v2411 = vsel %vm216, %v2395, %v2410
    %v2412 = vrot.slane %v2399, 4
    %v2413 = vsel %vm216, %v2412, %v2375
    %v2414 = vrot.slane %v2375, 4
    %v2415 = vsel %vm216, %v2399, %v2414
    %v2416 = vrot.slane %v1085, 4
    %v2417 = vsel %vm216, %v2416, %v1081
    %v2418 = vrot.slane %v1081, 4
    %v2419 = vsel %vm216, %v1085, %v2418
    %v2421 = vunpack.c.l.s4 1983009808
    %v2422 = vunpack.c.0.s8 %v2421
    %v2423 = vperm.slane %v2417, %v2422
    %v2425 = vunpack.c.l.s4 1983009808
    %v2426 = vunpack.c.0.s8 %v2425
    %v2427 = vperm.slane %v2419, %v2426
    %v2428 = vrot.slane %v1087, 4
    %v2429 = vsel %vm216, %v2428, %v1083
    %v2430 = vrot.slane %v1083, 4
    %v2431 = vsel %vm216, %v1087, %v2430
    %v2433 = vunpack.c.l.s4 1983009808
    %v2434 = vunpack.c.0.s8 %v2433
    %v2435 = vperm.slane %v2429, %v2434
    %v2437 = vunpack.c.l.s4 1983009808
    %v2438 = vunpack.c.0.s8 %v2437
    %v2439 = vperm.slane %v2431, %v2438
    %v2440 = vrot.slane %v1093, 4
    %v2441 = vsel %vm216, %v2440, %v1089
    %v2442 = vrot.slane %v1089, 4
    %v2443 = vsel %vm216, %v1093, %v2442
    %v2445 = vunpack.c.l.s4 1983009808
    %v2446 = vunpack.c.0.s8 %v2445
    %v2447 = vperm.slane %v2441, %v2446
    %v2449 = vunpack.c.l.s4 1983009808
    %v2450 = vunpack.c.0.s8 %v2449
    %v2451 = vperm.slane %v2443, %v2450
    %v2452 = vrot.slane %v1095, 4
    %v2453 = vsel %vm216, %v2452, %v1091
    %v2454 = vrot.slane %v1091, 4
    %v2455 = vsel %vm216, %v1095, %v2454
    %v2457 = vunpack.c.l.s4 1983009808
    %v2458 = vunpack.c.0.s8 %v2457
    %v2459 = vperm.slane %v2453, %v2458
    %v2461 = vunpack.c.l.s4 1983009808
    %v2462 = vunpack.c.0.s8 %v2461
    %v2463 = vperm.slane %v2455, %v2462
    %v2464 = vrot.slane %v2435, 4
    %v2465 = vsel %vm216, %v2464, %v2423
    %v2466 = vrot.slane %v2423, 4
    %v2467 = vsel %vm216, %v2435, %v2466
    %v2469 = vunpack.c.l.s4 1934713408
    %v2470 = vunpack.c.0.s8 %v2469
    %v2471 = vperm.slane %v2465, %v2470
    %v2473 = vunpack.c.l.s4 1934713408
    %v2474 = vunpack.c.0.s8 %v2473
    %v2475 = vperm.slane %v2467, %v2474
    %v2476 = vrot.slane %v2439, 4
    %v2477 = vsel %vm216, %v2476, %v2427
    %v2478 = vrot.slane %v2427, 4
    %v2479 = vsel %vm216, %v2439, %v2478
    %v2481 = vunpack.c.l.s4 1934713408
    %v2482 = vunpack.c.0.s8 %v2481
    %v2483 = vperm.slane %v2477, %v2482
    %v2485 = vunpack.c.l.s4 1934713408
    %v2486 = vunpack.c.0.s8 %v2485
    %v2487 = vperm.slane %v2479, %v2486
    %v2488 = vrot.slane %v2459, 4
    %v2489 = vsel %vm216, %v2488, %v2447
    %v2490 = vrot.slane %v2447, 4
    %v2491 = vsel %vm216, %v2459, %v2490
    %v2493 = vunpack.c.l.s4 1934713408
    %v2494 = vunpack.c.0.s8 %v2493
    %v2495 = vperm.slane %v2489, %v2494
    %v2497 = vunpack.c.l.s4 1934713408
    %v2498 = vunpack.c.0.s8 %v2497
    %v2499 = vperm.slane %v2491, %v2498
    %v2500 = vrot.slane %v2463, 4
    %v2501 = vsel %vm216, %v2500, %v2451
    %v2502 = vrot.slane %v2451, 4
    %v2503 = vsel %vm216, %v2463, %v2502
    %v2505 = vunpack.c.l.s4 1934713408
    %v2506 = vunpack.c.0.s8 %v2505
    %v2507 = vperm.slane %v2501, %v2506
    %v2509 = vunpack.c.l.s4 1934713408
    %v2510 = vunpack.c.0.s8 %v2509
    %v2511 = vperm.slane %v2503, %v2510
    %v2512 = vrot.slane %v2495, 4
    %v2513 = vsel %vm216, %v2512, %v2471
    %v2514 = vrot.slane %v2471, 4
    %v2515 = vsel %vm216, %v2495, %v2514
    %v2516 = vrot.slane %v2499, 4
    %v2517 = vsel %vm216, %v2516, %v2475
    %v2518 = vrot.slane %v2475, 4
    %v2519 = vsel %vm216, %v2499, %v2518
    %v2520 = vrot.slane %v2507, 4
    %v2521 = vsel %vm216, %v2520, %v2483
    %v2522 = vrot.slane %v2483, 4
    %v2523 = vsel %vm216, %v2507, %v2522
    %v2524 = vrot.slane %v2511, 4
    %v2525 = vsel %vm216, %v2524, %v2487
    %v2526 = vrot.slane %v2487, 4
    %v2527 = vsel %vm216, %v2511, %v2526
    %v2528 = vrot.slane %v1197, 4
    %v2529 = vsel %vm216, %v2528, %v1193
    %v2530 = vrot.slane %v1193, 4
    %v2531 = vsel %vm216, %v1197, %v2530
    %v2533 = vunpack.c.l.s4 1983009808
    %v2534 = vunpack.c.0.s8 %v2533
    %v2535 = vperm.slane %v2529, %v2534
    %v2537 = vunpack.c.l.s4 1983009808
    %v2538 = vunpack.c.0.s8 %v2537
    %v2539 = vperm.slane %v2531, %v2538
    %v2540 = vrot.slane %v1199, 4
    %v2541 = vsel %vm216, %v2540, %v1195
    %v2542 = vrot.slane %v1195, 4
    %v2543 = vsel %vm216, %v1199, %v2542
    %v2545 = vunpack.c.l.s4 1983009808
    %v2546 = vunpack.c.0.s8 %v2545
    %v2547 = vperm.slane %v2541, %v2546
    %v2549 = vunpack.c.l.s4 1983009808
    %v2550 = vunpack.c.0.s8 %v2549
    %v2551 = vperm.slane %v2543, %v2550
    %v2552 = vrot.slane %v1205, 4
    %v2553 = vsel %vm216, %v2552, %v1201
    %v2554 = vrot.slane %v1201, 4
    %v2555 = vsel %vm216, %v1205, %v2554
    %v2557 = vunpack.c.l.s4 1983009808
    %v2558 = vunpack.c.0.s8 %v2557
    %v2559 = vperm.slane %v2553, %v2558
    %v2561 = vunpack.c.l.s4 1983009808
    %v2562 = vunpack.c.0.s8 %v2561
    %v2563 = vperm.slane %v2555, %v2562
    %v2564 = vrot.slane %v1207, 4
    %v2565 = vsel %vm216, %v2564, %v1203
    %v2566 = vrot.slane %v1203, 4
    %v2567 = vsel %vm216, %v1207, %v2566
    %v2569 = vunpack.c.l.s4 1983009808
    %v2570 = vunpack.c.0.s8 %v2569
    %v2571 = vperm.slane %v2565, %v2570
    %v2573 = vunpack.c.l.s4 1983009808
    %v2574 = vunpack.c.0.s8 %v2573
    %v2575 = vperm.slane %v2567, %v2574
    %v2576 = vrot.slane %v2547, 4
    %v2577 = vsel %vm216, %v2576, %v2535
    %v2578 = vrot.slane %v2535, 4
    %v2579 = vsel %vm216, %v2547, %v2578
    %v2581 = vunpack.c.l.s4 1934713408
    %v2582 = vunpack.c.0.s8 %v2581
    %v2583 = vperm.slane %v2577, %v2582
    %v2585 = vunpack.c.l.s4 1934713408
    %v2586 = vunpack.c.0.s8 %v2585
    %v2587 = vperm.slane %v2579, %v2586
    %v2588 = vrot.slane %v2551, 4
    %v2589 = vsel %vm216, %v2588, %v2539
    %v2590 = vrot.slane %v2539, 4
    %v2591 = vsel %vm216, %v2551, %v2590
    %v2593 = vunpack.c.l.s4 1934713408
    %v2594 = vunpack.c.0.s8 %v2593
    %v2595 = vperm.slane %v2589, %v2594
    %v2597 = vunpack.c.l.s4 1934713408
    %v2598 = vunpack.c.0.s8 %v2597
    %v2599 = vperm.slane %v2591, %v2598
    %v2600 = vrot.slane %v2571, 4
    %v2601 = vsel %vm216, %v2600, %v2559
    %v2602 = vrot.slane %v2559, 4
    %v2603 = vsel %vm216, %v2571, %v2602
    %v2605 = vunpack.c.l.s4 1934713408
    %v2606 = vunpack.c.0.s8 %v2605
    %v2607 = vperm.slane %v2601, %v2606
    %v2609 = vunpack.c.l.s4 1934713408
    %v2610 = vunpack.c.0.s8 %v2609
    %v2611 = vperm.slane %v2603, %v2610
    %v2612 = vrot.slane %v2575, 4
    %v2613 = vsel %vm216, %v2612, %v2563
    %v2614 = vrot.slane %v2563, 4
    %v2615 = vsel %vm216, %v2575, %v2614
    %v2617 = vunpack.c.l.s4 1934713408
    %v2618 = vunpack.c.0.s8 %v2617
    %v2619 = vperm.slane %v2613, %v2618
    %v2621 = vunpack.c.l.s4 1934713408
    %v2622 = vunpack.c.0.s8 %v2621
    %v2623 = vperm.slane %v2615, %v2622
    %v2624 = vrot.slane %v2607, 4
    %v2625 = vsel %vm216, %v2624, %v2583
    %v2626 = vrot.slane %v2583, 4
    %v2627 = vsel %vm216, %v2607, %v2626
    %v2628 = vrot.slane %v2611, 4
    %v2629 = vsel %vm216, %v2628, %v2587
    %v2630 = vrot.slane %v2587, 4
    %v2631 = vsel %vm216, %v2611, %v2630
    %v2632 = vrot.slane %v2619, 4
    %v2633 = vsel %vm216, %v2632, %v2595
    %v2634 = vrot.slane %v2595, 4
    %v2635 = vsel %vm216, %v2619, %v2634
    %v2636 = vrot.slane %v2623, 4
    %v2637 = vsel %vm216, %v2636, %v2599
    %v2638 = vrot.slane %v2599, 4
    %v2639 = vsel %vm216, %v2623, %v2638
    %v2640 = vrot.slane %v1397, 4
    %v2641 = vsel %vm216, %v2640, %v1393
    %v2642 = vrot.slane %v1393, 4
    %v2643 = vsel %vm216, %v1397, %v2642
    %v2645 = vunpack.c.l.s4 1983009808
    %v2646 = vunpack.c.0.s8 %v2645
    %v2647 = vperm.slane %v2641, %v2646
    %v2649 = vunpack.c.l.s4 1983009808
    %v2650 = vunpack.c.0.s8 %v2649
    %v2651 = vperm.slane %v2643, %v2650
    %v2652 = vrot.slane %v1399, 4
    %v2653 = vsel %vm216, %v2652, %v1395
    %v2654 = vrot.slane %v1395, 4
    %v2655 = vsel %vm216, %v1399, %v2654
    %v2657 = vunpack.c.l.s4 1983009808
    %v2658 = vunpack.c.0.s8 %v2657
    %v2659 = vperm.slane %v2653, %v2658
    %v2661 = vunpack.c.l.s4 1983009808
    %v2662 = vunpack.c.0.s8 %v2661
    %v2663 = vperm.slane %v2655, %v2662
    %v2664 = vrot.slane %v1405, 4
    %v2665 = vsel %vm216, %v2664, %v1401
    %v2666 = vrot.slane %v1401, 4
    %v2667 = vsel %vm216, %v1405, %v2666
    %v2669 = vunpack.c.l.s4 1983009808
    %v2670 = vunpack.c.0.s8 %v2669
    %v2671 = vperm.slane %v2665, %v2670
    %v2673 = vunpack.c.l.s4 1983009808
    %v2674 = vunpack.c.0.s8 %v2673
    %v2675 = vperm.slane %v2667, %v2674
    %v2676 = vrot.slane %v1407, 4
    %v2677 = vsel %vm216, %v2676, %v1403
    %v2678 = vrot.slane %v1403, 4
    %v2679 = vsel %vm216, %v1407, %v2678
    %v2681 = vunpack.c.l.s4 1983009808
    %v2682 = vunpack.c.0.s8 %v2681
    %v2683 = vperm.slane %v2677, %v2682
    %v2685 = vunpack.c.l.s4 1983009808
    %v2686 = vunpack.c.0.s8 %v2685
    %v2687 = vperm.slane %v2679, %v2686
    %v2688 = vrot.slane %v2659, 4
    %v2689 = vsel %vm216, %v2688, %v2647
    %v2690 = vrot.slane %v2647, 4
    %v2691 = vsel %vm216, %v2659, %v2690
    %v2693 = vunpack.c.l.s4 1934713408
    %v2694 = vunpack.c.0.s8 %v2693
    %v2695 = vperm.slane %v2689, %v2694
    %v2697 = vunpack.c.l.s4 1934713408
    %v2698 = vunpack.c.0.s8 %v2697
    %v2699 = vperm.slane %v2691, %v2698
    %v2700 = vrot.slane %v2663, 4
    %v2701 = vsel %vm216, %v2700, %v2651
    %v2702 = vrot.slane %v2651, 4
    %v2703 = vsel %vm216, %v2663, %v2702
    %v2705 = vunpack.c.l.s4 1934713408
    %v2706 = vunpack.c.0.s8 %v2705
    %v2707 = vperm.slane %v2701, %v2706
    %v2709 = vunpack.c.l.s4 1934713408
    %v2710 = vunpack.c.0.s8 %v2709
    %v2711 = vperm.slane %v2703, %v2710
    %v2712 = vrot.slane %v2683, 4
    %v2713 = vsel %vm216, %v2712, %v2671
    %v2714 = vrot.slane %v2671, 4
    %v2715 = vsel %vm216, %v2683, %v2714
    %v2717 = vunpack.c.l.s4 1934713408
    %v2718 = vunpack.c.0.s8 %v2717
    %v2719 = vperm.slane %v2713, %v2718
    %v2721 = vunpack.c.l.s4 1934713408
    %v2722 = vunpack.c.0.s8 %v2721
    %v2723 = vperm.slane %v2715, %v2722
    %v2724 = vrot.slane %v2687, 4
    %v2725 = vsel %vm216, %v2724, %v2675
    %v2726 = vrot.slane %v2675, 4
    %v2727 = vsel %vm216, %v2687, %v2726
    %v2729 = vunpack.c.l.s4 1934713408
    %v2730 = vunpack.c.0.s8 %v2729
    %v2731 = vperm.slane %v2725, %v2730
    %v2733 = vunpack.c.l.s4 1934713408
    %v2734 = vunpack.c.0.s8 %v2733
    %v2735 = vperm.slane %v2727, %v2734
    %v2736 = vrot.slane %v2719, 4
    %v2737 = vsel %vm216, %v2736, %v2695
    %v2738 = vrot.slane %v2695, 4
    %v2739 = vsel %vm216, %v2719, %v2738
    %v2740 = vrot.slane %v2723, 4
    %v2741 = vsel %vm216, %v2740, %v2699
    %v2742 = vrot.slane %v2699, 4
    %v2743 = vsel %vm216, %v2723, %v2742
    %v2744 = vrot.slane %v2731, 4
    %v2745 = vsel %vm216, %v2744, %v2707
    %v2746 = vrot.slane %v2707, 4
    %v2747 = vsel %vm216, %v2731, %v2746
    %v2748 = vrot.slane %v2735, 4
    %v2749 = vsel %vm216, %v2748, %v2711
    %v2750 = vrot.slane %v2711, 4
    %v2751 = vsel %vm216, %v2735, %v2750
    %v2752 = vrot.slane %v1509, 4
    %v2753 = vsel %vm216, %v2752, %v1505
    %v2754 = vrot.slane %v1505, 4
    %v2755 = vsel %vm216, %v1509, %v2754
    %v2757 = vunpack.c.l.s4 1983009808
    %v2758 = vunpack.c.0.s8 %v2757
    %v2759 = vperm.slane %v2753, %v2758
    %v2761 = vunpack.c.l.s4 1983009808
    %v2762 = vunpack.c.0.s8 %v2761
    %v2763 = vperm.slane %v2755, %v2762
    %v2764 = vrot.slane %v1511, 4
    %v2765 = vsel %vm216, %v2764, %v1507
    %v2766 = vrot.slane %v1507, 4
    %v2767 = vsel %vm216, %v1511, %v2766
    %v2769 = vunpack.c.l.s4 1983009808
    %v2770 = vunpack.c.0.s8 %v2769
    %v2771 = vperm.slane %v2765, %v2770
    %v2773 = vunpack.c.l.s4 1983009808
    %v2774 = vunpack.c.0.s8 %v2773
    %v2775 = vperm.slane %v2767, %v2774
    %v2776 = vrot.slane %v1517, 4
    %v2777 = vsel %vm216, %v2776, %v1513
    %v2778 = vrot.slane %v1513, 4
    %v2779 = vsel %vm216, %v1517, %v2778
    %v2781 = vunpack.c.l.s4 1983009808
    %v2782 = vunpack.c.0.s8 %v2781
    %v2783 = vperm.slane %v2777, %v2782
    %v2785 = vunpack.c.l.s4 1983009808
    %v2786 = vunpack.c.0.s8 %v2785
    %v2787 = vperm.slane %v2779, %v2786
    %v2788 = vrot.slane %v1519, 4
    %v2789 = vsel %vm216, %v2788, %v1515
    %v2790 = vrot.slane %v1515, 4
    %v2791 = vsel %vm216, %v1519, %v2790
    %v2793 = vunpack.c.l.s4 1983009808
    %v2794 = vunpack.c.0.s8 %v2793
    %v2795 = vperm.slane %v2789, %v2794
    %v2797 = vunpack.c.l.s4 1983009808
    %v2798 = vunpack.c.0.s8 %v2797
    %v2799 = vperm.slane %v2791, %v2798
    %v2800 = vrot.slane %v2771, 4
    %v2801 = vsel %vm216, %v2800, %v2759
    %v2802 = vrot.slane %v2759, 4
    %v2803 = vsel %vm216, %v2771, %v2802
    %v2805 = vunpack.c.l.s4 1934713408
    %v2806 = vunpack.c.0.s8 %v2805
    %v2807 = vperm.slane %v2801, %v2806
    %v2809 = vunpack.c.l.s4 1934713408
    %v2810 = vunpack.c.0.s8 %v2809
    %v2811 = vperm.slane %v2803, %v2810
    %v2812 = vrot.slane %v2775, 4
    %v2813 = vsel %vm216, %v2812, %v2763
    %v2814 = vrot.slane %v2763, 4
    %v2815 = vsel %vm216, %v2775, %v2814
    %v2817 = vunpack.c.l.s4 1934713408
    %v2818 = vunpack.c.0.s8 %v2817
    %v2819 = vperm.slane %v2813, %v2818
    %v2821 = vunpack.c.l.s4 1934713408
    %v2822 = vunpack.c.0.s8 %v2821
    %v2823 = vperm.slane %v2815, %v2822
    %v2824 = vrot.slane %v2795, 4
    %v2825 = vsel %vm216, %v2824, %v2783
    %v2826 = vrot.slane %v2783, 4
    %v2827 = vsel %vm216, %v2795, %v2826
    %v2829 = vunpack.c.l.s4 1934713408
    %v2830 = vunpack.c.0.s8 %v2829
    %v2831 = vperm.slane %v2825, %v2830
    %v2833 = vunpack.c.l.s4 1934713408
    %v2834 = vunpack.c.0.s8 %v2833
    %v2835 = vperm.slane %v2827, %v2834
    %v2836 = vrot.slane %v2799, 4
    %v2837 = vsel %vm216, %v2836, %v2787
    %v2838 = vrot.slane %v2787, 4
    %v2839 = vsel %vm216, %v2799, %v2838
    %v2841 = vunpack.c.l.s4 1934713408
    %v2842 = vunpack.c.0.s8 %v2841
    %v2843 = vperm.slane %v2837, %v2842
    %v2845 = vunpack.c.l.s4 1934713408
    %v2846 = vunpack.c.0.s8 %v2845
    %v2847 = vperm.slane %v2839, %v2846
    %v2848 = vrot.slane %v2831, 4
    %v2849 = vsel %vm216, %v2848, %v2807
    %v2850 = vrot.slane %v2807, 4
    %v2851 = vsel %vm216, %v2831, %v2850
    %v2852 = vrot.slane %v2835, 4
    %v2853 = vsel %vm216, %v2852, %v2811
    %v2854 = vrot.slane %v2811, 4
    %v2855 = vsel %vm216, %v2835, %v2854
    %v2856 = vrot.slane %v2843, 4
    %v2857 = vsel %vm216, %v2856, %v2819
    %v2858 = vrot.slane %v2819, 4
    %v2859 = vsel %vm216, %v2843, %v2858
    %v2860 = vrot.slane %v2847, 4
    %v2861 = vsel %vm216, %v2860, %v2823
    %v2862 = vrot.slane %v2823, 4
    %v2863 = vsel %vm216, %v2847, %v2862
    %v2864 = vrot.slane %v1621, 4
    %v2865 = vsel %vm216, %v2864, %v1617
    %v2866 = vrot.slane %v1617, 4
    %v2867 = vsel %vm216, %v1621, %v2866
    %v2869 = vunpack.c.l.s4 1983009808
    %v2870 = vunpack.c.0.s8 %v2869
    %v2871 = vperm.slane %v2865, %v2870
    %v2873 = vunpack.c.l.s4 1983009808
    %v2874 = vunpack.c.0.s8 %v2873
    %v2875 = vperm.slane %v2867, %v2874
    %v2876 = vrot.slane %v1623, 4
    %v2877 = vsel %vm216, %v2876, %v1619
    %v2878 = vrot.slane %v1619, 4
    %v2879 = vsel %vm216, %v1623, %v2878
    %v2881 = vunpack.c.l.s4 1983009808
    %v2882 = vunpack.c.0.s8 %v2881
    %v2883 = vperm.slane %v2877, %v2882
    %v2885 = vunpack.c.l.s4 1983009808
    %v2886 = vunpack.c.0.s8 %v2885
    %v2887 = vperm.slane %v2879, %v2886
    %v2888 = vrot.slane %v1629, 4
    %v2889 = vsel %vm216, %v2888, %v1625
    %v2890 = vrot.slane %v1625, 4
    %v2891 = vsel %vm216, %v1629, %v2890
    %v2893 = vunpack.c.l.s4 1983009808
    %v2894 = vunpack.c.0.s8 %v2893
    %v2895 = vperm.slane %v2889, %v2894
    %v2897 = vunpack.c.l.s4 1983009808
    %v2898 = vunpack.c.0.s8 %v2897
    %v2899 = vperm.slane %v2891, %v2898
    %v2900 = vrot.slane %v1631, 4
    %v2901 = vsel %vm216, %v2900, %v1627
    %v2902 = vrot.slane %v1627, 4
    %v2903 = vsel %vm216, %v1631, %v2902
    %v2905 = vunpack.c.l.s4 1983009808
    %v2906 = vunpack.c.0.s8 %v2905
    %v2907 = vperm.slane %v2901, %v2906
    %v2909 = vunpack.c.l.s4 1983009808
    %v2910 = vunpack.c.0.s8 %v2909
    %v2911 = vperm.slane %v2903, %v2910
    %v2912 = vrot.slane %v2883, 4
    %v2913 = vsel %vm216, %v2912, %v2871
    %v2914 = vrot.slane %v2871, 4
    %v2915 = vsel %vm216, %v2883, %v2914
    %v2917 = vunpack.c.l.s4 1934713408
    %v2918 = vunpack.c.0.s8 %v2917
    %v2919 = vperm.slane %v2913, %v2918
    %v2921 = vunpack.c.l.s4 1934713408
    %v2922 = vunpack.c.0.s8 %v2921
    %v2923 = vperm.slane %v2915, %v2922
    %v2924 = vrot.slane %v2887, 4
    %v2925 = vsel %vm216, %v2924, %v2875
    %v2926 = vrot.slane %v2875, 4
    %v2927 = vsel %vm216, %v2887, %v2926
    %v2929 = vunpack.c.l.s4 1934713408
    %v2930 = vunpack.c.0.s8 %v2929
    %v2931 = vperm.slane %v2925, %v2930
    %v2933 = vunpack.c.l.s4 1934713408
    %v2934 = vunpack.c.0.s8 %v2933
    %v2935 = vperm.slane %v2927, %v2934
    %v2936 = vrot.slane %v2907, 4
    %v2937 = vsel %vm216, %v2936, %v2895
    %v2938 = vrot.slane %v2895, 4
    %v2939 = vsel %vm216, %v2907, %v2938
    %v2941 = vunpack.c.l.s4 1934713408
    %v2942 = vunpack.c.0.s8 %v2941
    %v2943 = vperm.slane %v2937, %v2942
    %v2945 = vunpack.c.l.s4 1934713408
    %v2946 = vunpack.c.0.s8 %v2945
    %v2947 = vperm.slane %v2939, %v2946
    %v2948 = vrot.slane %v2911, 4
    %v2949 = vsel %vm216, %v2948, %v2899
    %v2950 = vrot.slane %v2899, 4
    %v2951 = vsel %vm216, %v2911, %v2950
    %v2953 = vunpack.c.l.s4 1934713408
    %v2954 = vunpack.c.0.s8 %v2953
    %v2955 = vperm.slane %v2949, %v2954
    %v2957 = vunpack.c.l.s4 1934713408
    %v2958 = vunpack.c.0.s8 %v2957
    %v2959 = vperm.slane %v2951, %v2958
    %v2960 = vrot.slane %v2943, 4
    %v2961 = vsel %vm216, %v2960, %v2919
    %v2962 = vrot.slane %v2919, 4
    %v2963 = vsel %vm216, %v2943, %v2962
    %v2964 = vrot.slane %v2947, 4
    %v2965 = vsel %vm216, %v2964, %v2923
    %v2966 = vrot.slane %v2923, 4
    %v2967 = vsel %vm216, %v2947, %v2966
    %v2968 = vrot.slane %v2955, 4
    %v2969 = vsel %vm216, %v2968, %v2931
    %v2970 = vrot.slane %v2931, 4
    %v2971 = vsel %vm216, %v2955, %v2970
    %v2972 = vrot.slane %v2959, 4
    %v2973 = vsel %vm216, %v2972, %v2935
    %v2974 = vrot.slane %v2935, 4
    %v2975 = vsel %vm216, %v2959, %v2974
    %v2976 = vrot.slane %v1733, 4
    %v2977 = vsel %vm216, %v2976, %v1729
    %v2978 = vrot.slane %v1729, 4
    %v2979 = vsel %vm216, %v1733, %v2978
    %v2981 = vunpack.c.l.s4 1983009808
    %v2982 = vunpack.c.0.s8 %v2981
    %v2983 = vperm.slane %v2977, %v2982
    %v2985 = vunpack.c.l.s4 1983009808
    %v2986 = vunpack.c.0.s8 %v2985
    %v2987 = vperm.slane %v2979, %v2986
    %v2988 = vrot.slane %v1735, 4
    %v2989 = vsel %vm216, %v2988, %v1731
    %v2990 = vrot.slane %v1731, 4
    %v2991 = vsel %vm216, %v1735, %v2990
    %v2993 = vunpack.c.l.s4 1983009808
    %v2994 = vunpack.c.0.s8 %v2993
    %v2995 = vperm.slane %v2989, %v2994
    %v2997 = vunpack.c.l.s4 1983009808
    %v2998 = vunpack.c.0.s8 %v2997
    %v2999 = vperm.slane %v2991, %v2998
    %v3000 = vrot.slane %v1741, 4
    %v3001 = vsel %vm216, %v3000, %v1737
    %v3002 = vrot.slane %v1737, 4
    %v3003 = vsel %vm216, %v1741, %v3002
    %v3005 = vunpack.c.l.s4 1983009808
    %v3006 = vunpack.c.0.s8 %v3005
    %v3007 = vperm.slane %v3001, %v3006
    %v3009 = vunpack.c.l.s4 1983009808
    %v3010 = vunpack.c.0.s8 %v3009
    %v3011 = vperm.slane %v3003, %v3010
    %v3012 = vrot.slane %v1743, 4
    %v3013 = vsel %vm216, %v3012, %v1739
    %v3014 = vrot.slane %v1739, 4
    %v3015 = vsel %vm216, %v1743, %v3014
    %v3017 = vunpack.c.l.s4 1983009808
    %v3018 = vunpack.c.0.s8 %v3017
    %v3019 = vperm.slane %v3013, %v3018
    %v3021 = vunpack.c.l.s4 1983009808
    %v3022 = vunpack.c.0.s8 %v3021
    %v3023 = vperm.slane %v3015, %v3022
    %v3024 = vrot.slane %v2995, 4
    %v3025 = vsel %vm216, %v3024, %v2983
    %v3026 = vrot.slane %v2983, 4
    %v3027 = vsel %vm216, %v2995, %v3026
    %v3029 = vunpack.c.l.s4 1934713408
    %v3030 = vunpack.c.0.s8 %v3029
    %v3031 = vperm.slane %v3025, %v3030
    %v3033 = vunpack.c.l.s4 1934713408
    %v3034 = vunpack.c.0.s8 %v3033
    %v3035 = vperm.slane %v3027, %v3034
    %v3036 = vrot.slane %v2999, 4
    %v3037 = vsel %vm216, %v3036, %v2987
    %v3038 = vrot.slane %v2987, 4
    %v3039 = vsel %vm216, %v2999, %v3038
    %v3041 = vunpack.c.l.s4 1934713408
    %v3042 = vunpack.c.0.s8 %v3041
    %v3043 = vperm.slane %v3037, %v3042
    %v3045 = vunpack.c.l.s4 1934713408
    %v3046 = vunpack.c.0.s8 %v3045
    %v3047 = vperm.slane %v3039, %v3046
    %v3048 = vrot.slane %v3019, 4
    %v3049 = vsel %vm216, %v3048, %v3007
    %v3050 = vrot.slane %v3007, 4
    %v3051 = vsel %vm216, %v3019, %v3050
    %v3053 = vunpack.c.l.s4 1934713408
    %v3054 = vunpack.c.0.s8 %v3053
    %v3055 = vperm.slane %v3049, %v3054
    %v3057 = vunpack.c.l.s4 1934713408
    %v3058 = vunpack.c.0.s8 %v3057
    %v3059 = vperm.slane %v3051, %v3058
    %v3060 = vrot.slane %v3023, 4
    %v3061 = vsel %vm216, %v3060, %v3011
    %v3062 = vrot.slane %v3011, 4
    %v3063 = vsel %vm216, %v3023, %v3062
    %v3065 = vunpack.c.l.s4 1934713408
    %v3066 = vunpack.c.0.s8 %v3065
    %v3067 = vperm.slane %v3061, %v3066
    %v3069 = vunpack.c.l.s4 1934713408
    %v3070 = vunpack.c.0.s8 %v3069
    %v3071 = vperm.slane %v3063, %v3070
    %v3072 = vrot.slane %v3055, 4
    %v3073 = vsel %vm216, %v3072, %v3031
    %v3074 = vrot.slane %v3031, 4
    %v3075 = vsel %vm216, %v3055, %v3074
    %v3076 = vrot.slane %v3059, 4
    %v3077 = vsel %vm216, %v3076, %v3035
    %v3078 = vrot.slane %v3035, 4
    %v3079 = vsel %vm216, %v3059, %v3078
    %v3080 = vrot.slane %v3067, 4
    %v3081 = vsel %vm216, %v3080, %v3043
    %v3082 = vrot.slane %v3043, 4
    %v3083 = vsel %vm216, %v3067, %v3082
    %v3084 = vrot.slane %v3071, 4
    %v3085 = vsel %vm216, %v3084, %v3047
    %v3086 = vrot.slane %v3047, 4
    %v3087 = vsel %vm216, %v3071, %v3086
    %vm3088 = vcmask 64512
    %v3090 = vsel %vm3088, %v1841, 0
    %v3093 = vsel %vm3088, %v1953, 0
    %v3096 = vsel %vm3088, %v2289, 0
    %v3099 = vsel %vm3088, %v2401, 0
    %3101 = vmatpush.xpose.msra.mxu0 0.0
    %3102 = vmatpush.xpose.msra.mxu0 0.0
    %3103 = vmatpush.xpose.msra.mxu0 0.0
    %3104 = vmatpush.xpose.msra.mxu0 0.0
    %3105 = vmatpush.xpose.msra.mxu0 0.0
    %3106 = vmatpush.xpose.msra.mxu0 0.0
    %3107 = vmatpush.xpose.msra.mxu0 0.0
    %3108 = vmatpush.xpose.msra.mxu0 0.0
    %3109 = vmatpush.xpose.msra.mxu0 0.0
    %3110 = vmatpush.xpose.msra.mxu0 0.0
    %3111 = vmatpush.xpose.msra.mxu0 0.0
    %3112 = vmatpush.xpose.msra.mxu0 0.0
    %3113 = vmatpush.xpose.msra.mxu0 0.0
    %3114 = vmatpush.xpose.msra.mxu0 0.0
    %3115 = vmatpush.xpose.msra.mxu0 %v3099
    %3116 = vmatpush.xpose.msra.mxu0 %v3096
    %3117 = vmatmul.f32.gmra.mxu0 %v3090
    %v3118 = vpop.f32.mrf.mxu0
    %v3119 = vadd.f32 0.0, %v3118
    %3120 = vmatmul.f32.gmra.mxu0 %v3093
    %v3121 = vpop.f32.mrf.mxu0
    %v3122 = vadd.f32 0.0, %v3121
    %3123 = vdwg.mxu0
    %v3125 = vsel %vm3088, %v1843, 0
    %v3128 = vsel %vm3088, %v1955, 0
    %v3131 = vsel %vm3088, %v2291, 0
    %v3134 = vsel %vm3088, %v2403, 0
    %3136 = vmatpush.xpose.msra.mxu0 0.0
    %3137 = vmatpush.xpose.msra.mxu0 0.0
    %3138 = vmatpush.xpose.msra.mxu0 0.0
    %3139 = vmatpush.xpose.msra.mxu0 0.0
    %3140 = vmatpush.xpose.msra.mxu0 0.0
    %3141 = vmatpush.xpose.msra.mxu0 0.0
    %3142 = vmatpush.xpose.msra.mxu0 0.0
    %3143 = vmatpush.xpose.msra.mxu0 0.0
    %3144 = vmatpush.xpose.msra.mxu0 0.0
    %3145 = vmatpush.xpose.msra.mxu0 0.0
    %3146 = vmatpush.xpose.msra.mxu0 0.0
    %3147 = vmatpush.xpose.msra.mxu0 0.0
    %3148 = vmatpush.xpose.msra.mxu0 0.0
    %3149 = vmatpush.xpose.msra.mxu0 0.0
    %3150 = vmatpush.xpose.msra.mxu0 %v3134
    %3151 = vmatpush.xpose.msra.mxu0 %v3131
    %3152 = vmatmul.f32.gmra.mxu0 %v3125
    %v3153 = vpop.f32.mrf.mxu0
    %v3154 = vadd.f32 0.0, %v3153
    %3155 = vmatmul.f32.gmra.mxu0 %v3128
    %v3156 = vpop.f32.mrf.mxu0
    %v3157 = vadd.f32 0.0, %v3156
    %3158 = vdwg.mxu0
    %v3160 = vsel %vm3088, %v1845, 0
    %v3163 = vsel %vm3088, %v1957, 0
    %v3166 = vsel %vm3088, %v2293, 0
    %v3169 = vsel %vm3088, %v2405, 0
    %3171 = vmatpush.xpose.msra.mxu0 0.0
    %3172 = vmatpush.xpose.msra.mxu0 0.0
    %3173 = vmatpush.xpose.msra.mxu0 0.0
    %3174 = vmatpush.xpose.msra.mxu0 0.0
    %3175 = vmatpush.xpose.msra.mxu0 0.0
    %3176 = vmatpush.xpose.msra.mxu0 0.0
    %3177 = vmatpush.xpose.msra.mxu0 0.0
    %3178 = vmatpush.xpose.msra.mxu0 0.0
    %3179 = vmatpush.xpose.msra.mxu0 0.0
    %3180 = vmatpush.xpose.msra.mxu0 0.0
    %3181 = vmatpush.xpose.msra.mxu0 0.0
    %3182 = vmatpush.xpose.msra.mxu0 0.0
    %3183 = vmatpush.xpose.msra.mxu0 0.0
    %3184 = vmatpush.xpose.msra.mxu0 0.0
    %3185 = vmatpush.xpose.msra.mxu0 %v3169
    %3186 = vmatpush.xpose.msra.mxu0 %v3166
    %3187 = vmatmul.f32.gmra.mxu0 %v3160
    %v3188 = vpop.f32.mrf.mxu0
    %v3189 = vadd.f32 0.0, %v3188
    %3190 = vmatmul.f32.gmra.mxu0 %v3163
    %v3191 = vpop.f32.mrf.mxu0
    %v3192 = vadd.f32 0.0, %v3191
    %3193 = vdwg.mxu0
    %v3195 = vsel %vm3088, %v1847, 0
    %v3198 = vsel %vm3088, %v1959, 0
    %v3201 = vsel %vm3088, %v2295, 0
    %v3204 = vsel %vm3088, %v2407, 0
    %3206 = vmatpush.xpose.msra.mxu0 0.0
    %3207 = vmatpush.xpose.msra.mxu0 0.0
    %3208 = vmatpush.xpose.msra.mxu0 0.0
    %3209 = vmatpush.xpose.msra.mxu0 0.0
    %3210 = vmatpush.xpose.msra.mxu0 0.0
    %3211 = vmatpush.xpose.msra.mxu0 0.0
    %3212 = vmatpush.xpose.msra.mxu0 0.0
    %3213 = vmatpush.xpose.msra.mxu0 0.0
    %3214 = vmatpush.xpose.msra.mxu0 0.0
    %3215 = vmatpush.xpose.msra.mxu0 0.0
    %3216 = vmatpush.xpose.msra.mxu0 0.0
    %3217 = vmatpush.xpose.msra.mxu0 0.0
    %3218 = vmatpush.xpose.msra.mxu0 0.0
    %3219 = vmatpush.xpose.msra.mxu0 0.0
    %3220 = vmatpush.xpose.msra.mxu0 %v3204
    %3221 = vmatpush.xpose.msra.mxu0 %v3201
    %3222 = vmatmul.f32.gmra.mxu0 %v3195
    %v3223 = vpop.f32.mrf.mxu0
    %v3224 = vadd.f32 0.0, %v3223
    %3225 = vmatmul.f32.gmra.mxu0 %v3198
    %v3226 = vpop.f32.mrf.mxu0
    %v3227 = vadd.f32 0.0, %v3226
    %3228 = vdwg.mxu0
    %v3230 = vsel %vm3088, %v1849, 0
    %v3233 = vsel %vm3088, %v1961, 0
    %v3236 = vsel %vm3088, %v2297, 0
    %v3239 = vsel %vm3088, %v2409, 0
    %3241 = vmatpush.xpose.msra.mxu0 0.0
    %3242 = vmatpush.xpose.msra.mxu0 0.0
    %3243 = vmatpush.xpose.msra.mxu0 0.0
    %3244 = vmatpush.xpose.msra.mxu0 0.0
    %3245 = vmatpush.xpose.msra.mxu0 0.0
    %3246 = vmatpush.xpose.msra.mxu0 0.0
    %3247 = vmatpush.xpose.msra.mxu0 0.0
    %3248 = vmatpush.xpose.msra.mxu0 0.0
    %3249 = vmatpush.xpose.msra.mxu0 0.0
    %3250 = vmatpush.xpose.msra.mxu0 0.0
    %3251 = vmatpush.xpose.msra.mxu0 0.0
    %3252 = vmatpush.xpose.msra.mxu0 0.0
    %3253 = vmatpush.xpose.msra.mxu0 0.0
    %3254 = vmatpush.xpose.msra.mxu0 0.0
    %3255 = vmatpush.xpose.msra.mxu0 %v3239
    %3256 = vmatpush.xpose.msra.mxu0 %v3236
    %3257 = vmatmul.f32.gmra.mxu0 %v3230
    %v3258 = vpop.f32.mrf.mxu0
    %v3259 = vadd.f32 0.0, %v3258
    %3260 = vmatmul.f32.gmra.mxu0 %v3233
    %v3261 = vpop.f32.mrf.mxu0
    %v3262 = vadd.f32 0.0, %v3261
    %3263 = vdwg.mxu0
    %v3265 = vsel %vm3088, %v1851, 0
    %v3268 = vsel %vm3088, %v1963, 0
    %v3271 = vsel %vm3088, %v2299, 0
    %v3274 = vsel %vm3088, %v2411, 0
    %3276 = vmatpush.xpose.msra.mxu0 0.0
    %3277 = vmatpush.xpose.msra.mxu0 0.0
    %3278 = vmatpush.xpose.msra.mxu0 0.0
    %3279 = vmatpush.xpose.msra.mxu0 0.0
    %3280 = vmatpush.xpose.msra.mxu0 0.0
    %3281 = vmatpush.xpose.msra.mxu0 0.0
    %3282 = vmatpush.xpose.msra.mxu0 0.0
    %3283 = vmatpush.xpose.msra.mxu0 0.0
    %3284 = vmatpush.xpose.msra.mxu0 0.0
    %3285 = vmatpush.xpose.msra.mxu0 0.0
    %3286 = vmatpush.xpose.msra.mxu0 0.0
    %3287 = vmatpush.xpose.msra.mxu0 0.0
    %3288 = vmatpush.xpose.msra.mxu0 0.0
    %3289 = vmatpush.xpose.msra.mxu0 0.0
    %3290 = vmatpush.xpose.msra.mxu0 %v3274
    %3291 = vmatpush.xpose.msra.mxu0 %v3271
    %3292 = vmatmul.f32.gmra.mxu0 %v3265
    %v3293 = vpop.f32.mrf.mxu0
    %v3294 = vadd.f32 0.0, %v3293
    %3295 = vmatmul.f32.gmra.mxu0 %v3268
    %v3296 = vpop.f32.mrf.mxu0
    %v3297 = vadd.f32 0.0, %v3296
    %3298 = vdwg.mxu0
    %v3300 = vsel %vm3088, %v1853, 0
    %v3303 = vsel %vm3088, %v1965, 0
    %v3306 = vsel %vm3088, %v2301, 0
    %v3309 = vsel %vm3088, %v2413, 0
    %3311 = vmatpush.xpose.msra.mxu0 0.0
    %3312 = vmatpush.xpose.msra.mxu0 0.0
    %3313 = vmatpush.xpose.msra.mxu0 0.0
    %3314 = vmatpush.xpose.msra.mxu0 0.0
    %3315 = vmatpush.xpose.msra.mxu0 0.0
    %3316 = vmatpush.xpose.msra.mxu0 0.0
    %3317 = vmatpush.xpose.msra.mxu0 0.0
    %3318 = vmatpush.xpose.msra.mxu0 0.0
    %3319 = vmatpush.xpose.msra.mxu0 0.0
    %3320 = vmatpush.xpose.msra.mxu0 0.0
    %3321 = vmatpush.xpose.msra.mxu0 0.0
    %3322 = vmatpush.xpose.msra.mxu0 0.0
    %3323 = vmatpush.xpose.msra.mxu0 0.0
    %3324 = vmatpush.xpose.msra.mxu0 0.0
    %3325 = vmatpush.xpose.msra.mxu0 %v3309
    %3326 = vmatpush.xpose.msra.mxu0 %v3306
    %3327 = vmatmul.f32.gmra.mxu0 %v3300
    %v3328 = vpop.f32.mrf.mxu0
    %v3329 = vadd.f32 0.0, %v3328
    %3330 = vmatmul.f32.gmra.mxu0 %v3303
    %v3331 = vpop.f32.mrf.mxu0
    %v3332 = vadd.f32 0.0, %v3331
    %3333 = vdwg.mxu0
    %v3335 = vsel %vm3088, %v1855, 0
    %v3338 = vsel %vm3088, %v1967, 0
    %v3341 = vsel %vm3088, %v2303, 0
    %v3344 = vsel %vm3088, %v2415, 0
    %3346 = vmatpush.xpose.msra.mxu0 0.0
    %3347 = vmatpush.xpose.msra.mxu0 0.0
    %3348 = vmatpush.xpose.msra.mxu0 0.0
    %3349 = vmatpush.xpose.msra.mxu0 0.0
    %3350 = vmatpush.xpose.msra.mxu0 0.0
    %3351 = vmatpush.xpose.msra.mxu0 0.0
    %3352 = vmatpush.xpose.msra.mxu0 0.0
    %3353 = vmatpush.xpose.msra.mxu0 0.0
    %3354 = vmatpush.xpose.msra.mxu0 0.0
    %3355 = vmatpush.xpose.msra.mxu0 0.0
    %3356 = vmatpush.xpose.msra.mxu0 0.0
    %3357 = vmatpush.xpose.msra.mxu0 0.0
    %3358 = vmatpush.xpose.msra.mxu0 0.0
    %3359 = vmatpush.xpose.msra.mxu0 0.0
    %3360 = vmatpush.xpose.msra.mxu0 %v3344
    %3361 = vmatpush.xpose.msra.mxu0 %v3341
    %3362 = vmatmul.f32.gmra.mxu0 %v3335
    %v3363 = vpop.f32.mrf.mxu0
    %v3364 = vadd.f32 0.0, %v3363
    %3365 = vmatmul.f32.gmra.mxu0 %v3338
    %v3366 = vpop.f32.mrf.mxu0
    %v3367 = vadd.f32 0.0, %v3366
    %3368 = vdwg.mxu0
    %v3370 = vsel %vm3088, %v2065, 0
    %v3373 = vsel %vm3088, %v2177, 0
    %v3376 = vsel %vm3088, %v2513, 0
    %v3379 = vsel %vm3088, %v2625, 0
    %3381 = vmatpush.xpose.msra.mxu0 0.0
    %3382 = vmatpush.xpose.msra.mxu0 0.0
    %3383 = vmatpush.xpose.msra.mxu0 0.0
    %3384 = vmatpush.xpose.msra.mxu0 0.0
    %3385 = vmatpush.xpose.msra.mxu0 0.0
    %3386 = vmatpush.xpose.msra.mxu0 0.0
    %3387 = vmatpush.xpose.msra.mxu0 0.0
    %3388 = vmatpush.xpose.msra.mxu0 0.0
    %3389 = vmatpush.xpose.msra.mxu0 0.0
    %3390 = vmatpush.xpose.msra.mxu0 0.0
    %3391 = vmatpush.xpose.msra.mxu0 0.0
    %3392 = vmatpush.xpose.msra.mxu0 0.0
    %3393 = vmatpush.xpose.msra.mxu0 0.0
    %3394 = vmatpush.xpose.msra.mxu0 0.0
    %3395 = vmatpush.xpose.msra.mxu0 %v3379
    %3396 = vmatpush.xpose.msra.mxu0 %v3376
    %3397 = vmatmul.f32.gmra.mxu0 %v3370
    %v3398 = vpop.f32.mrf.mxu0
    %v3399 = vadd.f32 0.0, %v3398
    %3400 = vmatmul.f32.gmra.mxu0 %v3373
    %v3401 = vpop.f32.mrf.mxu0
    %v3402 = vadd.f32 0.0, %v3401
    %3403 = vdwg.mxu0
    %v3405 = vsel %vm3088, %v2067, 0
    %v3408 = vsel %vm3088, %v2179, 0
    %v3411 = vsel %vm3088, %v2515, 0
    %v3414 = vsel %vm3088, %v2627, 0
    %3416 = vmatpush.xpose.msra.mxu0 0.0
    %3417 = vmatpush.xpose.msra.mxu0 0.0
    %3418 = vmatpush.xpose.msra.mxu0 0.0
    %3419 = vmatpush.xpose.msra.mxu0 0.0
    %3420 = vmatpush.xpose.msra.mxu0 0.0
    %3421 = vmatpush.xpose.msra.mxu0 0.0
    %3422 = vmatpush.xpose.msra.mxu0 0.0
    %3423 = vmatpush.xpose.msra.mxu0 0.0
    %3424 = vmatpush.xpose.msra.mxu0 0.0
    %3425 = vmatpush.xpose.msra.mxu0 0.0
    %3426 = vmatpush.xpose.msra.mxu0 0.0
    %3427 = vmatpush.xpose.msra.mxu0 0.0
    %3428 = vmatpush.xpose.msra.mxu0 0.0
    %3429 = vmatpush.xpose.msra.mxu0 0.0
    %3430 = vmatpush.xpose.msra.mxu0 %v3414
    %3431 = vmatpush.xpose.msra.mxu0 %v3411
    %3432 = vmatmul.f32.gmra.mxu0 %v3405
    %v3433 = vpop.f32.mrf.mxu0
    %v3434 = vadd.f32 0.0, %v3433
    %3435 = vmatmul.f32.gmra.mxu0 %v3408
    %v3436 = vpop.f32.mrf.mxu0
    %v3437 = vadd.f32 0.0, %v3436
    %3438 = vdwg.mxu0
    %v3440 = vsel %vm3088, %v2069, 0
    %v3443 = vsel %vm3088, %v2181, 0
    %v3446 = vsel %vm3088, %v2517, 0
    %v3449 = vsel %vm3088, %v2629, 0
    %3451 = vmatpush.xpose.msra.mxu0 0.0
    %3452 = vmatpush.xpose.msra.mxu0 0.0
    %3453 = vmatpush.xpose.msra.mxu0 0.0
    %3454 = vmatpush.xpose.msra.mxu0 0.0
    %3455 = vmatpush.xpose.msra.mxu0 0.0
    %3456 = vmatpush.xpose.msra.mxu0 0.0
    %3457 = vmatpush.xpose.msra.mxu0 0.0
    %3458 = vmatpush.xpose.msra.mxu0 0.0
    %3459 = vmatpush.xpose.msra.mxu0 0.0
    %3460 = vmatpush.xpose.msra.mxu0 0.0
    %3461 = vmatpush.xpose.msra.mxu0 0.0
    %3462 = vmatpush.xpose.msra.mxu0 0.0
    %3463 = vmatpush.xpose.msra.mxu0 0.0
    %3464 = vmatpush.xpose.msra.mxu0 0.0
    %3465 = vmatpush.xpose.msra.mxu0 %v3449
    %3466 = vmatpush.xpose.msra.mxu0 %v3446
    %3467 = vmatmul.f32.gmra.mxu0 %v3440
    %v3468 = vpop.f32.mrf.mxu0
    %v3469 = vadd.f32 0.0, %v3468
    %3470 = vmatmul.f32.gmra.mxu0 %v3443
    %v3471 = vpop.f32.mrf.mxu0
    %v3472 = vadd.f32 0.0, %v3471
    %3473 = vdwg.mxu0
    %v3475 = vsel %vm3088, %v2071, 0
    %v3478 = vsel %vm3088, %v2183, 0
    %v3481 = vsel %vm3088, %v2519, 0
    %v3484 = vsel %vm3088, %v2631, 0
    %3486 = vmatpush.xpose.msra.mxu0 0.0
    %3487 = vmatpush.xpose.msra.mxu0 0.0
    %3488 = vmatpush.xpose.msra.mxu0 0.0
    %3489 = vmatpush.xpose.msra.mxu0 0.0
    %3490 = vmatpush.xpose.msra.mxu0 0.0
    %3491 = vmatpush.xpose.msra.mxu0 0.0
    %3492 = vmatpush.xpose.msra.mxu0 0.0
    %3493 = vmatpush.xpose.msra.mxu0 0.0
    %3494 = vmatpush.xpose.msra.mxu0 0.0
    %3495 = vmatpush.xpose.msra.mxu0 0.0
    %3496 = vmatpush.xpose.msra.mxu0 0.0
    %3497 = vmatpush.xpose.msra.mxu0 0.0
    %3498 = vmatpush.xpose.msra.mxu0 0.0
    %3499 = vmatpush.xpose.msra.mxu0 0.0
    %3500 = vmatpush.xpose.msra.mxu0 %v3484
    %3501 = vmatpush.xpose.msra.mxu0 %v3481
    %3502 = vmatmul.f32.gmra.mxu0 %v3475
    %v3503 = vpop.f32.mrf.mxu0
    %v3504 = vadd.f32 0.0, %v3503
    %3505 = vmatmul.f32.gmra.mxu0 %v3478
    %v3506 = vpop.f32.mrf.mxu0
    %v3507 = vadd.f32 0.0, %v3506
    %3508 = vdwg.mxu0
    %v3510 = vsel %vm3088, %v2073, 0
    %v3513 = vsel %vm3088, %v2185, 0
    %v3516 = vsel %vm3088, %v2521, 0
    %v3519 = vsel %vm3088, %v2633, 0
    %3521 = vmatpush.xpose.msra.mxu0 0.0
    %3522 = vmatpush.xpose.msra.mxu0 0.0
    %3523 = vmatpush.xpose.msra.mxu0 0.0
    %3524 = vmatpush.xpose.msra.mxu0 0.0
    %3525 = vmatpush.xpose.msra.mxu0 0.0
    %3526 = vmatpush.xpose.msra.mxu0 0.0
    %3527 = vmatpush.xpose.msra.mxu0 0.0
    %3528 = vmatpush.xpose.msra.mxu0 0.0
    %3529 = vmatpush.xpose.msra.mxu0 0.0
    %3530 = vmatpush.xpose.msra.mxu0 0.0
    %3531 = vmatpush.xpose.msra.mxu0 0.0
    %3532 = vmatpush.xpose.msra.mxu0 0.0
    %3533 = vmatpush.xpose.msra.mxu0 0.0
    %3534 = vmatpush.xpose.msra.mxu0 0.0
    %3535 = vmatpush.xpose.msra.mxu0 %v3519
    %3536 = vmatpush.xpose.msra.mxu0 %v3516
    %3537 = vmatmul.f32.gmra.mxu0 %v3510
    %v3538 = vpop.f32.mrf.mxu0
    %v3539 = vadd.f32 0.0, %v3538
    %3540 = vmatmul.f32.gmra.mxu0 %v3513
    %v3541 = vpop.f32.mrf.mxu0
    %v3542 = vadd.f32 0.0, %v3541
    %3543 = vdwg.mxu0
    %v3545 = vsel %vm3088, %v2075, 0
    %v3548 = vsel %vm3088, %v2187, 0
    %v3551 = vsel %vm3088, %v2523, 0
    %v3554 = vsel %vm3088, %v2635, 0
    %3556 = vmatpush.xpose.msra.mxu0 0.0
    %3557 = vmatpush.xpose.msra.mxu0 0.0
    %3558 = vmatpush.xpose.msra.mxu0 0.0
    %3559 = vmatpush.xpose.msra.mxu0 0.0
    %3560 = vmatpush.xpose.msra.mxu0 0.0
    %3561 = vmatpush.xpose.msra.mxu0 0.0
    %3562 = vmatpush.xpose.msra.mxu0 0.0
    %3563 = vmatpush.xpose.msra.mxu0 0.0
    %3564 = vmatpush.xpose.msra.mxu0 0.0
    %3565 = vmatpush.xpose.msra.mxu0 0.0
    %3566 = vmatpush.xpose.msra.mxu0 0.0
    %3567 = vmatpush.xpose.msra.mxu0 0.0
    %3568 = vmatpush.xpose.msra.mxu0 0.0
    %3569 = vmatpush.xpose.msra.mxu0 0.0
    %3570 = vmatpush.xpose.msra.mxu0 %v3554
    %3571 = vmatpush.xpose.msra.mxu0 %v3551
    %3572 = vmatmul.f32.gmra.mxu0 %v3545
    %v3573 = vpop.f32.mrf.mxu0
    %v3574 = vadd.f32 0.0, %v3573
    %3575 = vmatmul.f32.gmra.mxu0 %v3548
    %v3576 = vpop.f32.mrf.mxu0
    %v3577 = vadd.f32 0.0, %v3576
    %3578 = vdwg.mxu0
    %v3580 = vsel %vm3088, %v2077, 0
    %v3583 = vsel %vm3088, %v2189, 0
    %v3586 = vsel %vm3088, %v2525, 0
    %v3589 = vsel %vm3088, %v2637, 0
    %3591 = vmatpush.xpose.msra.mxu0 0.0
    %3592 = vmatpush.xpose.msra.mxu0 0.0
    %3593 = vmatpush.xpose.msra.mxu0 0.0
    %3594 = vmatpush.xpose.msra.mxu0 0.0
    %3595 = vmatpush.xpose.msra.mxu0 0.0
    %3596 = vmatpush.xpose.msra.mxu0 0.0
    %3597 = vmatpush.xpose.msra.mxu0 0.0
    %3598 = vmatpush.xpose.msra.mxu0 0.0
    %3599 = vmatpush.xpose.msra.mxu0 0.0
    %3600 = vmatpush.xpose.msra.mxu0 0.0
    %3601 = vmatpush.xpose.msra.mxu0 0.0
    %3602 = vmatpush.xpose.msra.mxu0 0.0
    %3603 = vmatpush.xpose.msra.mxu0 0.0
    %3604 = vmatpush.xpose.msra.mxu0 0.0
    %3605 = vmatpush.xpose.msra.mxu0 %v3589
    %3606 = vmatpush.xpose.msra.mxu0 %v3586
    %3607 = vmatmul.f32.gmra.mxu0 %v3580
    %v3608 = vpop.f32.mrf.mxu0
    %v3609 = vadd.f32 0.0, %v3608
    %3610 = vmatmul.f32.gmra.mxu0 %v3583
    %v3611 = vpop.f32.mrf.mxu0
    %v3612 = vadd.f32 0.0, %v3611
    %3613 = vdwg.mxu0
    %v3615 = vsel %vm3088, %v2079, 0
    %v3618 = vsel %vm3088, %v2191, 0
    %v3621 = vsel %vm3088, %v2527, 0
    %v3624 = vsel %vm3088, %v2639, 0
    %3626 = vmatpush.xpose.msra.mxu0 0.0
    %3627 = vmatpush.xpose.msra.mxu0 0.0
    %3628 = vmatpush.xpose.msra.mxu0 0.0
    %3629 = vmatpush.xpose.msra.mxu0 0.0
    %3630 = vmatpush.xpose.msra.mxu0 0.0
    %3631 = vmatpush.xpose.msra.mxu0 0.0
    %3632 = vmatpush.xpose.msra.mxu0 0.0
    %3633 = vmatpush.xpose.msra.mxu0 0.0
    %3634 = vmatpush.xpose.msra.mxu0 0.0
    %3635 = vmatpush.xpose.msra.mxu0 0.0
    %3636 = vmatpush.xpose.msra.mxu0 0.0
    %3637 = vmatpush.xpose.msra.mxu0 0.0
    %3638 = vmatpush.xpose.msra.mxu0 0.0
    %3639 = vmatpush.xpose.msra.mxu0 0.0
    %3640 = vmatpush.xpose.msra.mxu0 %v3624
    %3641 = vmatpush.xpose.msra.mxu0 %v3621
    %3642 = vmatmul.f32.gmra.mxu0 %v3615
    %v3643 = vpop.f32.mrf.mxu0
    %v3644 = vadd.f32 0.0, %v3643
    %3645 = vmatmul.f32.gmra.mxu0 %v3618
    %v3646 = vpop.f32.mrf.mxu0
    %v3647 = vadd.f32 0.0, %v3646
    %3648 = vdwg.mxu0
    %vm3649 = vcmask 130048
    %v3650 = vsel %vm3649, %v3119, -inf
    %3651 = vmax.xlane.f32.xlu0 %v3650
    %v3652 = vpop.xlane.xlu0 %3651
    %v3653 = vsel %vm3649, %v3122, -inf
    %3654 = vmax.xlane.f32.xlu0 %v3653
    %v3655 = vpop.xlane.xlu0 %3654
    %v3656 = vsel %vm3649, %v3154, -inf
    %3657 = vmax.xlane.f32.xlu0 %v3656
    %v3658 = vpop.xlane.xlu0 %3657
    %v3659 = vsel %vm3649, %v3157, -inf
    %3660 = vmax.xlane.f32.xlu0 %v3659
    %v3661 = vpop.xlane.xlu0 %3660
    %v3662 = vsel %vm3649, %v3189, -inf
    %3663 = vmax.xlane.f32.xlu0 %v3662
    %v3664 = vpop.xlane.xlu0 %3663
    %v3665 = vsel %vm3649, %v3192, -inf
    %3666 = vmax.xlane.f32.xlu0 %v3665
    %v3667 = vpop.xlane.xlu0 %3666
    %v3668 = vsel %vm3649, %v3224, -inf
    %3669 = vmax.xlane.f32.xlu0 %v3668
    %v3670 = vpop.xlane.xlu0 %3669
    %v3671 = vsel %vm3649, %v3227, -inf
    %3672 = vmax.xlane.f32.xlu0 %v3671
    %v3673 = vpop.xlane.xlu0 %3672
    %v3674 = vsel %vm3649, %v3259, -inf
    %3675 = vmax.xlane.f32.xlu0 %v3674
    %v3676 = vpop.xlane.xlu0 %3675
    %v3677 = vsel %vm3649, %v3262, -inf
    %3678 = vmax.xlane.f32.xlu0 %v3677
    %v3679 = vpop.xlane.xlu0 %3678
    %v3680 = vsel %vm3649, %v3294, -inf
    %3681 = vmax.xlane.f32.xlu0 %v3680
    %v3682 = vpop.xlane.xlu0 %3681
    %v3683 = vsel %vm3649, %v3297, -inf
    %3684 = vmax.xlane.f32.xlu0 %v3683
    %v3685 = vpop.xlane.xlu0 %3684
    %v3686 = vsel %vm3649, %v3329, -inf
    %3687 = vmax.xlane.f32.xlu0 %v3686
    %v3688 = vpop.xlane.xlu0 %3687
    %v3689 = vsel %vm3649, %v3332, -inf
    %3690 = vmax.xlane.f32.xlu0 %v3689
    %v3691 = vpop.xlane.xlu0 %3690
    %v3692 = vsel %vm3649, %v3364, -inf
    %3693 = vmax.xlane.f32.xlu0 %v3692
    %v3694 = vpop.xlane.xlu0 %3693
    %v3695 = vsel %vm3649, %v3367, -inf
    %3696 = vmax.xlane.f32.xlu0 %v3695
    %v3697 = vpop.xlane.xlu0 %3696
    %v3698 = vsel %vm3649, %v3399, -inf
    %3699 = vmax.xlane.f32.xlu0 %v3698
    %v3700 = vpop.xlane.xlu0 %3699
    %v3701 = vsel %vm3649, %v3402, -inf
    %3702 = vmax.xlane.f32.xlu0 %v3701
    %v3703 = vpop.xlane.xlu0 %3702
    %v3704 = vsel %vm3649, %v3434, -inf
    %3705 = vmax.xlane.f32.xlu0 %v3704
    %v3706 = vpop.xlane.xlu0 %3705
    %v3707 = vsel %vm3649, %v3437, -inf
    %3708 = vmax.xlane.f32.xlu0 %v3707
    %v3709 = vpop.xlane.xlu0 %3708
    %v3710 = vsel %vm3649, %v3469, -inf
    %3711 = vmax.xlane.f32.xlu0 %v3710
    %v3712 = vpop.xlane.xlu0 %3711
    %v3713 = vsel %vm3649, %v3472, -inf
    %3714 = vmax.xlane.f32.xlu0 %v3713
    %v3715 = vpop.xlane.xlu0 %3714
    %v3716 = vsel %vm3649, %v3504, -inf
    %3717 = vmax.xlane.f32.xlu0 %v3716
    %v3718 = vpop.xlane.xlu0 %3717
    %v3719 = vsel %vm3649, %v3507, -inf
    %3720 = vmax.xlane.f32.xlu0 %v3719
    %v3721 = vpop.xlane.xlu0 %3720
    %v3722 = vsel %vm3649, %v3539, -inf
    %3723 = vmax.xlane.f32.xlu0 %v3722
    %v3724 = vpop.xlane.xlu0 %3723
    %v3725 = vsel %vm3649, %v3542, -inf
    %3726 = vmax.xlane.f32.xlu0 %v3725
    %v3727 = vpop.xlane.xlu0 %3726
    %v3728 = vsel %vm3649, %v3574, -inf
    %3729 = vmax.xlane.f32.xlu0 %v3728
    %v3730 = vpop.xlane.xlu0 %3729
    %v3731 = vsel %vm3649, %v3577, -inf
    %3732 = vmax.xlane.f32.xlu0 %v3731
    %v3733 = vpop.xlane.xlu0 %3732
    %v3734 = vsel %vm3649, %v3609, -inf
    %3735 = vmax.xlane.f32.xlu0 %v3734
    %v3736 = vpop.xlane.xlu0 %3735
    %v3737 = vsel %vm3649, %v3612, -inf
    %3738 = vmax.xlane.f32.xlu0 %v3737
    %v3739 = vpop.xlane.xlu0 %3738
    %v3740 = vsel %vm3649, %v3644, -inf
    %3741 = vmax.xlane.f32.xlu0 %v3740
    %v3742 = vpop.xlane.xlu0 %3741
    %v3743 = vsel %vm3649, %v3647, -inf
    %3744 = vmax.xlane.f32.xlu0 %v3743
    %v3745 = vpop.xlane.xlu0 %3744
    %v3746 = vsub.f32 %v3119, %v3652
    %v3747 = vsub.f32 %v3122, %v3655
    %v3748 = vsub.f32 %v3154, %v3658
    %v3749 = vsub.f32 %v3157, %v3661
    %v3750 = vsub.f32 %v3189, %v3664
    %v3751 = vsub.f32 %v3192, %v3667
    %v3752 = vsub.f32 %v3224, %v3670
    %v3753 = vsub.f32 %v3227, %v3673
    %v3754 = vsub.f32 %v3259, %v3676
    %v3755 = vsub.f32 %v3262, %v3679
    %v3756 = vsub.f32 %v3294, %v3682
    %v3757 = vsub.f32 %v3297, %v3685
    %v3758 = vsub.f32 %v3329, %v3688
    %v3759 = vsub.f32 %v3332, %v3691
    %v3760 = vsub.f32 %v3364, %v3694
    %v3761 = vsub.f32 %v3367, %v3697
    %v3762 = vsub.f32 %v3399, %v3700
    %v3763 = vsub.f32 %v3402, %v3703
    %v3764 = vsub.f32 %v3434, %v3706
    %v3765 = vsub.f32 %v3437, %v3709
    %v3766 = vsub.f32 %v3469, %v3712
    %v3767 = vsub.f32 %v3472, %v3715
    %v3768 = vsub.f32 %v3504, %v3718
    %v3769 = vsub.f32 %v3507, %v3721
    %v3770 = vsub.f32 %v3539, %v3724
    %v3771 = vsub.f32 %v3542, %v3727
    %v3772 = vsub.f32 %v3574, %v3730
    %v3773 = vsub.f32 %v3577, %v3733
    %v3774 = vsub.f32 %v3609, %v3736
    %v3775 = vsub.f32 %v3612, %v3739
    %v3776 = vsub.f32 %v3644, %v3742
    %v3777 = vsub.f32 %v3647, %v3745
    %v3778 = vmul.f32 %v3746, 1.442695
    %v3779 = vpow.pop %v3778
    %v3780 = vmul.f32 %v3747, 1.442695
    %v3781 = vpow.pop %v3780
    %v3782 = vmul.f32 %v3748, 1.442695
    %v3783 = vpow.pop %v3782
    %v3784 = vmul.f32 %v3749, 1.442695
    %v3785 = vpow.pop %v3784
    %v3786 = vmul.f32 %v3750, 1.442695
    %v3787 = vpow.pop %v3786
    %v3788 = vmul.f32 %v3751, 1.442695
    %v3789 = vpow.pop %v3788
    %v3790 = vmul.f32 %v3752, 1.442695
    %v3791 = vpow.pop %v3790
    %v3792 = vmul.f32 %v3753, 1.442695
    %v3793 = vpow.pop %v3792
    %v3794 = vmul.f32 %v3754, 1.442695
    %v3795 = vpow.pop %v3794
    %v3796 = vmul.f32 %v3755, 1.442695
    %v3797 = vpow.pop %v3796
    %v3798 = vmul.f32 %v3756, 1.442695
    %v3799 = vpow.pop %v3798
    %v3800 = vmul.f32 %v3757, 1.442695
    %v3801 = vpow.pop %v3800
    %v3802 = vmul.f32 %v3758, 1.442695
    %v3803 = vpow.pop %v3802
    %v3804 = vmul.f32 %v3759, 1.442695
    %v3805 = vpow.pop %v3804
    %v3806 = vmul.f32 %v3760, 1.442695
    %v3807 = vpow.pop %v3806
    %v3808 = vmul.f32 %v3761, 1.442695
    %v3809 = vpow.pop %v3808
    %v3810 = vmul.f32 %v3762, 1.442695
    %v3811 = vpow.pop %v3810
    %v3812 = vmul.f32 %v3763, 1.442695
    %v3813 = vpow.pop %v3812
    %v3814 = vmul.f32 %v3764, 1.442695
    %v3815 = vpow.pop %v3814
    %v3816 = vmul.f32 %v3765, 1.442695
    %v3817 = vpow.pop %v3816
    %v3818 = vmul.f32 %v3766, 1.442695
    %v3819 = vpow.pop %v3818
    %v3820 = vmul.f32 %v3767, 1.442695
    %v3821 = vpow.pop %v3820
    %v3822 = vmul.f32 %v3768, 1.442695
    %v3823 = vpow.pop %v3822
    %v3824 = vmul.f32 %v3769, 1.442695
    %v3825 = vpow.pop %v3824
    %v3826 = vmul.f32 %v3770, 1.442695
    %v3827 = vpow.pop %v3826
    %v3828 = vmul.f32 %v3771, 1.442695
    %v3829 = vpow.pop %v3828
    %v3830 = vmul.f32 %v3772, 1.442695
    %v3831 = vpow.pop %v3830
    %v3832 = vmul.f32 %v3773, 1.442695
    %v3833 = vpow.pop %v3832
    %v3834 = vmul.f32 %v3774, 1.442695
    %v3835 = vpow.pop %v3834
    %v3836 = vmul.f32 %v3775, 1.442695
    %v3837 = vpow.pop %v3836
    %v3838 = vmul.f32 %v3776, 1.442695
    %v3839 = vpow.pop %v3838
    %v3840 = vmul.f32 %v3777, 1.442695
    %v3841 = vpow.pop %v3840
    %v3842 = vsel %vm3649, %v3779, 0.0
    %3843 = vadd.xlane.f32.xlu0 %v3842
    %v3844 = vpop.xlane.xlu0 %3843
    %v3845 = vsel %vm3649, %v3781, 0.0
    %3846 = vadd.xlane.f32.xlu0 %v3845
    %v3847 = vpop.xlane.xlu0 %3846
    %v3848 = vsel %vm3649, %v3783, 0.0
    %3849 = vadd.xlane.f32.xlu0 %v3848
    %v3850 = vpop.xlane.xlu0 %3849
    %v3851 = vsel %vm3649, %v3785, 0.0
    %3852 = vadd.xlane.f32.xlu0 %v3851
    %v3853 = vpop.xlane.xlu0 %3852
    %v3854 = vsel %vm3649, %v3787, 0.0
    %3855 = vadd.xlane.f32.xlu0 %v3854
    %v3856 = vpop.xlane.xlu0 %3855
    %v3857 = vsel %vm3649, %v3789, 0.0
    %3858 = vadd.xlane.f32.xlu0 %v3857
    %v3859 = vpop.xlane.xlu0 %3858
    %v3860 = vsel %vm3649, %v3791, 0.0
    %3861 = vadd.xlane.f32.xlu0 %v3860
    %v3862 = vpop.xlane.xlu0 %3861
    %v3863 = vsel %vm3649, %v3793, 0.0
    %3864 = vadd.xlane.f32.xlu0 %v3863
    %v3865 = vpop.xlane.xlu0 %3864
    %v3866 = vsel %vm3649, %v3795, 0.0
    %3867 = vadd.xlane.f32.xlu0 %v3866
    %v3868 = vpop.xlane.xlu0 %3867
    %v3869 = vsel %vm3649, %v3797, 0.0
    %3870 = vadd.xlane.f32.xlu0 %v3869
    %v3871 = vpop.xlane.xlu0 %3870
    %v3872 = vsel %vm3649, %v3799, 0.0
    %3873 = vadd.xlane.f32.xlu0 %v3872
    %v3874 = vpop.xlane.xlu0 %3873
    %v3875 = vsel %vm3649, %v3801, 0.0
    %3876 = vadd.xlane.f32.xlu0 %v3875
    %v3877 = vpop.xlane.xlu0 %3876
    %v3878 = vsel %vm3649, %v3803, 0.0
    %3879 = vadd.xlane.f32.xlu0 %v3878
    %v3880 = vpop.xlane.xlu0 %3879
    %v3881 = vsel %vm3649, %v3805, 0.0
    %3882 = vadd.xlane.f32.xlu0 %v3881
    %v3883 = vpop.xlane.xlu0 %3882
    %v3884 = vsel %vm3649, %v3807, 0.0
    %3885 = vadd.xlane.f32.xlu0 %v3884
    %v3886 = vpop.xlane.xlu0 %3885
    %v3887 = vsel %vm3649, %v3809, 0.0
    %3888 = vadd.xlane.f32.xlu0 %v3887
    %v3889 = vpop.xlane.xlu0 %3888
    %v3890 = vsel %vm3649, %v3811, 0.0
    %3891 = vadd.xlane.f32.xlu0 %v3890
    %v3892 = vpop.xlane.xlu0 %3891
    %v3893 = vsel %vm3649, %v3813, 0.0
    %3894 = vadd.xlane.f32.xlu0 %v3893
    %v3895 = vpop.xlane.xlu0 %3894
    %v3896 = vsel %vm3649, %v3815, 0.0
    %3897 = vadd.xlane.f32.xlu0 %v3896
    %v3898 = vpop.xlane.xlu0 %3897
    %v3899 = vsel %vm3649, %v3817, 0.0
    %3900 = vadd.xlane.f32.xlu0 %v3899
    %v3901 = vpop.xlane.xlu0 %3900
    %v3902 = vsel %vm3649, %v3819, 0.0
    %3903 = vadd.xlane.f32.xlu0 %v3902
    %v3904 = vpop.xlane.xlu0 %3903
    %v3905 = vsel %vm3649, %v3821, 0.0
    %3906 = vadd.xlane.f32.xlu0 %v3905
    %v3907 = vpop.xlane.xlu0 %3906
    %v3908 = vsel %vm3649, %v3823, 0.0
    %3909 = vadd.xlane.f32.xlu0 %v3908
    %v3910 = vpop.xlane.xlu0 %3909
    %v3911 = vsel %vm3649, %v3825, 0.0
    %3912 = vadd.xlane.f32.xlu0 %v3911
    %v3913 = vpop.xlane.xlu0 %3912
    %v3914 = vsel %vm3649, %v3827, 0.0
    %3915 = vadd.xlane.f32.xlu0 %v3914
    %v3916 = vpop.xlane.xlu0 %3915
    %v3917 = vsel %vm3649, %v3829, 0.0
    %3918 = vadd.xlane.f32.xlu0 %v3917
    %v3919 = vpop.xlane.xlu0 %3918
    %v3920 = vsel %vm3649, %v3831, 0.0
    %3921 = vadd.xlane.f32.xlu0 %v3920
    %v3922 = vpop.xlane.xlu0 %3921
    %v3923 = vsel %vm3649, %v3833, 0.0
    %3924 = vadd.xlane.f32.xlu0 %v3923
    %v3925 = vpop.xlane.xlu0 %3924
    %v3926 = vsel %vm3649, %v3835, 0.0
    %3927 = vadd.xlane.f32.xlu0 %v3926
    %v3928 = vpop.xlane.xlu0 %3927
    %v3929 = vsel %vm3649, %v3837, 0.0
    %3930 = vadd.xlane.f32.xlu0 %v3929
    %v3931 = vpop.xlane.xlu0 %3930
    %v3932 = vsel %vm3649, %v3839, 0.0
    %3933 = vadd.xlane.f32.xlu0 %v3932
    %v3934 = vpop.xlane.xlu0 %3933
    %v3935 = vsel %vm3649, %v3841, 0.0
    %3936 = vadd.xlane.f32.xlu0 %v3935
    %v3937 = vpop.xlane.xlu0 %3936
    %v3938 = vrcp.pop %v3844
    %v3939 = vmul.f32 %v3844, %v3938
    %v3940 = vsub.f32 1.0, %v3939
    %v3941 = vmul.f32 %v3938, %v3940
    %v3942 = vadd.f32 %v3938, %v3941
    %vm3943 = vweird.f32 %v3844
    %vm3944 = vweird.f32 %v3938
    %vm3945 = vmor %vm3943, %vm3944
    %v3946 = vsel %vm3945, %v3938, %v3942
    %v3947 = vand.u32 2147483647, %v3844
    %vm3948 = vcmp.eq.f32.partialorder %v3947, 8.507059e+37
    %v3949 = vand.u32 %v3844, 2147483648
    %v3950 = vor.u32 1.1754944e-38, %v3949
    %v3951 = vsel %vm3948, %v3950, %v3946
    %v3952 = vmul.f32 %v3779, %v3951
    %v3953 = vrcp.pop %v3847
    %v3954 = vmul.f32 %v3847, %v3953
    %v3955 = vsub.f32 1.0, %v3954
    %v3956 = vmul.f32 %v3953, %v3955
    %v3957 = vadd.f32 %v3953, %v3956
    %vm3958 = vweird.f32 %v3847
    %vm3959 = vweird.f32 %v3953
    %vm3960 = vmor %vm3958, %vm3959
    %v3961 = vsel %vm3960, %v3953, %v3957
    %v3962 = vand.u32 2147483647, %v3847
    %vm3963 = vcmp.eq.f32.partialorder %v3962, 8.507059e+37
    %v3964 = vand.u32 %v3847, 2147483648
    %v3965 = vor.u32 1.1754944e-38, %v3964
    %v3966 = vsel %vm3963, %v3965, %v3961
    %v3967 = vmul.f32 %v3781, %v3966
    %v3968 = vrcp.pop %v3850
    %v3969 = vmul.f32 %v3850, %v3968
    %v3970 = vsub.f32 1.0, %v3969
    %v3971 = vmul.f32 %v3968, %v3970
    %v3972 = vadd.f32 %v3968, %v3971
    %vm3973 = vweird.f32 %v3850
    %vm3974 = vweird.f32 %v3968
    %vm3975 = vmor %vm3973, %vm3974
    %v3976 = vsel %vm3975, %v3968, %v3972
    %v3977 = vand.u32 2147483647, %v3850
    %vm3978 = vcmp.eq.f32.partialorder %v3977, 8.507059e+37
    %v3979 = vand.u32 %v3850, 2147483648
    %v3980 = vor.u32 1.1754944e-38, %v3979
    %v3981 = vsel %vm3978, %v3980, %v3976
    %v3982 = vmul.f32 %v3783, %v3981
    %v3983 = vrcp.pop %v3853
    %v3984 = vmul.f32 %v3853, %v3983
    %v3985 = vsub.f32 1.0, %v3984
    %v3986 = vmul.f32 %v3983, %v3985
    %v3987 = vadd.f32 %v3983, %v3986
    %vm3988 = vweird.f32 %v3853
    %vm3989 = vweird.f32 %v3983
    %vm3990 = vmor %vm3988, %vm3989
    %v3991 = vsel %vm3990, %v3983, %v3987
    %v3992 = vand.u32 2147483647, %v3853
    %vm3993 = vcmp.eq.f32.partialorder %v3992, 8.507059e+37
    %v3994 = vand.u32 %v3853, 2147483648
    %v3995 = vor.u32 1.1754944e-38, %v3994
    %v3996 = vsel %vm3993, %v3995, %v3991
    %v3997 = vmul.f32 %v3785, %v3996
    %v3998 = vrcp.pop %v3856
    %v3999 = vmul.f32 %v3856, %v3998
    %v4000 = vsub.f32 1.0, %v3999
    %v4001 = vmul.f32 %v3998, %v4000
    %v4002 = vadd.f32 %v3998, %v4001
    %vm4003 = vweird.f32 %v3856
    %vm4004 = vweird.f32 %v3998
    %vm4005 = vmor %vm4003, %vm4004
    %v4006 = vsel %vm4005, %v3998, %v4002
    %v4007 = vand.u32 2147483647, %v3856
    %vm4008 = vcmp.eq.f32.partialorder %v4007, 8.507059e+37
    %v4009 = vand.u32 %v3856, 2147483648
    %v4010 = vor.u32 1.1754944e-38, %v4009
    %v4011 = vsel %vm4008, %v4010, %v4006
    %v4012 = vmul.f32 %v3787, %v4011
    %v4013 = vrcp.pop %v3859
    %v4014 = vmul.f32 %v3859, %v4013
    %v4015 = vsub.f32 1.0, %v4014
    %v4016 = vmul.f32 %v4013, %v4015
    %v4017 = vadd.f32 %v4013, %v4016
    %vm4018 = vweird.f32 %v3859
    %vm4019 = vweird.f32 %v4013
    %vm4020 = vmor %vm4018, %vm4019
    %v4021 = vsel %vm4020, %v4013, %v4017
    %v4022 = vand.u32 2147483647, %v3859
    %vm4023 = vcmp.eq.f32.partialorder %v4022, 8.507059e+37
    %v4024 = vand.u32 %v3859, 2147483648
    %v4025 = vor.u32 1.1754944e-38, %v4024
    %v4026 = vsel %vm4023, %v4025, %v4021
    %v4027 = vmul.f32 %v3789, %v4026
    %v4028 = vrcp.pop %v3862
    %v4029 = vmul.f32 %v3862, %v4028
    %v4030 = vsub.f32 1.0, %v4029
    %v4031 = vmul.f32 %v4028, %v4030
    %v4032 = vadd.f32 %v4028, %v4031
    %vm4033 = vweird.f32 %v3862
    %vm4034 = vweird.f32 %v4028
    %vm4035 = vmor %vm4033, %vm4034
    %v4036 = vsel %vm4035, %v4028, %v4032
    %v4037 = vand.u32 2147483647, %v3862
    %vm4038 = vcmp.eq.f32.partialorder %v4037, 8.507059e+37
    %v4039 = vand.u32 %v3862, 2147483648
    %v4040 = vor.u32 1.1754944e-38, %v4039
    %v4041 = vsel %vm4038, %v4040, %v4036
    %v4042 = vmul.f32 %v3791, %v4041
    %v4043 = vrcp.pop %v3865
    %v4044 = vmul.f32 %v3865, %v4043
    %v4045 = vsub.f32 1.0, %v4044
    %v4046 = vmul.f32 %v4043, %v4045
    %v4047 = vadd.f32 %v4043, %v4046
    %vm4048 = vweird.f32 %v3865
    %vm4049 = vweird.f32 %v4043
    %vm4050 = vmor %vm4048, %vm4049
    %v4051 = vsel %vm4050, %v4043, %v4047
    %v4052 = vand.u32 2147483647, %v3865
    %vm4053 = vcmp.eq.f32.partialorder %v4052, 8.507059e+37
    %v4054 = vand.u32 %v3865, 2147483648
    %v4055 = vor.u32 1.1754944e-38, %v4054
    %v4056 = vsel %vm4053, %v4055, %v4051
    %v4057 = vmul.f32 %v3793, %v4056
    %v4058 = vrcp.pop %v3868
    %v4059 = vmul.f32 %v3868, %v4058
    %v4060 = vsub.f32 1.0, %v4059
    %v4061 = vmul.f32 %v4058, %v4060
    %v4062 = vadd.f32 %v4058, %v4061
    %vm4063 = vweird.f32 %v3868
    %vm4064 = vweird.f32 %v4058
    %vm4065 = vmor %vm4063, %vm4064
    %v4066 = vsel %vm4065, %v4058, %v4062
    %v4067 = vand.u32 2147483647, %v3868
    %vm4068 = vcmp.eq.f32.partialorder %v4067, 8.507059e+37
    %v4069 = vand.u32 %v3868, 2147483648
    %v4070 = vor.u32 1.1754944e-38, %v4069
    %v4071 = vsel %vm4068, %v4070, %v4066
    %v4072 = vmul.f32 %v3795, %v4071
    %v4073 = vrcp.pop %v3871
    %v4074 = vmul.f32 %v3871, %v4073
    %v4075 = vsub.f32 1.0, %v4074
    %v4076 = vmul.f32 %v4073, %v4075
    %v4077 = vadd.f32 %v4073, %v4076
    %vm4078 = vweird.f32 %v3871
    %vm4079 = vweird.f32 %v4073
    %vm4080 = vmor %vm4078, %vm4079
    %v4081 = vsel %vm4080, %v4073, %v4077
    %v4082 = vand.u32 2147483647, %v3871
    %vm4083 = vcmp.eq.f32.partialorder %v4082, 8.507059e+37
    %v4084 = vand.u32 %v3871, 2147483648
    %v4085 = vor.u32 1.1754944e-38, %v4084
    %v4086 = vsel %vm4083, %v4085, %v4081
    %v4087 = vmul.f32 %v3797, %v4086
    %v4088 = vrcp.pop %v3874
    %v4089 = vmul.f32 %v3874, %v4088
    %v4090 = vsub.f32 1.0, %v4089
    %v4091 = vmul.f32 %v4088, %v4090
    %v4092 = vadd.f32 %v4088, %v4091
    %vm4093 = vweird.f32 %v3874
    %vm4094 = vweird.f32 %v4088
    %vm4095 = vmor %vm4093, %vm4094
    %v4096 = vsel %vm4095, %v4088, %v4092
    %v4097 = vand.u32 2147483647, %v3874
    %vm4098 = vcmp.eq.f32.partialorder %v4097, 8.507059e+37
    %v4099 = vand.u32 %v3874, 2147483648
    %v4100 = vor.u32 1.1754944e-38, %v4099
    %v4101 = vsel %vm4098, %v4100, %v4096
    %v4102 = vmul.f32 %v3799, %v4101
    %v4103 = vrcp.pop %v3877
    %v4104 = vmul.f32 %v3877, %v4103
    %v4105 = vsub.f32 1.0, %v4104
    %v4106 = vmul.f32 %v4103, %v4105
    %v4107 = vadd.f32 %v4103, %v4106
    %vm4108 = vweird.f32 %v3877
    %vm4109 = vweird.f32 %v4103
    %vm4110 = vmor %vm4108, %vm4109
    %v4111 = vsel %vm4110, %v4103, %v4107
    %v4112 = vand.u32 2147483647, %v3877
    %vm4113 = vcmp.eq.f32.partialorder %v4112, 8.507059e+37
    %v4114 = vand.u32 %v3877, 2147483648
    %v4115 = vor.u32 1.1754944e-38, %v4114
    %v4116 = vsel %vm4113, %v4115, %v4111
    %v4117 = vmul.f32 %v3801, %v4116
    %v4118 = vrcp.pop %v3880
    %v4119 = vmul.f32 %v3880, %v4118
    %v4120 = vsub.f32 1.0, %v4119
    %v4121 = vmul.f32 %v4118, %v4120
    %v4122 = vadd.f32 %v4118, %v4121
    %vm4123 = vweird.f32 %v3880
    %vm4124 = vweird.f32 %v4118
    %vm4125 = vmor %vm4123, %vm4124
    %v4126 = vsel %vm4125, %v4118, %v4122
    %v4127 = vand.u32 2147483647, %v3880
    %vm4128 = vcmp.eq.f32.partialorder %v4127, 8.507059e+37
    %v4129 = vand.u32 %v3880, 2147483648
    %v4130 = vor.u32 1.1754944e-38, %v4129
    %v4131 = vsel %vm4128, %v4130, %v4126
    %v4132 = vmul.f32 %v3803, %v4131
    %v4133 = vrcp.pop %v3883
    %v4134 = vmul.f32 %v3883, %v4133
    %v4135 = vsub.f32 1.0, %v4134
    %v4136 = vmul.f32 %v4133, %v4135
    %v4137 = vadd.f32 %v4133, %v4136
    %vm4138 = vweird.f32 %v3883
    %vm4139 = vweird.f32 %v4133
    %vm4140 = vmor %vm4138, %vm4139
    %v4141 = vsel %vm4140, %v4133, %v4137
    %v4142 = vand.u32 2147483647, %v3883
    %vm4143 = vcmp.eq.f32.partialorder %v4142, 8.507059e+37
    %v4144 = vand.u32 %v3883, 2147483648
    %v4145 = vor.u32 1.1754944e-38, %v4144
    %v4146 = vsel %vm4143, %v4145, %v4141
    %v4147 = vmul.f32 %v3805, %v4146
    %v4148 = vrcp.pop %v3886
    %v4149 = vmul.f32 %v3886, %v4148
    %v4150 = vsub.f32 1.0, %v4149
    %v4151 = vmul.f32 %v4148, %v4150
    %v4152 = vadd.f32 %v4148, %v4151
    %vm4153 = vweird.f32 %v3886
    %vm4154 = vweird.f32 %v4148
    %vm4155 = vmor %vm4153, %vm4154
    %v4156 = vsel %vm4155, %v4148, %v4152
    %v4157 = vand.u32 2147483647, %v3886
    %vm4158 = vcmp.eq.f32.partialorder %v4157, 8.507059e+37
    %v4159 = vand.u32 %v3886, 2147483648
    %v4160 = vor.u32 1.1754944e-38, %v4159
    %v4161 = vsel %vm4158, %v4160, %v4156
    %v4162 = vmul.f32 %v3807, %v4161
    %v4163 = vrcp.pop %v3889
    %v4164 = vmul.f32 %v3889, %v4163
    %v4165 = vsub.f32 1.0, %v4164
    %v4166 = vmul.f32 %v4163, %v4165
    %v4167 = vadd.f32 %v4163, %v4166
    %vm4168 = vweird.f32 %v3889
    %vm4169 = vweird.f32 %v4163
    %vm4170 = vmor %vm4168, %vm4169
    %v4171 = vsel %vm4170, %v4163, %v4167
    %v4172 = vand.u32 2147483647, %v3889
    %vm4173 = vcmp.eq.f32.partialorder %v4172, 8.507059e+37
    %v4174 = vand.u32 %v3889, 2147483648
    %v4175 = vor.u32 1.1754944e-38, %v4174
    %v4176 = vsel %vm4173, %v4175, %v4171
    %v4177 = vmul.f32 %v3809, %v4176
    %v4178 = vrcp.pop %v3892
    %v4179 = vmul.f32 %v3892, %v4178
    %v4180 = vsub.f32 1.0, %v4179
    %v4181 = vmul.f32 %v4178, %v4180
    %v4182 = vadd.f32 %v4178, %v4181
    %vm4183 = vweird.f32 %v3892
    %vm4184 = vweird.f32 %v4178
    %vm4185 = vmor %vm4183, %vm4184
    %v4186 = vsel %vm4185, %v4178, %v4182
    %v4187 = vand.u32 2147483647, %v3892
    %vm4188 = vcmp.eq.f32.partialorder %v4187, 8.507059e+37
    %v4189 = vand.u32 %v3892, 2147483648
    %v4190 = vor.u32 1.1754944e-38, %v4189
    %v4191 = vsel %vm4188, %v4190, %v4186
    %v4192 = vmul.f32 %v3811, %v4191
    %v4193 = vrcp.pop %v3895
    %v4194 = vmul.f32 %v3895, %v4193
    %v4195 = vsub.f32 1.0, %v4194
    %v4196 = vmul.f32 %v4193, %v4195
    %v4197 = vadd.f32 %v4193, %v4196
    %vm4198 = vweird.f32 %v3895
    %vm4199 = vweird.f32 %v4193
    %vm4200 = vmor %vm4198, %vm4199
    %v4201 = vsel %vm4200, %v4193, %v4197
    %v4202 = vand.u32 2147483647, %v3895
    %vm4203 = vcmp.eq.f32.partialorder %v4202, 8.507059e+37
    %v4204 = vand.u32 %v3895, 2147483648
    %v4205 = vor.u32 1.1754944e-38, %v4204
    %v4206 = vsel %vm4203, %v4205, %v4201
    %v4207 = vmul.f32 %v3813, %v4206
    %v4208 = vrcp.pop %v3898
    %v4209 = vmul.f32 %v3898, %v4208
    %v4210 = vsub.f32 1.0, %v4209
    %v4211 = vmul.f32 %v4208, %v4210
    %v4212 = vadd.f32 %v4208, %v4211
    %vm4213 = vweird.f32 %v3898
    %vm4214 = vweird.f32 %v4208
    %vm4215 = vmor %vm4213, %vm4214
    %v4216 = vsel %vm4215, %v4208, %v4212
    %v4217 = vand.u32 2147483647, %v3898
    %vm4218 = vcmp.eq.f32.partialorder %v4217, 8.507059e+37
    %v4219 = vand.u32 %v3898, 2147483648
    %v4220 = vor.u32 1.1754944e-38, %v4219
    %v4221 = vsel %vm4218, %v4220, %v4216
    %v4222 = vmul.f32 %v3815, %v4221
    %v4223 = vrcp.pop %v3901
    %v4224 = vmul.f32 %v3901, %v4223
    %v4225 = vsub.f32 1.0, %v4224
    %v4226 = vmul.f32 %v4223, %v4225
    %v4227 = vadd.f32 %v4223, %v4226
    %vm4228 = vweird.f32 %v3901
    %vm4229 = vweird.f32 %v4223
    %vm4230 = vmor %vm4228, %vm4229
    %v4231 = vsel %vm4230, %v4223, %v4227
    %v4232 = vand.u32 2147483647, %v3901
    %vm4233 = vcmp.eq.f32.partialorder %v4232, 8.507059e+37
    %v4234 = vand.u32 %v3901, 2147483648
    %v4235 = vor.u32 1.1754944e-38, %v4234
    %v4236 = vsel %vm4233, %v4235, %v4231
    %v4237 = vmul.f32 %v3817, %v4236
    %v4238 = vrcp.pop %v3904
    %v4239 = vmul.f32 %v3904, %v4238
    %v4240 = vsub.f32 1.0, %v4239
    %v4241 = vmul.f32 %v4238, %v4240
    %v4242 = vadd.f32 %v4238, %v4241
    %vm4243 = vweird.f32 %v3904
    %vm4244 = vweird.f32 %v4238
    %vm4245 = vmor %vm4243, %vm4244
    %v4246 = vsel %vm4245, %v4238, %v4242
    %v4247 = vand.u32 2147483647, %v3904
    %vm4248 = vcmp.eq.f32.partialorder %v4247, 8.507059e+37
    %v4249 = vand.u32 %v3904, 2147483648
    %v4250 = vor.u32 1.1754944e-38, %v4249
    %v4251 = vsel %vm4248, %v4250, %v4246
    %v4252 = vmul.f32 %v3819, %v4251
    %v4253 = vrcp.pop %v3907
    %v4254 = vmul.f32 %v3907, %v4253
    %v4255 = vsub.f32 1.0, %v4254
    %v4256 = vmul.f32 %v4253, %v4255
    %v4257 = vadd.f32 %v4253, %v4256
    %vm4258 = vweird.f32 %v3907
    %vm4259 = vweird.f32 %v4253
    %vm4260 = vmor %vm4258, %vm4259
    %v4261 = vsel %vm4260, %v4253, %v4257
    %v4262 = vand.u32 2147483647, %v3907
    %vm4263 = vcmp.eq.f32.partialorder %v4262, 8.507059e+37
    %v4264 = vand.u32 %v3907, 2147483648
    %v4265 = vor.u32 1.1754944e-38, %v4264
    %v4266 = vsel %vm4263, %v4265, %v4261
    %v4267 = vmul.f32 %v3821, %v4266
    %v4268 = vrcp.pop %v3910
    %v4269 = vmul.f32 %v3910, %v4268
    %v4270 = vsub.f32 1.0, %v4269
    %v4271 = vmul.f32 %v4268, %v4270
    %v4272 = vadd.f32 %v4268, %v4271
    %vm4273 = vweird.f32 %v3910
    %vm4274 = vweird.f32 %v4268
    %vm4275 = vmor %vm4273, %vm4274
    %v4276 = vsel %vm4275, %v4268, %v4272
    %v4277 = vand.u32 2147483647, %v3910
    %vm4278 = vcmp.eq.f32.partialorder %v4277, 8.507059e+37
    %v4279 = vand.u32 %v3910, 2147483648
    %v4280 = vor.u32 1.1754944e-38, %v4279
    %v4281 = vsel %vm4278, %v4280, %v4276
    %v4282 = vmul.f32 %v3823, %v4281
    %v4283 = vrcp.pop %v3913
    %v4284 = vmul.f32 %v3913, %v4283
    %v4285 = vsub.f32 1.0, %v4284
    %v4286 = vmul.f32 %v4283, %v4285
    %v4287 = vadd.f32 %v4283, %v4286
    %vm4288 = vweird.f32 %v3913
    %vm4289 = vweird.f32 %v4283
    %vm4290 = vmor %vm4288, %vm4289
    %v4291 = vsel %vm4290, %v4283, %v4287
    %v4292 = vand.u32 2147483647, %v3913
    %vm4293 = vcmp.eq.f32.partialorder %v4292, 8.507059e+37
    %v4294 = vand.u32 %v3913, 2147483648
    %v4295 = vor.u32 1.1754944e-38, %v4294
    %v4296 = vsel %vm4293, %v4295, %v4291
    %v4297 = vmul.f32 %v3825, %v4296
    %v4298 = vrcp.pop %v3916
    %v4299 = vmul.f32 %v3916, %v4298
    %v4300 = vsub.f32 1.0, %v4299
    %v4301 = vmul.f32 %v4298, %v4300
    %v4302 = vadd.f32 %v4298, %v4301
    %vm4303 = vweird.f32 %v3916
    %vm4304 = vweird.f32 %v4298
    %vm4305 = vmor %vm4303, %vm4304
    %v4306 = vsel %vm4305, %v4298, %v4302
    %v4307 = vand.u32 2147483647, %v3916
    %vm4308 = vcmp.eq.f32.partialorder %v4307, 8.507059e+37
    %v4309 = vand.u32 %v3916, 2147483648
    %v4310 = vor.u32 1.1754944e-38, %v4309
    %v4311 = vsel %vm4308, %v4310, %v4306
    %v4312 = vmul.f32 %v3827, %v4311
    %v4313 = vrcp.pop %v3919
    %v4314 = vmul.f32 %v3919, %v4313
    %v4315 = vsub.f32 1.0, %v4314
    %v4316 = vmul.f32 %v4313, %v4315
    %v4317 = vadd.f32 %v4313, %v4316
    %vm4318 = vweird.f32 %v3919
    %vm4319 = vweird.f32 %v4313
    %vm4320 = vmor %vm4318, %vm4319
    %v4321 = vsel %vm4320, %v4313, %v4317
    %v4322 = vand.u32 2147483647, %v3919
    %vm4323 = vcmp.eq.f32.partialorder %v4322, 8.507059e+37
    %v4324 = vand.u32 %v3919, 2147483648
    %v4325 = vor.u32 1.1754944e-38, %v4324
    %v4326 = vsel %vm4323, %v4325, %v4321
    %v4327 = vmul.f32 %v3829, %v4326
    %v4328 = vrcp.pop %v3922
    %v4329 = vmul.f32 %v3922, %v4328
    %v4330 = vsub.f32 1.0, %v4329
    %v4331 = vmul.f32 %v4328, %v4330
    %v4332 = vadd.f32 %v4328, %v4331
    %vm4333 = vweird.f32 %v3922
    %vm4334 = vweird.f32 %v4328
    %vm4335 = vmor %vm4333, %vm4334
    %v4336 = vsel %vm4335, %v4328, %v4332
    %v4337 = vand.u32 2147483647, %v3922
    %vm4338 = vcmp.eq.f32.partialorder %v4337, 8.507059e+37
    %v4339 = vand.u32 %v3922, 2147483648
    %v4340 = vor.u32 1.1754944e-38, %v4339
    %v4341 = vsel %vm4338, %v4340, %v4336
    %v4342 = vmul.f32 %v3831, %v4341
    %v4343 = vrcp.pop %v3925
    %v4344 = vmul.f32 %v3925, %v4343
    %v4345 = vsub.f32 1.0, %v4344
    %v4346 = vmul.f32 %v4343, %v4345
    %v4347 = vadd.f32 %v4343, %v4346
    %vm4348 = vweird.f32 %v3925
    %vm4349 = vweird.f32 %v4343
    %vm4350 = vmor %vm4348, %vm4349
    %v4351 = vsel %vm4350, %v4343, %v4347
    %v4352 = vand.u32 2147483647, %v3925
    %vm4353 = vcmp.eq.f32.partialorder %v4352, 8.507059e+37
    %v4354 = vand.u32 %v3925, 2147483648
    %v4355 = vor.u32 1.1754944e-38, %v4354
    %v4356 = vsel %vm4353, %v4355, %v4351
    %v4357 = vmul.f32 %v3833, %v4356
    %v4358 = vrcp.pop %v3928
    %v4359 = vmul.f32 %v3928, %v4358
    %v4360 = vsub.f32 1.0, %v4359
    %v4361 = vmul.f32 %v4358, %v4360
    %v4362 = vadd.f32 %v4358, %v4361
    %vm4363 = vweird.f32 %v3928
    %vm4364 = vweird.f32 %v4358
    %vm4365 = vmor %vm4363, %vm4364
    %v4366 = vsel %vm4365, %v4358, %v4362
    %v4367 = vand.u32 2147483647, %v3928
    %vm4368 = vcmp.eq.f32.partialorder %v4367, 8.507059e+37
    %v4369 = vand.u32 %v3928, 2147483648
    %v4370 = vor.u32 1.1754944e-38, %v4369
    %v4371 = vsel %vm4368, %v4370, %v4366
    %v4372 = vmul.f32 %v3835, %v4371
    %v4373 = vrcp.pop %v3931
    %v4374 = vmul.f32 %v3931, %v4373
    %v4375 = vsub.f32 1.0, %v4374
    %v4376 = vmul.f32 %v4373, %v4375
    %v4377 = vadd.f32 %v4373, %v4376
    %vm4378 = vweird.f32 %v3931
    %vm4379 = vweird.f32 %v4373
    %vm4380 = vmor %vm4378, %vm4379
    %v4381 = vsel %vm4380, %v4373, %v4377
    %v4382 = vand.u32 2147483647, %v3931
    %vm4383 = vcmp.eq.f32.partialorder %v4382, 8.507059e+37
    %v4384 = vand.u32 %v3931, 2147483648
    %v4385 = vor.u32 1.1754944e-38, %v4384
    %v4386 = vsel %vm4383, %v4385, %v4381
    %v4387 = vmul.f32 %v3837, %v4386
    %v4388 = vrcp.pop %v3934
    %v4389 = vmul.f32 %v3934, %v4388
    %v4390 = vsub.f32 1.0, %v4389
    %v4391 = vmul.f32 %v4388, %v4390
    %v4392 = vadd.f32 %v4388, %v4391
    %vm4393 = vweird.f32 %v3934
    %vm4394 = vweird.f32 %v4388
    %vm4395 = vmor %vm4393, %vm4394
    %v4396 = vsel %vm4395, %v4388, %v4392
    %v4397 = vand.u32 2147483647, %v3934
    %vm4398 = vcmp.eq.f32.partialorder %v4397, 8.507059e+37
    %v4399 = vand.u32 %v3934, 2147483648
    %v4400 = vor.u32 1.1754944e-38, %v4399
    %v4401 = vsel %vm4398, %v4400, %v4396
    %v4402 = vmul.f32 %v3839, %v4401
    %v4403 = vrcp.pop %v3937
    %v4404 = vmul.f32 %v3937, %v4403
    %v4405 = vsub.f32 1.0, %v4404
    %v4406 = vmul.f32 %v4403, %v4405
    %v4407 = vadd.f32 %v4403, %v4406
    %vm4408 = vweird.f32 %v3937
    %vm4409 = vweird.f32 %v4403
    %vm4410 = vmor %vm4408, %vm4409
    %v4411 = vsel %vm4410, %v4403, %v4407
    %v4412 = vand.u32 2147483647, %v3937
    %vm4413 = vcmp.eq.f32.partialorder %v4412, 8.507059e+37
    %v4414 = vand.u32 %v3937, 2147483648
    %v4415 = vor.u32 1.1754944e-38, %v4414
    %v4416 = vsel %vm4413, %v4415, %v4411
    %v4417 = vmul.f32 %v3841, %v4416
    %v4419 = vsel %vm3649, %v3952, 0
    %v4422 = vsel %vm3649, %v3967, 0
    %4424 = vmatpush.msra.mxu0 0.0
    %4425 = vmatpush.msra.mxu0 0.0
    %4426 = vmatpush.msra.mxu0 0.0
    %4427 = vmatpush.msra.mxu0 0.0
    %4428 = vmatpush.msra.mxu0 0.0
    %4429 = vmatpush.msra.mxu0 0.0
    %4430 = vmatpush.msra.mxu0 0.0
    %4431 = vmatpush.msra.mxu0 0.0
    %4432 = vmatpush.msra.mxu0 0.0
    %4433 = vmatpush.msra.mxu0 0.0
    %4434 = vmatpush.msra.mxu0 0.0
    %4435 = vmatpush.msra.mxu0 0.0
    %4436 = vmatpush.msra.mxu0 0.0
    %4437 = vmatpush.msra.mxu0 0.0
    %4438 = vmatpush.msra.mxu0 %v2849
    %4439 = vmatpush.msra.mxu0 %v2737
    %4440 = vmatmul.f32.gmra.mxu0 %v4419
    %v4441 = vpop.f32.mrf.mxu0
    %v4442 = vadd.f32 0.0, %v4441
    %4443 = vmatmul.f32.gmra.mxu0 %v4422
    %v4444 = vpop.f32.mrf.mxu0
    %v4445 = vadd.f32 0.0, %v4444
    %4446 = vdwg.mxu0
    %v4448 = vsel %vm3649, %v3982, 0
    %v4451 = vsel %vm3649, %v3997, 0
    %4453 = vmatpush.msra.mxu0 0.0
    %4454 = vmatpush.msra.mxu0 0.0
    %4455 = vmatpush.msra.mxu0 0.0
    %4456 = vmatpush.msra.mxu0 0.0
    %4457 = vmatpush.msra.mxu0 0.0
    %4458 = vmatpush.msra.mxu0 0.0
    %4459 = vmatpush.msra.mxu0 0.0
    %4460 = vmatpush.msra.mxu0 0.0
    %4461 = vmatpush.msra.mxu0 0.0
    %4462 = vmatpush.msra.mxu0 0.0
    %4463 = vmatpush.msra.mxu0 0.0
    %4464 = vmatpush.msra.mxu0 0.0
    %4465 = vmatpush.msra.mxu0 0.0
    %4466 = vmatpush.msra.mxu0 0.0
    %4467 = vmatpush.msra.mxu0 %v2851
    %4468 = vmatpush.msra.mxu0 %v2739
    %4469 = vmatmul.f32.gmra.mxu0 %v4448
    %v4470 = vpop.f32.mrf.mxu0
    %v4471 = vadd.f32 0.0, %v4470
    %4472 = vmatmul.f32.gmra.mxu0 %v4451
    %v4473 = vpop.f32.mrf.mxu0
    %v4474 = vadd.f32 0.0, %v4473
    %4475 = vdwg.mxu0
    %v4477 = vsel %vm3649, %v4012, 0
    %v4480 = vsel %vm3649, %v4027, 0
    %4482 = vmatpush.msra.mxu0 0.0
    %4483 = vmatpush.msra.mxu0 0.0
    %4484 = vmatpush.msra.mxu0 0.0
    %4485 = vmatpush.msra.mxu0 0.0
    %4486 = vmatpush.msra.mxu0 0.0
    %4487 = vmatpush.msra.mxu0 0.0
    %4488 = vmatpush.msra.mxu0 0.0
    %4489 = vmatpush.msra.mxu0 0.0
    %4490 = vmatpush.msra.mxu0 0.0
    %4491 = vmatpush.msra.mxu0 0.0
    %4492 = vmatpush.msra.mxu0 0.0
    %4493 = vmatpush.msra.mxu0 0.0
    %4494 = vmatpush.msra.mxu0 0.0
    %4495 = vmatpush.msra.mxu0 0.0
    %4496 = vmatpush.msra.mxu0 %v2853
    %4497 = vmatpush.msra.mxu0 %v2741
    %4498 = vmatmul.f32.gmra.mxu0 %v4477
    %v4499 = vpop.f32.mrf.mxu0
    %v4500 = vadd.f32 0.0, %v4499
    %4501 = vmatmul.f32.gmra.mxu0 %v4480
    %v4502 = vpop.f32.mrf.mxu0
    %v4503 = vadd.f32 0.0, %v4502
    %4504 = vdwg.mxu0
    %v4506 = vsel %vm3649, %v4042, 0
    %v4509 = vsel %vm3649, %v4057, 0
    %4511 = vmatpush.msra.mxu0 0.0
    %4512 = vmatpush.msra.mxu0 0.0
    %4513 = vmatpush.msra.mxu0 0.0
    %4514 = vmatpush.msra.mxu0 0.0
    %4515 = vmatpush.msra.mxu0 0.0
    %4516 = vmatpush.msra.mxu0 0.0
    %4517 = vmatpush.msra.mxu0 0.0
    %4518 = vmatpush.msra.mxu0 0.0
    %4519 = vmatpush.msra.mxu0 0.0
    %4520 = vmatpush.msra.mxu0 0.0
    %4521 = vmatpush.msra.mxu0 0.0
    %4522 = vmatpush.msra.mxu0 0.0
    %4523 = vmatpush.msra.mxu0 0.0
    %4524 = vmatpush.msra.mxu0 0.0
    %4525 = vmatpush.msra.mxu0 %v2855
    %4526 = vmatpush.msra.mxu0 %v2743
    %4527 = vmatmul.f32.gmra.mxu0 %v4506
    %v4528 = vpop.f32.mrf.mxu0
    %v4529 = vadd.f32 0.0, %v4528
    %4530 = vmatmul.f32.gmra.mxu0 %v4509
    %v4531 = vpop.f32.mrf.mxu0
    %v4532 = vadd.f32 0.0, %v4531
    %4533 = vdwg.mxu0
    %v4535 = vsel %vm3649, %v4072, 0
    %v4538 = vsel %vm3649, %v4087, 0
    %4540 = vmatpush.msra.mxu0 0.0
    %4541 = vmatpush.msra.mxu0 0.0
    %4542 = vmatpush.msra.mxu0 0.0
    %4543 = vmatpush.msra.mxu0 0.0
    %4544 = vmatpush.msra.mxu0 0.0
    %4545 = vmatpush.msra.mxu0 0.0
    %4546 = vmatpush.msra.mxu0 0.0
    %4547 = vmatpush.msra.mxu0 0.0
    %4548 = vmatpush.msra.mxu0 0.0
    %4549 = vmatpush.msra.mxu0 0.0
    %4550 = vmatpush.msra.mxu0 0.0
    %4551 = vmatpush.msra.mxu0 0.0
    %4552 = vmatpush.msra.mxu0 0.0
    %4553 = vmatpush.msra.mxu0 0.0
    %4554 = vmatpush.msra.mxu0 %v2857
    %4555 = vmatpush.msra.mxu0 %v2745
    %4556 = vmatmul.f32.gmra.mxu0 %v4535
    %v4557 = vpop.f32.mrf.mxu0
    %v4558 = vadd.f32 0.0, %v4557
    %4559 = vmatmul.f32.gmra.mxu0 %v4538
    %v4560 = vpop.f32.mrf.mxu0
    %v4561 = vadd.f32 0.0, %v4560
    %4562 = vdwg.mxu0
    %v4564 = vsel %vm3649, %v4102, 0
    %v4567 = vsel %vm3649, %v4117, 0
    %4569 = vmatpush.msra.mxu0 0.0
    %4570 = vmatpush.msra.mxu0 0.0
    %4571 = vmatpush.msra.mxu0 0.0
    %4572 = vmatpush.msra.mxu0 0.0
    %4573 = vmatpush.msra.mxu0 0.0
    %4574 = vmatpush.msra.mxu0 0.0
    %4575 = vmatpush.msra.mxu0 0.0
    %4576 = vmatpush.msra.mxu0 0.0
    %4577 = vmatpush.msra.mxu0 0.0
    %4578 = vmatpush.msra.mxu0 0.0
    %4579 = vmatpush.msra.mxu0 0.0
    %4580 = vmatpush.msra.mxu0 0.0
    %4581 = vmatpush.msra.mxu0 0.0
    %4582 = vmatpush.msra.mxu0 0.0
    %4583 = vmatpush.msra.mxu0 %v2859
    %4584 = vmatpush.msra.mxu0 %v2747
    %4585 = vmatmul.f32.gmra.mxu0 %v4564
    %v4586 = vpop.f32.mrf.mxu0
    %v4587 = vadd.f32 0.0, %v4586
    %4588 = vmatmul.f32.gmra.mxu0 %v4567
    %v4589 = vpop.f32.mrf.mxu0
    %v4590 = vadd.f32 0.0, %v4589
    %4591 = vdwg.mxu0
    %v4593 = vsel %vm3649, %v4132, 0
    %v4596 = vsel %vm3649, %v4147, 0
    %4598 = vmatpush.msra.mxu0 0.0
    %4599 = vmatpush.msra.mxu0 0.0
    %4600 = vmatpush.msra.mxu0 0.0
    %4601 = vmatpush.msra.mxu0 0.0
    %4602 = vmatpush.msra.mxu0 0.0
    %4603 = vmatpush.msra.mxu0 0.0
    %4604 = vmatpush.msra.mxu0 0.0
    %4605 = vmatpush.msra.mxu0 0.0
    %4606 = vmatpush.msra.mxu0 0.0
    %4607 = vmatpush.msra.mxu0 0.0
    %4608 = vmatpush.msra.mxu0 0.0
    %4609 = vmatpush.msra.mxu0 0.0
    %4610 = vmatpush.msra.mxu0 0.0
    %4611 = vmatpush.msra.mxu0 0.0
    %4612 = vmatpush.msra.mxu0 %v2861
    %4613 = vmatpush.msra.mxu0 %v2749
    %4614 = vmatmul.f32.gmra.mxu0 %v4593
    %v4615 = vpop.f32.mrf.mxu0
    %v4616 = vadd.f32 0.0, %v4615
    %4617 = vmatmul.f32.gmra.mxu0 %v4596
    %v4618 = vpop.f32.mrf.mxu0
    %v4619 = vadd.f32 0.0, %v4618
    %4620 = vdwg.mxu0
    %v4622 = vsel %vm3649, %v4162, 0
    %v4625 = vsel %vm3649, %v4177, 0
    %4627 = vmatpush.msra.mxu0 0.0
    %4628 = vmatpush.msra.mxu0 0.0
    %4629 = vmatpush.msra.mxu0 0.0
    %4630 = vmatpush.msra.mxu0 0.0
    %4631 = vmatpush.msra.mxu0 0.0
    %4632 = vmatpush.msra.mxu0 0.0
    %4633 = vmatpush.msra.mxu0 0.0
    %4634 = vmatpush.msra.mxu0 0.0
    %4635 = vmatpush.msra.mxu0 0.0
    %4636 = vmatpush.msra.mxu0 0.0
    %4637 = vmatpush.msra.mxu0 0.0
    %4638 = vmatpush.msra.mxu0 0.0
    %4639 = vmatpush.msra.mxu0 0.0
    %4640 = vmatpush.msra.mxu0 0.0
    %4641 = vmatpush.msra.mxu0 %v2863
    %4642 = vmatpush.msra.mxu0 %v2751
    %4643 = vmatmul.f32.gmra.mxu0 %v4622
    %v4644 = vpop.f32.mrf.mxu0
    %v4645 = vadd.f32 0.0, %v4644
    %4646 = vmatmul.f32.gmra.mxu0 %v4625
    %v4647 = vpop.f32.mrf.mxu0
    %v4648 = vadd.f32 0.0, %v4647
    %4649 = vdwg.mxu0
    %v4651 = vsel %vm3649, %v4192, 0
    %v4654 = vsel %vm3649, %v4207, 0
    %4656 = vmatpush.msra.mxu0 0.0
    %4657 = vmatpush.msra.mxu0 0.0
    %4658 = vmatpush.msra.mxu0 0.0
    %4659 = vmatpush.msra.mxu0 0.0
    %4660 = vmatpush.msra.mxu0 0.0
    %4661 = vmatpush.msra.mxu0 0.0
    %4662 = vmatpush.msra.mxu0 0.0
    %4663 = vmatpush.msra.mxu0 0.0
    %4664 = vmatpush.msra.mxu0 0.0
    %4665 = vmatpush.msra.mxu0 0.0
    %4666 = vmatpush.msra.mxu0 0.0
    %4667 = vmatpush.msra.mxu0 0.0
    %4668 = vmatpush.msra.mxu0 0.0
    %4669 = vmatpush.msra.mxu0 0.0
    %4670 = vmatpush.msra.mxu0 %v3073
    %4671 = vmatpush.msra.mxu0 %v2961
    %4672 = vmatmul.f32.gmra.mxu0 %v4651
    %v4673 = vpop.f32.mrf.mxu0
    %v4674 = vadd.f32 0.0, %v4673
    %4675 = vmatmul.f32.gmra.mxu0 %v4654
    %v4676 = vpop.f32.mrf.mxu0
    %v4677 = vadd.f32 0.0, %v4676
    %4678 = vdwg.mxu0
    %v4680 = vsel %vm3649, %v4222, 0
    %v4683 = vsel %vm3649, %v4237, 0
    %4685 = vmatpush.msra.mxu0 0.0
    %4686 = vmatpush.msra.mxu0 0.0
    %4687 = vmatpush.msra.mxu0 0.0
    %4688 = vmatpush.msra.mxu0 0.0
    %4689 = vmatpush.msra.mxu0 0.0
    %4690 = vmatpush.msra.mxu0 0.0
    %4691 = vmatpush.msra.mxu0 0.0
    %4692 = vmatpush.msra.mxu0 0.0
    %4693 = vmatpush.msra.mxu0 0.0
    %4694 = vmatpush.msra.mxu0 0.0
    %4695 = vmatpush.msra.mxu0 0.0
    %4696 = vmatpush.msra.mxu0 0.0
    %4697 = vmatpush.msra.mxu0 0.0
    %4698 = vmatpush.msra.mxu0 0.0
    %4699 = vmatpush.msra.mxu0 %v3075
    %4700 = vmatpush.msra.mxu0 %v2963
    %4701 = vmatmul.f32.gmra.mxu0 %v4680
    %v4702 = vpop.f32.mrf.mxu0
    %v4703 = vadd.f32 0.0, %v4702
    %4704 = vmatmul.f32.gmra.mxu0 %v4683
    %v4705 = vpop.f32.mrf.mxu0
    %v4706 = vadd.f32 0.0, %v4705
    %4707 = vdwg.mxu0
    %v4709 = vsel %vm3649, %v4252, 0
    %v4712 = vsel %vm3649, %v4267, 0
    %4714 = vmatpush.msra.mxu0 0.0
    %4715 = vmatpush.msra.mxu0 0.0
    %4716 = vmatpush.msra.mxu0 0.0
    %4717 = vmatpush.msra.mxu0 0.0
    %4718 = vmatpush.msra.mxu0 0.0
    %4719 = vmatpush.msra.mxu0 0.0
    %4720 = vmatpush.msra.mxu0 0.0
    %4721 = vmatpush.msra.mxu0 0.0
    %4722 = vmatpush.msra.mxu0 0.0
    %4723 = vmatpush.msra.mxu0 0.0
    %4724 = vmatpush.msra.mxu0 0.0
    %4725 = vmatpush.msra.mxu0 0.0
    %4726 = vmatpush.msra.mxu0 0.0
    %4727 = vmatpush.msra.mxu0 0.0
    %4728 = vmatpush.msra.mxu0 %v3077
    %4729 = vmatpush.msra.mxu0 %v2965
    %4730 = vmatmul.f32.gmra.mxu0 %v4709
    %v4731 = vpop.f32.mrf.mxu0
    %v4732 = vadd.f32 0.0, %v4731
    %4733 = vmatmul.f32.gmra.mxu0 %v4712
    %v4734 = vpop.f32.mrf.mxu0
    %v4735 = vadd.f32 0.0, %v4734
    %4736 = vdwg.mxu0
    %v4738 = vsel %vm3649, %v4282, 0
    %v4741 = vsel %vm3649, %v4297, 0
    %4743 = vmatpush.msra.mxu0 0.0
    %4744 = vmatpush.msra.mxu0 0.0
    %4745 = vmatpush.msra.mxu0 0.0
    %4746 = vmatpush.msra.mxu0 0.0
    %4747 = vmatpush.msra.mxu0 0.0
    %4748 = vmatpush.msra.mxu0 0.0
    %4749 = vmatpush.msra.mxu0 0.0
    %4750 = vmatpush.msra.mxu0 0.0
    %4751 = vmatpush.msra.mxu0 0.0
    %4752 = vmatpush.msra.mxu0 0.0
    %4753 = vmatpush.msra.mxu0 0.0
    %4754 = vmatpush.msra.mxu0 0.0
    %4755 = vmatpush.msra.mxu0 0.0
    %4756 = vmatpush.msra.mxu0 0.0
    %4757 = vmatpush.msra.mxu0 %v3079
    %4758 = vmatpush.msra.mxu0 %v2967
    %4759 = vmatmul.f32.gmra.mxu0 %v4738
    %v4760 = vpop.f32.mrf.mxu0
    %v4761 = vadd.f32 0.0, %v4760
    %4762 = vmatmul.f32.gmra.mxu0 %v4741
    %v4763 = vpop.f32.mrf.mxu0
    %v4764 = vadd.f32 0.0, %v4763
    %4765 = vdwg.mxu0
    %v4767 = vsel %vm3649, %v4312, 0
    %v4770 = vsel %vm3649, %v4327, 0
    %4772 = vmatpush.msra.mxu0 0.0
    %4773 = vmatpush.msra.mxu0 0.0
    %4774 = vmatpush.msra.mxu0 0.0
    %4775 = vmatpush.msra.mxu0 0.0
    %4776 = vmatpush.msra.mxu0 0.0
    %4777 = vmatpush.msra.mxu0 0.0
    %4778 = vmatpush.msra.mxu0 0.0
    %4779 = vmatpush.msra.mxu0 0.0
    %4780 = vmatpush.msra.mxu0 0.0
    %4781 = vmatpush.msra.mxu0 0.0
    %4782 = vmatpush.msra.mxu0 0.0
    %4783 = vmatpush.msra.mxu0 0.0
    %4784 = vmatpush.msra.mxu0 0.0
    %4785 = vmatpush.msra.mxu0 0.0
    %4786 = vmatpush.msra.mxu0 %v3081
    %4787 = vmatpush.msra.mxu0 %v2969
    %4788 = vmatmul.f32.gmra.mxu0 %v4767
    %v4789 = vpop.f32.mrf.mxu0
    %v4790 = vadd.f32 0.0, %v4789
    %4791 = vmatmul.f32.gmra.mxu0 %v4770
    %v4792 = vpop.f32.mrf.mxu0
    %v4793 = vadd.f32 0.0, %v4792
    %4794 = vdwg.mxu0
    %v4796 = vsel %vm3649, %v4342, 0
    %v4799 = vsel %vm3649, %v4357, 0
    %4801 = vmatpush.msra.mxu0 0.0
    %4802 = vmatpush.msra.mxu0 0.0
    %4803 = vmatpush.msra.mxu0 0.0
    %4804 = vmatpush.msra.mxu0 0.0
    %4805 = vmatpush.msra.mxu0 0.0
    %4806 = vmatpush.msra.mxu0 0.0
    %4807 = vmatpush.msra.mxu0 0.0
    %4808 = vmatpush.msra.mxu0 0.0
    %4809 = vmatpush.msra.mxu0 0.0
    %4810 = vmatpush.msra.mxu0 0.0
    %4811 = vmatpush.msra.mxu0 0.0
    %4812 = vmatpush.msra.mxu0 0.0
    %4813 = vmatpush.msra.mxu0 0.0
    %4814 = vmatpush.msra.mxu0 0.0
    %4815 = vmatpush.msra.mxu0 %v3083
    %4816 = vmatpush.msra.mxu0 %v2971
    %4817 = vmatmul.f32.gmra.mxu0 %v4796
    %v4818 = vpop.f32.mrf.mxu0
    %v4819 = vadd.f32 0.0, %v4818
    %4820 = vmatmul.f32.gmra.mxu0 %v4799
    %v4821 = vpop.f32.mrf.mxu0
    %v4822 = vadd.f32 0.0, %v4821
    %4823 = vdwg.mxu0
    %v4825 = vsel %vm3649, %v4372, 0
    %v4828 = vsel %vm3649, %v4387, 0
    %4830 = vmatpush.msra.mxu0 0.0
    %4831 = vmatpush.msra.mxu0 0.0
    %4832 = vmatpush.msra.mxu0 0.0
    %4833 = vmatpush.msra.mxu0 0.0
    %4834 = vmatpush.msra.mxu0 0.0
    %4835 = vmatpush.msra.mxu0 0.0
    %4836 = vmatpush.msra.mxu0 0.0
    %4837 = vmatpush.msra.mxu0 0.0
    %4838 = vmatpush.msra.mxu0 0.0
    %4839 = vmatpush.msra.mxu0 0.0
    %4840 = vmatpush.msra.mxu0 0.0
    %4841 = vmatpush.msra.mxu0 0.0
    %4842 = vmatpush.msra.mxu0 0.0
    %4843 = vmatpush.msra.mxu0 0.0
    %4844 = vmatpush.msra.mxu0 %v3085
    %4845 = vmatpush.msra.mxu0 %v2973
    %4846 = vmatmul.f32.gmra.mxu0 %v4825
    %v4847 = vpop.f32.mrf.mxu0
    %v4848 = vadd.f32 0.0, %v4847
    %4849 = vmatmul.f32.gmra.mxu0 %v4828
    %v4850 = vpop.f32.mrf.mxu0
    %v4851 = vadd.f32 0.0, %v4850
    %4852 = vdwg.mxu0
    %v4854 = vsel %vm3649, %v4402, 0
    %v4857 = vsel %vm3649, %v4417, 0
    %4859 = vmatpush.msra.mxu0 0.0
    %4860 = vmatpush.msra.mxu0 0.0
    %4861 = vmatpush.msra.mxu0 0.0
    %4862 = vmatpush.msra.mxu0 0.0
    %4863 = vmatpush.msra.mxu0 0.0
    %4864 = vmatpush.msra.mxu0 0.0
    %4865 = vmatpush.msra.mxu0 0.0
    %4866 = vmatpush.msra.mxu0 0.0
    %4867 = vmatpush.msra.mxu0 0.0
    %4868 = vmatpush.msra.mxu0 0.0
    %4869 = vmatpush.msra.mxu0 0.0
    %4870 = vmatpush.msra.mxu0 0.0
    %4871 = vmatpush.msra.mxu0 0.0
    %4872 = vmatpush.msra.mxu0 0.0
    %4873 = vmatpush.msra.mxu0 %v3087
    %4874 = vmatpush.msra.mxu0 %v2975
    %4875 = vmatmul.f32.gmra.mxu0 %v4854
    %v4876 = vpop.f32.mrf.mxu0
    %v4877 = vadd.f32 0.0, %v4876
    %4878 = vmatmul.f32.gmra.mxu0 %v4857
    %v4879 = vpop.f32.mrf.mxu0
    %v4880 = vadd.f32 0.0, %v4879
    %4881 = vdwg.mxu0
    %v4882 = vrot.slane %v4500, 4
    %v4883 = vsel %vm216, %v4882, %v4442
    %v4884 = vrot.slane %v4442, 4
    %v4885 = vsel %vm216, %v4500, %v4884
    %v4887 = vunpack.c.l.s4 1983009808
    %v4888 = vunpack.c.0.s8 %v4887
    %v4889 = vperm.slane %v4883, %v4888
    %v4891 = vunpack.c.l.s4 1983009808
    %v4892 = vunpack.c.0.s8 %v4891
    %v4893 = vperm.slane %v4885, %v4892
    %v4894 = vrot.slane %v4529, 4
    %v4895 = vsel %vm216, %v4894, %v4471
    %v4896 = vrot.slane %v4471, 4
    %v4897 = vsel %vm216, %v4529, %v4896
    %v4899 = vunpack.c.l.s4 1983009808
    %v4900 = vunpack.c.0.s8 %v4899
    %v4901 = vperm.slane %v4895, %v4900
    %v4903 = vunpack.c.l.s4 1983009808
    %v4904 = vunpack.c.0.s8 %v4903
    %v4905 = vperm.slane %v4897, %v4904
    %v4906 = vrot.slane %v4616, 4
    %v4907 = vsel %vm216, %v4906, %v4558
    %v4908 = vrot.slane %v4558, 4
    %v4909 = vsel %vm216, %v4616, %v4908
    %v4911 = vunpack.c.l.s4 1983009808
    %v4912 = vunpack.c.0.s8 %v4911
    %v4913 = vperm.slane %v4907, %v4912
    %v4915 = vunpack.c.l.s4 1983009808
    %v4916 = vunpack.c.0.s8 %v4915
    %v4917 = vperm.slane %v4909, %v4916
    %v4918 = vrot.slane %v4645, 4
    %v4919 = vsel %vm216, %v4918, %v4587
    %v4920 = vrot.slane %v4587, 4
    %v4921 = vsel %vm216, %v4645, %v4920
    %v4923 = vunpack.c.l.s4 1983009808
    %v4924 = vunpack.c.0.s8 %v4923
    %v4925 = vperm.slane %v4919, %v4924
    %v4927 = vunpack.c.l.s4 1983009808
    %v4928 = vunpack.c.0.s8 %v4927
    %v4929 = vperm.slane %v4921, %v4928
    %v4930 = vrot.slane %v4901, 4
    %v4931 = vsel %vm216, %v4930, %v4889
    %v4932 = vrot.slane %v4889, 4
    %v4933 = vsel %vm216, %v4901, %v4932
    %v4935 = vunpack.c.l.s4 1934713408
    %v4936 = vunpack.c.0.s8 %v4935
    %v4937 = vperm.slane %v4931, %v4936
    %v4939 = vunpack.c.l.s4 1934713408
    %v4940 = vunpack.c.0.s8 %v4939
    %v4941 = vperm.slane %v4933, %v4940
    %v4942 = vrot.slane %v4905, 4
    %v4943 = vsel %vm216, %v4942, %v4893
    %v4944 = vrot.slane %v4893, 4
    %v4945 = vsel %vm216, %v4905, %v4944
    %v4947 = vunpack.c.l.s4 1934713408
    %v4948 = vunpack.c.0.s8 %v4947
    %v4949 = vperm.slane %v4943, %v4948
    %v4951 = vunpack.c.l.s4 1934713408
    %v4952 = vunpack.c.0.s8 %v4951
    %v4953 = vperm.slane %v4945, %v4952
    %v4954 = vrot.slane %v4925, 4
    %v4955 = vsel %vm216, %v4954, %v4913
    %v4956 = vrot.slane %v4913, 4
    %v4957 = vsel %vm216, %v4925, %v4956
    %v4959 = vunpack.c.l.s4 1934713408
    %v4960 = vunpack.c.0.s8 %v4959
    %v4961 = vperm.slane %v4955, %v4960
    %v4963 = vunpack.c.l.s4 1934713408
    %v4964 = vunpack.c.0.s8 %v4963
    %v4965 = vperm.slane %v4957, %v4964
    %v4966 = vrot.slane %v4929, 4
    %v4967 = vsel %vm216, %v4966, %v4917
    %v4968 = vrot.slane %v4917, 4
    %v4969 = vsel %vm216, %v4929, %v4968
    %v4971 = vunpack.c.l.s4 1934713408
    %v4972 = vunpack.c.0.s8 %v4971
    %v4973 = vperm.slane %v4967, %v4972
    %v4975 = vunpack.c.l.s4 1934713408
    %v4976 = vunpack.c.0.s8 %v4975
    %v4977 = vperm.slane %v4969, %v4976
    %v4978 = vrot.slane %v4961, 4
    %v4979 = vsel %vm216, %v4978, %v4937
    %v4980 = vrot.slane %v4937, 4
    %v4981 = vsel %vm216, %v4961, %v4980
    %v4982 = vrot.slane %v4965, 4
    %v4983 = vsel %vm216, %v4982, %v4941
    %v4984 = vrot.slane %v4941, 4
    %v4985 = vsel %vm216, %v4965, %v4984
    %v4986 = vrot.slane %v4973, 4
    %v4987 = vsel %vm216, %v4986, %v4949
    %v4988 = vrot.slane %v4949, 4
    %v4989 = vsel %vm216, %v4973, %v4988
    %v4990 = vrot.slane %v4977, 4
    %v4991 = vsel %vm216, %v4990, %v4953
    %v4992 = vrot.slane %v4953, 4
    %v4993 = vsel %vm216, %v4977, %v4992
    %v4994 = vrot.slane %v4503, 4
    %v4995 = vsel %vm216, %v4994, %v4445
    %v4996 = vrot.slane %v4445, 4
    %v4997 = vsel %vm216, %v4503, %v4996
    %v4999 = vunpack.c.l.s4 1983009808
    %v5000 = vunpack.c.0.s8 %v4999
    %v5001 = vperm.slane %v4995, %v5000
    %v5003 = vunpack.c.l.s4 1983009808
    %v5004 = vunpack.c.0.s8 %v5003
    %v5005 = vperm.slane %v4997, %v5004
    %v5006 = vrot.slane %v4532, 4
    %v5007 = vsel %vm216, %v5006, %v4474
    %v5008 = vrot.slane %v4474, 4
    %v5009 = vsel %vm216, %v4532, %v5008
    %v5011 = vunpack.c.l.s4 1983009808
    %v5012 = vunpack.c.0.s8 %v5011
    %v5013 = vperm.slane %v5007, %v5012
    %v5015 = vunpack.c.l.s4 1983009808
    %v5016 = vunpack.c.0.s8 %v5015
    %v5017 = vperm.slane %v5009, %v5016
    %v5018 = vrot.slane %v4619, 4
    %v5019 = vsel %vm216, %v5018, %v4561
    %v5020 = vrot.slane %v4561, 4
    %v5021 = vsel %vm216, %v4619, %v5020
    %v5023 = vunpack.c.l.s4 1983009808
    %v5024 = vunpack.c.0.s8 %v5023
    %v5025 = vperm.slane %v5019, %v5024
    %v5027 = vunpack.c.l.s4 1983009808
    %v5028 = vunpack.c.0.s8 %v5027
    %v5029 = vperm.slane %v5021, %v5028
    %v5030 = vrot.slane %v4648, 4
    %v5031 = vsel %vm216, %v5030, %v4590
    %v5032 = vrot.slane %v4590, 4
    %v5033 = vsel %vm216, %v4648, %v5032
    %v5035 = vunpack.c.l.s4 1983009808
    %v5036 = vunpack.c.0.s8 %v5035
    %v5037 = vperm.slane %v5031, %v5036
    %v5039 = vunpack.c.l.s4 1983009808
    %v5040 = vunpack.c.0.s8 %v5039
    %v5041 = vperm.slane %v5033, %v5040
    %v5042 = vrot.slane %v5013, 4
    %v5043 = vsel %vm216, %v5042, %v5001
    %v5044 = vrot.slane %v5001, 4
    %v5045 = vsel %vm216, %v5013, %v5044
    %v5047 = vunpack.c.l.s4 1934713408
    %v5048 = vunpack.c.0.s8 %v5047
    %v5049 = vperm.slane %v5043, %v5048
    %v5051 = vunpack.c.l.s4 1934713408
    %v5052 = vunpack.c.0.s8 %v5051
    %v5053 = vperm.slane %v5045, %v5052
    %v5054 = vrot.slane %v5017, 4
    %v5055 = vsel %vm216, %v5054, %v5005
    %v5056 = vrot.slane %v5005, 4
    %v5057 = vsel %vm216, %v5017, %v5056
    %v5059 = vunpack.c.l.s4 1934713408
    %v5060 = vunpack.c.0.s8 %v5059
    %v5061 = vperm.slane %v5055, %v5060
    %v5063 = vunpack.c.l.s4 1934713408
    %v5064 = vunpack.c.0.s8 %v5063
    %v5065 = vperm.slane %v5057, %v5064
    %v5066 = vrot.slane %v5037, 4
    %v5067 = vsel %vm216, %v5066, %v5025
    %v5068 = vrot.slane %v5025, 4
    %v5069 = vsel %vm216, %v5037, %v5068
    %v5071 = vunpack.c.l.s4 1934713408
    %v5072 = vunpack.c.0.s8 %v5071
    %v5073 = vperm.slane %v5067, %v5072
    %v5075 = vunpack.c.l.s4 1934713408
    %v5076 = vunpack.c.0.s8 %v5075
    %v5077 = vperm.slane %v5069, %v5076
    %v5078 = vrot.slane %v5041, 4
    %v5079 = vsel %vm216, %v5078, %v5029
    %v5080 = vrot.slane %v5029, 4
    %v5081 = vsel %vm216, %v5041, %v5080
    %v5083 = vunpack.c.l.s4 1934713408
    %v5084 = vunpack.c.0.s8 %v5083
    %v5085 = vperm.slane %v5079, %v5084
    %v5087 = vunpack.c.l.s4 1934713408
    %v5088 = vunpack.c.0.s8 %v5087
    %v5089 = vperm.slane %v5081, %v5088
    %v5090 = vrot.slane %v5073, 4
    %v5091 = vsel %vm216, %v5090, %v5049
    %v5092 = vrot.slane %v5049, 4
    %v5093 = vsel %vm216, %v5073, %v5092
    %v5094 = vrot.slane %v5077, 4
    %v5095 = vsel %vm216, %v5094, %v5053
    %v5096 = vrot.slane %v5053, 4
    %v5097 = vsel %vm216, %v5077, %v5096
    %v5098 = vrot.slane %v5085, 4
    %v5099 = vsel %vm216, %v5098, %v5061
    %v5100 = vrot.slane %v5061, 4
    %v5101 = vsel %vm216, %v5085, %v5100
    %v5102 = vrot.slane %v5089, 4
    %v5103 = vsel %vm216, %v5102, %v5065
    %v5104 = vrot.slane %v5065, 4
    %v5105 = vsel %vm216, %v5089, %v5104
    %v5106 = vrot.slane %v4732, 4
    %v5107 = vsel %vm216, %v5106, %v4674
    %v5108 = vrot.slane %v4674, 4
    %v5109 = vsel %vm216, %v4732, %v5108
    %v5111 = vunpack.c.l.s4 1983009808
    %v5112 = vunpack.c.0.s8 %v5111
    %v5113 = vperm.slane %v5107, %v5112
    %v5115 = vunpack.c.l.s4 1983009808
    %v5116 = vunpack.c.0.s8 %v5115
    %v5117 = vperm.slane %v5109, %v5116
    %v5118 = vrot.slane %v4761, 4
    %v5119 = vsel %vm216, %v5118, %v4703
    %v5120 = vrot.slane %v4703, 4
    %v5121 = vsel %vm216, %v4761, %v5120
    %v5123 = vunpack.c.l.s4 1983009808
    %v5124 = vunpack.c.0.s8 %v5123
    %v5125 = vperm.slane %v5119, %v5124
    %v5127 = vunpack.c.l.s4 1983009808
    %v5128 = vunpack.c.0.s8 %v5127
    %v5129 = vperm.slane %v5121, %v5128
    %v5130 = vrot.slane %v4848, 4
    %v5131 = vsel %vm216, %v5130, %v4790
    %v5132 = vrot.slane %v4790, 4
    %v5133 = vsel %vm216, %v4848, %v5132
    %v5135 = vunpack.c.l.s4 1983009808
    %v5136 = vunpack.c.0.s8 %v5135
    %v5137 = vperm.slane %v5131, %v5136
    %v5139 = vunpack.c.l.s4 1983009808
    %v5140 = vunpack.c.0.s8 %v5139
    %v5141 = vperm.slane %v5133, %v5140
    %v5142 = vrot.slane %v4877, 4
    %v5143 = vsel %vm216, %v5142, %v4819
    %v5144 = vrot.slane %v4819, 4
    %v5145 = vsel %vm216, %v4877, %v5144
    %v5147 = vunpack.c.l.s4 1983009808
    %v5148 = vunpack.c.0.s8 %v5147
    %v5149 = vperm.slane %v5143, %v5148
    %v5151 = vunpack.c.l.s4 1983009808
    %v5152 = vunpack.c.0.s8 %v5151
    %v5153 = vperm.slane %v5145, %v5152
    %v5154 = vrot.slane %v5125, 4
    %v5155 = vsel %vm216, %v5154, %v5113
    %v5156 = vrot.slane %v5113, 4
    %v5157 = vsel %vm216, %v5125, %v5156
    %v5159 = vunpack.c.l.s4 1934713408
    %v5160 = vunpack.c.0.s8 %v5159
    %v5161 = vperm.slane %v5155, %v5160
    %v5163 = vunpack.c.l.s4 1934713408
    %v5164 = vunpack.c.0.s8 %v5163
    %v5165 = vperm.slane %v5157, %v5164
    %v5166 = vrot.slane %v5129, 4
    %v5167 = vsel %vm216, %v5166, %v5117
    %v5168 = vrot.slane %v5117, 4
    %v5169 = vsel %vm216, %v5129, %v5168
    %v5171 = vunpack.c.l.s4 1934713408
    %v5172 = vunpack.c.0.s8 %v5171
    %v5173 = vperm.slane %v5167, %v5172
    %v5175 = vunpack.c.l.s4 1934713408
    %v5176 = vunpack.c.0.s8 %v5175
    %v5177 = vperm.slane %v5169, %v5176
    %v5178 = vrot.slane %v5149, 4
    %v5179 = vsel %vm216, %v5178, %v5137
    %v5180 = vrot.slane %v5137, 4
    %v5181 = vsel %vm216, %v5149, %v5180
    %v5183 = vunpack.c.l.s4 1934713408
    %v5184 = vunpack.c.0.s8 %v5183
    %v5185 = vperm.slane %v5179, %v5184
    %v5187 = vunpack.c.l.s4 1934713408
    %v5188 = vunpack.c.0.s8 %v5187
    %v5189 = vperm.slane %v5181, %v5188
    %v5190 = vrot.slane %v5153, 4
    %v5191 = vsel %vm216, %v5190, %v5141
    %v5192 = vrot.slane %v5141, 4
    %v5193 = vsel %vm216, %v5153, %v5192
    %v5195 = vunpack.c.l.s4 1934713408
    %v5196 = vunpack.c.0.s8 %v5195
    %v5197 = vperm.slane %v5191, %v5196
    %v5199 = vunpack.c.l.s4 1934713408
    %v5200 = vunpack.c.0.s8 %v5199
    %v5201 = vperm.slane %v5193, %v5200
    %v5202 = vrot.slane %v5185, 4
    %v5203 = vsel %vm216, %v5202, %v5161
    %v5204 = vrot.slane %v5161, 4
    %v5205 = vsel %vm216, %v5185, %v5204
    %v5206 = vrot.slane %v5189, 4
    %v5207 = vsel %vm216, %v5206, %v5165
    %v5208 = vrot.slane %v5165, 4
    %v5209 = vsel %vm216, %v5189, %v5208
    %v5210 = vrot.slane %v5197, 4
    %v5211 = vsel %vm216, %v5210, %v5173
    %v5212 = vrot.slane %v5173, 4
    %v5213 = vsel %vm216, %v5197, %v5212
    %v5214 = vrot.slane %v5201, 4
    %v5215 = vsel %vm216, %v5214, %v5177
    %v5216 = vrot.slane %v5177, 4
    %v5217 = vsel %vm216, %v5201, %v5216
    %v5218 = vrot.slane %v4735, 4
    %v5219 = vsel %vm216, %v5218, %v4677
    %v5220 = vrot.slane %v4677, 4
    %v5221 = vsel %vm216, %v4735, %v5220
    %v5223 = vunpack.c.l.s4 1983009808
    %v5224 = vunpack.c.0.s8 %v5223
    %v5225 = vperm.slane %v5219, %v5224
    %v5227 = vunpack.c.l.s4 1983009808
    %v5228 = vunpack.c.0.s8 %v5227
    %v5229 = vperm.slane %v5221, %v5228
    %v5230 = vrot.slane %v4764, 4
    %v5231 = vsel %vm216, %v5230, %v4706
    %v5232 = vrot.slane %v4706, 4
    %v5233 = vsel %vm216, %v4764, %v5232
    %v5235 = vunpack.c.l.s4 1983009808
    %v5236 = vunpack.c.0.s8 %v5235
    %v5237 = vperm.slane %v5231, %v5236
    %v5239 = vunpack.c.l.s4 1983009808
    %v5240 = vunpack.c.0.s8 %v5239
    %v5241 = vperm.slane %v5233, %v5240
    %v5242 = vrot.slane %v4851, 4
    %v5243 = vsel %vm216, %v5242, %v4793
    %v5244 = vrot.slane %v4793, 4
    %v5245 = vsel %vm216, %v4851, %v5244
    %v5247 = vunpack.c.l.s4 1983009808
    %v5248 = vunpack.c.0.s8 %v5247
    %v5249 = vperm.slane %v5243, %v5248
    %v5251 = vunpack.c.l.s4 1983009808
    %v5252 = vunpack.c.0.s8 %v5251
    %v5253 = vperm.slane %v5245, %v5252
    %v5254 = vrot.slane %v4880, 4
    %v5255 = vsel %vm216, %v5254, %v4822
    %v5256 = vrot.slane %v4822, 4
    %v5257 = vsel %vm216, %v4880, %v5256
    %v5259 = vunpack.c.l.s4 1983009808
    %v5260 = vunpack.c.0.s8 %v5259
    %v5261 = vperm.slane %v5255, %v5260
    %v5263 = vunpack.c.l.s4 1983009808
    %v5264 = vunpack.c.0.s8 %v5263
    %v5265 = vperm.slane %v5257, %v5264
    %v5266 = vrot.slane %v5237, 4
    %v5267 = vsel %vm216, %v5266, %v5225
    %v5268 = vrot.slane %v5225, 4
    %v5269 = vsel %vm216, %v5237, %v5268
    %v5271 = vunpack.c.l.s4 1934713408
    %v5272 = vunpack.c.0.s8 %v5271
    %v5273 = vperm.slane %v5267, %v5272
    %v5275 = vunpack.c.l.s4 1934713408
    %v5276 = vunpack.c.0.s8 %v5275
    %v5277 = vperm.slane %v5269, %v5276
    %v5278 = vrot.slane %v5241, 4
    %v5279 = vsel %vm216, %v5278, %v5229
    %v5280 = vrot.slane %v5229, 4
    %v5281 = vsel %vm216, %v5241, %v5280
    %v5283 = vunpack.c.l.s4 1934713408
    %v5284 = vunpack.c.0.s8 %v5283
    %v5285 = vperm.slane %v5279, %v5284
    %v5287 = vunpack.c.l.s4 1934713408
    %v5288 = vunpack.c.0.s8 %v5287
    %v5289 = vperm.slane %v5281, %v5288
    %v5290 = vrot.slane %v5261, 4
    %v5291 = vsel %vm216, %v5290, %v5249
    %v5292 = vrot.slane %v5249, 4
    %v5293 = vsel %vm216, %v5261, %v5292
    %v5295 = vunpack.c.l.s4 1934713408
    %v5296 = vunpack.c.0.s8 %v5295
    %v5297 = vperm.slane %v5291, %v5296
    %v5299 = vunpack.c.l.s4 1934713408
    %v5300 = vunpack.c.0.s8 %v5299
    %v5301 = vperm.slane %v5293, %v5300
    %v5302 = vrot.slane %v5265, 4
    %v5303 = vsel %vm216, %v5302, %v5253
    %v5304 = vrot.slane %v5253, 4
    %v5305 = vsel %vm216, %v5265, %v5304
    %v5307 = vunpack.c.l.s4 1934713408
    %v5308 = vunpack.c.0.s8 %v5307
    %v5309 = vperm.slane %v5303, %v5308
    %v5311 = vunpack.c.l.s4 1934713408
    %v5312 = vunpack.c.0.s8 %v5311
    %v5313 = vperm.slane %v5305, %v5312
    %v5314 = vrot.slane %v5297, 4
    %v5315 = vsel %vm216, %v5314, %v5273
    %v5316 = vrot.slane %v5273, 4
    %v5317 = vsel %vm216, %v5297, %v5316
    %v5318 = vrot.slane %v5301, 4
    %v5319 = vsel %vm216, %v5318, %v5277
    %v5320 = vrot.slane %v5277, 4
    %v5321 = vsel %vm216, %v5301, %v5320
    %v5322 = vrot.slane %v5309, 4
    %v5323 = vsel %vm216, %v5322, %v5285
    %v5324 = vrot.slane %v5285, 4
    %v5325 = vsel %vm216, %v5309, %v5324
    %v5326 = vrot.slane %v5313, 4
    %v5327 = vsel %vm216, %v5326, %v5289
    %v5328 = vrot.slane %v5289, 4
    %v5329 = vsel %vm216, %v5313, %v5328
    %v5330 = vrot.slane %v4983, 4
    %v5331 = vsel %vm216, %v5330, %v4979
    %v5332 = vrot.slane %v4979, 4
    %v5333 = vsel %vm216, %v4983, %v5332
    %v5335 = vunpack.c.l.s4 1983009808
    %v5336 = vunpack.c.0.s8 %v5335
    %v5337 = vperm.slane %v5331, %v5336
    %v5339 = vunpack.c.l.s4 1983009808
    %v5340 = vunpack.c.0.s8 %v5339
    %v5341 = vperm.slane %v5333, %v5340
    %v5342 = vrot.slane %v4985, 4
    %v5343 = vsel %vm216, %v5342, %v4981
    %v5344 = vrot.slane %v4981, 4
    %v5345 = vsel %vm216, %v4985, %v5344
    %v5347 = vunpack.c.l.s4 1983009808
    %v5348 = vunpack.c.0.s8 %v5347
    %v5349 = vperm.slane %v5343, %v5348
    %v5351 = vunpack.c.l.s4 1983009808
    %v5352 = vunpack.c.0.s8 %v5351
    %v5353 = vperm.slane %v5345, %v5352
    %v5354 = vrot.slane %v4991, 4
    %v5355 = vsel %vm216, %v5354, %v4987
    %v5356 = vrot.slane %v4987, 4
    %v5357 = vsel %vm216, %v4991, %v5356
    %v5359 = vunpack.c.l.s4 1983009808
    %v5360 = vunpack.c.0.s8 %v5359
    %v5361 = vperm.slane %v5355, %v5360
    %v5363 = vunpack.c.l.s4 1983009808
    %v5364 = vunpack.c.0.s8 %v5363
    %v5365 = vperm.slane %v5357, %v5364
    %v5366 = vrot.slane %v4993, 4
    %v5367 = vsel %vm216, %v5366, %v4989
    %v5368 = vrot.slane %v4989, 4
    %v5369 = vsel %vm216, %v4993, %v5368
    %v5371 = vunpack.c.l.s4 1983009808
    %v5372 = vunpack.c.0.s8 %v5371
    %v5373 = vperm.slane %v5367, %v5372
    %v5375 = vunpack.c.l.s4 1983009808
    %v5376 = vunpack.c.0.s8 %v5375
    %v5377 = vperm.slane %v5369, %v5376
    %v5378 = vrot.slane %v5349, 4
    %v5379 = vsel %vm216, %v5378, %v5337
    %v5380 = vrot.slane %v5337, 4
    %v5381 = vsel %vm216, %v5349, %v5380
    %v5383 = vunpack.c.l.s4 1934713408
    %v5384 = vunpack.c.0.s8 %v5383
    %v5385 = vperm.slane %v5379, %v5384
    %v5387 = vunpack.c.l.s4 1934713408
    %v5388 = vunpack.c.0.s8 %v5387
    %v5389 = vperm.slane %v5381, %v5388
    %v5390 = vrot.slane %v5353, 4
    %v5391 = vsel %vm216, %v5390, %v5341
    %v5392 = vrot.slane %v5341, 4
    %v5393 = vsel %vm216, %v5353, %v5392
    %v5395 = vunpack.c.l.s4 1934713408
    %v5396 = vunpack.c.0.s8 %v5395
    %v5397 = vperm.slane %v5391, %v5396
    %v5399 = vunpack.c.l.s4 1934713408
    %v5400 = vunpack.c.0.s8 %v5399
    %v5401 = vperm.slane %v5393, %v5400
    %v5402 = vrot.slane %v5373, 4
    %v5403 = vsel %vm216, %v5402, %v5361
    %v5404 = vrot.slane %v5361, 4
    %v5405 = vsel %vm216, %v5373, %v5404
    %v5407 = vunpack.c.l.s4 1934713408
    %v5408 = vunpack.c.0.s8 %v5407
    %v5409 = vperm.slane %v5403, %v5408
    %v5411 = vunpack.c.l.s4 1934713408
    %v5412 = vunpack.c.0.s8 %v5411
    %v5413 = vperm.slane %v5405, %v5412
    %v5414 = vrot.slane %v5377, 4
    %v5415 = vsel %vm216, %v5414, %v5365
    %v5416 = vrot.slane %v5365, 4
    %v5417 = vsel %vm216, %v5377, %v5416
    %v5419 = vunpack.c.l.s4 1934713408
    %v5420 = vunpack.c.0.s8 %v5419
    %v5421 = vperm.slane %v5415, %v5420
    %v5423 = vunpack.c.l.s4 1934713408
    %v5424 = vunpack.c.0.s8 %v5423
    %v5425 = vperm.slane %v5417, %v5424
    %v5426 = vrot.slane %v5409, 4
    %v5427 = vsel %vm216, %v5426, %v5385
    %v5428 = vrot.slane %v5385, 4
    %v5429 = vsel %vm216, %v5409, %v5428
    %v5430 = vrot.slane %v5413, 4
    %v5431 = vsel %vm216, %v5430, %v5389
    %v5432 = vrot.slane %v5389, 4
    %v5433 = vsel %vm216, %v5413, %v5432
    %v5434 = vrot.slane %v5421, 4
    %v5435 = vsel %vm216, %v5434, %v5397
    %v5436 = vrot.slane %v5397, 4
    %v5437 = vsel %vm216, %v5421, %v5436
    %v5438 = vrot.slane %v5425, 4
    %v5439 = vsel %vm216, %v5438, %v5401
    %v5440 = vrot.slane %v5401, 4
    %v5441 = vsel %vm216, %v5425, %v5440
    %v5442 = vrot.slane %v5095, 4
    %v5443 = vsel %vm216, %v5442, %v5091
    %v5444 = vrot.slane %v5091, 4
    %v5445 = vsel %vm216, %v5095, %v5444
    %v5447 = vunpack.c.l.s4 1983009808
    %v5448 = vunpack.c.0.s8 %v5447
    %v5449 = vperm.slane %v5443, %v5448
    %v5451 = vunpack.c.l.s4 1983009808
    %v5452 = vunpack.c.0.s8 %v5451
    %v5453 = vperm.slane %v5445, %v5452
    %v5454 = vrot.slane %v5097, 4
    %v5455 = vsel %vm216, %v5454, %v5093
    %v5456 = vrot.slane %v5093, 4
    %v5457 = vsel %vm216, %v5097, %v5456
    %v5459 = vunpack.c.l.s4 1983009808
    %v5460 = vunpack.c.0.s8 %v5459
    %v5461 = vperm.slane %v5455, %v5460
    %v5463 = vunpack.c.l.s4 1983009808
    %v5464 = vunpack.c.0.s8 %v5463
    %v5465 = vperm.slane %v5457, %v5464
    %v5466 = vrot.slane %v5103, 4
    %v5467 = vsel %vm216, %v5466, %v5099
    %v5468 = vrot.slane %v5099, 4
    %v5469 = vsel %vm216, %v5103, %v5468
    %v5471 = vunpack.c.l.s4 1983009808
    %v5472 = vunpack.c.0.s8 %v5471
    %v5473 = vperm.slane %v5467, %v5472
    %v5475 = vunpack.c.l.s4 1983009808
    %v5476 = vunpack.c.0.s8 %v5475
    %v5477 = vperm.slane %v5469, %v5476
    %v5478 = vrot.slane %v5105, 4
    %v5479 = vsel %vm216, %v5478, %v5101
    %v5480 = vrot.slane %v5101, 4
    %v5481 = vsel %vm216, %v5105, %v5480
    %v5483 = vunpack.c.l.s4 1983009808
    %v5484 = vunpack.c.0.s8 %v5483
    %v5485 = vperm.slane %v5479, %v5484
    %v5487 = vunpack.c.l.s4 1983009808
    %v5488 = vunpack.c.0.s8 %v5487
    %v5489 = vperm.slane %v5481, %v5488
    %v5490 = vrot.slane %v5461, 4
    %v5491 = vsel %vm216, %v5490, %v5449
    %v5492 = vrot.slane %v5449, 4
    %v5493 = vsel %vm216, %v5461, %v5492
    %v5495 = vunpack.c.l.s4 1934713408
    %v5496 = vunpack.c.0.s8 %v5495
    %v5497 = vperm.slane %v5491, %v5496
    %v5499 = vunpack.c.l.s4 1934713408
    %v5500 = vunpack.c.0.s8 %v5499
    %v5501 = vperm.slane %v5493, %v5500
    %v5502 = vrot.slane %v5465, 4
    %v5503 = vsel %vm216, %v5502, %v5453
    %v5504 = vrot.slane %v5453, 4
    %v5505 = vsel %vm216, %v5465, %v5504
    %v5507 = vunpack.c.l.s4 1934713408
    %v5508 = vunpack.c.0.s8 %v5507
    %v5509 = vperm.slane %v5503, %v5508
    %v5511 = vunpack.c.l.s4 1934713408
    %v5512 = vunpack.c.0.s8 %v5511
    %v5513 = vperm.slane %v5505, %v5512
    %v5514 = vrot.slane %v5485, 4
    %v5515 = vsel %vm216, %v5514, %v5473
    %v5516 = vrot.slane %v5473, 4
    %v5517 = vsel %vm216, %v5485, %v5516
    %v5519 = vunpack.c.l.s4 1934713408
    %v5520 = vunpack.c.0.s8 %v5519
    %v5521 = vperm.slane %v5515, %v5520
    %v5523 = vunpack.c.l.s4 1934713408
    %v5524 = vunpack.c.0.s8 %v5523
    %v5525 = vperm.slane %v5517, %v5524
    %v5526 = vrot.slane %v5489, 4
    %v5527 = vsel %vm216, %v5526, %v5477
    %v5528 = vrot.slane %v5477, 4
    %v5529 = vsel %vm216, %v5489, %v5528
    %v5531 = vunpack.c.l.s4 1934713408
    %v5532 = vunpack.c.0.s8 %v5531
    %v5533 = vperm.slane %v5527, %v5532
    %v5535 = vunpack.c.l.s4 1934713408
    %v5536 = vunpack.c.0.s8 %v5535
    %v5537 = vperm.slane %v5529, %v5536
    %v5538 = vrot.slane %v5521, 4
    %v5539 = vsel %vm216, %v5538, %v5497
    %v5540 = vrot.slane %v5497, 4
    %v5541 = vsel %vm216, %v5521, %v5540
    %v5542 = vrot.slane %v5525, 4
    %v5543 = vsel %vm216, %v5542, %v5501
    %v5544 = vrot.slane %v5501, 4
    %v5545 = vsel %vm216, %v5525, %v5544
    %v5546 = vrot.slane %v5533, 4
    %v5547 = vsel %vm216, %v5546, %v5509
    %v5548 = vrot.slane %v5509, 4
    %v5549 = vsel %vm216, %v5533, %v5548
    %v5550 = vrot.slane %v5537, 4
    %v5551 = vsel %vm216, %v5550, %v5513
    %v5552 = vrot.slane %v5513, 4
    %v5553 = vsel %vm216, %v5537, %v5552
    %v5554 = vrot.slane %v5207, 4
    %v5555 = vsel %vm216, %v5554, %v5203
    %v5556 = vrot.slane %v5203, 4
    %v5557 = vsel %vm216, %v5207, %v5556
    %v5559 = vunpack.c.l.s4 1983009808
    %v5560 = vunpack.c.0.s8 %v5559
    %v5561 = vperm.slane %v5555, %v5560
    %v5563 = vunpack.c.l.s4 1983009808
    %v5564 = vunpack.c.0.s8 %v5563
    %v5565 = vperm.slane %v5557, %v5564
    %v5566 = vrot.slane %v5209, 4
    %v5567 = vsel %vm216, %v5566, %v5205
    %v5568 = vrot.slane %v5205, 4
    %v5569 = vsel %vm216, %v5209, %v5568
    %v5571 = vunpack.c.l.s4 1983009808
    %v5572 = vunpack.c.0.s8 %v5571
    %v5573 = vperm.slane %v5567, %v5572
    %v5575 = vunpack.c.l.s4 1983009808
    %v5576 = vunpack.c.0.s8 %v5575
    %v5577 = vperm.slane %v5569, %v5576
    %v5578 = vrot.slane %v5215, 4
    %v5579 = vsel %vm216, %v5578, %v5211
    %v5580 = vrot.slane %v5211, 4
    %v5581 = vsel %vm216, %v5215, %v5580
    %v5583 = vunpack.c.l.s4 1983009808
    %v5584 = vunpack.c.0.s8 %v5583
    %v5585 = vperm.slane %v5579, %v5584
    %v5587 = vunpack.c.l.s4 1983009808
    %v5588 = vunpack.c.0.s8 %v5587
    %v5589 = vperm.slane %v5581, %v5588
    %v5590 = vrot.slane %v5217, 4
    %v5591 = vsel %vm216, %v5590, %v5213
    %v5592 = vrot.slane %v5213, 4
    %v5593 = vsel %vm216, %v5217, %v5592
    %v5595 = vunpack.c.l.s4 1983009808
    %v5596 = vunpack.c.0.s8 %v5595
    %v5597 = vperm.slane %v5591, %v5596
    %v5599 = vunpack.c.l.s4 1983009808
    %v5600 = vunpack.c.0.s8 %v5599
    %v5601 = vperm.slane %v5593, %v5600
    %v5602 = vrot.slane %v5573, 4
    %v5603 = vsel %vm216, %v5602, %v5561
    %v5604 = vrot.slane %v5561, 4
    %v5605 = vsel %vm216, %v5573, %v5604
    %v5607 = vunpack.c.l.s4 1934713408
    %v5608 = vunpack.c.0.s8 %v5607
    %v5609 = vperm.slane %v5603, %v5608
    %v5611 = vunpack.c.l.s4 1934713408
    %v5612 = vunpack.c.0.s8 %v5611
    %v5613 = vperm.slane %v5605, %v5612
    %v5614 = vrot.slane %v5577, 4
    %v5615 = vsel %vm216, %v5614, %v5565
    %v5616 = vrot.slane %v5565, 4
    %v5617 = vsel %vm216, %v5577, %v5616
    %v5619 = vunpack.c.l.s4 1934713408
    %v5620 = vunpack.c.0.s8 %v5619
    %v5621 = vperm.slane %v5615, %v5620
    %v5623 = vunpack.c.l.s4 1934713408
    %v5624 = vunpack.c.0.s8 %v5623
    %v5625 = vperm.slane %v5617, %v5624
    %v5626 = vrot.slane %v5597, 4
    %v5627 = vsel %vm216, %v5626, %v5585
    %v5628 = vrot.slane %v5585, 4
    %v5629 = vsel %vm216, %v5597, %v5628
    %v5631 = vunpack.c.l.s4 1934713408
    %v5632 = vunpack.c.0.s8 %v5631
    %v5633 = vperm.slane %v5627, %v5632
    %v5635 = vunpack.c.l.s4 1934713408
    %v5636 = vunpack.c.0.s8 %v5635
    %v5637 = vperm.slane %v5629, %v5636
    %v5638 = vrot.slane %v5601, 4
    %v5639 = vsel %vm216, %v5638, %v5589
    %v5640 = vrot.slane %v5589, 4
    %v5641 = vsel %vm216, %v5601, %v5640
    %v5643 = vunpack.c.l.s4 1934713408
    %v5644 = vunpack.c.0.s8 %v5643
    %v5645 = vperm.slane %v5639, %v5644
    %v5647 = vunpack.c.l.s4 1934713408
    %v5648 = vunpack.c.0.s8 %v5647
    %v5649 = vperm.slane %v5641, %v5648
    %v5650 = vrot.slane %v5633, 4
    %v5651 = vsel %vm216, %v5650, %v5609
    %v5652 = vrot.slane %v5609, 4
    %v5653 = vsel %vm216, %v5633, %v5652
    %v5654 = vrot.slane %v5637, 4
    %v5655 = vsel %vm216, %v5654, %v5613
    %v5656 = vrot.slane %v5613, 4
    %v5657 = vsel %vm216, %v5637, %v5656
    %v5658 = vrot.slane %v5645, 4
    %v5659 = vsel %vm216, %v5658, %v5621
    %v5660 = vrot.slane %v5621, 4
    %v5661 = vsel %vm216, %v5645, %v5660
    %v5662 = vrot.slane %v5649, 4
    %v5663 = vsel %vm216, %v5662, %v5625
    %v5664 = vrot.slane %v5625, 4
    %v5665 = vsel %vm216, %v5649, %v5664
    %v5666 = vrot.slane %v5319, 4
    %v5667 = vsel %vm216, %v5666, %v5315
    %v5668 = vrot.slane %v5315, 4
    %v5669 = vsel %vm216, %v5319, %v5668
    %v5671 = vunpack.c.l.s4 1983009808
    %v5672 = vunpack.c.0.s8 %v5671
    %v5673 = vperm.slane %v5667, %v5672
    %v5675 = vunpack.c.l.s4 1983009808
    %v5676 = vunpack.c.0.s8 %v5675
    %v5677 = vperm.slane %v5669, %v5676
    %v5678 = vrot.slane %v5321, 4
    %v5679 = vsel %vm216, %v5678, %v5317
    %v5680 = vrot.slane %v5317, 4
    %v5681 = vsel %vm216, %v5321, %v5680
    %v5683 = vunpack.c.l.s4 1983009808
    %v5684 = vunpack.c.0.s8 %v5683
    %v5685 = vperm.slane %v5679, %v5684
    %v5687 = vunpack.c.l.s4 1983009808
    %v5688 = vunpack.c.0.s8 %v5687
    %v5689 = vperm.slane %v5681, %v5688
    %v5690 = vrot.slane %v5327, 4
    %v5691 = vsel %vm216, %v5690, %v5323
    %v5692 = vrot.slane %v5323, 4
    %v5693 = vsel %vm216, %v5327, %v5692
    %v5695 = vunpack.c.l.s4 1983009808
    %v5696 = vunpack.c.0.s8 %v5695
    %v5697 = vperm.slane %v5691, %v5696
    %v5699 = vunpack.c.l.s4 1983009808
    %v5700 = vunpack.c.0.s8 %v5699
    %v5701 = vperm.slane %v5693, %v5700
    %v5702 = vrot.slane %v5329, 4
    %v5703 = vsel %vm216, %v5702, %v5325
    %v5704 = vrot.slane %v5325, 4
    %v5705 = vsel %vm216, %v5329, %v5704
    %v5707 = vunpack.c.l.s4 1983009808
    %v5708 = vunpack.c.0.s8 %v5707
    %v5709 = vperm.slane %v5703, %v5708
    %v5711 = vunpack.c.l.s4 1983009808
    %v5712 = vunpack.c.0.s8 %v5711
    %v5713 = vperm.slane %v5705, %v5712
    %v5714 = vrot.slane %v5685, 4
    %v5715 = vsel %vm216, %v5714, %v5673
    %v5716 = vrot.slane %v5673, 4
    %v5717 = vsel %vm216, %v5685, %v5716
    %v5719 = vunpack.c.l.s4 1934713408
    %v5720 = vunpack.c.0.s8 %v5719
    %v5721 = vperm.slane %v5715, %v5720
    %v5723 = vunpack.c.l.s4 1934713408
    %v5724 = vunpack.c.0.s8 %v5723
    %v5725 = vperm.slane %v5717, %v5724
    %v5726 = vrot.slane %v5689, 4
    %v5727 = vsel %vm216, %v5726, %v5677
    %v5728 = vrot.slane %v5677, 4
    %v5729 = vsel %vm216, %v5689, %v5728
    %v5731 = vunpack.c.l.s4 1934713408
    %v5732 = vunpack.c.0.s8 %v5731
    %v5733 = vperm.slane %v5727, %v5732
    %v5735 = vunpack.c.l.s4 1934713408
    %v5736 = vunpack.c.0.s8 %v5735
    %v5737 = vperm.slane %v5729, %v5736
    %v5738 = vrot.slane %v5709, 4
    %v5739 = vsel %vm216, %v5738, %v5697
    %v5740 = vrot.slane %v5697, 4
    %v5741 = vsel %vm216, %v5709, %v5740
    %v5743 = vunpack.c.l.s4 1934713408
    %v5744 = vunpack.c.0.s8 %v5743
    %v5745 = vperm.slane %v5739, %v5744
    %v5747 = vunpack.c.l.s4 1934713408
    %v5748 = vunpack.c.0.s8 %v5747
    %v5749 = vperm.slane %v5741, %v5748
    %v5750 = vrot.slane %v5713, 4
    %v5751 = vsel %vm216, %v5750, %v5701
    %v5752 = vrot.slane %v5701, 4
    %v5753 = vsel %vm216, %v5713, %v5752
    %v5755 = vunpack.c.l.s4 1934713408
    %v5756 = vunpack.c.0.s8 %v5755
    %v5757 = vperm.slane %v5751, %v5756
    %v5759 = vunpack.c.l.s4 1934713408
    %v5760 = vunpack.c.0.s8 %v5759
    %v5761 = vperm.slane %v5753, %v5760
    %v5762 = vrot.slane %v5745, 4
    %v5763 = vsel %vm216, %v5762, %v5721
    %v5764 = vrot.slane %v5721, 4
    %v5765 = vsel %vm216, %v5745, %v5764
    %v5766 = vrot.slane %v5749, 4
    %v5767 = vsel %vm216, %v5766, %v5725
    %v5768 = vrot.slane %v5725, 4
    %v5769 = vsel %vm216, %v5749, %v5768
    %v5770 = vrot.slane %v5757, 4
    %v5771 = vsel %vm216, %v5770, %v5733
    %v5772 = vrot.slane %v5733, 4
    %v5773 = vsel %vm216, %v5757, %v5772
    %v5774 = vrot.slane %v5761, 4
    %v5775 = vsel %vm216, %v5774, %v5737
    %v5776 = vrot.slane %v5737, 4
    %v5777 = vsel %vm216, %v5761, %v5776
    %5782 = vrot.lane.b32.xlu0 %v5429, 8
    %v5783 = vpop.permute.xlu0 %5782
    %5784 = vrot.lane.b32.xlu0 %v5541, 8
    %v5785 = vpop.permute.xlu0 %5784
    %5786 = vrot.lane.b32.xlu0 %v5653, 8
    %v5787 = vpop.permute.xlu0 %5786
    %5788 = vrot.lane.b32.xlu0 %v5765, 8
    %v5789 = vpop.permute.xlu0 %5788
    %5798 = vrot.lane.b32.xlu0 %v5431, 16
    %v5799 = vpop.permute.xlu0 %5798
    %5800 = vrot.lane.b32.xlu0 %v5543, 16
    %v5801 = vpop.permute.xlu0 %5800
    %5802 = vrot.lane.b32.xlu0 %v5655, 16
    %v5803 = vpop.permute.xlu0 %5802
    %5804 = vrot.lane.b32.xlu0 %v5767, 16
    %v5805 = vpop.permute.xlu0 %5804
    %5814 = vrot.lane.b32.xlu0 %v5433, 24
    %v5815 = vpop.permute.xlu0 %5814
    %5816 = vrot.lane.b32.xlu0 %v5545, 24
    %v5817 = vpop.permute.xlu0 %5816
    %5818 = vrot.lane.b32.xlu0 %v5657, 24
    %v5819 = vpop.permute.xlu0 %5818
    %5820 = vrot.lane.b32.xlu0 %v5769, 24
    %v5821 = vpop.permute.xlu0 %5820
    %5830 = vrot.lane.b32.xlu0 %v5435, 32
    %v5831 = vpop.permute.xlu0 %5830
    %5832 = vrot.lane.b32.xlu0 %v5547, 32
    %v5833 = vpop.permute.xlu0 %5832
    %5834 = vrot.lane.b32.xlu0 %v5659, 32
    %v5835 = vpop.permute.xlu0 %5834
    %5836 = vrot.lane.b32.xlu0 %v5771, 32
    %v5837 = vpop.permute.xlu0 %5836
    %5846 = vrot.lane.b32.xlu0 %v5437, 40
    %v5847 = vpop.permute.xlu0 %5846
    %5848 = vrot.lane.b32.xlu0 %v5549, 40
    %v5849 = vpop.permute.xlu0 %5848
    %5850 = vrot.lane.b32.xlu0 %v5661, 40
    %v5851 = vpop.permute.xlu0 %5850
    %5852 = vrot.lane.b32.xlu0 %v5773, 40
    %v5853 = vpop.permute.xlu0 %5852
    %5862 = vrot.lane.b32.xlu0 %v5439, 48
    %v5863 = vpop.permute.xlu0 %5862
    %5864 = vrot.lane.b32.xlu0 %v5551, 48
    %v5865 = vpop.permute.xlu0 %5864
    %5866 = vrot.lane.b32.xlu0 %v5663, 48
    %v5867 = vpop.permute.xlu0 %5866
    %5868 = vrot.lane.b32.xlu0 %v5775, 48
    %v5869 = vpop.permute.xlu0 %5868
    %5878 = vrot.lane.b32.xlu0 %v5441, 56
    %v5879 = vpop.permute.xlu0 %5878
    %5880 = vrot.lane.b32.xlu0 %v5553, 56
    %v5881 = vpop.permute.xlu0 %5880
    %5882 = vrot.lane.b32.xlu0 %v5665, 56
    %v5883 = vpop.permute.xlu0 %5882
    %5884 = vrot.lane.b32.xlu0 %v5777, 56
    %v5885 = vpop.permute.xlu0 %5884
    %v5890 = vsel %vm3088, %v5427, %v5783
    %v5891 = vsel %vm3088, %v5539, %v5785
    %v5892 = vsel %vm3088, %v5651, %v5787
    %v5893 = vsel %vm3088, %v5763, %v5789
    %v5894 = vsel %vm3649, %v5890, %v5799
    %v5895 = vsel %vm3649, %v5891, %v5801
    %v5896 = vsel %vm3649, %v5892, %v5803
    %v5897 = vsel %vm3649, %v5893, %v5805
    %vm5898 = vcmask 195584
    %v5899 = vsel %vm5898, %v5894, %v5815
    %v5900 = vsel %vm5898, %v5895, %v5817
    %v5901 = vsel %vm5898, %v5896, %v5819
    %v5902 = vsel %vm5898, %v5897, %v5821
    %v5903 = vsel %vm56, %v5899, %v5831
    %v5904 = vsel %vm56, %v5900, %v5833
    %v5905 = vsel %vm56, %v5901, %v5835
    %v5906 = vsel %vm56, %v5902, %v5837
    %vm5907 = vcmask 326656
    %v5908 = vsel %vm5907, %v5903, %v5847
    %v5909 = vsel %vm5907, %v5904, %v5849
    %v5910 = vsel %vm5907, %v5905, %v5851
    %v5911 = vsel %vm5907, %v5906, %v5853
    %vm5912 = vcmask 392192
    %v5913 = vsel %vm5912, %v5908, %v5863
    %v5914 = vsel %vm5912, %v5909, %v5865
    %v5915 = vsel %vm5912, %v5910, %v5867
    %v5916 = vsel %vm5912, %v5911, %v5869
    %vm5917 = vcmask 457728
    %v5918 = vsel %vm5917, %v5913, %v5879
    %v5919 = vsel %vm5917, %v5914, %v5881
    %v5920 = vsel %vm5917, %v5915, %v5883
    %v5921 = vsel %vm5917, %v5916, %v5885
    %vm5922 = vcmask 523264
    %5923 = vst.msk [vmem:[#allocation7] sm:$0xff] %vm5922, %v5918
    %5924 = vst.msk [vmem:[#allocation7 + $0x8] sm:$0xff] %vm5922, %v5919
    %5925 = vst.msk [vmem:[#allocation7 + $0x10] sm:$0xff] %vm5922, %v5920
    %5926 = vst.msk [vmem:[#allocation7 + $0x18] sm:$0xff] %vm5922, %v5921
    // Predicated region
    $region18: #{tpu_custom_call.1} parent=1 // pred_check
      _
    $region19: #{tpu_custom_call.1} parent=1 // pred_check_branch
      %5928 = sbr.rel (0) target = $region21
    $region20: #{tpu_custom_call.1} parent=1 // pred_region
      %5930 = vsyncadd [#allocation4], 0
      %s5931 = sshll.u32 [#allocation7], 4
      %s5932 = int_to_ptr.vmem [resolvable:$true] %s5931
      %s5933 = sshll.u32 %s2, 4
      %s5934 = int_to_ptr.hbm [resolvable:$true] %s5933
      %5939 = dma.vmem_to_hbm [thread:$0]  %s5932, 512, %s5934, [#allocation4], 128, 128, 8
    $region21: #{tpu_custom_call.1} parent=1 // pred_fallthru
      _
    // Predicated region
    $region22: #{tpu_custom_call.1} parent=1 // pred_check
      _
    $region23: #{tpu_custom_call.1} parent=1 // pred_check_branch
      %5941 = sbr.rel (0) target = $region25
    $region24: #{tpu_custom_call.1} parent=1 // pred_region
      %5943 = dma.done [#allocation4], 512
    $region25: #{tpu_custom_call.1} parent=1 // pred_fallthru
      _
    %5944 = vsyncpa [#allocation3], 1
    %5945 = vsyncpa [#allocation6], 1
    %5946 = vsyncpa [#allocation4], 1

</llo_original>
